<compile_context>
chip_gen: v5e
topology: v5e:2x2
jax: 0.10.0
libtpu: 0.0.40
codegen_flags: <defaults>
</compile_context>

<pallas_src>
import jax
import jax.numpy as jnp
from jax.experimental import pallas as pl
from jax.experimental.pallas import tpu as pltpu

_LANE = 128


def _conv3x3_same(pad_ref, w_ref, H, W, C):
    """3x3 'same' conv on a zero-bordered VMEM buffer: 9 bf16 tap matmuls,
    f32 accumulation on the MXU. With C a multiple of 128, each tap reshape
    is a layout no-op (leading dims collapse onto a full-lane minor dim)."""
    acc = jnp.zeros((H * W, C), jnp.float32)
    for dh in range(3):
        for dw in range(3):
            tap = pad_ref[dh:dh + H, dw:dw + W, :]            # (H, W, C) bf16
            acc = acc + jnp.dot(tap.reshape(H * W, C), w_ref[dh, dw],
                                preferred_element_type=jnp.float32)
    return acc                                                # (H*W, C) f32


def _basic_unit_kernel(x_ref, w1_ref, w2_ref, s1_ref, b1_ref, s2_ref, b2_ref,
                       o_ref, pad_ref):
    _, H, W, C = x_ref.shape

    # Zero the padded scratch once; the 1-wide border stays zero for both convs.
    pad_ref[...] = jnp.zeros_like(pad_ref)

    # --- BN1 (folded, eval mode) + ReLU -> bf16 interior of padded scratch --
    t = jnp.maximum(x_ref[0].astype(jnp.float32) * s1_ref[0] + b1_ref[0], 0.0)
    pad_ref[1:H + 1, 1:W + 1, :] = t.astype(pad_ref.dtype)

    # --- Conv1: 3x3, stride 1, pad 1, no bias --------------------------------
    y = _conv3x3_same(pad_ref, w1_ref, H, W, C)               # (H*W, C) f32

    # --- BN2 (folded) + ReLU; Dropout == identity in eval mode ---------------
    u = jnp.maximum(y * s2_ref[0] + b2_ref[0], 0.0)
    # Only the interior is rewritten; the border is still zero.
    pad_ref[1:H + 1, 1:W + 1, :] = u.reshape(H, W, C).astype(pad_ref.dtype)

    # --- Conv2: 3x3, stride 1, pad 1, no bias --------------------------------
    z = _conv3x3_same(pad_ref, w2_ref, H, W, C)               # (H*W, C) f32

    # --- Residual add (re-read x so its live range does not span the convs) --
    o_ref[0] = (x_ref[0].astype(jnp.float32)
                + z.reshape(H, W, C)).astype(o_ref.dtype)


def basic_unit_forward(x_nchw, w1_oihw, w2_oihw, scale1, shift1, scale2, shift2):
    """x: [N, C, H, W] (torch layout). Weights: OIHW [C, C, 3, 3]."""
    N, C, H, W = x_nchw.shape
    C_pad = max(_LANE, ((C + _LANE - 1) // _LANE) * _LANE)
    pc = C_pad - C

    # NCHW -> NHWC and zero-pad channels up to a lane-dense multiple of 128.
    x = jnp.transpose(x_nchw, (0, 2, 3, 1))
    if pc:
        x = jnp.pad(x, ((0, 0), (0, 0), (0, 0), (0, pc)))

    def prep_w(w_oihw):
        w = jnp.transpose(w_oihw, (2, 3, 1, 0))               # OIHW -> HWIO
        if pc:
            w = jnp.pad(w, ((0, 0), (0, 0), (0, pc), (0, pc)))
        return w.astype(jnp.bfloat16)                          # bf16 MXU weights

    w1 = prep_w(w1_oihw)
    w2 = prep_w(w2_oihw)

    def prep_v(v):
        v = v.astype(jnp.float32)
        if pc:
            v = jnp.pad(v, ((0, pc),))
        return v.reshape(1, C_pad)

    s1, b1, s2, b2 = (prep_v(v) for v in (scale1, shift1, scale2, shift2))

    out = pl.pallas_call(
        _basic_unit_kernel,
        out_shape=jax.ShapeDtypeStruct((N, H, W, C_pad), x_nchw.dtype),
        grid_spec=pltpu.PrefetchScalarGridSpec(
            num_scalar_prefetch=0,
            grid=(N,),
            in_specs=[
                pl.BlockSpec((1, H, W, C_pad), lambda n: (n, 0, 0, 0)),       # x
                pl.BlockSpec((3, 3, C_pad, C_pad), lambda n: (0, 0, 0, 0)),   # w1
                pl.BlockSpec((3, 3, C_pad, C_pad), lambda n: (0, 0, 0, 0)),   # w2
                pl.BlockSpec((1, C_pad), lambda n: (0, 0)),                   # scale1
                pl.BlockSpec((1, C_pad), lambda n: (0, 0)),                   # shift1
                pl.BlockSpec((1, C_pad), lambda n: (0, 0)),                   # scale2
                pl.BlockSpec((1, C_pad), lambda n: (0, 0)),                   # shift2
            ],
            out_specs=pl.BlockSpec((1, H, W, C_pad), lambda n: (n, 0, 0, 0)),
            # Zero-bordered conv input buffer, kept in bf16 (halves VMEM, feeds
            # the MXU directly).
            scratch_shapes=[pltpu.VMEM((H + 2, W + 2, C_pad), jnp.bfloat16)],
        ),
        compiler_params=pltpu.CompilerParams(
            dimension_semantics=("parallel",),       # batch images independent
            vmem_limit_bytes=32 * 1024 * 1024),
    )(x, w1, w2, s1, b1, s2, b2)

    out = out[..., :C]                                         # drop channel pad
    return jnp.transpose(out, (0, 3, 1, 2))                    # NHWC -> NCHW


def _reference_forward(x_nchw, w1_oihw, w2_oihw, scale1, shift1, scale2, shift2):
    """Pure-JAX reference mirroring the eval-mode forward (bf16 conv inputs,
    f32 accumulation — same numerics as the kernel's MXU path)."""
    def bn_relu(v, s, b):
        return jnp.maximum(v * s[None, :, None, None] + b[None, :, None, None], 0.0)

    def conv(v, w):
        return jax.lax.conv_general_dilated(
            v.astype(jnp.bfloat16), w.astype(jnp.bfloat16),
            window_strides=(1, 1), padding=((1, 1), (1, 1)),
            dimension_numbers=("NCHW", "OIHW", "NCHW"),
            preferred_element_type=jnp.float32)

    t = bn_relu(x_nchw, scale1, shift1)
    y = conv(t, w1_oihw)
    u = bn_relu(y, scale2, shift2)
    z = conv(u, w2_oihw)
    return x_nchw + z


if __name__ == "__main__":
    N, C, H, W = 2, 8, 16, 16                                  # small NCHW example
    key = jax.random.PRNGKey(0)
    kx, k1, k2 = jax.random.split(key, 3)

    x = jax.random.normal(kx, (N, C, H, W), jnp.float32)

    # Conv2d(channels, channels, 3, padding=1, bias=False) weights, OIHW.
    w1_oihw = jax.random.normal(k1, (C, C, 3, 3), jnp.float32) * 0.1
    w2_oihw = jax.random.normal(k2, (C, C, 3, 3), jnp.float32) * 0.1

    # BatchNorm2d default init (eval mode): gamma=1, beta=0, mean=0, var=1.
    eps = 1e-5
    gamma = jnp.ones((C,), jnp.float32)
    beta = jnp.zeros((C,), jnp.float32)
    running_mean = jnp.zeros((C,), jnp.float32)
    running_var = jnp.ones((C,), jnp.float32)
    scale1 = gamma / jnp.sqrt(running_var + eps)
    shift1 = beta - running_mean * scale1
    scale2, shift2 = scale1, shift1

    out = basic_unit_forward(x, w1_oihw, w2_oihw, scale1, shift1, scale2, shift2)
    out = jax.block_until_ready(out)

    ref = _reference_forward(x, w1_oihw, w2_oihw, scale1, shift1, scale2, shift2)
    ref = jax.block_until_ready(ref)

    assert out.shape == (N, C, H, W)
    max_err = jnp.max(jnp.abs(out - ref))
    assert jnp.allclose(out, ref, atol=1e-2, rtol=1e-2), f"max abs err = {max_err}"

    print("KERNEL_OK")
</pallas_src>

<mosaic_0001>
module attributes {stable_mosaic.version = 11 : i64} {
  func.func @_basic_unit_kernel(%arg0: i32, %arg1: memref<1x16x16x128xf32, #tpu.memory_space<vmem>>, %arg2: memref<3x3x128x128xbf16, #tpu.memory_space<vmem>>, %arg3: memref<3x3x128x128xbf16, #tpu.memory_space<vmem>>, %arg4: memref<1x128xf32, #tpu.memory_space<vmem>>, %arg5: memref<1x128xf32, #tpu.memory_space<vmem>>, %arg6: memref<1x128xf32, #tpu.memory_space<vmem>>, %arg7: memref<1x128xf32, #tpu.memory_space<vmem>>, %arg8: memref<1x16x16x128xf32, #tpu.memory_space<vmem>>, %arg9: memref<18x18x128xbf16, #tpu.memory_space<vmem>>) attributes {dimension_semantics = [#tpu.dimension_semantics<parallel>], iteration_bounds = array<i64: 2>, scalar_prefetch = 0 : i64, scratch_operands = 1 : i64, tpu.core_type = #tpu.core_type<tc>, window_params = [{transform_indices = @transform_0, window_bounds = array<i64: 1, 16, 16, 128>}, {pipeline_mode = #tpu.pipeline_mode<synchronous>, transform_indices = @transform_1, window_bounds = array<i64: 3, 3, 128, 128>}, {pipeline_mode = #tpu.pipeline_mode<synchronous>, transform_indices = @transform_2, window_bounds = array<i64: 3, 3, 128, 128>}, {pipeline_mode = #tpu.pipeline_mode<synchronous>, transform_indices = @transform_3, window_bounds = array<i64: 1, 128>}, {pipeline_mode = #tpu.pipeline_mode<synchronous>, transform_indices = @transform_4, window_bounds = array<i64: 1, 128>}, {pipeline_mode = #tpu.pipeline_mode<synchronous>, transform_indices = @transform_5, window_bounds = array<i64: 1, 128>}, {pipeline_mode = #tpu.pipeline_mode<synchronous>, transform_indices = @transform_6, window_bounds = array<i64: 1, 128>}, {transform_indices = @transform_7, window_bounds = array<i64: 1, 16, 16, 128>}]} {
    %cst = arith.constant 0.000000e+00 : bf16
    %0 = vector.broadcast %cst : bf16 to vector<18x18x128xbf16>
    %c0 = arith.constant 0 : index
    %c0_0 = arith.constant 0 : index
    %c0_1 = arith.constant 0 : index
    %1 = vector.load %arg9[%c0, %c0_0, %c0_1] : memref<18x18x128xbf16, #tpu.memory_space<vmem>>, vector<18x18x128xbf16>
    tpu.vector_store %arg9[%c0, %c0_0, %c0_1], %0 {strides = array<i32>} : memref<18x18x128xbf16, #tpu.memory_space<vmem>>, vector<18x18x128xbf16>,
    %c0_2 = arith.constant 0 : index
    %c0_3 = arith.constant 0 : index
    %c0_4 = arith.constant 0 : index
    %c0_5 = arith.constant 0 : index
    %2 = vector.load %arg1[%c0_2, %c0_3, %c0_4, %c0_5] : memref<1x16x16x128xf32, #tpu.memory_space<vmem>>, vector<1x16x16x128xf32>
    %3 = vector.shape_cast %2 : vector<1x16x16x128xf32> to vector<16x16x128xf32>
    %c0_6 = arith.constant 0 : index
    %c0_7 = arith.constant 0 : index
    %4 = vector.load %arg4[%c0_6, %c0_7] : memref<1x128xf32, #tpu.memory_space<vmem>>, vector<1x128xf32>
    %5 = vector.shape_cast %4 : vector<1x128xf32> to vector<128xf32>
    %6 = vector.shape_cast %5 : vector<128xf32> to vector<1x1x128xf32>
    %7 = vector.broadcast %6 : vector<1x1x128xf32> to vector<16x16x128xf32>
    %8 = arith.mulf %3, %7 : vector<16x16x128xf32>
    %c0_8 = arith.constant 0 : index
    %c0_9 = arith.constant 0 : index
    %9 = vector.load %arg5[%c0_8, %c0_9] : memref<1x128xf32, #tpu.memory_space<vmem>>, vector<1x128xf32>
    %10 = vector.shape_cast %9 : vector<1x128xf32> to vector<128xf32>
    %11 = vector.shape_cast %10 : vector<128xf32> to vector<1x1x128xf32>
    %12 = vector.broadcast %11 : vector<1x1x128xf32> to vector<16x16x128xf32>
    %13 = arith.addf %8, %12 : vector<16x16x128xf32>
    %cst_10 = arith.constant 0.000000e+00 : f32
    %14 = vector.broadcast %cst_10 : f32 to vector<16x16x128xf32>
    %15 = arith.maximumf %13, %14 : vector<16x16x128xf32>
    %16 = arith.truncf %15 : vector<16x16x128xf32> to vector<16x16x128xbf16>
    %c1 = arith.constant 1 : index
    %c1_11 = arith.constant 1 : index
    %c0_12 = arith.constant 0 : index
    %17 = vector.load %arg9[%c1, %c1_11, %c0_12] : memref<18x18x128xbf16, #tpu.memory_space<vmem>>, vector<16x16x128xbf16>
    tpu.vector_store %arg9[%c1, %c1_11, %c0_12], %16 {strides = array<i32>} : memref<18x18x128xbf16, #tpu.memory_space<vmem>>, vector<16x16x128xbf16>,
    %cst_13 = arith.constant 0.000000e+00 : f32
    %18 = vector.broadcast %cst_13 : f32 to vector<256x128xf32>
    %c0_14 = arith.constant 0 : index
    %c0_15 = arith.constant 0 : index
    %c0_16 = arith.constant 0 : index
    %19 = vector.load %arg9[%c0_14, %c0_15, %c0_16] : memref<18x18x128xbf16, #tpu.memory_space<vmem>>, vector<16x16x128xbf16>
    %20 = vector.shape_cast %19 : vector<16x16x128xbf16> to vector<256x128xbf16>
    %c0_17 = arith.constant 0 : index
    %c0_18 = arith.constant 0 : index
    %c0_19 = arith.constant 0 : index
    %c0_20 = arith.constant 0 : index
    %21 = vector.load %arg2[%c0_17, %c0_18, %c0_19, %c0_20] : memref<3x3x128x128xbf16, #tpu.memory_space<vmem>>, vector<1x1x128x128xbf16>
    %22 = vector.shape_cast %21 : vector<1x1x128x128xbf16> to vector<128x128xbf16>
    %cst_21 = arith.constant dense<0.000000e+00> : vector<256x128xf32>
    %23 = tpu.matmul %20, %22, %cst_21 {dimension_numbers = #tpu.dot_dimension_numbers<[1], [0], [0], [1], [0, 0, 1, 1], [], []>} : vector<256x128xbf16>, vector<128x128xbf16>, vector<256x128xf32> -> vector<256x128xf32>
    %24 = arith.addf %18, %23 : vector<256x128xf32>
    %c0_22 = arith.constant 0 : index
    %c1_23 = arith.constant 1 : index
    %c0_24 = arith.constant 0 : index
    %25 = vector.load %arg9[%c0_22, %c1_23, %c0_24] : memref<18x18x128xbf16, #tpu.memory_space<vmem>>, vector<16x16x128xbf16>
    %26 = vector.shape_cast %25 : vector<16x16x128xbf16> to vector<256x128xbf16>
    %c0_25 = arith.constant 0 : index
    %c1_26 = arith.constant 1 : index
    %c0_27 = arith.constant 0 : index
    %c0_28 = arith.constant 0 : index
    %27 = vector.load %arg2[%c0_25, %c1_26, %c0_27, %c0_28] : memref<3x3x128x128xbf16, #tpu.memory_space<vmem>>, vector<1x1x128x128xbf16>
    %28 = vector.shape_cast %27 : vector<1x1x128x128xbf16> to vector<128x128xbf16>
    %cst_29 = arith.constant dense<0.000000e+00> : vector<256x128xf32>
    %29 = tpu.matmul %26, %28, %cst_29 {dimension_numbers = #tpu.dot_dimension_numbers<[1], [0], [0], [1], [0, 0, 1, 1], [], []>} : vector<256x128xbf16>, vector<128x128xbf16>, vector<256x128xf32> -> vector<256x128xf32>
    %30 = arith.addf %24, %29 : vector<256x128xf32>
    %c0_30 = arith.constant 0 : index
    %c2 = arith.constant 2 : index
    %c0_31 = arith.constant 0 : index
    %31 = vector.load %arg9[%c0_30, %c2, %c0_31] : memref<18x18x128xbf16, #tpu.memory_space<vmem>>, vector<16x16x128xbf16>
    %32 = vector.shape_cast %31 : vector<16x16x128xbf16> to vector<256x128xbf16>
    %c0_32 = arith.constant 0 : index
    %c2_33 = arith.constant 2 : index
    %c0_34 = arith.constant 0 : index
    %c0_35 = arith.constant 0 : index
    %33 = vector.load %arg2[%c0_32, %c2_33, %c0_34, %c0_35] : memref<3x3x128x128xbf16, #tpu.memory_space<vmem>>, vector<1x1x128x128xbf16>
    %34 = vector.shape_cast %33 : vector<1x1x128x128xbf16> to vector<128x128xbf16>
    %cst_36 = arith.constant dense<0.000000e+00> : vector<256x128xf32>
    %35 = tpu.matmul %32, %34, %cst_36 {dimension_numbers = #tpu.dot_dimension_numbers<[1], [0], [0], [1], [0, 0, 1, 1], [], []>} : vector<256x128xbf16>, vector<128x128xbf16>, vector<256x128xf32> -> vector<256x128xf32>
    %36 = arith.addf %30, %35 : vector<256x128xf32>
    %c1_37 = arith.constant 1 : index
    %c0_38 = arith.constant 0 : index
    %c0_39 = arith.constant 0 : index
    %37 = vector.load %arg9[%c1_37, %c0_38, %c0_39] : memref<18x18x128xbf16, #tpu.memory_space<vmem>>, vector<16x16x128xbf16>
    %38 = vector.shape_cast %37 : vector<16x16x128xbf16> to vector<256x128xbf16>
    %c1_40 = arith.constant 1 : index
    %c0_41 = arith.constant 0 : index
    %c0_42 = arith.constant 0 : index
    %c0_43 = arith.constant 0 : index
    %39 = vector.load %arg2[%c1_40, %c0_41, %c0_42, %c0_43] : memref<3x3x128x128xbf16, #tpu.memory_space<vmem>>, vector<1x1x128x128xbf16>
    %40 = vector.shape_cast %39 : vector<1x1x128x128xbf16> to vector<128x128xbf16>
    %cst_44 = arith.constant dense<0.000000e+00> : vector<256x128xf32>
    %41 = tpu.matmul %38, %40, %cst_44 {dimension_numbers = #tpu.dot_dimension_numbers<[1], [0], [0], [1], [0, 0, 1, 1], [], []>} : vector<256x128xbf16>, vector<128x128xbf16>, vector<256x128xf32> -> vector<256x128xf32>
    %42 = arith.addf %36, %41 : vector<256x128xf32>
    %c1_45 = arith.constant 1 : index
    %c1_46 = arith.constant 1 : index
    %c0_47 = arith.constant 0 : index
    %43 = vector.load %arg9[%c1_45, %c1_46, %c0_47] : memref<18x18x128xbf16, #tpu.memory_space<vmem>>, vector<16x16x128xbf16>
    %44 = vector.shape_cast %43 : vector<16x16x128xbf16> to vector<256x128xbf16>
    %c1_48 = arith.constant 1 : index
    %c1_49 = arith.constant 1 : index
    %c0_50 = arith.constant 0 : index
    %c0_51 = arith.constant 0 : index
    %45 = vector.load %arg2[%c1_48, %c1_49, %c0_50, %c0_51] : memref<3x3x128x128xbf16, #tpu.memory_space<vmem>>, vector<1x1x128x128xbf16>
    %46 = vector.shape_cast %45 : vector<1x1x128x128xbf16> to vector<128x128xbf16>
    %cst_52 = arith.constant dense<0.000000e+00> : vector<256x128xf32>
    %47 = tpu.matmul %44, %46, %cst_52 {dimension_numbers = #tpu.dot_dimension_numbers<[1], [0], [0], [1], [0, 0, 1, 1], [], []>} : vector<256x128xbf16>, vector<128x128xbf16>, vector<256x128xf32> -> vector<256x128xf32>
    %48 = arith.addf %42, %47 : vector<256x128xf32>
    %c1_53 = arith.constant 1 : index
    %c2_54 = arith.constant 2 : index
    %c0_55 = arith.constant 0 : index
    %49 = vector.load %arg9[%c1_53, %c2_54, %c0_55] : memref<18x18x128xbf16, #tpu.memory_space<vmem>>, vector<16x16x128xbf16>
    %50 = vector.shape_cast %49 : vector<16x16x128xbf16> to vector<256x128xbf16>
    %c1_56 = arith.constant 1 : index
    %c2_57 = arith.constant 2 : index
    %c0_58 = arith.constant 0 : index
    %c0_59 = arith.constant 0 : index
    %51 = vector.load %arg2[%c1_56, %c2_57, %c0_58, %c0_59] : memref<3x3x128x128xbf16, #tpu.memory_space<vmem>>, vector<1x1x128x128xbf16>
    %52 = vector.shape_cast %51 : vector<1x1x128x128xbf16> to vector<128x128xbf16>
    %cst_60 = arith.constant dense<0.000000e+00> : vector<256x128xf32>
    %53 = tpu.matmul %50, %52, %cst_60 {dimension_numbers = #tpu.dot_dimension_numbers<[1], [0], [0], [1], [0, 0, 1, 1], [], []>} : vector<256x128xbf16>, vector<128x128xbf16>, vector<256x128xf32> -> vector<256x128xf32>
    %54 = arith.addf %48, %53 : vector<256x128xf32>
    %c2_61 = arith.constant 2 : index
    %c0_62 = arith.constant 0 : index
    %c0_63 = arith.constant 0 : index
    %55 = vector.load %arg9[%c2_61, %c0_62, %c0_63] : memref<18x18x128xbf16, #tpu.memory_space<vmem>>, vector<16x16x128xbf16>
    %56 = vector.shape_cast %55 : vector<16x16x128xbf16> to vector<256x128xbf16>
    %c2_64 = arith.constant 2 : index
    %c0_65 = arith.constant 0 : index
    %c0_66 = arith.constant 0 : index
    %c0_67 = arith.constant 0 : index
    %57 = vector.load %arg2[%c2_64, %c0_65, %c0_66, %c0_67] : memref<3x3x128x128xbf16, #tpu.memory_space<vmem>>, vector<1x1x128x128xbf16>
    %58 = vector.shape_cast %57 : vector<1x1x128x128xbf16> to vector<128x128xbf16>
    %cst_68 = arith.constant dense<0.000000e+00> : vector<256x128xf32>
    %59 = tpu.matmul %56, %58, %cst_68 {dimension_numbers = #tpu.dot_dimension_numbers<[1], [0], [0], [1], [0, 0, 1, 1], [], []>} : vector<256x128xbf16>, vector<128x128xbf16>, vector<256x128xf32> -> vector<256x128xf32>
    %60 = arith.addf %54, %59 : vector<256x128xf32>
    %c2_69 = arith.constant 2 : index
    %c1_70 = arith.constant 1 : index
    %c0_71 = arith.constant 0 : index
    %61 = vector.load %arg9[%c2_69, %c1_70, %c0_71] : memref<18x18x128xbf16, #tpu.memory_space<vmem>>, vector<16x16x128xbf16>
    %62 = vector.shape_cast %61 : vector<16x16x128xbf16> to vector<256x128xbf16>
    %c2_72 = arith.constant 2 : index
    %c1_73 = arith.constant 1 : index
    %c0_74 = arith.constant 0 : index
    %c0_75 = arith.constant 0 : index
    %63 = vector.load %arg2[%c2_72, %c1_73, %c0_74, %c0_75] : memref<3x3x128x128xbf16, #tpu.memory_space<vmem>>, vector<1x1x128x128xbf16>
    %64 = vector.shape_cast %63 : vector<1x1x128x128xbf16> to vector<128x128xbf16>
    %cst_76 = arith.constant dense<0.000000e+00> : vector<256x128xf32>
    %65 = tpu.matmul %62, %64, %cst_76 {dimension_numbers = #tpu.dot_dimension_numbers<[1], [0], [0], [1], [0, 0, 1, 1], [], []>} : vector<256x128xbf16>, vector<128x128xbf16>, vector<256x128xf32> -> vector<256x128xf32>
    %66 = arith.addf %60, %65 : vector<256x128xf32>
    %c2_77 = arith.constant 2 : index
    %c2_78 = arith.constant 2 : index
    %c0_79 = arith.constant 0 : index
    %67 = vector.load %arg9[%c2_77, %c2_78, %c0_79] : memref<18x18x128xbf16, #tpu.memory_space<vmem>>, vector<16x16x128xbf16>
    %68 = vector.shape_cast %67 : vector<16x16x128xbf16> to vector<256x128xbf16>
    %c2_80 = arith.constant 2 : index
    %c2_81 = arith.constant 2 : index
    %c0_82 = arith.constant 0 : index
    %c0_83 = arith.constant 0 : index
    %69 = vector.load %arg2[%c2_80, %c2_81, %c0_82, %c0_83] : memref<3x3x128x128xbf16, #tpu.memory_space<vmem>>, vector<1x1x128x128xbf16>
    %70 = vector.shape_cast %69 : vector<1x1x128x128xbf16> to vector<128x128xbf16>
    %cst_84 = arith.constant dense<0.000000e+00> : vector<256x128xf32>
    %71 = tpu.matmul %68, %70, %cst_84 {dimension_numbers = #tpu.dot_dimension_numbers<[1], [0], [0], [1], [0, 0, 1, 1], [], []>} : vector<256x128xbf16>, vector<128x128xbf16>, vector<256x128xf32> -> vector<256x128xf32>
    %72 = arith.addf %66, %71 : vector<256x128xf32>
    %c0_85 = arith.constant 0 : index
    %c0_86 = arith.constant 0 : index
    %73 = vector.load %arg6[%c0_85, %c0_86] : memref<1x128xf32, #tpu.memory_space<vmem>>, vector<1x128xf32>
    %74 = vector.shape_cast %73 : vector<1x128xf32> to vector<128xf32>
    %75 = vector.shape_cast %74 : vector<128xf32> to vector<1x128xf32>
    %76 = vector.broadcast %75 : vector<1x128xf32> to vector<256x128xf32>
    %77 = arith.mulf %72, %76 : vector<256x128xf32>
    %c0_87 = arith.constant 0 : index
    %c0_88 = arith.constant 0 : index
    %78 = vector.load %arg7[%c0_87, %c0_88] : memref<1x128xf32, #tpu.memory_space<vmem>>, vector<1x128xf32>
    %79 = vector.shape_cast %78 : vector<1x128xf32> to vector<128xf32>
    %80 = vector.shape_cast %79 : vector<128xf32> to vector<1x128xf32>
    %81 = vector.broadcast %80 : vector<1x128xf32> to vector<256x128xf32>
    %82 = arith.addf %77, %81 : vector<256x128xf32>
    %cst_89 = arith.constant 0.000000e+00 : f32
    %83 = vector.broadcast %cst_89 : f32 to vector<256x128xf32>
    %84 = arith.maximumf %82, %83 : vector<256x128xf32>
    %85 = vector.shape_cast %84 : vector<256x128xf32> to vector<16x16x128xf32>
    %86 = arith.truncf %85 : vector<16x16x128xf32> to vector<16x16x128xbf16>
    %c1_90 = arith.constant 1 : index
    %c1_91 = arith.constant 1 : index
    %c0_92 = arith.constant 0 : index
    %87 = vector.load %arg9[%c1_90, %c1_91, %c0_92] : memref<18x18x128xbf16, #tpu.memory_space<vmem>>, vector<16x16x128xbf16>
    tpu.vector_store %arg9[%c1_90, %c1_91, %c0_92], %86 {strides = array<i32>} : memref<18x18x128xbf16, #tpu.memory_space<vmem>>, vector<16x16x128xbf16>,
    %cst_93 = arith.constant 0.000000e+00 : f32
    %88 = vector.broadcast %cst_93 : f32 to vector<256x128xf32>
    %c0_94 = arith.constant 0 : index
    %c0_95 = arith.constant 0 : index
    %c0_96 = arith.constant 0 : index
    %89 = vector.load %arg9[%c0_94, %c0_95, %c0_96] : memref<18x18x128xbf16, #tpu.memory_space<vmem>>, vector<16x16x128xbf16>
    %90 = vector.shape_cast %89 : vector<16x16x128xbf16> to vector<256x128xbf16>
    %c0_97 = arith.constant 0 : index
    %c0_98 = arith.constant 0 : index
    %c0_99 = arith.constant 0 : index
    %c0_100 = arith.constant 0 : index
    %91 = vector.load %arg3[%c0_97, %c0_98, %c0_99, %c0_100] : memref<3x3x128x128xbf16, #tpu.memory_space<vmem>>, vector<1x1x128x128xbf16>
    %92 = vector.shape_cast %91 : vector<1x1x128x128xbf16> to vector<128x128xbf16>
    %cst_101 = arith.constant dense<0.000000e+00> : vector<256x128xf32>
    %93 = tpu.matmul %90, %92, %cst_101 {dimension_numbers = #tpu.dot_dimension_numbers<[1], [0], [0], [1], [0, 0, 1, 1], [], []>} : vector<256x128xbf16>, vector<128x128xbf16>, vector<256x128xf32> -> vector<256x128xf32>
    %94 = arith.addf %88, %93 : vector<256x128xf32>
    %c0_102 = arith.constant 0 : index
    %c1_103 = arith.constant 1 : index
    %c0_104 = arith.constant 0 : index
    %95 = vector.load %arg9[%c0_102, %c1_103, %c0_104] : memref<18x18x128xbf16, #tpu.memory_space<vmem>>, vector<16x16x128xbf16>
    %96 = vector.shape_cast %95 : vector<16x16x128xbf16> to vector<256x128xbf16>
    %c0_105 = arith.constant 0 : index
    %c1_106 = arith.constant 1 : index
    %c0_107 = arith.constant 0 : index
    %c0_108 = arith.constant 0 : index
    %97 = vector.load %arg3[%c0_105, %c1_106, %c0_107, %c0_108] : memref<3x3x128x128xbf16, #tpu.memory_space<vmem>>, vector<1x1x128x128xbf16>
    %98 = vector.shape_cast %97 : vector<1x1x128x128xbf16> to vector<128x128xbf16>
    %cst_109 = arith.constant dense<0.000000e+00> : vector<256x128xf32>
    %99 = tpu.matmul %96, %98, %cst_109 {dimension_numbers = #tpu.dot_dimension_numbers<[1], [0], [0], [1], [0, 0, 1, 1], [], []>} : vector<256x128xbf16>, vector<128x128xbf16>, vector<256x128xf32> -> vector<256x128xf32>
    %100 = arith.addf %94, %99 : vector<256x128xf32>
    %c0_110 = arith.constant 0 : index
    %c2_111 = arith.constant 2 : index
    %c0_112 = arith.constant 0 : index
    %101 = vector.load %arg9[%c0_110, %c2_111, %c0_112] : memref<18x18x128xbf16, #tpu.memory_space<vmem>>, vector<16x16x128xbf16>
    %102 = vector.shape_cast %101 : vector<16x16x128xbf16> to vector<256x128xbf16>
    %c0_113 = arith.constant 0 : index
    %c2_114 = arith.constant 2 : index
    %c0_115 = arith.constant 0 : index
    %c0_116 = arith.constant 0 : index
    %103 = vector.load %arg3[%c0_113, %c2_114, %c0_115, %c0_116] : memref<3x3x128x128xbf16, #tpu.memory_space<vmem>>, vector<1x1x128x128xbf16>
    %104 = vector.shape_cast %103 : vector<1x1x128x128xbf16> to vector<128x128xbf16>
    %cst_117 = arith.constant dense<0.000000e+00> : vector<256x128xf32>
    %105 = tpu.matmul %102, %104, %cst_117 {dimension_numbers = #tpu.dot_dimension_numbers<[1], [0], [0], [1], [0, 0, 1, 1], [], []>} : vector<256x128xbf16>, vector<128x128xbf16>, vector<256x128xf32> -> vector<256x128xf32>
    %106 = arith.addf %100, %105 : vector<256x128xf32>
    %c1_118 = arith.constant 1 : index
    %c0_119 = arith.constant 0 : index
    %c0_120 = arith.constant 0 : index
    %107 = vector.load %arg9[%c1_118, %c0_119, %c0_120] : memref<18x18x128xbf16, #tpu.memory_space<vmem>>, vector<16x16x128xbf16>
    %108 = vector.shape_cast %107 : vector<16x16x128xbf16> to vector<256x128xbf16>
    %c1_121 = arith.constant 1 : index
    %c0_122 = arith.constant 0 : index
    %c0_123 = arith.constant 0 : index
    %c0_124 = arith.constant 0 : index
    %109 = vector.load %arg3[%c1_121, %c0_122, %c0_123, %c0_124] : memref<3x3x128x128xbf16, #tpu.memory_space<vmem>>, vector<1x1x128x128xbf16>
    %110 = vector.shape_cast %109 : vector<1x1x128x128xbf16> to vector<128x128xbf16>
    %cst_125 = arith.constant dense<0.000000e+00> : vector<256x128xf32>
    %111 = tpu.matmul %108, %110, %cst_125 {dimension_numbers = #tpu.dot_dimension_numbers<[1], [0], [0], [1], [0, 0, 1, 1], [], []>} : vector<256x128xbf16>, vector<128x128xbf16>, vector<256x128xf32> -> vector<256x128xf32>
    %112 = arith.addf %106, %111 : vector<256x128xf32>
    %c1_126 = arith.constant 1 : index
    %c1_127 = arith.constant 1 : index
    %c0_128 = arith.constant 0 : index
    %113 = vector.load %arg9[%c1_126, %c1_127, %c0_128] : memref<18x18x128xbf16, #tpu.memory_space<vmem>>, vector<16x16x128xbf16>
    %114 = vector.shape_cast %113 : vector<16x16x128xbf16> to vector<256x128xbf16>
    %c1_129 = arith.constant 1 : index
    %c1_130 = arith.constant 1 : index
    %c0_131 = arith.constant 0 : index
    %c0_132 = arith.constant 0 : index
    %115 = vector.load %arg3[%c1_129, %c1_130, %c0_131, %c0_132] : memref<3x3x128x128xbf16, #tpu.memory_space<vmem>>, vector<1x1x128x128xbf16>
    %116 = vector.shape_cast %115 : vector<1x1x128x128xbf16> to vector<128x128xbf16>
    %cst_133 = arith.constant dense<0.000000e+00> : vector<256x128xf32>
    %117 = tpu.matmul %114, %116, %cst_133 {dimension_numbers = #tpu.dot_dimension_numbers<[1], [0], [0], [1], [0, 0, 1, 1], [], []>} : vector<256x128xbf16>, vector<128x128xbf16>, vector<256x128xf32> -> vector<256x128xf32>
    %118 = arith.addf %112, %117 : vector<256x128xf32>
    %c1_134 = arith.constant 1 : index
    %c2_135 = arith.constant 2 : index
    %c0_136 = arith.constant 0 : index
    %119 = vector.load %arg9[%c1_134, %c2_135, %c0_136] : memref<18x18x128xbf16, #tpu.memory_space<vmem>>, vector<16x16x128xbf16>
    %120 = vector.shape_cast %119 : vector<16x16x128xbf16> to vector<256x128xbf16>
    %c1_137 = arith.constant 1 : index
    %c2_138 = arith.constant 2 : index
    %c0_139 = arith.constant 0 : index
    %c0_140 = arith.constant 0 : index
    %121 = vector.load %arg3[%c1_137, %c2_138, %c0_139, %c0_140] : memref<3x3x128x128xbf16, #tpu.memory_space<vmem>>, vector<1x1x128x128xbf16>
    %122 = vector.shape_cast %121 : vector<1x1x128x128xbf16> to vector<128x128xbf16>
    %cst_141 = arith.constant dense<0.000000e+00> : vector<256x128xf32>
    %123 = tpu.matmul %120, %122, %cst_141 {dimension_numbers = #tpu.dot_dimension_numbers<[1], [0], [0], [1], [0, 0, 1, 1], [], []>} : vector<256x128xbf16>, vector<128x128xbf16>, vector<256x128xf32> -> vector<256x128xf32>
    %124 = arith.addf %118, %123 : vector<256x128xf32>
    %c2_142 = arith.constant 2 : index
    %c0_143 = arith.constant 0 : index
    %c0_144 = arith.constant 0 : index
    %125 = vector.load %arg9[%c2_142, %c0_143, %c0_144] : memref<18x18x128xbf16, #tpu.memory_space<vmem>>, vector<16x16x128xbf16>
    %126 = vector.shape_cast %125 : vector<16x16x128xbf16> to vector<256x128xbf16>
    %c2_145 = arith.constant 2 : index
    %c0_146 = arith.constant 0 : index
    %c0_147 = arith.constant 0 : index
    %c0_148 = arith.constant 0 : index
    %127 = vector.load %arg3[%c2_145, %c0_146, %c0_147, %c0_148] : memref<3x3x128x128xbf16, #tpu.memory_space<vmem>>, vector<1x1x128x128xbf16>
    %128 = vector.shape_cast %127 : vector<1x1x128x128xbf16> to vector<128x128xbf16>
    %cst_149 = arith.constant dense<0.000000e+00> : vector<256x128xf32>
    %129 = tpu.matmul %126, %128, %cst_149 {dimension_numbers = #tpu.dot_dimension_numbers<[1], [0], [0], [1], [0, 0, 1, 1], [], []>} : vector<256x128xbf16>, vector<128x128xbf16>, vector<256x128xf32> -> vector<256x128xf32>
    %130 = arith.addf %124, %129 : vector<256x128xf32>
    %c2_150 = arith.constant 2 : index
    %c1_151 = arith.constant 1 : index
    %c0_152 = arith.constant 0 : index
    %131 = vector.load %arg9[%c2_150, %c1_151, %c0_152] : memref<18x18x128xbf16, #tpu.memory_space<vmem>>, vector<16x16x128xbf16>
    %132 = vector.shape_cast %131 : vector<16x16x128xbf16> to vector<256x128xbf16>
    %c2_153 = arith.constant 2 : index
    %c1_154 = arith.constant 1 : index
    %c0_155 = arith.constant 0 : index
    %c0_156 = arith.constant 0 : index
    %133 = vector.load %arg3[%c2_153, %c1_154, %c0_155, %c0_156] : memref<3x3x128x128xbf16, #tpu.memory_space<vmem>>, vector<1x1x128x128xbf16>
    %134 = vector.shape_cast %133 : vector<1x1x128x128xbf16> to vector<128x128xbf16>
    %cst_157 = arith.constant dense<0.000000e+00> : vector<256x128xf32>
    %135 = tpu.matmul %132, %134, %cst_157 {dimension_numbers = #tpu.dot_dimension_numbers<[1], [0], [0], [1], [0, 0, 1, 1], [], []>} : vector<256x128xbf16>, vector<128x128xbf16>, vector<256x128xf32> -> vector<256x128xf32>
    %136 = arith.addf %130, %135 : vector<256x128xf32>
    %c2_158 = arith.constant 2 : index
    %c2_159 = arith.constant 2 : index
    %c0_160 = arith.constant 0 : index
    %137 = vector.load %arg9[%c2_158, %c2_159, %c0_160] : memref<18x18x128xbf16, #tpu.memory_space<vmem>>, vector<16x16x128xbf16>
    %138 = vector.shape_cast %137 : vector<16x16x128xbf16> to vector<256x128xbf16>
    %c2_161 = arith.constant 2 : index
    %c2_162 = arith.constant 2 : index
    %c0_163 = arith.constant 0 : index
    %c0_164 = arith.constant 0 : index
    %139 = vector.load %arg3[%c2_161, %c2_162, %c0_163, %c0_164] : memref<3x3x128x128xbf16, #tpu.memory_space<vmem>>, vector<1x1x128x128xbf16>
    %140 = vector.shape_cast %139 : vector<1x1x128x128xbf16> to vector<128x128xbf16>
    %cst_165 = arith.constant dense<0.000000e+00> : vector<256x128xf32>
    %141 = tpu.matmul %138, %140, %cst_165 {dimension_numbers = #tpu.dot_dimension_numbers<[1], [0], [0], [1], [0, 0, 1, 1], [], []>} : vector<256x128xbf16>, vector<128x128xbf16>, vector<256x128xf32> -> vector<256x128xf32>
    %142 = arith.addf %136, %141 : vector<256x128xf32>
    %c0_166 = arith.constant 0 : index
    %c0_167 = arith.constant 0 : index
    %c0_168 = arith.constant 0 : index
    %c0_169 = arith.constant 0 : index
    %143 = vector.load %arg1[%c0_166, %c0_167, %c0_168, %c0_169] : memref<1x16x16x128xf32, #tpu.memory_space<vmem>>, vector<1x16x16x128xf32>
    %144 = vector.shape_cast %143 : vector<1x16x16x128xf32> to vector<16x16x128xf32>
    %145 = vector.shape_cast %142 : vector<256x128xf32> to vector<16x16x128xf32>
    %146 = arith.addf %144, %145 : vector<16x16x128xf32>
    %c0_170 = arith.constant 0 : index
    %c0_171 = arith.constant 0 : index
    %c0_172 = arith.constant 0 : index
    %c0_173 = arith.constant 0 : index
    %147 = vector.load %arg8[%c0_170, %c0_171, %c0_172, %c0_173] : memref<1x16x16x128xf32, #tpu.memory_space<vmem>>, vector<1x16x16x128xf32>
    %148 = vector.shape_cast %147 : vector<1x16x16x128xf32> to vector<16x16x128xf32>
    %149 = vector.shape_cast %146 : vector<16x16x128xf32> to vector<1x16x16x128xf32>
    tpu.vector_store %arg8[%c0_170, %c0_171, %c0_172, %c0_173], %149 {strides = array<i32>} : memref<1x16x16x128xf32, #tpu.memory_space<vmem>>, vector<1x16x16x128xf32>,
    return
  }
  func.func @transform_0(%arg0: i32) -> (i32, i32, i32, i32) {
    %c0_i32 = arith.constant 0 : i32
    %c0_i32_0 = arith.constant 0 : i32
    %c0_i32_1 = arith.constant 0 : i32
    %c0_i32_2 = arith.constant 0 : i32
    return %arg0, %c0_i32, %c0_i32_0, %c0_i32_1 : i32, i32, i32, i32
  }
  func.func @transform_1(%arg0: i32) -> (i32, i32, i32, i32) {
    %c0_i32 = arith.constant 0 : i32
    %c0_i32_0 = arith.constant 0 : i32
    %c0_i32_1 = arith.constant 0 : i32
    %c0_i32_2 = arith.constant 0 : i32
    %c0_i32_3 = arith.constant 0 : i32
    return %c0_i32, %c0_i32_0, %c0_i32_1, %c0_i32_2 : i32, i32, i32, i32
  }
  func.func @transform_2(%arg0: i32) -> (i32, i32, i32, i32) {
    %c0_i32 = arith.constant 0 : i32
    %c0_i32_0 = arith.constant 0 : i32
    %c0_i32_1 = arith.constant 0 : i32
    %c0_i32_2 = arith.constant 0 : i32
    %c0_i32_3 = arith.constant 0 : i32
    return %c0_i32, %c0_i32_0, %c0_i32_1, %c0_i32_2 : i32, i32, i32, i32
  }
  func.func @transform_3(%arg0: i32) -> (i32, i32) {
    %c0_i32 = arith.constant 0 : i32
    %c0_i32_0 = arith.constant 0 : i32
    %c0_i32_1 = arith.constant 0 : i32
    return %c0_i32, %c0_i32_0 : i32, i32
  }
  func.func @transform_4(%arg0: i32) -> (i32, i32) {
    %c0_i32 = arith.constant 0 : i32
    %c0_i32_0 = arith.constant 0 : i32
    %c0_i32_1 = arith.constant 0 : i32
    return %c0_i32, %c0_i32_0 : i32, i32
  }
  func.func @transform_5(%arg0: i32) -> (i32, i32) {
    %c0_i32 = arith.constant 0 : i32
    %c0_i32_0 = arith.constant 0 : i32
    %c0_i32_1 = arith.constant 0 : i32
    return %c0_i32, %c0_i32_0 : i32, i32
  }
  func.func @transform_6(%arg0: i32) -> (i32, i32) {
    %c0_i32 = arith.constant 0 : i32
    %c0_i32_0 = arith.constant 0 : i32
    %c0_i32_1 = arith.constant 0 : i32
    return %c0_i32, %c0_i32_0 : i32, i32
  }
  func.func @transform_7(%arg0: i32) -> (i32, i32, i32, i32) {
    %c0_i32 = arith.constant 0 : i32
    %c0_i32_0 = arith.constant 0 : i32
    %c0_i32_1 = arith.constant 0 : i32
    %c0_i32_2 = arith.constant 0 : i32
    return %arg0, %c0_i32, %c0_i32_0, %c0_i32_1 : i32, i32, i32, i32
  }
}

</mosaic_0001>

<llo_original>
// kernel: tpu_custom_call.1
$region0: #{tpu_custom_call.1}
  #allocation0 [shape = 'u32[]', space=smem, size = 0x4, offset = 0x4, fixed_abs, tag = 'smem constant byte address 0x4 - core index']
  #allocation1 [shape = 'u32[72,128]{1,0:T(1,128)}', space=vmem, size = 0x9000, scoped, tag = 'internal scratch']
  #allocation2 [shape = 'bf16[18,18,128]{2,1,0:T(8,128)(2,1)}', space=vmem, size = 0x1b000, scoped, tag = 'scratch operand']
  %s0 = inlined_call_operand.hbm [shape: f32[2,16,16,128], index: 0, kind: input, shape index: {}]
  %s1 = inlined_call_operand.hbm [shape: bf16[3,3,128,128], index: 1, kind: input, shape index: {}]
  %s2 = inlined_call_operand.hbm [shape: bf16[3,3,128,128], index: 2, kind: input, shape index: {}]
  %s3 = inlined_call_operand.vmem [shape: f32[1,128], index: 3, kind: input, shape index: {}]
  %s4 = inlined_call_operand.vmem [shape: f32[1,128], index: 4, kind: input, shape index: {}]
  %s5 = inlined_call_operand.vmem [shape: f32[1,128], index: 5, kind: input, shape index: {}]
  %s6 = inlined_call_operand.vmem [shape: f32[1,128], index: 6, kind: input, shape index: {}]
  %s7 = inlined_call_operand.hbm [shape: f32[2,16,16,128], index: 7, kind: output, shape index: {}]
  %s8 = sld [smem:[#allocation0]]
  $region73: #{tpu_custom_call.1} parent=0
    _
  %s10 = ssub.s32 1, %s8
  %s11 = scalar_select 0, %s10, %s8
  $region1: #{tpu_custom_call.1} parent=0
    #allocation3 [shape = 'u8[262144]{0}', space=vmem, size = 0x40000, scoped, tag = 'input window, operand 0']
    #allocation4 [shape = 's32[2]{0}', space=sflag, size = 0x8, scoped, tag = 'scoped memory for tpu_custom_call.1']
    #allocation5 [shape = 's32[2]{0}', space=sflag, size = 0x8, scoped, tag = 'scoped memory for tpu_custom_call.1']
    #allocation6 [shape = 'u8[294912]{0}', space=vmem, size = 0x48000, scoped, tag = 'input window, operand 1, single buffered']
    #allocation7 [shape = 's32[1]{0}', space=sflag, size = 0x4, scoped, tag = 'scoped memory for tpu_custom_call.1']
    #allocation8 [shape = 'u8[294912]{0}', space=vmem, size = 0x48000, scoped, tag = 'input window, operand 2, single buffered']
    #allocation9 [shape = 'u8[262144]{0}', space=vmem, size = 0x40000, scoped, tag = 'output window, operand 0']
    %12 = vsyncpa [#allocation4], 0
    %s13 = scalar_lea.sflag [#allocation4], 1
    %14 = vsyncpa %s13, 0
    %15 = vsyncpa [#allocation7], 0
    %16 = vsyncpa [#allocation5], 0
    %s17 = scalar_lea.sflag [#allocation5], 1
    %18 = vsyncpa %s17, 0
    loop: start=0, step=1, limit=4
    $region2: #{tpu_custom_call.1} parent=1 // loop_pre_header
      _
    $region3: #{tpu_custom_call.1} parent=1 // loop_header
      %s20 = sphi 0, %s24
      %p21 = scmp.ge.s32.totalorder %s20, 4
      %s30 = sphi 0, %s32
      %s33 = sphi 0, %s30
      %s34 = sphi 0, %s33
      %s50 = sphi 0, %s34
      %s54 = sphi 0, %s54
      %s56 = sphi 0, %s54
      %s57 = sphi 0, %s56
      %s71 = sphi 0, %s57
      %s75 = sphi 0, %s75
      %s77 = sphi 0, %s75
      %s78 = sphi 0, %s77
      %s92 = sphi 0, %s78
      %s96 = sphi 0, %s96
      %s98 = sphi 0, %s96
      %s99 = sphi 0, %s98
      %s113 = sphi 0, %s99
      %s117 = sphi 0, %s117
      %s119 = sphi 0, %s117
      %s120 = sphi 0, %s119
      %s134 = sphi 0, %s120
      %s138 = sphi 0, %s138
      %s140 = sphi 0, %s138
      %s141 = sphi 0, %s140
      %s155 = sphi 0, %s141
      %s159 = sphi 0, %s159
      %s161 = sphi 0, %s159
      %s162 = sphi 0, %s161
      %s176 = sphi 0, %s162
      %s182 = sphi 0, %s184
      %s185 = sphi 0, %s182
      %s186 = sphi 0, %s185
      %s202 = sphi 0, %s186
    $region4: #{tpu_custom_call.1} parent=1 // loop_header_branch
      %23 = sbr.rel (%p21) target = $region8
    $region5: #{tpu_custom_call.1} parent=1 // loop_body
      %s25 = ssub.s32 %s20, 1
      %s26 = ssub.s32 %s20, 2
      %s27 = sadd.s32 %s20, 1
      %s28 = ssub.s32 %s20, %s27
      %p29 = scmp.eq.s32.totalorder %s28, 0
      %s31 = sadd.s32 %s30, 1
      %s32 = scalar_select %p29, %s30, %s31
      %p35 = pneg %p29
      %p36 = scmp.eq.s32.totalorder %s20, 1
      %p37 = por %p35, %p36
      %p38 = scmp.ne.s32.totalorder %s30, %s33
      %p39 = scmp.eq.s32.totalorder %s20, 0
      %p40 = por %p38, %p39
      %p41 = scmp.ne.s32.totalorder %s30, %s33
      %p42 = scmp.eq.s32.totalorder %s25, 1
      %p43 = por %p41, %p42
      %p44 = scmp.ne.s32.totalorder %s33, %s34
      %p45 = scmp.eq.s32.totalorder %s25, 0
      %p46 = por %p44, %p45
      %p47 = scmp.ne.s32.totalorder %s33, %s34
      %p48 = scmp.eq.s32.totalorder %s26, 1
      %p49 = por %p47, %p48
      %p51 = scmp.ne.s32.totalorder %s34, %s50
      %p52 = scmp.eq.s32.totalorder %s26, 0
      %p53 = por %p51, %p52
      %s55 = sadd.s32 %s54, 1
      %p58 = scmp.eq.s32.totalorder %s20, 1
      %p59 = scmp.ne.s32.totalorder %s54, %s56
      %p60 = scmp.eq.s32.totalorder %s20, 0
      %p61 = por %p59, %p60
      %p62 = scmp.ne.s32.totalorder %s54, %s56
      %p63 = scmp.eq.s32.totalorder %s25, 1
      %p64 = por %p62, %p63
      %p65 = scmp.ne.s32.totalorder %s56, %s57
      %p66 = scmp.eq.s32.totalorder %s25, 0
      %p67 = por %p65, %p66
      %p68 = scmp.ne.s32.totalorder %s56, %s57
      %p69 = scmp.eq.s32.totalorder %s26, 1
      %p70 = por %p68, %p69
      %p72 = scmp.ne.s32.totalorder %s57, %s71
      %p73 = scmp.eq.s32.totalorder %s26, 0
      %p74 = por %p72, %p73
      %s76 = sadd.s32 %s75, 1
      %p79 = scmp.eq.s32.totalorder %s20, 1
      %p80 = scmp.ne.s32.totalorder %s75, %s77
      %p81 = scmp.eq.s32.totalorder %s20, 0
      %p82 = por %p80, %p81
      %p83 = scmp.ne.s32.totalorder %s75, %s77
      %p84 = scmp.eq.s32.totalorder %s25, 1
      %p85 = por %p83, %p84
      %p86 = scmp.ne.s32.totalorder %s77, %s78
      %p87 = scmp.eq.s32.totalorder %s25, 0
      %p88 = por %p86, %p87
      %p89 = scmp.ne.s32.totalorder %s77, %s78
      %p90 = scmp.eq.s32.totalorder %s26, 1
      %p91 = por %p89, %p90
      %p93 = scmp.ne.s32.totalorder %s78, %s92
      %p94 = scmp.eq.s32.totalorder %s26, 0
      %p95 = por %p93, %p94
      %s97 = sadd.s32 %s96, 1
      %p100 = scmp.eq.s32.totalorder %s20, 1
      %p101 = scmp.ne.s32.totalorder %s96, %s98
      %p102 = scmp.eq.s32.totalorder %s20, 0
      %p103 = por %p101, %p102
      %p104 = scmp.ne.s32.totalorder %s96, %s98
      %p105 = scmp.eq.s32.totalorder %s25, 1
      %p106 = por %p104, %p105
      %p107 = scmp.ne.s32.totalorder %s98, %s99
      %p108 = scmp.eq.s32.totalorder %s25, 0
      %p109 = por %p107, %p108
      %p110 = scmp.ne.s32.totalorder %s98, %s99
      %p111 = scmp.eq.s32.totalorder %s26, 1
      %p112 = por %p110, %p111
      %p114 = scmp.ne.s32.totalorder %s99, %s113
      %p115 = scmp.eq.s32.totalorder %s26, 0
      %p116 = por %p114, %p115
      %s118 = sadd.s32 %s117, 1
      %p121 = scmp.eq.s32.totalorder %s20, 1
      %p122 = scmp.ne.s32.totalorder %s117, %s119
      %p123 = scmp.eq.s32.totalorder %s20, 0
      %p124 = por %p122, %p123
      %p125 = scmp.ne.s32.totalorder %s117, %s119
      %p126 = scmp.eq.s32.totalorder %s25, 1
      %p127 = por %p125, %p126
      %p128 = scmp.ne.s32.totalorder %s119, %s120
      %p129 = scmp.eq.s32.totalorder %s25, 0
      %p130 = por %p128, %p129
      %p131 = scmp.ne.s32.totalorder %s119, %s120
      %p132 = scmp.eq.s32.totalorder %s26, 1
      %p133 = por %p131, %p132
      %p135 = scmp.ne.s32.totalorder %s120, %s134
      %p136 = scmp.eq.s32.totalorder %s26, 0
      %p137 = por %p135, %p136
      %s139 = sadd.s32 %s138, 1
      %p142 = scmp.eq.s32.totalorder %s20, 1
      %p143 = scmp.ne.s32.totalorder %s138, %s140
      %p144 = scmp.eq.s32.totalorder %s20, 0
      %p145 = por %p143, %p144
      %p146 = scmp.ne.s32.totalorder %s138, %s140
      %p147 = scmp.eq.s32.totalorder %s25, 1
      %p148 = por %p146, %p147
      %p149 = scmp.ne.s32.totalorder %s140, %s141
      %p150 = scmp.eq.s32.totalorder %s25, 0
      %p151 = por %p149, %p150
      %p152 = scmp.ne.s32.totalorder %s140, %s141
      %p153 = scmp.eq.s32.totalorder %s26, 1
      %p154 = por %p152, %p153
      %p156 = scmp.ne.s32.totalorder %s141, %s155
      %p157 = scmp.eq.s32.totalorder %s26, 0
      %p158 = por %p156, %p157
      %s160 = sadd.s32 %s159, 1
      %p163 = scmp.eq.s32.totalorder %s20, 1
      %p164 = scmp.ne.s32.totalorder %s159, %s161
      %p165 = scmp.eq.s32.totalorder %s20, 0
      %p166 = por %p164, %p165
      %p167 = scmp.ne.s32.totalorder %s159, %s161
      %p168 = scmp.eq.s32.totalorder %s25, 1
      %p169 = por %p167, %p168
      %p170 = scmp.ne.s32.totalorder %s161, %s162
      %p171 = scmp.eq.s32.totalorder %s25, 0
      %p172 = por %p170, %p171
      %p173 = scmp.ne.s32.totalorder %s161, %s162
      %p174 = scmp.eq.s32.totalorder %s26, 1
      %p175 = por %p173, %p174
      %p177 = scmp.ne.s32.totalorder %s162, %s176
      %p178 = scmp.eq.s32.totalorder %s26, 0
      %p179 = por %p177, %p178
      %s180 = ssub.s32 %s20, %s27
      %p181 = scmp.eq.s32.totalorder %s180, 0
      %s183 = sadd.s32 %s182, 1
      %s184 = scalar_select %p181, %s182, %s183
      %p187 = pneg %p181
      %p188 = scmp.eq.s32.totalorder %s20, 1
      %p189 = por %p187, %p188
      %p190 = scmp.ne.s32.totalorder %s182, %s185
      %p191 = scmp.eq.s32.totalorder %s20, 0
      %p192 = por %p190, %p191
      %p193 = scmp.ne.s32.totalorder %s182, %s185
      %p194 = scmp.eq.s32.totalorder %s25, 1
      %p195 = por %p193, %p194
      %p196 = scmp.ne.s32.totalorder %s185, %s186
      %p197 = scmp.eq.s32.totalorder %s25, 0
      %p198 = por %p196, %p197
      %p199 = scmp.ne.s32.totalorder %s185, %s186
      %p200 = scmp.eq.s32.totalorder %s26, 1
      %p201 = por %p199, %p200
      %p203 = scmp.ne.s32.totalorder %s186, %s202
      %p204 = scmp.eq.s32.totalorder %s26, 0
      %p205 = por %p203, %p204
      %p206 = scmp.le.s32.totalorder 1, %s20
      %p207 = scmp.lt.s32.totalorder %s20, 3
      %p208 = pnand %p206, %p207
      %p209 = pneg %p208
      // Predicated region
      $region9: #{tpu_custom_call.1} parent=5 // pred_check
        _
      $region10: #{tpu_custom_call.1} parent=5 // pred_check_branch
        %211 = sbr.rel (%p208) target = $region12
      $region11: #{tpu_custom_call.1} parent=5 // pred_region
        %s212 = ssub.s32 %s20, 1
        // Predicated region
        $region13: #{tpu_custom_call.1} parent=11 // pred_check
          %p213 = pneg %p67
        $region14: #{tpu_custom_call.1} parent=11 // pred_check_branch
          %215 = sbr.rel (%p213) target = $region16
        $region15: #{tpu_custom_call.1} parent=11 // pred_region
          %217 = vsyncadd [#allocation7], 0
          %s218 = sshll.u32 %s1, 4
          %s219 = int_to_ptr.hbm [resolvable:$true] %s218
          %s220 = sshll.u32 [#allocation6], 4
          %s221 = int_to_ptr.vmem [resolvable:$true] %s220
          %226 = dma.hbm_to_vmem [thread:$0]  %s219, 9216, %s221, [#allocation7], 64, 64, 4
        $region16: #{tpu_custom_call.1} parent=11 // pred_fallthru
          _
        // Predicated region
        $region17: #{tpu_custom_call.1} parent=11 // pred_check
          %p227 = pneg %p88
        $region18: #{tpu_custom_call.1} parent=11 // pred_check_branch
          %229 = sbr.rel (%p227) target = $region20
        $region19: #{tpu_custom_call.1} parent=11 // pred_region
          %231 = vsyncadd [#allocation7], 0
          %s232 = sshll.u32 %s2, 4
          %s233 = int_to_ptr.hbm [resolvable:$true] %s232
          %s234 = sshll.u32 [#allocation8], 4
          %s235 = int_to_ptr.vmem [resolvable:$true] %s234
          %240 = dma.hbm_to_vmem [thread:$0]  %s233, 9216, %s235, [#allocation7], 64, 64, 4
        $region20: #{tpu_custom_call.1} parent=11 // pred_fallthru
          _
        // Predicated region
        $region21: #{tpu_custom_call.1} parent=11 // pred_check
          %p241 = pneg %p109
        $region22: #{tpu_custom_call.1} parent=11 // pred_check_branch
          %243 = sbr.rel (%p241) target = $region24
        $region23: #{tpu_custom_call.1} parent=11 // pred_region
          _
        $region24: #{tpu_custom_call.1} parent=11 // pred_fallthru
          _
        // Predicated region
        $region25: #{tpu_custom_call.1} parent=11 // pred_check
          %p244 = pneg %p130
        $region26: #{tpu_custom_call.1} parent=11 // pred_check_branch
          %246 = sbr.rel (%p244) target = $region28
        $region27: #{tpu_custom_call.1} parent=11 // pred_region
          _
        $region28: #{tpu_custom_call.1} parent=11 // pred_fallthru
          _
        // Predicated region
        $region29: #{tpu_custom_call.1} parent=11 // pred_check
          %p247 = pneg %p151
        $region30: #{tpu_custom_call.1} parent=11 // pred_check_branch
          %249 = sbr.rel (%p247) target = $region32
        $region31: #{tpu_custom_call.1} parent=11 // pred_region
          _
        $region32: #{tpu_custom_call.1} parent=11 // pred_fallthru
          _
        // Predicated region
        $region33: #{tpu_custom_call.1} parent=11 // pred_check
          %p250 = pneg %p172
        $region34: #{tpu_custom_call.1} parent=11 // pred_check_branch
          %252 = sbr.rel (%p250) target = $region36
        $region35: #{tpu_custom_call.1} parent=11 // pred_region
          _
        $region36: #{tpu_custom_call.1} parent=11 // pred_fallthru
          _
      $region12: #{tpu_custom_call.1} parent=5 // pred_fallthru
        _
      %p253 = scmp.lt.s32.totalorder %s20, 2
      // Predicated region
      $region37: #{tpu_custom_call.1} parent=5 // pred_check
        %p254 = pneg %p253
      $region38: #{tpu_custom_call.1} parent=5 // pred_check_branch
        %256 = sbr.rel (%p254) target = $region40
      $region39: #{tpu_custom_call.1} parent=5 // pred_region
        // Predicated region
        $region41: #{tpu_custom_call.1} parent=39 // pred_check
          %p257 = pneg %p40
        $region42: #{tpu_custom_call.1} parent=39 // pred_check_branch
          %259 = sbr.rel (%p257) target = $region44
        $region43: #{tpu_custom_call.1} parent=39 // pred_region
          %s260 = sand.u32 %s30, 1
          %s261 = scalar_lea.sflag [#allocation4], %s260
          %s262 = sand.u32 %s30, 1
          %s263 = smul.addr %s262, 256
          %s264 = scalar_lea.vmem [#allocation3], %s263
          %266 = vsyncadd %s261, 0
          %s267 = smul.addr %s20, 32
          %s268 = smul.addr %s267, 8
          %s269 = scalar_lea.hbm %s0, %s268
          %s270 = sshll.u32 %s269, 4
          %s271 = int_to_ptr.hbm [resolvable:$true] %s270
          %s272 = sshll.u32 %s264, 4
          %s273 = int_to_ptr.vmem [resolvable:$true] %s272
          %278 = dma.hbm_to_vmem [thread:$0]  %s271, 4096, %s273, %s261, 128, 128, 8
        $region44: #{tpu_custom_call.1} parent=39 // pred_fallthru
          _
      $region40: #{tpu_custom_call.1} parent=5 // pred_fallthru
        _
      %p279 = scmp.le.s32.totalorder 1, %s20
      %p280 = scmp.lt.s32.totalorder %s20, 3
      %p281 = pnand %p279, %p280
      %p282 = pneg %p281
      // Predicated region
      $region45: #{tpu_custom_call.1} parent=5 // pred_check
        _
      $region46: #{tpu_custom_call.1} parent=5 // pred_check_branch
        %284 = sbr.rel (%p281) target = $region48
      $region47: #{tpu_custom_call.1} parent=5 // pred_region
        %s285 = ssub.s32 %s20, 1
        %s286 = sand.u32 %s33, 1
        %s287 = scalar_lea.sflag [#allocation4], %s286
        %s288 = sand.u32 %s33, 1
        %s289 = smul.addr %s288, 256
        %s290 = scalar_lea.vmem [#allocation3], %s289
        // Predicated region
        $region49: #{tpu_custom_call.1} parent=47 // pred_check
          %p291 = pneg %p46
        $region50: #{tpu_custom_call.1} parent=47 // pred_check_branch
          %293 = sbr.rel (%p291) target = $region52
        $region51: #{tpu_custom_call.1} parent=47 // pred_region
          %295 = dma.done %s287, 4096
        $region52: #{tpu_custom_call.1} parent=47 // pred_fallthru
          _
        // Predicated region
        $region53: #{tpu_custom_call.1} parent=47 // pred_check
          %p296 = pneg %p67
        $region54: #{tpu_custom_call.1} parent=47 // pred_check_branch
          %298 = sbr.rel (%p296) target = $region56
        $region55: #{tpu_custom_call.1} parent=47 // pred_region
          %300 = dma.done [#allocation7], 9216
        $region56: #{tpu_custom_call.1} parent=47 // pred_fallthru
          _
        // Predicated region
        $region57: #{tpu_custom_call.1} parent=47 // pred_check
          %p301 = pneg %p88
        $region58: #{tpu_custom_call.1} parent=47 // pred_check_branch
          %303 = sbr.rel (%p301) target = $region60
        $region59: #{tpu_custom_call.1} parent=47 // pred_region
          %305 = dma.done [#allocation7], 9216
        $region60: #{tpu_custom_call.1} parent=47 // pred_fallthru
          _
        %s306 = sand.u32 %s33, 1
        %s307 = scalar_lea.sflag [#allocation4], %s306
        %s308 = sand.u32 %s33, 1
        %s309 = smul.addr %s308, 256
        %s310 = scalar_lea.vmem [#allocation3], %s309
        %p311 = pneg %p46
        %p312 = pneg %p43
        %p313 = pneg %p67
        %p314 = pneg %p64
        %p315 = pneg %p88
        %p316 = pneg %p85
        %p317 = pneg %p109
        %p318 = pneg %p106
        %p319 = pneg %p130
        %p320 = pneg %p127
        %p321 = pneg %p151
        %p322 = pneg %p148
        %p323 = pneg %p172
        %p324 = pneg %p169
        %p325 = pneg %p198
        %p326 = pneg %p195
        %s327 = sand.u32 %s185, 1
        %s328 = scalar_lea.sflag [#allocation5], %s327
        %s329 = sand.u32 %s185, 1
        %s330 = smul.addr %s329, 256
        %s331 = scalar_lea.vmem [#allocation9], %s330
        %333 = vst [vmem:[#allocation2] sm:$0xf] 0
        %334 = vst [vmem:[#allocation2 + $0x4] sm:$0xf] 0
        %335 = vst [vmem:[#allocation2 + $0x8] sm:$0x1] 0
        %336 = vst [vmem:[#allocation2 + $0xc] sm:$0xf] 0
        %337 = vst [vmem:[#allocation2 + $0x10] sm:$0xf] 0
        %338 = vst [vmem:[#allocation2 + $0x14] sm:$0x1] 0
        %339 = vst [vmem:[#allocation2 + $0x18] sm:$0xf] 0
        %340 = vst [vmem:[#allocation2 + $0x1c] sm:$0xf] 0
        %341 = vst [vmem:[#allocation2 + $0x20] sm:$0x1] 0
        %342 = vst [vmem:[#allocation2 + $0x24] sm:$0xf] 0
        %343 = vst [vmem:[#allocation2 + $0x28] sm:$0xf] 0
        %344 = vst [vmem:[#allocation2 + $0x2c] sm:$0x1] 0
        %345 = vst [vmem:[#allocation2 + $0x30] sm:$0xf] 0
        %346 = vst [vmem:[#allocation2 + $0x34] sm:$0xf] 0
        %347 = vst [vmem:[#allocation2 + $0x38] sm:$0x1] 0
        %348 = vst [vmem:[#allocation2 + $0x3c] sm:$0xf] 0
        %349 = vst [vmem:[#allocation2 + $0x40] sm:$0xf] 0
        %350 = vst [vmem:[#allocation2 + $0x44] sm:$0x1] 0
        %351 = vst [vmem:[#allocation2 + $0x48] sm:$0xf] 0
        %352 = vst [vmem:[#allocation2 + $0x4c] sm:$0xf] 0
        %353 = vst [vmem:[#allocation2 + $0x50] sm:$0x1] 0
        %354 = vst [vmem:[#allocation2 + $0x54] sm:$0xf] 0
        %355 = vst [vmem:[#allocation2 + $0x58] sm:$0xf] 0
        %356 = vst [vmem:[#allocation2 + $0x5c] sm:$0x1] 0
        %357 = vst [vmem:[#allocation2 + $0x60] sm:$0xf] 0
        %358 = vst [vmem:[#allocation2 + $0x64] sm:$0xf] 0
        %359 = vst [vmem:[#allocation2 + $0x68] sm:$0x1] 0
        %360 = vst [vmem:[#allocation2 + $0x6c] sm:$0xf] 0
        %361 = vst [vmem:[#allocation2 + $0x70] sm:$0xf] 0
        %362 = vst [vmem:[#allocation2 + $0x74] sm:$0x1] 0
        %363 = vst [vmem:[#allocation2 + $0x78] sm:$0xf] 0
        %364 = vst [vmem:[#allocation2 + $0x7c] sm:$0xf] 0
        %365 = vst [vmem:[#allocation2 + $0x80] sm:$0x1] 0
        %366 = vst [vmem:[#allocation2 + $0x84] sm:$0xf] 0
        %367 = vst [vmem:[#allocation2 + $0x88] sm:$0xf] 0
        %368 = vst [vmem:[#allocation2 + $0x8c] sm:$0x1] 0
        %369 = vst [vmem:[#allocation2 + $0x90] sm:$0xf] 0
        %370 = vst [vmem:[#allocation2 + $0x94] sm:$0xf] 0
        %371 = vst [vmem:[#allocation2 + $0x98] sm:$0x1] 0
        %372 = vst [vmem:[#allocation2 + $0x9c] sm:$0xf] 0
        %373 = vst [vmem:[#allocation2 + $0xa0] sm:$0xf] 0
        %374 = vst [vmem:[#allocation2 + $0xa4] sm:$0x1] 0
        %375 = vst [vmem:[#allocation2 + $0xa8] sm:$0xf] 0
        %376 = vst [vmem:[#allocation2 + $0xac] sm:$0xf] 0
        %377 = vst [vmem:[#allocation2 + $0xb0] sm:$0x1] 0
        %378 = vst [vmem:[#allocation2 + $0xb4] sm:$0xf] 0
        %379 = vst [vmem:[#allocation2 + $0xb8] sm:$0xf] 0
        %380 = vst [vmem:[#allocation2 + $0xbc] sm:$0x1] 0
        %381 = vst [vmem:[#allocation2 + $0xc0] sm:$0xf] 0
        %382 = vst [vmem:[#allocation2 + $0xc4] sm:$0xf] 0
        %383 = vst [vmem:[#allocation2 + $0xc8] sm:$0x1] 0
        %384 = vst [vmem:[#allocation2 + $0xcc] sm:$0xf] 0
        %385 = vst [vmem:[#allocation2 + $0xd0] sm:$0xf] 0
        %386 = vst [vmem:[#allocation2 + $0xd4] sm:$0x1] 0
        %v387 = vld [vmem:[%s290] sm:$0xff]
        %v388 = vld [vmem:[%s290 + $0x8] sm:$0xff]
        %v389 = vld [vmem:[%s290 + $0x10] sm:$0xff]
        %v390 = vld [vmem:[%s290 + $0x18] sm:$0xff]
        %v391 = vld [vmem:[%s290 + $0x20] sm:$0xff]
        %v392 = vld [vmem:[%s290 + $0x28] sm:$0xff]
        %v393 = vld [vmem:[%s290 + $0x30] sm:$0xff]
        %v394 = vld [vmem:[%s290 + $0x38] sm:$0xff]
        %v395 = vld [vmem:[%s290 + $0x40] sm:$0xff]
        %v396 = vld [vmem:[%s290 + $0x48] sm:$0xff]
        %v397 = vld [vmem:[%s290 + $0x50] sm:$0xff]
        %v398 = vld [vmem:[%s290 + $0x58] sm:$0xff]
        %v399 = vld [vmem:[%s290 + $0x60] sm:$0xff]
        %v400 = vld [vmem:[%s290 + $0x68] sm:$0xff]
        %v401 = vld [vmem:[%s290 + $0x70] sm:$0xff]
        %v402 = vld [vmem:[%s290 + $0x78] sm:$0xff]
        %v403 = vld [vmem:[%s290 + $0x80] sm:$0xff]
        %v404 = vld [vmem:[%s290 + $0x88] sm:$0xff]
        %v405 = vld [vmem:[%s290 + $0x90] sm:$0xff]
        %v406 = vld [vmem:[%s290 + $0x98] sm:$0xff]
        %v407 = vld [vmem:[%s290 + $0xa0] sm:$0xff]
        %v408 = vld [vmem:[%s290 + $0xa8] sm:$0xff]
        %v409 = vld [vmem:[%s290 + $0xb0] sm:$0xff]
        %v410 = vld [vmem:[%s290 + $0xb8] sm:$0xff]
        %v411 = vld [vmem:[%s290 + $0xc0] sm:$0xff]
        %v412 = vld [vmem:[%s290 + $0xc8] sm:$0xff]
        %v413 = vld [vmem:[%s290 + $0xd0] sm:$0xff]
        %v414 = vld [vmem:[%s290 + $0xd8] sm:$0xff]
        %v415 = vld [vmem:[%s290 + $0xe0] sm:$0xff]
        %v416 = vld [vmem:[%s290 + $0xe8] sm:$0xff]
        %v417 = vld [vmem:[%s290 + $0xf0] sm:$0xff]
        %v418 = vld [vmem:[%s290 + $0xf8] sm:$0xff]
        %v419 = vld [vmem:[%s3] sm:$0x1]
        %v421 = vperm.slane %v419, 0
        %v423 = vmul.f32 %v387, %v421
        %v424 = vmul.f32 %v388, %v421
        %v425 = vmul.f32 %v389, %v421
        %v426 = vmul.f32 %v390, %v421
        %v427 = vmul.f32 %v391, %v421
        %v428 = vmul.f32 %v392, %v421
        %v429 = vmul.f32 %v393, %v421
        %v430 = vmul.f32 %v394, %v421
        %v431 = vmul.f32 %v395, %v421
        %v432 = vmul.f32 %v396, %v421
        %v433 = vmul.f32 %v397, %v421
        %v434 = vmul.f32 %v398, %v421
        %v435 = vmul.f32 %v399, %v421
        %v436 = vmul.f32 %v400, %v421
        %v437 = vmul.f32 %v401, %v421
        %v438 = vmul.f32 %v402, %v421
        %v439 = vmul.f32 %v403, %v421
        %v440 = vmul.f32 %v404, %v421
        %v441 = vmul.f32 %v405, %v421
        %v442 = vmul.f32 %v406, %v421
        %v443 = vmul.f32 %v407, %v421
        %v444 = vmul.f32 %v408, %v421
        %v445 = vmul.f32 %v409, %v421
        %v446 = vmul.f32 %v410, %v421
        %v447 = vmul.f32 %v411, %v421
        %v448 = vmul.f32 %v412, %v421
        %v449 = vmul.f32 %v413, %v421
        %v450 = vmul.f32 %v414, %v421
        %v451 = vmul.f32 %v415, %v421
        %v452 = vmul.f32 %v416, %v421
        %v453 = vmul.f32 %v417, %v421
        %v454 = vmul.f32 %v418, %v421
        %v455 = vld [vmem:[%s4] sm:$0x1]
        %v457 = vperm.slane %v455, 0
        %v459 = vadd.f32 %v423, %v457
        %v460 = vadd.f32 %v424, %v457
        %v461 = vadd.f32 %v425, %v457
        %v462 = vadd.f32 %v426, %v457
        %v463 = vadd.f32 %v427, %v457
        %v464 = vadd.f32 %v428, %v457
        %v465 = vadd.f32 %v429, %v457
        %v466 = vadd.f32 %v430, %v457
        %v467 = vadd.f32 %v431, %v457
        %v468 = vadd.f32 %v432, %v457
        %v469 = vadd.f32 %v433, %v457
        %v470 = vadd.f32 %v434, %v457
        %v471 = vadd.f32 %v435, %v457
        %v472 = vadd.f32 %v436, %v457
        %v473 = vadd.f32 %v437, %v457
        %v474 = vadd.f32 %v438, %v457
        %v475 = vadd.f32 %v439, %v457
        %v476 = vadd.f32 %v440, %v457
        %v477 = vadd.f32 %v441, %v457
        %v478 = vadd.f32 %v442, %v457
        %v479 = vadd.f32 %v443, %v457
        %v480 = vadd.f32 %v444, %v457
        %v481 = vadd.f32 %v445, %v457
        %v482 = vadd.f32 %v446, %v457
        %v483 = vadd.f32 %v447, %v457
        %v484 = vadd.f32 %v448, %v457
        %v485 = vadd.f32 %v449, %v457
        %v486 = vadd.f32 %v450, %v457
        %v487 = vadd.f32 %v451, %v457
        %v488 = vadd.f32 %v452, %v457
        %v489 = vadd.f32 %v453, %v457
        %v490 = vadd.f32 %v454, %v457
        %v491 = vmax.f32 %v459, 0.0
        %v492 = vmax.f32 %v460, 0.0
        %v493 = vmax.f32 %v461, 0.0
        %v494 = vmax.f32 %v462, 0.0
        %v495 = vmax.f32 %v463, 0.0
        %v496 = vmax.f32 %v464, 0.0
        %v497 = vmax.f32 %v465, 0.0
        %v498 = vmax.f32 %v466, 0.0
        %v499 = vmax.f32 %v467, 0.0
        %v500 = vmax.f32 %v468, 0.0
        %v501 = vmax.f32 %v469, 0.0
        %v502 = vmax.f32 %v470, 0.0
        %v503 = vmax.f32 %v471, 0.0
        %v504 = vmax.f32 %v472, 0.0
        %v505 = vmax.f32 %v473, 0.0
        %v506 = vmax.f32 %v474, 0.0
        %v507 = vmax.f32 %v475, 0.0
        %v508 = vmax.f32 %v476, 0.0
        %v509 = vmax.f32 %v477, 0.0
        %v510 = vmax.f32 %v478, 0.0
        %v511 = vmax.f32 %v479, 0.0
        %v512 = vmax.f32 %v480, 0.0
        %v513 = vmax.f32 %v481, 0.0
        %v514 = vmax.f32 %v482, 0.0
        %v515 = vmax.f32 %v483, 0.0
        %v516 = vmax.f32 %v484, 0.0
        %v517 = vmax.f32 %v485, 0.0
        %v518 = vmax.f32 %v486, 0.0
        %v519 = vmax.f32 %v487, 0.0
        %v520 = vmax.f32 %v488, 0.0
        %v521 = vmax.f32 %v489, 0.0
        %v522 = vmax.f32 %v490, 0.0
        %v523 = vpack.c.bf16 %v491, %v491
        %v524 = vpack.c.bf16 %v492, %v492
        %v525 = vpack.c.bf16 %v493, %v493
        %v526 = vpack.c.bf16 %v494, %v494
        %v527 = vpack.c.bf16 %v495, %v495
        %v528 = vpack.c.bf16 %v496, %v496
        %v529 = vpack.c.bf16 %v497, %v497
        %v530 = vpack.c.bf16 %v498, %v498
        %v531 = vpack.c.bf16 %v499, %v499
        %v532 = vpack.c.bf16 %v500, %v500
        %v533 = vpack.c.bf16 %v501, %v501
        %v534 = vpack.c.bf16 %v502, %v502
        %v535 = vpack.c.bf16 %v503, %v503
        %v536 = vpack.c.bf16 %v504, %v504
        %v537 = vpack.c.bf16 %v505, %v505
        %v538 = vpack.c.bf16 %v506, %v506
        %v539 = vpack.c.bf16 %v507, %v507
        %v540 = vpack.c.bf16 %v508, %v508
        %v541 = vpack.c.bf16 %v509, %v509
        %v542 = vpack.c.bf16 %v510, %v510
        %v543 = vpack.c.bf16 %v511, %v511
        %v544 = vpack.c.bf16 %v512, %v512
        %v545 = vpack.c.bf16 %v513, %v513
        %v546 = vpack.c.bf16 %v514, %v514
        %v547 = vpack.c.bf16 %v515, %v515
        %v548 = vpack.c.bf16 %v516, %v516
        %v549 = vpack.c.bf16 %v517, %v517
        %v550 = vpack.c.bf16 %v518, %v518
        %v551 = vpack.c.bf16 %v519, %v519
        %v552 = vpack.c.bf16 %v520, %v520
        %v553 = vpack.c.bf16 %v521, %v521
        %v554 = vpack.c.bf16 %v522, %v522
        %vm555 = vsmask.f32 256
        %vm556 = vsmask.f32 4368
        %vm557 = vmor %vm555, %vm556
        %v559 = vshrl.u32 %v523, 16
        %v561 = vrot.slane %v559, 7
        %v562 = vshll.u32 %v523, 16
        %v564 = vor.u32 %v561, %v562
        %v565 = vrot.slane %v561, 4
        %v567 = vshrl.u32 %v524, 16
        %v569 = vrot.slane %v567, 7
        %v570 = vshll.u32 %v524, 16
        %v572 = vor.u32 %v569, %v570
        %v573 = vsel %vm557, %v565, %v572
        %v574 = vrot.slane %v569, 4
        %v576 = vshrl.u32 %v525, 16
        %v578 = vrot.slane %v576, 7
        %v579 = vshll.u32 %v525, 16
        %v581 = vor.u32 %v578, %v579
        %v582 = vrot.slane %v578, 4
        %v584 = vshrl.u32 %v526, 16
        %v586 = vrot.slane %v584, 7
        %v587 = vshll.u32 %v526, 16
        %v589 = vor.u32 %v586, %v587
        %v590 = vsel %vm557, %v582, %v589
        %v591 = vrot.slane %v586, 4
        %v593 = vshrl.u32 %v527, 16
        %v595 = vrot.slane %v593, 7
        %v596 = vshll.u32 %v527, 16
        %v598 = vor.u32 %v595, %v596
        %v599 = vrot.slane %v595, 4
        %v601 = vshrl.u32 %v528, 16
        %v603 = vrot.slane %v601, 7
        %v604 = vshll.u32 %v528, 16
        %v606 = vor.u32 %v603, %v604
        %v607 = vsel %vm557, %v599, %v606
        %v608 = vrot.slane %v603, 4
        %v610 = vshrl.u32 %v529, 16
        %v612 = vrot.slane %v610, 7
        %v613 = vshll.u32 %v529, 16
        %v615 = vor.u32 %v612, %v613
        %v616 = vrot.slane %v612, 4
        %v618 = vshrl.u32 %v530, 16
        %v620 = vrot.slane %v618, 7
        %v621 = vshll.u32 %v530, 16
        %v623 = vor.u32 %v620, %v621
        %v624 = vsel %vm557, %v616, %v623
        %v625 = vrot.slane %v620, 4
        %v627 = vshrl.u32 %v531, 16
        %v629 = vrot.slane %v627, 7
        %v630 = vshll.u32 %v531, 16
        %v632 = vor.u32 %v629, %v630
        %v633 = vrot.slane %v629, 4
        %v635 = vshrl.u32 %v532, 16
        %v637 = vrot.slane %v635, 7
        %v638 = vshll.u32 %v532, 16
        %v640 = vor.u32 %v637, %v638
        %v641 = vsel %vm557, %v633, %v640
        %v642 = vrot.slane %v637, 4
        %v644 = vshrl.u32 %v533, 16
        %v646 = vrot.slane %v644, 7
        %v647 = vshll.u32 %v533, 16
        %v649 = vor.u32 %v646, %v647
        %v650 = vrot.slane %v646, 4
        %v652 = vshrl.u32 %v534, 16
        %v654 = vrot.slane %v652, 7
        %v655 = vshll.u32 %v534, 16
        %v657 = vor.u32 %v654, %v655
        %v658 = vsel %vm557, %v650, %v657
        %v659 = vrot.slane %v654, 4
        %v661 = vshrl.u32 %v535, 16
        %v663 = vrot.slane %v661, 7
        %v664 = vshll.u32 %v535, 16
        %v666 = vor.u32 %v663, %v664
        %v667 = vrot.slane %v663, 4
        %v669 = vshrl.u32 %v536, 16
        %v671 = vrot.slane %v669, 7
        %v672 = vshll.u32 %v536, 16
        %v674 = vor.u32 %v671, %v672
        %v675 = vsel %vm557, %v667, %v674
        %v676 = vrot.slane %v671, 4
        %v678 = vshrl.u32 %v537, 16
        %v680 = vrot.slane %v678, 7
        %v681 = vshll.u32 %v537, 16
        %v683 = vor.u32 %v680, %v681
        %v684 = vrot.slane %v680, 4
        %v686 = vshrl.u32 %v538, 16
        %v688 = vrot.slane %v686, 7
        %v689 = vshll.u32 %v538, 16
        %v691 = vor.u32 %v688, %v689
        %v692 = vsel %vm557, %v684, %v691
        %v693 = vrot.slane %v688, 4
        %v695 = vshrl.u32 %v539, 16
        %v697 = vrot.slane %v695, 7
        %v698 = vshll.u32 %v539, 16
        %v700 = vor.u32 %v697, %v698
        %v701 = vrot.slane %v697, 4
        %v703 = vshrl.u32 %v540, 16
        %v705 = vrot.slane %v703, 7
        %v706 = vshll.u32 %v540, 16
        %v708 = vor.u32 %v705, %v706
        %v709 = vsel %vm557, %v701, %v708
        %v710 = vrot.slane %v705, 4
        %v712 = vshrl.u32 %v541, 16
        %v714 = vrot.slane %v712, 7
        %v715 = vshll.u32 %v541, 16
        %v717 = vor.u32 %v714, %v715
        %v718 = vrot.slane %v714, 4
        %v720 = vshrl.u32 %v542, 16
        %v722 = vrot.slane %v720, 7
        %v723 = vshll.u32 %v542, 16
        %v725 = vor.u32 %v722, %v723
        %v726 = vsel %vm557, %v718, %v725
        %v727 = vrot.slane %v722, 4
        %v729 = vshrl.u32 %v543, 16
        %v731 = vrot.slane %v729, 7
        %v732 = vshll.u32 %v543, 16
        %v734 = vor.u32 %v731, %v732
        %v735 = vrot.slane %v731, 4
        %v737 = vshrl.u32 %v544, 16
        %v739 = vrot.slane %v737, 7
        %v740 = vshll.u32 %v544, 16
        %v742 = vor.u32 %v739, %v740
        %v743 = vsel %vm557, %v735, %v742
        %v744 = vrot.slane %v739, 4
        %v746 = vshrl.u32 %v545, 16
        %v748 = vrot.slane %v746, 7
        %v749 = vshll.u32 %v545, 16
        %v751 = vor.u32 %v748, %v749
        %v752 = vrot.slane %v748, 4
        %v754 = vshrl.u32 %v546, 16
        %v756 = vrot.slane %v754, 7
        %v757 = vshll.u32 %v546, 16
        %v759 = vor.u32 %v756, %v757
        %v760 = vsel %vm557, %v752, %v759
        %v761 = vrot.slane %v756, 4
        %v763 = vshrl.u32 %v547, 16
        %v765 = vrot.slane %v763, 7
        %v766 = vshll.u32 %v547, 16
        %v768 = vor.u32 %v765, %v766
        %v769 = vrot.slane %v765, 4
        %v771 = vshrl.u32 %v548, 16
        %v773 = vrot.slane %v771, 7
        %v774 = vshll.u32 %v548, 16
        %v776 = vor.u32 %v773, %v774
        %v777 = vsel %vm557, %v769, %v776
        %v778 = vrot.slane %v773, 4
        %v780 = vshrl.u32 %v549, 16
        %v782 = vrot.slane %v780, 7
        %v783 = vshll.u32 %v549, 16
        %v785 = vor.u32 %v782, %v783
        %v786 = vrot.slane %v782, 4
        %v788 = vshrl.u32 %v550, 16
        %v790 = vrot.slane %v788, 7
        %v791 = vshll.u32 %v550, 16
        %v793 = vor.u32 %v790, %v791
        %v794 = vsel %vm557, %v786, %v793
        %v795 = vrot.slane %v790, 4
        %v797 = vshrl.u32 %v551, 16
        %v799 = vrot.slane %v797, 7
        %v800 = vshll.u32 %v551, 16
        %v802 = vor.u32 %v799, %v800
        %v803 = vrot.slane %v799, 4
        %v805 = vshrl.u32 %v552, 16
        %v807 = vrot.slane %v805, 7
        %v808 = vshll.u32 %v552, 16
        %v810 = vor.u32 %v807, %v808
        %v811 = vsel %vm557, %v803, %v810
        %v812 = vrot.slane %v807, 4
        %v814 = vshrl.u32 %v553, 16
        %v816 = vrot.slane %v814, 7
        %v817 = vshll.u32 %v553, 16
        %v819 = vor.u32 %v816, %v817
        %v820 = vrot.slane %v816, 4
        %v822 = vshrl.u32 %v554, 16
        %v824 = vrot.slane %v822, 7
        %v825 = vshll.u32 %v554, 16
        %v827 = vor.u32 %v824, %v825
        %v828 = vsel %vm557, %v820, %v827
        %v829 = vrot.slane %v824, 4
        %s878 = scalar_lea.vmem [#allocation2], 12
        %vm879 = vcmask 1043456
        %vm880 = vsmask.f32 7938
        %vm881 = vmand %vm879, %vm880
        %v882 = vld [vmem:[%s878] sm:$0xf]
        %v883 = vsel %vm881, %v564, %v882
        %884 = vst [vmem:[%s878] sm:$0xf] %v883
        %885 = vst [vmem:[%s878 + $0x4] sm:$0xf] %v573
        %vm886 = vcmask 1040384
        %vm887 = vmand %vm886, %vm555
        %v888 = vld [vmem:[%s878 + $0x8] sm:$0x1]
        %v889 = vsel %vm887, %v574, %v888
        %890 = vst [vmem:[%s878 + $0x8] sm:$0x1] %v889
        %v891 = vld [vmem:[%s878 + $0xc] sm:$0xf]
        %v892 = vsel %vm881, %v581, %v891
        %893 = vst [vmem:[%s878 + $0xc] sm:$0xf] %v892
        %894 = vst [vmem:[%s878 + $0x10] sm:$0xf] %v590
        %v895 = vld [vmem:[%s878 + $0x14] sm:$0x1]
        %v896 = vsel %vm887, %v591, %v895
        %897 = vst [vmem:[%s878 + $0x14] sm:$0x1] %v896
        %v898 = vld [vmem:[%s878 + $0x18] sm:$0xf]
        %v899 = vsel %vm881, %v598, %v898
        %900 = vst [vmem:[%s878 + $0x18] sm:$0xf] %v899
        %901 = vst [vmem:[%s878 + $0x1c] sm:$0xf] %v607
        %v902 = vld [vmem:[%s878 + $0x20] sm:$0x1]
        %v903 = vsel %vm887, %v608, %v902
        %904 = vst [vmem:[%s878 + $0x20] sm:$0x1] %v903
        %v905 = vld [vmem:[%s878 + $0x24] sm:$0xf]
        %v906 = vsel %vm881, %v615, %v905
        %907 = vst [vmem:[%s878 + $0x24] sm:$0xf] %v906
        %908 = vst [vmem:[%s878 + $0x28] sm:$0xf] %v624
        %v909 = vld [vmem:[%s878 + $0x2c] sm:$0x1]
        %v910 = vsel %vm887, %v625, %v909
        %911 = vst [vmem:[%s878 + $0x2c] sm:$0x1] %v910
        %v912 = vld [vmem:[%s878 + $0x30] sm:$0xf]
        %v913 = vsel %vm881, %v632, %v912
        %914 = vst [vmem:[%s878 + $0x30] sm:$0xf] %v913
        %915 = vst [vmem:[%s878 + $0x34] sm:$0xf] %v641
        %v916 = vld [vmem:[%s878 + $0x38] sm:$0x1]
        %v917 = vsel %vm887, %v642, %v916
        %918 = vst [vmem:[%s878 + $0x38] sm:$0x1] %v917
        %v919 = vld [vmem:[%s878 + $0x3c] sm:$0xf]
        %v920 = vsel %vm881, %v649, %v919
        %921 = vst [vmem:[%s878 + $0x3c] sm:$0xf] %v920
        %922 = vst [vmem:[%s878 + $0x40] sm:$0xf] %v658
        %v923 = vld [vmem:[%s878 + $0x44] sm:$0x1]
        %v924 = vsel %vm887, %v659, %v923
        %925 = vst [vmem:[%s878 + $0x44] sm:$0x1] %v924
        %v926 = vld [vmem:[%s878 + $0x48] sm:$0xf]
        %v927 = vsel %vm881, %v666, %v926
        %928 = vst [vmem:[%s878 + $0x48] sm:$0xf] %v927
        %929 = vst [vmem:[%s878 + $0x4c] sm:$0xf] %v675
        %v930 = vld [vmem:[%s878 + $0x50] sm:$0x1]
        %v931 = vsel %vm887, %v676, %v930
        %932 = vst [vmem:[%s878 + $0x50] sm:$0x1] %v931
        %v933 = vld [vmem:[%s878 + $0x54] sm:$0xf]
        %v934 = vsel %vm881, %v683, %v933
        %935 = vst [vmem:[%s878 + $0x54] sm:$0xf] %v934
        %936 = vst [vmem:[%s878 + $0x58] sm:$0xf] %v692
        %v937 = vld [vmem:[%s878 + $0x5c] sm:$0x1]
        %v938 = vsel %vm887, %v693, %v937
        %939 = vst [vmem:[%s878 + $0x5c] sm:$0x1] %v938
        %v940 = vld [vmem:[%s878 + $0x60] sm:$0xf]
        %v941 = vsel %vm881, %v700, %v940
        %942 = vst [vmem:[%s878 + $0x60] sm:$0xf] %v941
        %943 = vst [vmem:[%s878 + $0x64] sm:$0xf] %v709
        %v944 = vld [vmem:[%s878 + $0x68] sm:$0x1]
        %v945 = vsel %vm887, %v710, %v944
        %946 = vst [vmem:[%s878 + $0x68] sm:$0x1] %v945
        %v947 = vld [vmem:[%s878 + $0x6c] sm:$0xf]
        %v948 = vsel %vm881, %v717, %v947
        %949 = vst [vmem:[%s878 + $0x6c] sm:$0xf] %v948
        %950 = vst [vmem:[%s878 + $0x70] sm:$0xf] %v726
        %v951 = vld [vmem:[%s878 + $0x74] sm:$0x1]
        %v952 = vsel %vm887, %v727, %v951
        %953 = vst [vmem:[%s878 + $0x74] sm:$0x1] %v952
        %v954 = vld [vmem:[%s878 + $0x78] sm:$0xf]
        %v955 = vsel %vm881, %v734, %v954
        %956 = vst [vmem:[%s878 + $0x78] sm:$0xf] %v955
        %957 = vst [vmem:[%s878 + $0x7c] sm:$0xf] %v743
        %v958 = vld [vmem:[%s878 + $0x80] sm:$0x1]
        %v959 = vsel %vm887, %v744, %v958
        %960 = vst [vmem:[%s878 + $0x80] sm:$0x1] %v959
        %v961 = vld [vmem:[%s878 + $0x84] sm:$0xf]
        %v962 = vsel %vm881, %v751, %v961
        %963 = vst [vmem:[%s878 + $0x84] sm:$0xf] %v962
        %964 = vst [vmem:[%s878 + $0x88] sm:$0xf] %v760
        %v965 = vld [vmem:[%s878 + $0x8c] sm:$0x1]
        %v966 = vsel %vm887, %v761, %v965
        %967 = vst [vmem:[%s878 + $0x8c] sm:$0x1] %v966
        %v968 = vld [vmem:[%s878 + $0x90] sm:$0xf]
        %v969 = vsel %vm881, %v768, %v968
        %970 = vst [vmem:[%s878 + $0x90] sm:$0xf] %v969
        %971 = vst [vmem:[%s878 + $0x94] sm:$0xf] %v777
        %v972 = vld [vmem:[%s878 + $0x98] sm:$0x1]
        %v973 = vsel %vm887, %v778, %v972
        %974 = vst [vmem:[%s878 + $0x98] sm:$0x1] %v973
        %v975 = vld [vmem:[%s878 + $0x9c] sm:$0xf]
        %v976 = vsel %vm881, %v785, %v975
        %977 = vst [vmem:[%s878 + $0x9c] sm:$0xf] %v976
        %978 = vst [vmem:[%s878 + $0xa0] sm:$0xf] %v794
        %v979 = vld [vmem:[%s878 + $0xa4] sm:$0x1]
        %v980 = vsel %vm887, %v795, %v979
        %981 = vst [vmem:[%s878 + $0xa4] sm:$0x1] %v980
        %v982 = vld [vmem:[%s878 + $0xa8] sm:$0xf]
        %v983 = vsel %vm881, %v802, %v982
        %984 = vst [vmem:[%s878 + $0xa8] sm:$0xf] %v983
        %985 = vst [vmem:[%s878 + $0xac] sm:$0xf] %v811
        %v986 = vld [vmem:[%s878 + $0xb0] sm:$0x1]
        %v987 = vsel %vm887, %v812, %v986
        %988 = vst [vmem:[%s878 + $0xb0] sm:$0x1] %v987
        %v989 = vld [vmem:[%s878 + $0xb4] sm:$0xf]
        %v990 = vsel %vm881, %v819, %v989
        %991 = vst [vmem:[%s878 + $0xb4] sm:$0xf] %v990
        %992 = vst [vmem:[%s878 + $0xb8] sm:$0xf] %v828
        %v993 = vld [vmem:[%s878 + $0xbc] sm:$0x1]
        %v994 = vsel %vm887, %v829, %v993
        %995 = vst [vmem:[%s878 + $0xbc] sm:$0x1] %v994
        %v996 = vld [vmem:[#allocation2] sm:$0xf]
        %v997 = vld [vmem:[#allocation2 + $0x4] sm:$0xf]
        %v998 = vld [vmem:[#allocation2 + $0xc] sm:$0xf]
        %v999 = vld [vmem:[#allocation2 + $0x10] sm:$0xf]
        %v1000 = vld [vmem:[#allocation2 + $0x18] sm:$0xf]
        %v1001 = vld [vmem:[#allocation2 + $0x1c] sm:$0xf]
        %v1002 = vld [vmem:[#allocation2 + $0x24] sm:$0xf]
        %v1003 = vld [vmem:[#allocation2 + $0x28] sm:$0xf]
        %v1004 = vld [vmem:[#allocation2 + $0x30] sm:$0xf]
        %v1005 = vld [vmem:[#allocation2 + $0x34] sm:$0xf]
        %v1006 = vld [vmem:[#allocation2 + $0x3c] sm:$0xf]
        %v1007 = vld [vmem:[#allocation2 + $0x40] sm:$0xf]
        %v1008 = vld [vmem:[#allocation2 + $0x48] sm:$0xf]
        %v1009 = vld [vmem:[#allocation2 + $0x4c] sm:$0xf]
        %v1010 = vld [vmem:[#allocation2 + $0x54] sm:$0xf]
        %v1011 = vld [vmem:[#allocation2 + $0x58] sm:$0xf]
        %v1012 = vld [vmem:[#allocation2 + $0x60] sm:$0xf]
        %v1013 = vld [vmem:[#allocation2 + $0x64] sm:$0xf]
        %v1014 = vld [vmem:[#allocation2 + $0x6c] sm:$0xf]
        %v1015 = vld [vmem:[#allocation2 + $0x70] sm:$0xf]
        %v1016 = vld [vmem:[#allocation2 + $0x78] sm:$0xf]
        %v1017 = vld [vmem:[#allocation2 + $0x7c] sm:$0xf]
        %v1018 = vld [vmem:[#allocation2 + $0x84] sm:$0xf]
        %v1019 = vld [vmem:[#allocation2 + $0x88] sm:$0xf]
        %v1020 = vld [vmem:[#allocation2 + $0x90] sm:$0xf]
        %v1021 = vld [vmem:[#allocation2 + $0x94] sm:$0xf]
        %v1022 = vld [vmem:[#allocation2 + $0x9c] sm:$0xf]
        %v1023 = vld [vmem:[#allocation2 + $0xa0] sm:$0xf]
        %v1024 = vld [vmem:[#allocation2 + $0xa8] sm:$0xf]
        %v1025 = vld [vmem:[#allocation2 + $0xac] sm:$0xf]
        %v1026 = vld [vmem:[#allocation2 + $0xb4] sm:$0xf]
        %v1027 = vld [vmem:[#allocation2 + $0xb8] sm:$0xf]
        %v1028 = vld [vmem:[#allocation6] sm:$0xf]
        %v1029 = vld [vmem:[#allocation6 + $0x4] sm:$0xf]
        %v1030 = vld [vmem:[#allocation6 + $0x8] sm:$0xf]
        %v1031 = vld [vmem:[#allocation6 + $0xc] sm:$0xf]
        %v1032 = vld [vmem:[#allocation6 + $0x10] sm:$0xf]
        %v1033 = vld [vmem:[#allocation6 + $0x14] sm:$0xf]
        %v1034 = vld [vmem:[#allocation6 + $0x18] sm:$0xf]
        %v1035 = vld [vmem:[#allocation6 + $0x1c] sm:$0xf]
        %v1036 = vld [vmem:[#allocation6 + $0x20] sm:$0xf]
        %v1037 = vld [vmem:[#allocation6 + $0x24] sm:$0xf]
        %v1038 = vld [vmem:[#allocation6 + $0x28] sm:$0xf]
        %v1039 = vld [vmem:[#allocation6 + $0x2c] sm:$0xf]
        %v1040 = vld [vmem:[#allocation6 + $0x30] sm:$0xf]
        %v1041 = vld [vmem:[#allocation6 + $0x34] sm:$0xf]
        %v1042 = vld [vmem:[#allocation6 + $0x38] sm:$0xf]
        %v1043 = vld [vmem:[#allocation6 + $0x3c] sm:$0xf]
        %v1044 = vld [vmem:[#allocation2 + $0x8] sm:$0x1]
        %v1045 = vld [vmem:[#allocation2 + $0x14] sm:$0x1]
        %v1046 = vld [vmem:[#allocation2 + $0x20] sm:$0x1]
        %v1047 = vld [vmem:[#allocation2 + $0x2c] sm:$0x1]
        %v1048 = vld [vmem:[#allocation2 + $0x38] sm:$0x1]
        %v1049 = vld [vmem:[#allocation2 + $0x44] sm:$0x1]
        %v1050 = vld [vmem:[#allocation2 + $0x50] sm:$0x1]
        %v1051 = vld [vmem:[#allocation2 + $0x5c] sm:$0x1]
        %v1052 = vld [vmem:[#allocation2 + $0x68] sm:$0x1]
        %v1053 = vld [vmem:[#allocation2 + $0x74] sm:$0x1]
        %v1054 = vld [vmem:[#allocation2 + $0x80] sm:$0x1]
        %v1055 = vld [vmem:[#allocation2 + $0x8c] sm:$0x1]
        %v1056 = vld [vmem:[#allocation2 + $0x98] sm:$0x1]
        %v1057 = vld [vmem:[#allocation2 + $0xa4] sm:$0x1]
        %v1058 = vld [vmem:[#allocation2 + $0xb0] sm:$0x1]
        %v1059 = vld [vmem:[#allocation2 + $0xbc] sm:$0x1]
        %vm1060 = vsmask.f32 3328
        %vm1061 = vsmask.f32 7440
        %vm1062 = vmor %vm1060, %vm1061
        %v1064 = vshrl.u32 %v996, 16
        %v1066 = vrot.slane %v1064, 4
        %v1067 = vshll.u32 %v996, 16
        %v1069 = vrot.slane %v1067, 5
        %v1070 = vor.u32 %v1066, %v1069
        %v1071 = vrot.slane %v1070, 4
        %v1073 = vshll.u32 %v997, 16
        %v1075 = vrot.slane %v1073, 5
        %v1076 = vsel %vm1062, %v1071, %v1075
        %v1077 = vshrl.u32 %v997, 16
        %v1079 = vrot.slane %v1077, 4
        %v1080 = vor.u32 %v1079, %v1075
        %v1081 = vrot.slane %v1080, 4
        %v1083 = vshll.u32 %v1044, 16
        %v1085 = vrot.slane %v1083, 5
        %v1086 = vsel %vm1062, %v1081, %v1085
        %v1088 = vshrl.u32 %v998, 16
        %v1090 = vrot.slane %v1088, 4
        %v1091 = vshll.u32 %v998, 16
        %v1093 = vrot.slane %v1091, 5
        %v1094 = vor.u32 %v1090, %v1093
        %v1095 = vrot.slane %v1094, 4
        %v1097 = vshll.u32 %v999, 16
        %v1099 = vrot.slane %v1097, 5
        %v1100 = vsel %vm1062, %v1095, %v1099
        %v1101 = vshrl.u32 %v999, 16
        %v1103 = vrot.slane %v1101, 4
        %v1104 = vor.u32 %v1103, %v1099
        %v1105 = vrot.slane %v1104, 4
        %v1107 = vshll.u32 %v1045, 16
        %v1109 = vrot.slane %v1107, 5
        %v1110 = vsel %vm1062, %v1105, %v1109
        %v1112 = vshrl.u32 %v1000, 16
        %v1114 = vrot.slane %v1112, 4
        %v1115 = vshll.u32 %v1000, 16
        %v1117 = vrot.slane %v1115, 5
        %v1118 = vor.u32 %v1114, %v1117
        %v1119 = vrot.slane %v1118, 4
        %v1121 = vshll.u32 %v1001, 16
        %v1123 = vrot.slane %v1121, 5
        %v1124 = vsel %vm1062, %v1119, %v1123
        %v1125 = vshrl.u32 %v1001, 16
        %v1127 = vrot.slane %v1125, 4
        %v1128 = vor.u32 %v1127, %v1123
        %v1129 = vrot.slane %v1128, 4
        %v1131 = vshll.u32 %v1046, 16
        %v1133 = vrot.slane %v1131, 5
        %v1134 = vsel %vm1062, %v1129, %v1133
        %v1136 = vshrl.u32 %v1002, 16
        %v1138 = vrot.slane %v1136, 4
        %v1139 = vshll.u32 %v1002, 16
        %v1141 = vrot.slane %v1139, 5
        %v1142 = vor.u32 %v1138, %v1141
        %v1143 = vrot.slane %v1142, 4
        %v1145 = vshll.u32 %v1003, 16
        %v1147 = vrot.slane %v1145, 5
        %v1148 = vsel %vm1062, %v1143, %v1147
        %v1149 = vshrl.u32 %v1003, 16
        %v1151 = vrot.slane %v1149, 4
        %v1152 = vor.u32 %v1151, %v1147
        %v1153 = vrot.slane %v1152, 4
        %v1155 = vshll.u32 %v1047, 16
        %v1157 = vrot.slane %v1155, 5
        %v1158 = vsel %vm1062, %v1153, %v1157
        %v1160 = vshrl.u32 %v1004, 16
        %v1162 = vrot.slane %v1160, 4
        %v1163 = vshll.u32 %v1004, 16
        %v1165 = vrot.slane %v1163, 5
        %v1166 = vor.u32 %v1162, %v1165
        %v1167 = vrot.slane %v1166, 4
        %v1169 = vshll.u32 %v1005, 16
        %v1171 = vrot.slane %v1169, 5
        %v1172 = vsel %vm1062, %v1167, %v1171
        %v1173 = vshrl.u32 %v1005, 16
        %v1175 = vrot.slane %v1173, 4
        %v1176 = vor.u32 %v1175, %v1171
        %v1177 = vrot.slane %v1176, 4
        %v1179 = vshll.u32 %v1048, 16
        %v1181 = vrot.slane %v1179, 5
        %v1182 = vsel %vm1062, %v1177, %v1181
        %v1184 = vshrl.u32 %v1006, 16
        %v1186 = vrot.slane %v1184, 4
        %v1187 = vshll.u32 %v1006, 16
        %v1189 = vrot.slane %v1187, 5
        %v1190 = vor.u32 %v1186, %v1189
        %v1191 = vrot.slane %v1190, 4
        %v1193 = vshll.u32 %v1007, 16
        %v1195 = vrot.slane %v1193, 5
        %v1196 = vsel %vm1062, %v1191, %v1195
        %v1197 = vshrl.u32 %v1007, 16
        %v1199 = vrot.slane %v1197, 4
        %v1200 = vor.u32 %v1199, %v1195
        %v1201 = vrot.slane %v1200, 4
        %v1203 = vshll.u32 %v1049, 16
        %v1205 = vrot.slane %v1203, 5
        %v1206 = vsel %vm1062, %v1201, %v1205
        %v1208 = vshrl.u32 %v1008, 16
        %v1210 = vrot.slane %v1208, 4
        %v1211 = vshll.u32 %v1008, 16
        %v1213 = vrot.slane %v1211, 5
        %v1214 = vor.u32 %v1210, %v1213
        %v1215 = vrot.slane %v1214, 4
        %v1217 = vshll.u32 %v1009, 16
        %v1219 = vrot.slane %v1217, 5
        %v1220 = vsel %vm1062, %v1215, %v1219
        %v1221 = vshrl.u32 %v1009, 16
        %v1223 = vrot.slane %v1221, 4
        %v1224 = vor.u32 %v1223, %v1219
        %v1225 = vrot.slane %v1224, 4
        %v1227 = vshll.u32 %v1050, 16
        %v1229 = vrot.slane %v1227, 5
        %v1230 = vsel %vm1062, %v1225, %v1229
        %v1232 = vshrl.u32 %v1010, 16
        %v1234 = vrot.slane %v1232, 4
        %v1235 = vshll.u32 %v1010, 16
        %v1237 = vrot.slane %v1235, 5
        %v1238 = vor.u32 %v1234, %v1237
        %v1239 = vrot.slane %v1238, 4
        %v1241 = vshll.u32 %v1011, 16
        %v1243 = vrot.slane %v1241, 5
        %v1244 = vsel %vm1062, %v1239, %v1243
        %v1245 = vshrl.u32 %v1011, 16
        %v1247 = vrot.slane %v1245, 4
        %v1248 = vor.u32 %v1247, %v1243
        %v1249 = vrot.slane %v1248, 4
        %v1251 = vshll.u32 %v1051, 16
        %v1253 = vrot.slane %v1251, 5
        %v1254 = vsel %vm1062, %v1249, %v1253
        %v1256 = vshrl.u32 %v1012, 16
        %v1258 = vrot.slane %v1256, 4
        %v1259 = vshll.u32 %v1012, 16
        %v1261 = vrot.slane %v1259, 5
        %v1262 = vor.u32 %v1258, %v1261
        %v1263 = vrot.slane %v1262, 4
        %v1265 = vshll.u32 %v1013, 16
        %v1267 = vrot.slane %v1265, 5
        %v1268 = vsel %vm1062, %v1263, %v1267
        %v1269 = vshrl.u32 %v1013, 16
        %v1271 = vrot.slane %v1269, 4
        %v1272 = vor.u32 %v1271, %v1267
        %v1273 = vrot.slane %v1272, 4
        %v1275 = vshll.u32 %v1052, 16
        %v1277 = vrot.slane %v1275, 5
        %v1278 = vsel %vm1062, %v1273, %v1277
        %v1280 = vshrl.u32 %v1014, 16
        %v1282 = vrot.slane %v1280, 4
        %v1283 = vshll.u32 %v1014, 16
        %v1285 = vrot.slane %v1283, 5
        %v1286 = vor.u32 %v1282, %v1285
        %v1287 = vrot.slane %v1286, 4
        %v1289 = vshll.u32 %v1015, 16
        %v1291 = vrot.slane %v1289, 5
        %v1292 = vsel %vm1062, %v1287, %v1291
        %v1293 = vshrl.u32 %v1015, 16
        %v1295 = vrot.slane %v1293, 4
        %v1296 = vor.u32 %v1295, %v1291
        %v1297 = vrot.slane %v1296, 4
        %v1299 = vshll.u32 %v1053, 16
        %v1301 = vrot.slane %v1299, 5
        %v1302 = vsel %vm1062, %v1297, %v1301
        %v1304 = vshrl.u32 %v1016, 16
        %v1306 = vrot.slane %v1304, 4
        %v1307 = vshll.u32 %v1016, 16
        %v1309 = vrot.slane %v1307, 5
        %v1310 = vor.u32 %v1306, %v1309
        %v1311 = vrot.slane %v1310, 4
        %v1313 = vshll.u32 %v1017, 16
        %v1315 = vrot.slane %v1313, 5
        %v1316 = vsel %vm1062, %v1311, %v1315
        %v1317 = vshrl.u32 %v1017, 16
        %v1319 = vrot.slane %v1317, 4
        %v1320 = vor.u32 %v1319, %v1315
        %v1321 = vrot.slane %v1320, 4
        %v1323 = vshll.u32 %v1054, 16
        %v1325 = vrot.slane %v1323, 5
        %v1326 = vsel %vm1062, %v1321, %v1325
        %v1328 = vshrl.u32 %v1018, 16
        %v1330 = vrot.slane %v1328, 4
        %v1331 = vshll.u32 %v1018, 16
        %v1333 = vrot.slane %v1331, 5
        %v1334 = vor.u32 %v1330, %v1333
        %v1335 = vrot.slane %v1334, 4
        %v1337 = vshll.u32 %v1019, 16
        %v1339 = vrot.slane %v1337, 5
        %v1340 = vsel %vm1062, %v1335, %v1339
        %v1341 = vshrl.u32 %v1019, 16
        %v1343 = vrot.slane %v1341, 4
        %v1344 = vor.u32 %v1343, %v1339
        %v1345 = vrot.slane %v1344, 4
        %v1347 = vshll.u32 %v1055, 16
        %v1349 = vrot.slane %v1347, 5
        %v1350 = vsel %vm1062, %v1345, %v1349
        %v1352 = vshrl.u32 %v1020, 16
        %v1354 = vrot.slane %v1352, 4
        %v1355 = vshll.u32 %v1020, 16
        %v1357 = vrot.slane %v1355, 5
        %v1358 = vor.u32 %v1354, %v1357
        %v1359 = vrot.slane %v1358, 4
        %v1361 = vshll.u32 %v1021, 16
        %v1363 = vrot.slane %v1361, 5
        %v1364 = vsel %vm1062, %v1359, %v1363
        %v1365 = vshrl.u32 %v1021, 16
        %v1367 = vrot.slane %v1365, 4
        %v1368 = vor.u32 %v1367, %v1363
        %v1369 = vrot.slane %v1368, 4
        %v1371 = vshll.u32 %v1056, 16
        %v1373 = vrot.slane %v1371, 5
        %v1374 = vsel %vm1062, %v1369, %v1373
        %v1376 = vshrl.u32 %v1022, 16
        %v1378 = vrot.slane %v1376, 4
        %v1379 = vshll.u32 %v1022, 16
        %v1381 = vrot.slane %v1379, 5
        %v1382 = vor.u32 %v1378, %v1381
        %v1383 = vrot.slane %v1382, 4
        %v1385 = vshll.u32 %v1023, 16
        %v1387 = vrot.slane %v1385, 5
        %v1388 = vsel %vm1062, %v1383, %v1387
        %v1389 = vshrl.u32 %v1023, 16
        %v1391 = vrot.slane %v1389, 4
        %v1392 = vor.u32 %v1391, %v1387
        %v1393 = vrot.slane %v1392, 4
        %v1395 = vshll.u32 %v1057, 16
        %v1397 = vrot.slane %v1395, 5
        %v1398 = vsel %vm1062, %v1393, %v1397
        %v1400 = vshrl.u32 %v1024, 16
        %v1402 = vrot.slane %v1400, 4
        %v1403 = vshll.u32 %v1024, 16
        %v1405 = vrot.slane %v1403, 5
        %v1406 = vor.u32 %v1402, %v1405
        %v1407 = vrot.slane %v1406, 4
        %v1409 = vshll.u32 %v1025, 16
        %v1411 = vrot.slane %v1409, 5
        %v1412 = vsel %vm1062, %v1407, %v1411
        %v1413 = vshrl.u32 %v1025, 16
        %v1415 = vrot.slane %v1413, 4
        %v1416 = vor.u32 %v1415, %v1411
        %v1417 = vrot.slane %v1416, 4
        %v1419 = vshll.u32 %v1058, 16
        %v1421 = vrot.slane %v1419, 5
        %v1422 = vsel %vm1062, %v1417, %v1421
        %v1424 = vshrl.u32 %v1026, 16
        %v1426 = vrot.slane %v1424, 4
        %v1427 = vshll.u32 %v1026, 16
        %v1429 = vrot.slane %v1427, 5
        %v1430 = vor.u32 %v1426, %v1429
        %v1431 = vrot.slane %v1430, 4
        %v1433 = vshll.u32 %v1027, 16
        %v1435 = vrot.slane %v1433, 5
        %v1436 = vsel %vm1062, %v1431, %v1435
        %v1437 = vshrl.u32 %v1027, 16
        %v1439 = vrot.slane %v1437, 4
        %v1440 = vor.u32 %v1439, %v1435
        %v1441 = vrot.slane %v1440, 4
        %v1443 = vshll.u32 %v1059, 16
        %v1445 = vrot.slane %v1443, 5
        %v1446 = vsel %vm1062, %v1441, %v1445
        %s1447 = scalar_lea.vmem [#allocation6], 64
        %v1448 = vld [vmem:[%s1447] sm:$0xf]
        %v1449 = vld [vmem:[%s1447 + $0x4] sm:$0xf]
        %v1450 = vld [vmem:[%s1447 + $0x8] sm:$0xf]
        %v1451 = vld [vmem:[%s1447 + $0xc] sm:$0xf]
        %v1452 = vld [vmem:[%s1447 + $0x10] sm:$0xf]
        %v1453 = vld [vmem:[%s1447 + $0x14] sm:$0xf]
        %v1454 = vld [vmem:[%s1447 + $0x18] sm:$0xf]
        %v1455 = vld [vmem:[%s1447 + $0x1c] sm:$0xf]
        %v1456 = vld [vmem:[%s1447 + $0x20] sm:$0xf]
        %v1457 = vld [vmem:[%s1447 + $0x24] sm:$0xf]
        %v1458 = vld [vmem:[%s1447 + $0x28] sm:$0xf]
        %v1459 = vld [vmem:[%s1447 + $0x2c] sm:$0xf]
        %v1460 = vld [vmem:[%s1447 + $0x30] sm:$0xf]
        %v1461 = vld [vmem:[%s1447 + $0x34] sm:$0xf]
        %v1462 = vld [vmem:[%s1447 + $0x38] sm:$0xf]
        %v1463 = vld [vmem:[%s1447 + $0x3c] sm:$0xf]
        %v1464 = vunpack.c.l.b16 %v1076
        %v1465 = vunpack.c.l.b16 %v1086
        %v1466 = vunpack.c.l.b16 %v1100
        %v1467 = vunpack.c.l.b16 %v1110
        %v1468 = vunpack.c.l.b16 %v1124
        %v1469 = vunpack.c.l.b16 %v1134
        %v1470 = vunpack.c.l.b16 %v1148
        %v1471 = vunpack.c.l.b16 %v1158
        %v1472 = vunpack.c.l.b16 %v1172
        %v1473 = vunpack.c.l.b16 %v1182
        %v1474 = vunpack.c.l.b16 %v1196
        %v1475 = vunpack.c.l.b16 %v1206
        %v1476 = vunpack.c.l.b16 %v1220
        %v1477 = vunpack.c.l.b16 %v1230
        %v1478 = vunpack.c.l.b16 %v1244
        %v1479 = vunpack.c.l.b16 %v1254
        %v1480 = vunpack.c.l.b16 %v1268
        %v1481 = vunpack.c.l.b16 %v1278
        %v1482 = vunpack.c.l.b16 %v1292
        %v1483 = vunpack.c.l.b16 %v1302
        %v1484 = vunpack.c.l.b16 %v1316
        %v1485 = vunpack.c.l.b16 %v1326
        %v1486 = vunpack.c.l.b16 %v1340
        %v1487 = vunpack.c.l.b16 %v1350
        %v1488 = vunpack.c.l.b16 %v1364
        %v1489 = vunpack.c.l.b16 %v1374
        %v1490 = vunpack.c.l.b16 %v1388
        %v1491 = vunpack.c.l.b16 %v1398
        %v1492 = vunpack.c.l.b16 %v1412
        %v1493 = vunpack.c.l.b16 %v1422
        %v1494 = vunpack.c.l.b16 %v1436
        %v1495 = vunpack.c.l.b16 %v1446
        %v1496 = vpack.c.b16 %v1465, %v1464
        %v1497 = vpack.c.b16 %v1467, %v1466
        %v1498 = vpack.c.b16 %v1469, %v1468
        %v1499 = vpack.c.b16 %v1471, %v1470
        %v1500 = vpack.c.b16 %v1473, %v1472
        %v1501 = vpack.c.b16 %v1475, %v1474
        %v1502 = vpack.c.b16 %v1477, %v1476
        %v1503 = vpack.c.b16 %v1479, %v1478
        %v1504 = vpack.c.b16 %v1481, %v1480
        %v1505 = vpack.c.b16 %v1483, %v1482
        %v1506 = vpack.c.b16 %v1485, %v1484
        %v1507 = vpack.c.b16 %v1487, %v1486
        %v1508 = vpack.c.b16 %v1489, %v1488
        %v1509 = vpack.c.b16 %v1491, %v1490
        %v1510 = vpack.c.b16 %v1493, %v1492
        %v1511 = vpack.c.b16 %v1495, %v1494
        %v1544 = vunpack.c.l.b16 %v1448
        %v1545 = vunpack.c.l.b16 %v1449
        %v1546 = vunpack.c.l.b16 %v1450
        %v1547 = vunpack.c.l.b16 %v1451
        %v1548 = vunpack.c.l.b16 %v1452
        %v1549 = vunpack.c.l.b16 %v1453
        %v1550 = vunpack.c.l.b16 %v1454
        %v1551 = vunpack.c.l.b16 %v1455
        %v1552 = vunpack.c.l.b16 %v1456
        %v1553 = vunpack.c.l.b16 %v1457
        %v1554 = vunpack.c.l.b16 %v1458
        %v1555 = vunpack.c.l.b16 %v1459
        %v1556 = vunpack.c.l.b16 %v1460
        %v1557 = vunpack.c.l.b16 %v1461
        %v1558 = vunpack.c.l.b16 %v1462
        %v1559 = vunpack.c.l.b16 %v1463
        %v1560 = vpack.c.b16 %v1545, %v1544
        %v1561 = vpack.c.b16 %v1547, %v1546
        %v1562 = vpack.c.b16 %v1549, %v1548
        %v1563 = vpack.c.b16 %v1551, %v1550
        %v1564 = vpack.c.b16 %v1553, %v1552
        %v1565 = vpack.c.b16 %v1555, %v1554
        %v1566 = vpack.c.b16 %v1557, %v1556
        %v1567 = vpack.c.b16 %v1559, %v1558
        %1576 = vmatpush.bf16.msra.mxu0 %v1567
        %1577 = vmatpush.bf16.msra.mxu0 %v1566
        %1578 = vmatpush.bf16.msra.mxu0 %v1565
        %1579 = vmatpush.bf16.msra.mxu0 %v1564
        %1580 = vmatpush.bf16.msra.mxu0 %v1563
        %1581 = vmatpush.bf16.msra.mxu0 %v1562
        %1582 = vmatpush.bf16.msra.mxu0 %v1561
        %1583 = vmatpush.bf16.msra.mxu0 %v1560
        %1584 = vmatmul.bf16.gmra.mxu0 %v1496
        %v1585 = vpop.f32.mrf.mxu0
        %v1586 = vadd.f32 0.0, %v1585
        %v1587 = vpop.f32.mrf.mxu0
        %v1588 = vadd.f32 0.0, %v1587
        %1589 = vmatmul.bf16.gmra.mxu0 %v1497
        %v1590 = vpop.f32.mrf.mxu0
        %v1591 = vadd.f32 0.0, %v1590
        %v1592 = vpop.f32.mrf.mxu0
        %v1593 = vadd.f32 0.0, %v1592
        %1594 = vmatmul.bf16.gmra.mxu0 %v1498
        %v1595 = vpop.f32.mrf.mxu0
        %v1596 = vadd.f32 0.0, %v1595
        %v1597 = vpop.f32.mrf.mxu0
        %v1598 = vadd.f32 0.0, %v1597
        %1599 = vmatmul.bf16.gmra.mxu0 %v1499
        %v1600 = vpop.f32.mrf.mxu0
        %v1601 = vadd.f32 0.0, %v1600
        %v1602 = vpop.f32.mrf.mxu0
        %v1603 = vadd.f32 0.0, %v1602
        %1604 = vmatmul.bf16.gmra.mxu0 %v1500
        %v1605 = vpop.f32.mrf.mxu0
        %v1606 = vadd.f32 0.0, %v1605
        %v1607 = vpop.f32.mrf.mxu0
        %v1608 = vadd.f32 0.0, %v1607
        %1609 = vmatmul.bf16.gmra.mxu0 %v1501
        %v1610 = vpop.f32.mrf.mxu0
        %v1611 = vadd.f32 0.0, %v1610
        %v1612 = vpop.f32.mrf.mxu0
        %v1613 = vadd.f32 0.0, %v1612
        %1614 = vmatmul.bf16.gmra.mxu0 %v1502
        %v1615 = vpop.f32.mrf.mxu0
        %v1616 = vadd.f32 0.0, %v1615
        %v1617 = vpop.f32.mrf.mxu0
        %v1618 = vadd.f32 0.0, %v1617
        %1619 = vmatmul.bf16.gmra.mxu0 %v1503
        %v1620 = vpop.f32.mrf.mxu0
        %v1621 = vadd.f32 0.0, %v1620
        %v1622 = vpop.f32.mrf.mxu0
        %v1623 = vadd.f32 0.0, %v1622
        %1624 = vmatmul.bf16.gmra.mxu0 %v1504
        %v1625 = vpop.f32.mrf.mxu0
        %v1626 = vadd.f32 0.0, %v1625
        %v1627 = vpop.f32.mrf.mxu0
        %v1628 = vadd.f32 0.0, %v1627
        %1629 = vmatmul.bf16.gmra.mxu0 %v1505
        %v1630 = vpop.f32.mrf.mxu0
        %v1631 = vadd.f32 0.0, %v1630
        %v1632 = vpop.f32.mrf.mxu0
        %v1633 = vadd.f32 0.0, %v1632
        %1634 = vmatmul.bf16.gmra.mxu0 %v1506
        %v1635 = vpop.f32.mrf.mxu0
        %v1636 = vadd.f32 0.0, %v1635
        %v1637 = vpop.f32.mrf.mxu0
        %v1638 = vadd.f32 0.0, %v1637
        %1639 = vmatmul.bf16.gmra.mxu0 %v1507
        %v1640 = vpop.f32.mrf.mxu0
        %v1641 = vadd.f32 0.0, %v1640
        %v1642 = vpop.f32.mrf.mxu0
        %v1643 = vadd.f32 0.0, %v1642
        %1644 = vmatmul.bf16.gmra.mxu0 %v1508
        %v1645 = vpop.f32.mrf.mxu0
        %v1646 = vadd.f32 0.0, %v1645
        %v1647 = vpop.f32.mrf.mxu0
        %v1648 = vadd.f32 0.0, %v1647
        %1649 = vmatmul.bf16.gmra.mxu0 %v1509
        %v1650 = vpop.f32.mrf.mxu0
        %v1651 = vadd.f32 0.0, %v1650
        %v1652 = vpop.f32.mrf.mxu0
        %v1653 = vadd.f32 0.0, %v1652
        %1654 = vmatmul.bf16.gmra.mxu0 %v1510
        %v1655 = vpop.f32.mrf.mxu0
        %v1656 = vadd.f32 0.0, %v1655
        %v1657 = vpop.f32.mrf.mxu0
        %v1658 = vadd.f32 0.0, %v1657
        %1659 = vmatmul.bf16.gmra.mxu0 %v1511
        %v1660 = vpop.f32.mrf.mxu0
        %v1661 = vadd.f32 0.0, %v1660
        %v1662 = vpop.f32.mrf.mxu0
        %v1663 = vadd.f32 0.0, %v1662
        %1664 = vdwg.mxu0
        %v1697 = vunpack.c.l.b16 %v996
        %v1698 = vunpack.c.l.b16 %v997
        %v1699 = vunpack.c.l.b16 %v998
        %v1700 = vunpack.c.l.b16 %v999
        %v1701 = vunpack.c.l.b16 %v1000
        %v1702 = vunpack.c.l.b16 %v1001
        %v1703 = vunpack.c.l.b16 %v1002
        %v1704 = vunpack.c.l.b16 %v1003
        %v1705 = vunpack.c.l.b16 %v1004
        %v1706 = vunpack.c.l.b16 %v1005
        %v1707 = vunpack.c.l.b16 %v1006
        %v1708 = vunpack.c.l.b16 %v1007
        %v1709 = vunpack.c.l.b16 %v1008
        %v1710 = vunpack.c.l.b16 %v1009
        %v1711 = vunpack.c.l.b16 %v1010
        %v1712 = vunpack.c.l.b16 %v1011
        %v1713 = vunpack.c.l.b16 %v1012
        %v1714 = vunpack.c.l.b16 %v1013
        %v1715 = vunpack.c.l.b16 %v1014
        %v1716 = vunpack.c.l.b16 %v1015
        %v1717 = vunpack.c.l.b16 %v1016
        %v1718 = vunpack.c.l.b16 %v1017
        %v1719 = vunpack.c.l.b16 %v1018
        %v1720 = vunpack.c.l.b16 %v1019
        %v1721 = vunpack.c.l.b16 %v1020
        %v1722 = vunpack.c.l.b16 %v1021
        %v1723 = vunpack.c.l.b16 %v1022
        %v1724 = vunpack.c.l.b16 %v1023
        %v1725 = vunpack.c.l.b16 %v1024
        %v1726 = vunpack.c.l.b16 %v1025
        %v1727 = vunpack.c.l.b16 %v1026
        %v1728 = vunpack.c.l.b16 %v1027
        %v1729 = vpack.c.b16 %v1698, %v1697
        %v1730 = vpack.c.b16 %v1700, %v1699
        %v1731 = vpack.c.b16 %v1702, %v1701
        %v1732 = vpack.c.b16 %v1704, %v1703
        %v1733 = vpack.c.b16 %v1706, %v1705
        %v1734 = vpack.c.b16 %v1708, %v1707
        %v1735 = vpack.c.b16 %v1710, %v1709
        %v1736 = vpack.c.b16 %v1712, %v1711
        %v1737 = vpack.c.b16 %v1714, %v1713
        %v1738 = vpack.c.b16 %v1716, %v1715
        %v1739 = vpack.c.b16 %v1718, %v1717
        %v1740 = vpack.c.b16 %v1720, %v1719
        %v1741 = vpack.c.b16 %v1722, %v1721
        %v1742 = vpack.c.b16 %v1724, %v1723
        %v1743 = vpack.c.b16 %v1726, %v1725
        %v1744 = vpack.c.b16 %v1728, %v1727
        %v1777 = vunpack.c.l.b16 %v1028
        %v1778 = vunpack.c.l.b16 %v1029
        %v1779 = vunpack.c.l.b16 %v1030
        %v1780 = vunpack.c.l.b16 %v1031
        %v1781 = vunpack.c.l.b16 %v1032
        %v1782 = vunpack.c.l.b16 %v1033
        %v1783 = vunpack.c.l.b16 %v1034
        %v1784 = vunpack.c.l.b16 %v1035
        %v1785 = vunpack.c.l.b16 %v1036
        %v1786 = vunpack.c.l.b16 %v1037
        %v1787 = vunpack.c.l.b16 %v1038
        %v1788 = vunpack.c.l.b16 %v1039
        %v1789 = vunpack.c.l.b16 %v1040
        %v1790 = vunpack.c.l.b16 %v1041
        %v1791 = vunpack.c.l.b16 %v1042
        %v1792 = vunpack.c.l.b16 %v1043
        %v1793 = vpack.c.b16 %v1778, %v1777
        %v1794 = vpack.c.b16 %v1780, %v1779
        %v1795 = vpack.c.b16 %v1782, %v1781
        %v1796 = vpack.c.b16 %v1784, %v1783
        %v1797 = vpack.c.b16 %v1786, %v1785
        %v1798 = vpack.c.b16 %v1788, %v1787
        %v1799 = vpack.c.b16 %v1790, %v1789
        %v1800 = vpack.c.b16 %v1792, %v1791
        %1809 = vmatpush.bf16.msra.mxu0 %v1800
        %1810 = vmatpush.bf16.msra.mxu0 %v1799
        %1811 = vmatpush.bf16.msra.mxu0 %v1798
        %1812 = vmatpush.bf16.msra.mxu0 %v1797
        %1813 = vmatpush.bf16.msra.mxu0 %v1796
        %1814 = vmatpush.bf16.msra.mxu0 %v1795
        %1815 = vmatpush.bf16.msra.mxu0 %v1794
        %1816 = vmatpush.bf16.msra.mxu0 %v1793
        %1817 = vmatmul.bf16.gmra.mxu0 %v1729
        %v1818 = vpop.f32.mrf.mxu0
        %v1819 = vadd.f32 %v1586, %v1818
        %v1820 = vpop.f32.mrf.mxu0
        %v1821 = vadd.f32 %v1588, %v1820
        %1822 = vmatmul.bf16.gmra.mxu0 %v1730
        %v1823 = vpop.f32.mrf.mxu0
        %v1824 = vadd.f32 %v1591, %v1823
        %v1825 = vpop.f32.mrf.mxu0
        %v1826 = vadd.f32 %v1593, %v1825
        %1827 = vmatmul.bf16.gmra.mxu0 %v1731
        %v1828 = vpop.f32.mrf.mxu0
        %v1829 = vadd.f32 %v1596, %v1828
        %v1830 = vpop.f32.mrf.mxu0
        %v1831 = vadd.f32 %v1598, %v1830
        %1832 = vmatmul.bf16.gmra.mxu0 %v1732
        %v1833 = vpop.f32.mrf.mxu0
        %v1834 = vadd.f32 %v1601, %v1833
        %v1835 = vpop.f32.mrf.mxu0
        %v1836 = vadd.f32 %v1603, %v1835
        %1837 = vmatmul.bf16.gmra.mxu0 %v1733
        %v1838 = vpop.f32.mrf.mxu0
        %v1839 = vadd.f32 %v1606, %v1838
        %v1840 = vpop.f32.mrf.mxu0
        %v1841 = vadd.f32 %v1608, %v1840
        %1842 = vmatmul.bf16.gmra.mxu0 %v1734
        %v1843 = vpop.f32.mrf.mxu0
        %v1844 = vadd.f32 %v1611, %v1843
        %v1845 = vpop.f32.mrf.mxu0
        %v1846 = vadd.f32 %v1613, %v1845
        %1847 = vmatmul.bf16.gmra.mxu0 %v1735
        %v1848 = vpop.f32.mrf.mxu0
        %v1849 = vadd.f32 %v1616, %v1848
        %v1850 = vpop.f32.mrf.mxu0
        %v1851 = vadd.f32 %v1618, %v1850
        %1852 = vmatmul.bf16.gmra.mxu0 %v1736
        %v1853 = vpop.f32.mrf.mxu0
        %v1854 = vadd.f32 %v1621, %v1853
        %v1855 = vpop.f32.mrf.mxu0
        %v1856 = vadd.f32 %v1623, %v1855
        %1857 = vmatmul.bf16.gmra.mxu0 %v1737
        %v1858 = vpop.f32.mrf.mxu0
        %v1859 = vadd.f32 %v1626, %v1858
        %v1860 = vpop.f32.mrf.mxu0
        %v1861 = vadd.f32 %v1628, %v1860
        %1862 = vmatmul.bf16.gmra.mxu0 %v1738
        %v1863 = vpop.f32.mrf.mxu0
        %v1864 = vadd.f32 %v1631, %v1863
        %v1865 = vpop.f32.mrf.mxu0
        %v1866 = vadd.f32 %v1633, %v1865
        %1867 = vmatmul.bf16.gmra.mxu0 %v1739
        %v1868 = vpop.f32.mrf.mxu0
        %v1869 = vadd.f32 %v1636, %v1868
        %v1870 = vpop.f32.mrf.mxu0
        %v1871 = vadd.f32 %v1638, %v1870
        %1872 = vmatmul.bf16.gmra.mxu0 %v1740
        %v1873 = vpop.f32.mrf.mxu0
        %v1874 = vadd.f32 %v1641, %v1873
        %v1875 = vpop.f32.mrf.mxu0
        %v1876 = vadd.f32 %v1643, %v1875
        %1877 = vmatmul.bf16.gmra.mxu0 %v1741
        %v1878 = vpop.f32.mrf.mxu0
        %v1879 = vadd.f32 %v1646, %v1878
        %v1880 = vpop.f32.mrf.mxu0
        %v1881 = vadd.f32 %v1648, %v1880
        %1882 = vmatmul.bf16.gmra.mxu0 %v1742
        %v1883 = vpop.f32.mrf.mxu0
        %v1884 = vadd.f32 %v1651, %v1883
        %v1885 = vpop.f32.mrf.mxu0
        %v1886 = vadd.f32 %v1653, %v1885
        %1887 = vmatmul.bf16.gmra.mxu0 %v1743
        %v1888 = vpop.f32.mrf.mxu0
        %v1889 = vadd.f32 %v1656, %v1888
        %v1890 = vpop.f32.mrf.mxu0
        %v1891 = vadd.f32 %v1658, %v1890
        %1892 = vmatmul.bf16.gmra.mxu0 %v1744
        %v1893 = vpop.f32.mrf.mxu0
        %v1894 = vadd.f32 %v1661, %v1893
        %v1895 = vpop.f32.mrf.mxu0
        %v1896 = vadd.f32 %v1663, %v1895
        %1897 = vdwg.mxu0
        %v1898 = vld [vmem:[#allocation2] sm:$0xe]
        %v1899 = vld [vmem:[#allocation2 + $0xc] sm:$0xe]
        %v1900 = vld [vmem:[#allocation2 + $0x18] sm:$0xe]
        %v1901 = vld [vmem:[#allocation2 + $0x24] sm:$0xe]
        %v1902 = vld [vmem:[#allocation2 + $0x30] sm:$0xe]
        %v1903 = vld [vmem:[#allocation2 + $0x3c] sm:$0xe]
        %v1904 = vld [vmem:[#allocation2 + $0x48] sm:$0xe]
        %v1905 = vld [vmem:[#allocation2 + $0x54] sm:$0xe]
        %v1906 = vld [vmem:[#allocation2 + $0x60] sm:$0xe]
        %v1907 = vld [vmem:[#allocation2 + $0x6c] sm:$0xe]
        %v1908 = vld [vmem:[#allocation2 + $0x78] sm:$0xe]
        %v1909 = vld [vmem:[#allocation2 + $0x84] sm:$0xe]
        %v1910 = vld [vmem:[#allocation2 + $0x90] sm:$0xe]
        %v1911 = vld [vmem:[#allocation2 + $0x9c] sm:$0xe]
        %v1912 = vld [vmem:[#allocation2 + $0xa8] sm:$0xe]
        %v1913 = vld [vmem:[#allocation2 + $0xb4] sm:$0xe]
        %vm1946 = vcmask 1042432
        %vm1947 = vcmask 1046532
        %vm1948 = vmor %vm1946, %vm1947
        %v1949 = vrot.slane %v1898, 5
        %v1950 = vrot.slane %v1949, 4
        %v1951 = vrot.slane %v997, 5
        %v1952 = vsel %vm1948, %v1950, %v1951
        %v1953 = vrot.slane %v1951, 4
        %v1954 = vrot.slane %v1044, 5
        %v1955 = vsel %vm1948, %v1953, %v1954
        %v1956 = vrot.slane %v1899, 5
        %v1957 = vrot.slane %v1956, 4
        %v1958 = vrot.slane %v999, 5
        %v1959 = vsel %vm1948, %v1957, %v1958
        %v1960 = vrot.slane %v1958, 4
        %v1961 = vrot.slane %v1045, 5
        %v1962 = vsel %vm1948, %v1960, %v1961
        %v1963 = vrot.slane %v1900, 5
        %v1964 = vrot.slane %v1963, 4
        %v1965 = vrot.slane %v1001, 5
        %v1966 = vsel %vm1948, %v1964, %v1965
        %v1967 = vrot.slane %v1965, 4
        %v1968 = vrot.slane %v1046, 5
        %v1969 = vsel %vm1948, %v1967, %v1968
        %v1970 = vrot.slane %v1901, 5
        %v1971 = vrot.slane %v1970, 4
        %v1972 = vrot.slane %v1003, 5
        %v1973 = vsel %vm1948, %v1971, %v1972
        %v1974 = vrot.slane %v1972, 4
        %v1975 = vrot.slane %v1047, 5
        %v1976 = vsel %vm1948, %v1974, %v1975
        %v1977 = vrot.slane %v1902, 5
        %v1978 = vrot.slane %v1977, 4
        %v1979 = vrot.slane %v1005, 5
        %v1980 = vsel %vm1948, %v1978, %v1979
        %v1981 = vrot.slane %v1979, 4
        %v1982 = vrot.slane %v1048, 5
        %v1983 = vsel %vm1948, %v1981, %v1982
        %v1984 = vrot.slane %v1903, 5
        %v1985 = vrot.slane %v1984, 4
        %v1986 = vrot.slane %v1007, 5
        %v1987 = vsel %vm1948, %v1985, %v1986
        %v1988 = vrot.slane %v1986, 4
        %v1989 = vrot.slane %v1049, 5
        %v1990 = vsel %vm1948, %v1988, %v1989
        %v1991 = vrot.slane %v1904, 5
        %v1992 = vrot.slane %v1991, 4
        %v1993 = vrot.slane %v1009, 5
        %v1994 = vsel %vm1948, %v1992, %v1993
        %v1995 = vrot.slane %v1993, 4
        %v1996 = vrot.slane %v1050, 5
        %v1997 = vsel %vm1948, %v1995, %v1996
        %v1998 = vrot.slane %v1905, 5
        %v1999 = vrot.slane %v1998, 4
        %v2000 = vrot.slane %v1011, 5
        %v2001 = vsel %vm1948, %v1999, %v2000
        %v2002 = vrot.slane %v2000, 4
        %v2003 = vrot.slane %v1051, 5
        %v2004 = vsel %vm1948, %v2002, %v2003
        %v2005 = vrot.slane %v1906, 5
        %v2006 = vrot.slane %v2005, 4
        %v2007 = vrot.slane %v1013, 5
        %v2008 = vsel %vm1948, %v2006, %v2007
        %v2009 = vrot.slane %v2007, 4
        %v2010 = vrot.slane %v1052, 5
        %v2011 = vsel %vm1948, %v2009, %v2010
        %v2012 = vrot.slane %v1907, 5
        %v2013 = vrot.slane %v2012, 4
        %v2014 = vrot.slane %v1015, 5
        %v2015 = vsel %vm1948, %v2013, %v2014
        %v2016 = vrot.slane %v2014, 4
        %v2017 = vrot.slane %v1053, 5
        %v2018 = vsel %vm1948, %v2016, %v2017
        %v2019 = vrot.slane %v1908, 5
        %v2020 = vrot.slane %v2019, 4
        %v2021 = vrot.slane %v1017, 5
        %v2022 = vsel %vm1948, %v2020, %v2021
        %v2023 = vrot.slane %v2021, 4
        %v2024 = vrot.slane %v1054, 5
        %v2025 = vsel %vm1948, %v2023, %v2024
        %v2026 = vrot.slane %v1909, 5
        %v2027 = vrot.slane %v2026, 4
        %v2028 = vrot.slane %v1019, 5
        %v2029 = vsel %vm1948, %v2027, %v2028
        %v2030 = vrot.slane %v2028, 4
        %v2031 = vrot.slane %v1055, 5
        %v2032 = vsel %vm1948, %v2030, %v2031
        %v2033 = vrot.slane %v1910, 5
        %v2034 = vrot.slane %v2033, 4
        %v2035 = vrot.slane %v1021, 5
        %v2036 = vsel %vm1948, %v2034, %v2035
        %v2037 = vrot.slane %v2035, 4
        %v2038 = vrot.slane %v1056, 5
        %v2039 = vsel %vm1948, %v2037, %v2038
        %v2040 = vrot.slane %v1911, 5
        %v2041 = vrot.slane %v2040, 4
        %v2042 = vrot.slane %v1023, 5
        %v2043 = vsel %vm1948, %v2041, %v2042
        %v2044 = vrot.slane %v2042, 4
        %v2045 = vrot.slane %v1057, 5
        %v2046 = vsel %vm1948, %v2044, %v2045
        %v2047 = vrot.slane %v1912, 5
        %v2048 = vrot.slane %v2047, 4
        %v2049 = vrot.slane %v1025, 5
        %v2050 = vsel %vm1948, %v2048, %v2049
        %v2051 = vrot.slane %v2049, 4
        %v2052 = vrot.slane %v1058, 5
        %v2053 = vsel %vm1948, %v2051, %v2052
        %v2054 = vrot.slane %v1913, 5
        %v2055 = vrot.slane %v2054, 4
        %v2056 = vrot.slane %v1027, 5
        %v2057 = vsel %vm1948, %v2055, %v2056
        %v2058 = vrot.slane %v2056, 4
        %v2059 = vrot.slane %v1059, 5
        %v2060 = vsel %vm1948, %v2058, %v2059
        %s2061 = scalar_lea.vmem [#allocation6], 128
        %v2062 = vld [vmem:[%s2061] sm:$0xf]
        %v2063 = vld [vmem:[%s2061 + $0x4] sm:$0xf]
        %v2064 = vld [vmem:[%s2061 + $0x8] sm:$0xf]
        %v2065 = vld [vmem:[%s2061 + $0xc] sm:$0xf]
        %v2066 = vld [vmem:[%s2061 + $0x10] sm:$0xf]
        %v2067 = vld [vmem:[%s2061 + $0x14] sm:$0xf]
        %v2068 = vld [vmem:[%s2061 + $0x18] sm:$0xf]
        %v2069 = vld [vmem:[%s2061 + $0x1c] sm:$0xf]
        %v2070 = vld [vmem:[%s2061 + $0x20] sm:$0xf]
        %v2071 = vld [vmem:[%s2061 + $0x24] sm:$0xf]
        %v2072 = vld [vmem:[%s2061 + $0x28] sm:$0xf]
        %v2073 = vld [vmem:[%s2061 + $0x2c] sm:$0xf]
        %v2074 = vld [vmem:[%s2061 + $0x30] sm:$0xf]
        %v2075 = vld [vmem:[%s2061 + $0x34] sm:$0xf]
        %v2076 = vld [vmem:[%s2061 + $0x38] sm:$0xf]
        %v2077 = vld [vmem:[%s2061 + $0x3c] sm:$0xf]
        %v2078 = vunpack.c.l.b16 %v1952
        %v2079 = vunpack.c.l.b16 %v1955
        %v2080 = vunpack.c.l.b16 %v1959
        %v2081 = vunpack.c.l.b16 %v1962
        %v2082 = vunpack.c.l.b16 %v1966
        %v2083 = vunpack.c.l.b16 %v1969
        %v2084 = vunpack.c.l.b16 %v1973
        %v2085 = vunpack.c.l.b16 %v1976
        %v2086 = vunpack.c.l.b16 %v1980
        %v2087 = vunpack.c.l.b16 %v1983
        %v2088 = vunpack.c.l.b16 %v1987
        %v2089 = vunpack.c.l.b16 %v1990
        %v2090 = vunpack.c.l.b16 %v1994
        %v2091 = vunpack.c.l.b16 %v1997
        %v2092 = vunpack.c.l.b16 %v2001
        %v2093 = vunpack.c.l.b16 %v2004
        %v2094 = vunpack.c.l.b16 %v2008
        %v2095 = vunpack.c.l.b16 %v2011
        %v2096 = vunpack.c.l.b16 %v2015
        %v2097 = vunpack.c.l.b16 %v2018
        %v2098 = vunpack.c.l.b16 %v2022
        %v2099 = vunpack.c.l.b16 %v2025
        %v2100 = vunpack.c.l.b16 %v2029
        %v2101 = vunpack.c.l.b16 %v2032
        %v2102 = vunpack.c.l.b16 %v2036
        %v2103 = vunpack.c.l.b16 %v2039
        %v2104 = vunpack.c.l.b16 %v2043
        %v2105 = vunpack.c.l.b16 %v2046
        %v2106 = vunpack.c.l.b16 %v2050
        %v2107 = vunpack.c.l.b16 %v2053
        %v2108 = vunpack.c.l.b16 %v2057
        %v2109 = vunpack.c.l.b16 %v2060
        %v2110 = vpack.c.b16 %v2079, %v2078
        %v2111 = vpack.c.b16 %v2081, %v2080
        %v2112 = vpack.c.b16 %v2083, %v2082
        %v2113 = vpack.c.b16 %v2085, %v2084
        %v2114 = vpack.c.b16 %v2087, %v2086
        %v2115 = vpack.c.b16 %v2089, %v2088
        %v2116 = vpack.c.b16 %v2091, %v2090
        %v2117 = vpack.c.b16 %v2093, %v2092
        %v2118 = vpack.c.b16 %v2095, %v2094
        %v2119 = vpack.c.b16 %v2097, %v2096
        %v2120 = vpack.c.b16 %v2099, %v2098
        %v2121 = vpack.c.b16 %v2101, %v2100
        %v2122 = vpack.c.b16 %v2103, %v2102
        %v2123 = vpack.c.b16 %v2105, %v2104
        %v2124 = vpack.c.b16 %v2107, %v2106
        %v2125 = vpack.c.b16 %v2109, %v2108
        %v2158 = vunpack.c.l.b16 %v2062
        %v2159 = vunpack.c.l.b16 %v2063
        %v2160 = vunpack.c.l.b16 %v2064
        %v2161 = vunpack.c.l.b16 %v2065
        %v2162 = vunpack.c.l.b16 %v2066
        %v2163 = vunpack.c.l.b16 %v2067
        %v2164 = vunpack.c.l.b16 %v2068
        %v2165 = vunpack.c.l.b16 %v2069
        %v2166 = vunpack.c.l.b16 %v2070
        %v2167 = vunpack.c.l.b16 %v2071
        %v2168 = vunpack.c.l.b16 %v2072
        %v2169 = vunpack.c.l.b16 %v2073
        %v2170 = vunpack.c.l.b16 %v2074
        %v2171 = vunpack.c.l.b16 %v2075
        %v2172 = vunpack.c.l.b16 %v2076
        %v2173 = vunpack.c.l.b16 %v2077
        %v2174 = vpack.c.b16 %v2159, %v2158
        %v2175 = vpack.c.b16 %v2161, %v2160
        %v2176 = vpack.c.b16 %v2163, %v2162
        %v2177 = vpack.c.b16 %v2165, %v2164
        %v2178 = vpack.c.b16 %v2167, %v2166
        %v2179 = vpack.c.b16 %v2169, %v2168
        %v2180 = vpack.c.b16 %v2171, %v2170
        %v2181 = vpack.c.b16 %v2173, %v2172
        %2190 = vmatpush.bf16.msra.mxu0 %v2181
        %2191 = vmatpush.bf16.msra.mxu0 %v2180
        %2192 = vmatpush.bf16.msra.mxu0 %v2179
        %2193 = vmatpush.bf16.msra.mxu0 %v2178
        %2194 = vmatpush.bf16.msra.mxu0 %v2177
        %2195 = vmatpush.bf16.msra.mxu0 %v2176
        %2196 = vmatpush.bf16.msra.mxu0 %v2175
        %2197 = vmatpush.bf16.msra.mxu0 %v2174
        %2198 = vmatmul.bf16.gmra.mxu0 %v2110
        %v2199 = vpop.f32.mrf.mxu0
        %v2200 = vadd.f32 0.0, %v2199
        %v2201 = vpop.f32.mrf.mxu0
        %v2202 = vadd.f32 0.0, %v2201
        %2203 = vmatmul.bf16.gmra.mxu0 %v2111
        %v2204 = vpop.f32.mrf.mxu0
        %v2205 = vadd.f32 0.0, %v2204
        %v2206 = vpop.f32.mrf.mxu0
        %v2207 = vadd.f32 0.0, %v2206
        %2208 = vmatmul.bf16.gmra.mxu0 %v2112
        %v2209 = vpop.f32.mrf.mxu0
        %v2210 = vadd.f32 0.0, %v2209
        %v2211 = vpop.f32.mrf.mxu0
        %v2212 = vadd.f32 0.0, %v2211
        %2213 = vmatmul.bf16.gmra.mxu0 %v2113
        %v2214 = vpop.f32.mrf.mxu0
        %v2215 = vadd.f32 0.0, %v2214
        %v2216 = vpop.f32.mrf.mxu0
        %v2217 = vadd.f32 0.0, %v2216
        %2218 = vmatmul.bf16.gmra.mxu0 %v2114
        %v2219 = vpop.f32.mrf.mxu0
        %v2220 = vadd.f32 0.0, %v2219
        %v2221 = vpop.f32.mrf.mxu0
        %v2222 = vadd.f32 0.0, %v2221
        %2223 = vmatmul.bf16.gmra.mxu0 %v2115
        %v2224 = vpop.f32.mrf.mxu0
        %v2225 = vadd.f32 0.0, %v2224
        %v2226 = vpop.f32.mrf.mxu0
        %v2227 = vadd.f32 0.0, %v2226
        %2228 = vmatmul.bf16.gmra.mxu0 %v2116
        %v2229 = vpop.f32.mrf.mxu0
        %v2230 = vadd.f32 0.0, %v2229
        %v2231 = vpop.f32.mrf.mxu0
        %v2232 = vadd.f32 0.0, %v2231
        %2233 = vmatmul.bf16.gmra.mxu0 %v2117
        %v2234 = vpop.f32.mrf.mxu0
        %v2235 = vadd.f32 0.0, %v2234
        %v2236 = vpop.f32.mrf.mxu0
        %v2237 = vadd.f32 0.0, %v2236
        %2238 = vmatmul.bf16.gmra.mxu0 %v2118
        %v2239 = vpop.f32.mrf.mxu0
        %v2240 = vadd.f32 0.0, %v2239
        %v2241 = vpop.f32.mrf.mxu0
        %v2242 = vadd.f32 0.0, %v2241
        %2243 = vmatmul.bf16.gmra.mxu0 %v2119
        %v2244 = vpop.f32.mrf.mxu0
        %v2245 = vadd.f32 0.0, %v2244
        %v2246 = vpop.f32.mrf.mxu0
        %v2247 = vadd.f32 0.0, %v2246
        %2248 = vmatmul.bf16.gmra.mxu0 %v2120
        %v2249 = vpop.f32.mrf.mxu0
        %v2250 = vadd.f32 0.0, %v2249
        %v2251 = vpop.f32.mrf.mxu0
        %v2252 = vadd.f32 0.0, %v2251
        %2253 = vmatmul.bf16.gmra.mxu0 %v2121
        %v2254 = vpop.f32.mrf.mxu0
        %v2255 = vadd.f32 0.0, %v2254
        %v2256 = vpop.f32.mrf.mxu0
        %v2257 = vadd.f32 0.0, %v2256
        %2258 = vmatmul.bf16.gmra.mxu0 %v2122
        %v2259 = vpop.f32.mrf.mxu0
        %v2260 = vadd.f32 0.0, %v2259
        %v2261 = vpop.f32.mrf.mxu0
        %v2262 = vadd.f32 0.0, %v2261
        %2263 = vmatmul.bf16.gmra.mxu0 %v2123
        %v2264 = vpop.f32.mrf.mxu0
        %v2265 = vadd.f32 0.0, %v2264
        %v2266 = vpop.f32.mrf.mxu0
        %v2267 = vadd.f32 0.0, %v2266
        %2268 = vmatmul.bf16.gmra.mxu0 %v2124
        %v2269 = vpop.f32.mrf.mxu0
        %v2270 = vadd.f32 0.0, %v2269
        %v2271 = vpop.f32.mrf.mxu0
        %v2272 = vadd.f32 0.0, %v2271
        %2273 = vmatmul.bf16.gmra.mxu0 %v2125
        %v2274 = vpop.f32.mrf.mxu0
        %v2275 = vadd.f32 0.0, %v2274
        %v2276 = vpop.f32.mrf.mxu0
        %v2277 = vadd.f32 0.0, %v2276
        %2278 = vdwg.mxu0
        %v2279 = vadd.f32 %v1819, %v2200
        %v2280 = vadd.f32 %v1821, %v2202
        %v2281 = vadd.f32 %v1824, %v2205
        %v2282 = vadd.f32 %v1826, %v2207
        %v2283 = vadd.f32 %v1829, %v2210
        %v2284 = vadd.f32 %v1831, %v2212
        %v2285 = vadd.f32 %v1834, %v2215
        %v2286 = vadd.f32 %v1836, %v2217
        %v2287 = vadd.f32 %v1839, %v2220
        %v2288 = vadd.f32 %v1841, %v2222
        %v2289 = vadd.f32 %v1844, %v2225
        %v2290 = vadd.f32 %v1846, %v2227
        %v2291 = vadd.f32 %v1849, %v2230
        %v2292 = vadd.f32 %v1851, %v2232
        %v2293 = vadd.f32 %v1854, %v2235
        %v2294 = vadd.f32 %v1856, %v2237
        %v2295 = vadd.f32 %v1859, %v2240
        %v2296 = vadd.f32 %v1861, %v2242
        %v2297 = vadd.f32 %v1864, %v2245
        %v2298 = vadd.f32 %v1866, %v2247
        %v2299 = vadd.f32 %v1869, %v2250
        %v2300 = vadd.f32 %v1871, %v2252
        %v2301 = vadd.f32 %v1874, %v2255
        %v2302 = vadd.f32 %v1876, %v2257
        %v2303 = vadd.f32 %v1879, %v2260
        %v2304 = vadd.f32 %v1881, %v2262
        %v2305 = vadd.f32 %v1884, %v2265
        %v2306 = vadd.f32 %v1886, %v2267
        %v2307 = vadd.f32 %v1889, %v2270
        %v2308 = vadd.f32 %v1891, %v2272
        %v2309 = vadd.f32 %v1894, %v2275
        %v2310 = vadd.f32 %v1896, %v2277
        %v2311 = vld [vmem:[%s878] sm:$0xf]
        %v2312 = vld [vmem:[%s878 + $0x4] sm:$0xf]
        %v2313 = vld [vmem:[%s878 + $0xc] sm:$0xf]
        %v2314 = vld [vmem:[%s878 + $0x10] sm:$0xf]
        %v2315 = vld [vmem:[%s878 + $0x18] sm:$0xf]
        %v2316 = vld [vmem:[%s878 + $0x1c] sm:$0xf]
        %v2317 = vld [vmem:[%s878 + $0x24] sm:$0xf]
        %v2318 = vld [vmem:[%s878 + $0x28] sm:$0xf]
        %v2319 = vld [vmem:[%s878 + $0x30] sm:$0xf]
        %v2320 = vld [vmem:[%s878 + $0x34] sm:$0xf]
        %v2321 = vld [vmem:[%s878 + $0x3c] sm:$0xf]
        %v2322 = vld [vmem:[%s878 + $0x40] sm:$0xf]
        %v2323 = vld [vmem:[%s878 + $0x48] sm:$0xf]
        %v2324 = vld [vmem:[%s878 + $0x4c] sm:$0xf]
        %v2325 = vld [vmem:[%s878 + $0x54] sm:$0xf]
        %v2326 = vld [vmem:[%s878 + $0x58] sm:$0xf]
        %v2327 = vld [vmem:[%s878 + $0x60] sm:$0xf]
        %v2328 = vld [vmem:[%s878 + $0x64] sm:$0xf]
        %v2329 = vld [vmem:[%s878 + $0x6c] sm:$0xf]
        %v2330 = vld [vmem:[%s878 + $0x70] sm:$0xf]
        %v2331 = vld [vmem:[%s878 + $0x78] sm:$0xf]
        %v2332 = vld [vmem:[%s878 + $0x7c] sm:$0xf]
        %v2333 = vld [vmem:[%s878 + $0x84] sm:$0xf]
        %v2334 = vld [vmem:[%s878 + $0x88] sm:$0xf]
        %v2335 = vld [vmem:[%s878 + $0x90] sm:$0xf]
        %v2336 = vld [vmem:[%s878 + $0x94] sm:$0xf]
        %v2337 = vld [vmem:[%s878 + $0x9c] sm:$0xf]
        %v2338 = vld [vmem:[%s878 + $0xa0] sm:$0xf]
        %v2339 = vld [vmem:[%s878 + $0xa8] sm:$0xf]
        %v2340 = vld [vmem:[%s878 + $0xac] sm:$0xf]
        %v2341 = vld [vmem:[%s878 + $0xb4] sm:$0xf]
        %v2342 = vld [vmem:[%s878 + $0xb8] sm:$0xf]
        %s2343 = scalar_lea.vmem [#allocation6], 192
        %v2344 = vld [vmem:[%s2343] sm:$0xf]
        %v2345 = vld [vmem:[%s2343 + $0x4] sm:$0xf]
        %v2346 = vld [vmem:[%s2343 + $0x8] sm:$0xf]
        %v2347 = vld [vmem:[%s2343 + $0xc] sm:$0xf]
        %v2348 = vld [vmem:[%s2343 + $0x10] sm:$0xf]
        %v2349 = vld [vmem:[%s2343 + $0x14] sm:$0xf]
        %v2350 = vld [vmem:[%s2343 + $0x18] sm:$0xf]
        %v2351 = vld [vmem:[%s2343 + $0x1c] sm:$0xf]
        %v2352 = vld [vmem:[%s2343 + $0x20] sm:$0xf]
        %v2353 = vld [vmem:[%s2343 + $0x24] sm:$0xf]
        %v2354 = vld [vmem:[%s2343 + $0x28] sm:$0xf]
        %v2355 = vld [vmem:[%s2343 + $0x2c] sm:$0xf]
        %v2356 = vld [vmem:[%s2343 + $0x30] sm:$0xf]
        %v2357 = vld [vmem:[%s2343 + $0x34] sm:$0xf]
        %v2358 = vld [vmem:[%s2343 + $0x38] sm:$0xf]
        %v2359 = vld [vmem:[%s2343 + $0x3c] sm:$0xf]
        %v2392 = vunpack.c.l.b16 %v2311
        %v2393 = vunpack.c.l.b16 %v2312
        %v2394 = vunpack.c.l.b16 %v2313
        %v2395 = vunpack.c.l.b16 %v2314
        %v2396 = vunpack.c.l.b16 %v2315
        %v2397 = vunpack.c.l.b16 %v2316
        %v2398 = vunpack.c.l.b16 %v2317
        %v2399 = vunpack.c.l.b16 %v2318
        %v2400 = vunpack.c.l.b16 %v2319
        %v2401 = vunpack.c.l.b16 %v2320
        %v2402 = vunpack.c.l.b16 %v2321
        %v2403 = vunpack.c.l.b16 %v2322
        %v2404 = vunpack.c.l.b16 %v2323
        %v2405 = vunpack.c.l.b16 %v2324
        %v2406 = vunpack.c.l.b16 %v2325
        %v2407 = vunpack.c.l.b16 %v2326
        %v2408 = vunpack.c.l.b16 %v2327
        %v2409 = vunpack.c.l.b16 %v2328
        %v2410 = vunpack.c.l.b16 %v2329
        %v2411 = vunpack.c.l.b16 %v2330
        %v2412 = vunpack.c.l.b16 %v2331
        %v2413 = vunpack.c.l.b16 %v2332
        %v2414 = vunpack.c.l.b16 %v2333
        %v2415 = vunpack.c.l.b16 %v2334
        %v2416 = vunpack.c.l.b16 %v2335
        %v2417 = vunpack.c.l.b16 %v2336
        %v2418 = vunpack.c.l.b16 %v2337
        %v2419 = vunpack.c.l.b16 %v2338
        %v2420 = vunpack.c.l.b16 %v2339
        %v2421 = vunpack.c.l.b16 %v2340
        %v2422 = vunpack.c.l.b16 %v2341
        %v2423 = vunpack.c.l.b16 %v2342
        %v2424 = vpack.c.b16 %v2393, %v2392
        %v2425 = vpack.c.b16 %v2395, %v2394
        %v2426 = vpack.c.b16 %v2397, %v2396
        %v2427 = vpack.c.b16 %v2399, %v2398
        %v2428 = vpack.c.b16 %v2401, %v2400
        %v2429 = vpack.c.b16 %v2403, %v2402
        %v2430 = vpack.c.b16 %v2405, %v2404
        %v2431 = vpack.c.b16 %v2407, %v2406
        %v2432 = vpack.c.b16 %v2409, %v2408
        %v2433 = vpack.c.b16 %v2411, %v2410
        %v2434 = vpack.c.b16 %v2413, %v2412
        %v2435 = vpack.c.b16 %v2415, %v2414
        %v2436 = vpack.c.b16 %v2417, %v2416
        %v2437 = vpack.c.b16 %v2419, %v2418
        %v2438 = vpack.c.b16 %v2421, %v2420
        %v2439 = vpack.c.b16 %v2423, %v2422
        %v2472 = vunpack.c.l.b16 %v2344
        %v2473 = vunpack.c.l.b16 %v2345
        %v2474 = vunpack.c.l.b16 %v2346
        %v2475 = vunpack.c.l.b16 %v2347
        %v2476 = vunpack.c.l.b16 %v2348
        %v2477 = vunpack.c.l.b16 %v2349
        %v2478 = vunpack.c.l.b16 %v2350
        %v2479 = vunpack.c.l.b16 %v2351
        %v2480 = vunpack.c.l.b16 %v2352
        %v2481 = vunpack.c.l.b16 %v2353
        %v2482 = vunpack.c.l.b16 %v2354
        %v2483 = vunpack.c.l.b16 %v2355
        %v2484 = vunpack.c.l.b16 %v2356
        %v2485 = vunpack.c.l.b16 %v2357
        %v2486 = vunpack.c.l.b16 %v2358
        %v2487 = vunpack.c.l.b16 %v2359
        %v2488 = vpack.c.b16 %v2473, %v2472
        %v2489 = vpack.c.b16 %v2475, %v2474
        %v2490 = vpack.c.b16 %v2477, %v2476
        %v2491 = vpack.c.b16 %v2479, %v2478
        %v2492 = vpack.c.b16 %v2481, %v2480
        %v2493 = vpack.c.b16 %v2483, %v2482
        %v2494 = vpack.c.b16 %v2485, %v2484
        %v2495 = vpack.c.b16 %v2487, %v2486
        %2504 = vmatpush.bf16.msra.mxu0 %v2495
        %2505 = vmatpush.bf16.msra.mxu0 %v2494
        %2506 = vmatpush.bf16.msra.mxu0 %v2493
        %2507 = vmatpush.bf16.msra.mxu0 %v2492
        %2508 = vmatpush.bf16.msra.mxu0 %v2491
        %2509 = vmatpush.bf16.msra.mxu0 %v2490
        %2510 = vmatpush.bf16.msra.mxu0 %v2489
        %2511 = vmatpush.bf16.msra.mxu0 %v2488
        %2512 = vmatmul.bf16.gmra.mxu0 %v2424
        %v2513 = vpop.f32.mrf.mxu0
        %v2514 = vadd.f32 0.0, %v2513
        %v2515 = vpop.f32.mrf.mxu0
        %v2516 = vadd.f32 0.0, %v2515
        %2517 = vmatmul.bf16.gmra.mxu0 %v2425
        %v2518 = vpop.f32.mrf.mxu0
        %v2519 = vadd.f32 0.0, %v2518
        %v2520 = vpop.f32.mrf.mxu0
        %v2521 = vadd.f32 0.0, %v2520
        %2522 = vmatmul.bf16.gmra.mxu0 %v2426
        %v2523 = vpop.f32.mrf.mxu0
        %v2524 = vadd.f32 0.0, %v2523
        %v2525 = vpop.f32.mrf.mxu0
        %v2526 = vadd.f32 0.0, %v2525
        %2527 = vmatmul.bf16.gmra.mxu0 %v2427
        %v2528 = vpop.f32.mrf.mxu0
        %v2529 = vadd.f32 0.0, %v2528
        %v2530 = vpop.f32.mrf.mxu0
        %v2531 = vadd.f32 0.0, %v2530
        %2532 = vmatmul.bf16.gmra.mxu0 %v2428
        %v2533 = vpop.f32.mrf.mxu0
        %v2534 = vadd.f32 0.0, %v2533
        %v2535 = vpop.f32.mrf.mxu0
        %v2536 = vadd.f32 0.0, %v2535
        %2537 = vmatmul.bf16.gmra.mxu0 %v2429
        %v2538 = vpop.f32.mrf.mxu0
        %v2539 = vadd.f32 0.0, %v2538
        %v2540 = vpop.f32.mrf.mxu0
        %v2541 = vadd.f32 0.0, %v2540
        %2542 = vmatmul.bf16.gmra.mxu0 %v2430
        %v2543 = vpop.f32.mrf.mxu0
        %v2544 = vadd.f32 0.0, %v2543
        %v2545 = vpop.f32.mrf.mxu0
        %v2546 = vadd.f32 0.0, %v2545
        %2547 = vmatmul.bf16.gmra.mxu0 %v2431
        %v2548 = vpop.f32.mrf.mxu0
        %v2549 = vadd.f32 0.0, %v2548
        %v2550 = vpop.f32.mrf.mxu0
        %v2551 = vadd.f32 0.0, %v2550
        %2552 = vmatmul.bf16.gmra.mxu0 %v2432
        %v2553 = vpop.f32.mrf.mxu0
        %v2554 = vadd.f32 0.0, %v2553
        %v2555 = vpop.f32.mrf.mxu0
        %v2556 = vadd.f32 0.0, %v2555
        %2557 = vmatmul.bf16.gmra.mxu0 %v2433
        %v2558 = vpop.f32.mrf.mxu0
        %v2559 = vadd.f32 0.0, %v2558
        %v2560 = vpop.f32.mrf.mxu0
        %v2561 = vadd.f32 0.0, %v2560
        %2562 = vmatmul.bf16.gmra.mxu0 %v2434
        %v2563 = vpop.f32.mrf.mxu0
        %v2564 = vadd.f32 0.0, %v2563
        %v2565 = vpop.f32.mrf.mxu0
        %v2566 = vadd.f32 0.0, %v2565
        %2567 = vmatmul.bf16.gmra.mxu0 %v2435
        %v2568 = vpop.f32.mrf.mxu0
        %v2569 = vadd.f32 0.0, %v2568
        %v2570 = vpop.f32.mrf.mxu0
        %v2571 = vadd.f32 0.0, %v2570
        %2572 = vmatmul.bf16.gmra.mxu0 %v2436
        %v2573 = vpop.f32.mrf.mxu0
        %v2574 = vadd.f32 0.0, %v2573
        %v2575 = vpop.f32.mrf.mxu0
        %v2576 = vadd.f32 0.0, %v2575
        %2577 = vmatmul.bf16.gmra.mxu0 %v2437
        %v2578 = vpop.f32.mrf.mxu0
        %v2579 = vadd.f32 0.0, %v2578
        %v2580 = vpop.f32.mrf.mxu0
        %v2581 = vadd.f32 0.0, %v2580
        %2582 = vmatmul.bf16.gmra.mxu0 %v2438
        %v2583 = vpop.f32.mrf.mxu0
        %v2584 = vadd.f32 0.0, %v2583
        %v2585 = vpop.f32.mrf.mxu0
        %v2586 = vadd.f32 0.0, %v2585
        %2587 = vmatmul.bf16.gmra.mxu0 %v2439
        %v2588 = vpop.f32.mrf.mxu0
        %v2589 = vadd.f32 0.0, %v2588
        %v2590 = vpop.f32.mrf.mxu0
        %v2591 = vadd.f32 0.0, %v2590
        %2592 = vdwg.mxu0
        %v2593 = vadd.f32 %v2279, %v2514
        %v2594 = vadd.f32 %v2280, %v2516
        %v2595 = vadd.f32 %v2281, %v2519
        %v2596 = vadd.f32 %v2282, %v2521
        %v2597 = vadd.f32 %v2283, %v2524
        %v2598 = vadd.f32 %v2284, %v2526
        %v2599 = vadd.f32 %v2285, %v2529
        %v2600 = vadd.f32 %v2286, %v2531
        %v2601 = vadd.f32 %v2287, %v2534
        %v2602 = vadd.f32 %v2288, %v2536
        %v2603 = vadd.f32 %v2289, %v2539
        %v2604 = vadd.f32 %v2290, %v2541
        %v2605 = vadd.f32 %v2291, %v2544
        %v2606 = vadd.f32 %v2292, %v2546
        %v2607 = vadd.f32 %v2293, %v2549
        %v2608 = vadd.f32 %v2294, %v2551
        %v2609 = vadd.f32 %v2295, %v2554
        %v2610 = vadd.f32 %v2296, %v2556
        %v2611 = vadd.f32 %v2297, %v2559
        %v2612 = vadd.f32 %v2298, %v2561
        %v2613 = vadd.f32 %v2299, %v2564
        %v2614 = vadd.f32 %v2300, %v2566
        %v2615 = vadd.f32 %v2301, %v2569
        %v2616 = vadd.f32 %v2302, %v2571
        %v2617 = vadd.f32 %v2303, %v2574
        %v2618 = vadd.f32 %v2304, %v2576
        %v2619 = vadd.f32 %v2305, %v2579
        %v2620 = vadd.f32 %v2306, %v2581
        %v2621 = vadd.f32 %v2307, %v2584
        %v2622 = vadd.f32 %v2308, %v2586
        %v2623 = vadd.f32 %v2309, %v2589
        %v2624 = vadd.f32 %v2310, %v2591
        %v2625 = vld [vmem:[%s878] sm:$0xf]
        %v2626 = vld [vmem:[%s878 + $0x4] sm:$0xf]
        %v2627 = vld [vmem:[%s878 + $0x8] sm:$0x1]
        %v2628 = vld [vmem:[%s878 + $0xc] sm:$0xf]
        %v2629 = vld [vmem:[%s878 + $0x10] sm:$0xf]
        %v2630 = vld [vmem:[%s878 + $0x14] sm:$0x1]
        %v2631 = vld [vmem:[%s878 + $0x18] sm:$0xf]
        %v2632 = vld [vmem:[%s878 + $0x1c] sm:$0xf]
        %v2633 = vld [vmem:[%s878 + $0x20] sm:$0x1]
        %v2634 = vld [vmem:[%s878 + $0x24] sm:$0xf]
        %v2635 = vld [vmem:[%s878 + $0x28] sm:$0xf]
        %v2636 = vld [vmem:[%s878 + $0x2c] sm:$0x1]
        %v2637 = vld [vmem:[%s878 + $0x30] sm:$0xf]
        %v2638 = vld [vmem:[%s878 + $0x34] sm:$0xf]
        %v2639 = vld [vmem:[%s878 + $0x38] sm:$0x1]
        %v2640 = vld [vmem:[%s878 + $0x3c] sm:$0xf]
        %v2641 = vld [vmem:[%s878 + $0x40] sm:$0xf]
        %v2642 = vld [vmem:[%s878 + $0x44] sm:$0x1]
        %v2643 = vld [vmem:[%s878 + $0x48] sm:$0xf]
        %v2644 = vld [vmem:[%s878 + $0x4c] sm:$0xf]
        %v2645 = vld [vmem:[%s878 + $0x50] sm:$0x1]
        %v2646 = vld [vmem:[%s878 + $0x54] sm:$0xf]
        %v2647 = vld [vmem:[%s878 + $0x58] sm:$0xf]
        %v2648 = vld [vmem:[%s878 + $0x5c] sm:$0x1]
        %v2649 = vld [vmem:[%s878 + $0x60] sm:$0xf]
        %v2650 = vld [vmem:[%s878 + $0x64] sm:$0xf]
        %v2651 = vld [vmem:[%s878 + $0x68] sm:$0x1]
        %v2652 = vld [vmem:[%s878 + $0x6c] sm:$0xf]
        %v2653 = vld [vmem:[%s878 + $0x70] sm:$0xf]
        %v2654 = vld [vmem:[%s878 + $0x74] sm:$0x1]
        %v2655 = vld [vmem:[%s878 + $0x78] sm:$0xf]
        %v2656 = vld [vmem:[%s878 + $0x7c] sm:$0xf]
        %v2657 = vld [vmem:[%s878 + $0x80] sm:$0x1]
        %v2658 = vld [vmem:[%s878 + $0x84] sm:$0xf]
        %v2659 = vld [vmem:[%s878 + $0x88] sm:$0xf]
        %v2660 = vld [vmem:[%s878 + $0x8c] sm:$0x1]
        %v2661 = vld [vmem:[%s878 + $0x90] sm:$0xf]
        %v2662 = vld [vmem:[%s878 + $0x94] sm:$0xf]
        %v2663 = vld [vmem:[%s878 + $0x98] sm:$0x1]
        %v2664 = vld [vmem:[%s878 + $0x9c] sm:$0xf]
        %v2665 = vld [vmem:[%s878 + $0xa0] sm:$0xf]
        %v2666 = vld [vmem:[%s878 + $0xa4] sm:$0x1]
        %v2667 = vld [vmem:[%s878 + $0xa8] sm:$0xf]
        %v2668 = vld [vmem:[%s878 + $0xac] sm:$0xf]
        %v2669 = vld [vmem:[%s878 + $0xb0] sm:$0x1]
        %v2670 = vld [vmem:[%s878 + $0xb4] sm:$0xf]
        %v2671 = vld [vmem:[%s878 + $0xb8] sm:$0xf]
        %v2672 = vld [vmem:[%s878 + $0xbc] sm:$0x1]
        %v2674 = vshrl.u32 %v2625, 16
        %v2676 = vrot.slane %v2674, 4
        %v2677 = vshll.u32 %v2625, 16
        %v2679 = vrot.slane %v2677, 5
        %v2680 = vor.u32 %v2676, %v2679
        %v2681 = vrot.slane %v2680, 4
        %v2683 = vshll.u32 %v2626, 16
        %v2685 = vrot.slane %v2683, 5
        %v2686 = vsel %vm1062, %v2681, %v2685
        %v2687 = vshrl.u32 %v2626, 16
        %v2689 = vrot.slane %v2687, 4
        %v2690 = vor.u32 %v2689, %v2685
        %v2691 = vrot.slane %v2690, 4
        %v2693 = vshll.u32 %v2627, 16
        %v2695 = vrot.slane %v2693, 5
        %v2696 = vsel %vm1062, %v2691, %v2695
        %v2698 = vshrl.u32 %v2628, 16
        %v2700 = vrot.slane %v2698, 4
        %v2701 = vshll.u32 %v2628, 16
        %v2703 = vrot.slane %v2701, 5
        %v2704 = vor.u32 %v2700, %v2703
        %v2705 = vrot.slane %v2704, 4
        %v2707 = vshll.u32 %v2629, 16
        %v2709 = vrot.slane %v2707, 5
        %v2710 = vsel %vm1062, %v2705, %v2709
        %v2711 = vshrl.u32 %v2629, 16
        %v2713 = vrot.slane %v2711, 4
        %v2714 = vor.u32 %v2713, %v2709
        %v2715 = vrot.slane %v2714, 4
        %v2717 = vshll.u32 %v2630, 16
        %v2719 = vrot.slane %v2717, 5
        %v2720 = vsel %vm1062, %v2715, %v2719
        %v2722 = vshrl.u32 %v2631, 16
        %v2724 = vrot.slane %v2722, 4
        %v2725 = vshll.u32 %v2631, 16
        %v2727 = vrot.slane %v2725, 5
        %v2728 = vor.u32 %v2724, %v2727
        %v2729 = vrot.slane %v2728, 4
        %v2731 = vshll.u32 %v2632, 16
        %v2733 = vrot.slane %v2731, 5
        %v2734 = vsel %vm1062, %v2729, %v2733
        %v2735 = vshrl.u32 %v2632, 16
        %v2737 = vrot.slane %v2735, 4
        %v2738 = vor.u32 %v2737, %v2733
        %v2739 = vrot.slane %v2738, 4
        %v2741 = vshll.u32 %v2633, 16
        %v2743 = vrot.slane %v2741, 5
        %v2744 = vsel %vm1062, %v2739, %v2743
        %v2746 = vshrl.u32 %v2634, 16
        %v2748 = vrot.slane %v2746, 4
        %v2749 = vshll.u32 %v2634, 16
        %v2751 = vrot.slane %v2749, 5
        %v2752 = vor.u32 %v2748, %v2751
        %v2753 = vrot.slane %v2752, 4
        %v2755 = vshll.u32 %v2635, 16
        %v2757 = vrot.slane %v2755, 5
        %v2758 = vsel %vm1062, %v2753, %v2757
        %v2759 = vshrl.u32 %v2635, 16
        %v2761 = vrot.slane %v2759, 4
        %v2762 = vor.u32 %v2761, %v2757
        %v2763 = vrot.slane %v2762, 4
        %v2765 = vshll.u32 %v2636, 16
        %v2767 = vrot.slane %v2765, 5
        %v2768 = vsel %vm1062, %v2763, %v2767
        %v2770 = vshrl.u32 %v2637, 16
        %v2772 = vrot.slane %v2770, 4
        %v2773 = vshll.u32 %v2637, 16
        %v2775 = vrot.slane %v2773, 5
        %v2776 = vor.u32 %v2772, %v2775
        %v2777 = vrot.slane %v2776, 4
        %v2779 = vshll.u32 %v2638, 16
        %v2781 = vrot.slane %v2779, 5
        %v2782 = vsel %vm1062, %v2777, %v2781
        %v2783 = vshrl.u32 %v2638, 16
        %v2785 = vrot.slane %v2783, 4
        %v2786 = vor.u32 %v2785, %v2781
        %v2787 = vrot.slane %v2786, 4
        %v2789 = vshll.u32 %v2639, 16
        %v2791 = vrot.slane %v2789, 5
        %v2792 = vsel %vm1062, %v2787, %v2791
        %v2794 = vshrl.u32 %v2640, 16
        %v2796 = vrot.slane %v2794, 4
        %v2797 = vshll.u32 %v2640, 16
        %v2799 = vrot.slane %v2797, 5
        %v2800 = vor.u32 %v2796, %v2799
        %v2801 = vrot.slane %v2800, 4
        %v2803 = vshll.u32 %v2641, 16
        %v2805 = vrot.slane %v2803, 5
        %v2806 = vsel %vm1062, %v2801, %v2805
        %v2807 = vshrl.u32 %v2641, 16
        %v2809 = vrot.slane %v2807, 4
        %v2810 = vor.u32 %v2809, %v2805
        %v2811 = vrot.slane %v2810, 4
        %v2813 = vshll.u32 %v2642, 16
        %v2815 = vrot.slane %v2813, 5
        %v2816 = vsel %vm1062, %v2811, %v2815
        %v2818 = vshrl.u32 %v2643, 16
        %v2820 = vrot.slane %v2818, 4
        %v2821 = vshll.u32 %v2643, 16
        %v2823 = vrot.slane %v2821, 5
        %v2824 = vor.u32 %v2820, %v2823
        %v2825 = vrot.slane %v2824, 4
        %v2827 = vshll.u32 %v2644, 16
        %v2829 = vrot.slane %v2827, 5
        %v2830 = vsel %vm1062, %v2825, %v2829
        %v2831 = vshrl.u32 %v2644, 16
        %v2833 = vrot.slane %v2831, 4
        %v2834 = vor.u32 %v2833, %v2829
        %v2835 = vrot.slane %v2834, 4
        %v2837 = vshll.u32 %v2645, 16
        %v2839 = vrot.slane %v2837, 5
        %v2840 = vsel %vm1062, %v2835, %v2839
        %v2842 = vshrl.u32 %v2646, 16
        %v2844 = vrot.slane %v2842, 4
        %v2845 = vshll.u32 %v2646, 16
        %v2847 = vrot.slane %v2845, 5
        %v2848 = vor.u32 %v2844, %v2847
        %v2849 = vrot.slane %v2848, 4
        %v2851 = vshll.u32 %v2647, 16
        %v2853 = vrot.slane %v2851, 5
        %v2854 = vsel %vm1062, %v2849, %v2853
        %v2855 = vshrl.u32 %v2647, 16
        %v2857 = vrot.slane %v2855, 4
        %v2858 = vor.u32 %v2857, %v2853
        %v2859 = vrot.slane %v2858, 4
        %v2861 = vshll.u32 %v2648, 16
        %v2863 = vrot.slane %v2861, 5
        %v2864 = vsel %vm1062, %v2859, %v2863
        %v2866 = vshrl.u32 %v2649, 16
        %v2868 = vrot.slane %v2866, 4
        %v2869 = vshll.u32 %v2649, 16
        %v2871 = vrot.slane %v2869, 5
        %v2872 = vor.u32 %v2868, %v2871
        %v2873 = vrot.slane %v2872, 4
        %v2875 = vshll.u32 %v2650, 16
        %v2877 = vrot.slane %v2875, 5
        %v2878 = vsel %vm1062, %v2873, %v2877
        %v2879 = vshrl.u32 %v2650, 16
        %v2881 = vrot.slane %v2879, 4
        %v2882 = vor.u32 %v2881, %v2877
        %v2883 = vrot.slane %v2882, 4
        %v2885 = vshll.u32 %v2651, 16
        %v2887 = vrot.slane %v2885, 5
        %v2888 = vsel %vm1062, %v2883, %v2887
        %v2890 = vshrl.u32 %v2652, 16
        %v2892 = vrot.slane %v2890, 4
        %v2893 = vshll.u32 %v2652, 16
        %v2895 = vrot.slane %v2893, 5
        %v2896 = vor.u32 %v2892, %v2895
        %v2897 = vrot.slane %v2896, 4
        %v2899 = vshll.u32 %v2653, 16
        %v2901 = vrot.slane %v2899, 5
        %v2902 = vsel %vm1062, %v2897, %v2901
        %v2903 = vshrl.u32 %v2653, 16
        %v2905 = vrot.slane %v2903, 4
        %v2906 = vor.u32 %v2905, %v2901
        %v2907 = vrot.slane %v2906, 4
        %v2909 = vshll.u32 %v2654, 16
        %v2911 = vrot.slane %v2909, 5
        %v2912 = vsel %vm1062, %v2907, %v2911
        %v2914 = vshrl.u32 %v2655, 16
        %v2916 = vrot.slane %v2914, 4
        %v2917 = vshll.u32 %v2655, 16
        %v2919 = vrot.slane %v2917, 5
        %v2920 = vor.u32 %v2916, %v2919
        %v2921 = vrot.slane %v2920, 4
        %v2923 = vshll.u32 %v2656, 16
        %v2925 = vrot.slane %v2923, 5
        %v2926 = vsel %vm1062, %v2921, %v2925
        %v2927 = vshrl.u32 %v2656, 16
        %v2929 = vrot.slane %v2927, 4
        %v2930 = vor.u32 %v2929, %v2925
        %v2931 = vrot.slane %v2930, 4
        %v2933 = vshll.u32 %v2657, 16
        %v2935 = vrot.slane %v2933, 5
        %v2936 = vsel %vm1062, %v2931, %v2935
        %v2938 = vshrl.u32 %v2658, 16
        %v2940 = vrot.slane %v2938, 4
        %v2941 = vshll.u32 %v2658, 16
        %v2943 = vrot.slane %v2941, 5
        %v2944 = vor.u32 %v2940, %v2943
        %v2945 = vrot.slane %v2944, 4
        %v2947 = vshll.u32 %v2659, 16
        %v2949 = vrot.slane %v2947, 5
        %v2950 = vsel %vm1062, %v2945, %v2949
        %v2951 = vshrl.u32 %v2659, 16
        %v2953 = vrot.slane %v2951, 4
        %v2954 = vor.u32 %v2953, %v2949
        %v2955 = vrot.slane %v2954, 4
        %v2957 = vshll.u32 %v2660, 16
        %v2959 = vrot.slane %v2957, 5
        %v2960 = vsel %vm1062, %v2955, %v2959
        %v2962 = vshrl.u32 %v2661, 16
        %v2964 = vrot.slane %v2962, 4
        %v2965 = vshll.u32 %v2661, 16
        %v2967 = vrot.slane %v2965, 5
        %v2968 = vor.u32 %v2964, %v2967
        %v2969 = vrot.slane %v2968, 4
        %v2971 = vshll.u32 %v2662, 16
        %v2973 = vrot.slane %v2971, 5
        %v2974 = vsel %vm1062, %v2969, %v2973
        %v2975 = vshrl.u32 %v2662, 16
        %v2977 = vrot.slane %v2975, 4
        %v2978 = vor.u32 %v2977, %v2973
        %v2979 = vrot.slane %v2978, 4
        %v2981 = vshll.u32 %v2663, 16
        %v2983 = vrot.slane %v2981, 5
        %v2984 = vsel %vm1062, %v2979, %v2983
        %v2986 = vshrl.u32 %v2664, 16
        %v2988 = vrot.slane %v2986, 4
        %v2989 = vshll.u32 %v2664, 16
        %v2991 = vrot.slane %v2989, 5
        %v2992 = vor.u32 %v2988, %v2991
        %v2993 = vrot.slane %v2992, 4
        %v2995 = vshll.u32 %v2665, 16
        %v2997 = vrot.slane %v2995, 5
        %v2998 = vsel %vm1062, %v2993, %v2997
        %v2999 = vshrl.u32 %v2665, 16
        %v3001 = vrot.slane %v2999, 4
        %v3002 = vor.u32 %v3001, %v2997
        %v3003 = vrot.slane %v3002, 4
        %v3005 = vshll.u32 %v2666, 16
        %v3007 = vrot.slane %v3005, 5
        %v3008 = vsel %vm1062, %v3003, %v3007
        %v3010 = vshrl.u32 %v2667, 16
        %v3012 = vrot.slane %v3010, 4
        %v3013 = vshll.u32 %v2667, 16
        %v3015 = vrot.slane %v3013, 5
        %v3016 = vor.u32 %v3012, %v3015
        %v3017 = vrot.slane %v3016, 4
        %v3019 = vshll.u32 %v2668, 16
        %v3021 = vrot.slane %v3019, 5
        %v3022 = vsel %vm1062, %v3017, %v3021
        %v3023 = vshrl.u32 %v2668, 16
        %v3025 = vrot.slane %v3023, 4
        %v3026 = vor.u32 %v3025, %v3021
        %v3027 = vrot.slane %v3026, 4
        %v3029 = vshll.u32 %v2669, 16
        %v3031 = vrot.slane %v3029, 5
        %v3032 = vsel %vm1062, %v3027, %v3031
        %v3034 = vshrl.u32 %v2670, 16
        %v3036 = vrot.slane %v3034, 4
        %v3037 = vshll.u32 %v2670, 16
        %v3039 = vrot.slane %v3037, 5
        %v3040 = vor.u32 %v3036, %v3039
        %v3041 = vrot.slane %v3040, 4
        %v3043 = vshll.u32 %v2671, 16
        %v3045 = vrot.slane %v3043, 5
        %v3046 = vsel %vm1062, %v3041, %v3045
        %v3047 = vshrl.u32 %v2671, 16
        %v3049 = vrot.slane %v3047, 4
        %v3050 = vor.u32 %v3049, %v3045
        %v3051 = vrot.slane %v3050, 4
        %v3053 = vshll.u32 %v2672, 16
        %v3055 = vrot.slane %v3053, 5
        %v3056 = vsel %vm1062, %v3051, %v3055
        %s3057 = scalar_lea.vmem [#allocation6], 256
        %v3058 = vld [vmem:[%s3057] sm:$0xf]
        %v3059 = vld [vmem:[%s3057 + $0x4] sm:$0xf]
        %v3060 = vld [vmem:[%s3057 + $0x8] sm:$0xf]
        %v3061 = vld [vmem:[%s3057 + $0xc] sm:$0xf]
        %v3062 = vld [vmem:[%s3057 + $0x10] sm:$0xf]
        %v3063 = vld [vmem:[%s3057 + $0x14] sm:$0xf]
        %v3064 = vld [vmem:[%s3057 + $0x18] sm:$0xf]
        %v3065 = vld [vmem:[%s3057 + $0x1c] sm:$0xf]
        %v3066 = vld [vmem:[%s3057 + $0x20] sm:$0xf]
        %v3067 = vld [vmem:[%s3057 + $0x24] sm:$0xf]
        %v3068 = vld [vmem:[%s3057 + $0x28] sm:$0xf]
        %v3069 = vld [vmem:[%s3057 + $0x2c] sm:$0xf]
        %v3070 = vld [vmem:[%s3057 + $0x30] sm:$0xf]
        %v3071 = vld [vmem:[%s3057 + $0x34] sm:$0xf]
        %v3072 = vld [vmem:[%s3057 + $0x38] sm:$0xf]
        %v3073 = vld [vmem:[%s3057 + $0x3c] sm:$0xf]
        %v3074 = vunpack.c.l.b16 %v2686
        %v3075 = vunpack.c.l.b16 %v2696
        %v3076 = vunpack.c.l.b16 %v2710
        %v3077 = vunpack.c.l.b16 %v2720
        %v3078 = vunpack.c.l.b16 %v2734
        %v3079 = vunpack.c.l.b16 %v2744
        %v3080 = vunpack.c.l.b16 %v2758
        %v3081 = vunpack.c.l.b16 %v2768
        %v3082 = vunpack.c.l.b16 %v2782
        %v3083 = vunpack.c.l.b16 %v2792
        %v3084 = vunpack.c.l.b16 %v2806
        %v3085 = vunpack.c.l.b16 %v2816
        %v3086 = vunpack.c.l.b16 %v2830
        %v3087 = vunpack.c.l.b16 %v2840
        %v3088 = vunpack.c.l.b16 %v2854
        %v3089 = vunpack.c.l.b16 %v2864
        %v3090 = vunpack.c.l.b16 %v2878
        %v3091 = vunpack.c.l.b16 %v2888
        %v3092 = vunpack.c.l.b16 %v2902
        %v3093 = vunpack.c.l.b16 %v2912
        %v3094 = vunpack.c.l.b16 %v2926
        %v3095 = vunpack.c.l.b16 %v2936
        %v3096 = vunpack.c.l.b16 %v2950
        %v3097 = vunpack.c.l.b16 %v2960
        %v3098 = vunpack.c.l.b16 %v2974
        %v3099 = vunpack.c.l.b16 %v2984
        %v3100 = vunpack.c.l.b16 %v2998
        %v3101 = vunpack.c.l.b16 %v3008
        %v3102 = vunpack.c.l.b16 %v3022
        %v3103 = vunpack.c.l.b16 %v3032
        %v3104 = vunpack.c.l.b16 %v3046
        %v3105 = vunpack.c.l.b16 %v3056
        %v3106 = vpack.c.b16 %v3075, %v3074
        %v3107 = vpack.c.b16 %v3077, %v3076
        %v3108 = vpack.c.b16 %v3079, %v3078
        %v3109 = vpack.c.b16 %v3081, %v3080
        %v3110 = vpack.c.b16 %v3083, %v3082
        %v3111 = vpack.c.b16 %v3085, %v3084
        %v3112 = vpack.c.b16 %v3087, %v3086
        %v3113 = vpack.c.b16 %v3089, %v3088
        %v3114 = vpack.c.b16 %v3091, %v3090
        %v3115 = vpack.c.b16 %v3093, %v3092
        %v3116 = vpack.c.b16 %v3095, %v3094
        %v3117 = vpack.c.b16 %v3097, %v3096
        %v3118 = vpack.c.b16 %v3099, %v3098
        %v3119 = vpack.c.b16 %v3101, %v3100
        %v3120 = vpack.c.b16 %v3103, %v3102
        %v3121 = vpack.c.b16 %v3105, %v3104
        %v3154 = vunpack.c.l.b16 %v3058
        %v3155 = vunpack.c.l.b16 %v3059
        %v3156 = vunpack.c.l.b16 %v3060
        %v3157 = vunpack.c.l.b16 %v3061
        %v3158 = vunpack.c.l.b16 %v3062
        %v3159 = vunpack.c.l.b16 %v3063
        %v3160 = vunpack.c.l.b16 %v3064
        %v3161 = vunpack.c.l.b16 %v3065
        %v3162 = vunpack.c.l.b16 %v3066
        %v3163 = vunpack.c.l.b16 %v3067
        %v3164 = vunpack.c.l.b16 %v3068
        %v3165 = vunpack.c.l.b16 %v3069
        %v3166 = vunpack.c.l.b16 %v3070
        %v3167 = vunpack.c.l.b16 %v3071
        %v3168 = vunpack.c.l.b16 %v3072
        %v3169 = vunpack.c.l.b16 %v3073
        %v3170 = vpack.c.b16 %v3155, %v3154
        %v3171 = vpack.c.b16 %v3157, %v3156
        %v3172 = vpack.c.b16 %v3159, %v3158
        %v3173 = vpack.c.b16 %v3161, %v3160
        %v3174 = vpack.c.b16 %v3163, %v3162
        %v3175 = vpack.c.b16 %v3165, %v3164
        %v3176 = vpack.c.b16 %v3167, %v3166
        %v3177 = vpack.c.b16 %v3169, %v3168
        %3186 = vmatpush.bf16.msra.mxu0 %v3177
        %3187 = vmatpush.bf16.msra.mxu0 %v3176
        %3188 = vmatpush.bf16.msra.mxu0 %v3175
        %3189 = vmatpush.bf16.msra.mxu0 %v3174
        %3190 = vmatpush.bf16.msra.mxu0 %v3173
        %3191 = vmatpush.bf16.msra.mxu0 %v3172
        %3192 = vmatpush.bf16.msra.mxu0 %v3171
        %3193 = vmatpush.bf16.msra.mxu0 %v3170
        %3194 = vmatmul.bf16.gmra.mxu0 %v3106
        %v3195 = vpop.f32.mrf.mxu0
        %v3196 = vadd.f32 0.0, %v3195
        %v3197 = vpop.f32.mrf.mxu0
        %v3198 = vadd.f32 0.0, %v3197
        %3199 = vmatmul.bf16.gmra.mxu0 %v3107
        %v3200 = vpop.f32.mrf.mxu0
        %v3201 = vadd.f32 0.0, %v3200
        %v3202 = vpop.f32.mrf.mxu0
        %v3203 = vadd.f32 0.0, %v3202
        %3204 = vmatmul.bf16.gmra.mxu0 %v3108
        %v3205 = vpop.f32.mrf.mxu0
        %v3206 = vadd.f32 0.0, %v3205
        %v3207 = vpop.f32.mrf.mxu0
        %v3208 = vadd.f32 0.0, %v3207
        %3209 = vmatmul.bf16.gmra.mxu0 %v3109
        %v3210 = vpop.f32.mrf.mxu0
        %v3211 = vadd.f32 0.0, %v3210
        %v3212 = vpop.f32.mrf.mxu0
        %v3213 = vadd.f32 0.0, %v3212
        %3214 = vmatmul.bf16.gmra.mxu0 %v3110
        %v3215 = vpop.f32.mrf.mxu0
        %v3216 = vadd.f32 0.0, %v3215
        %v3217 = vpop.f32.mrf.mxu0
        %v3218 = vadd.f32 0.0, %v3217
        %3219 = vmatmul.bf16.gmra.mxu0 %v3111
        %v3220 = vpop.f32.mrf.mxu0
        %v3221 = vadd.f32 0.0, %v3220
        %v3222 = vpop.f32.mrf.mxu0
        %v3223 = vadd.f32 0.0, %v3222
        %3224 = vmatmul.bf16.gmra.mxu0 %v3112
        %v3225 = vpop.f32.mrf.mxu0
        %v3226 = vadd.f32 0.0, %v3225
        %v3227 = vpop.f32.mrf.mxu0
        %v3228 = vadd.f32 0.0, %v3227
        %3229 = vmatmul.bf16.gmra.mxu0 %v3113
        %v3230 = vpop.f32.mrf.mxu0
        %v3231 = vadd.f32 0.0, %v3230
        %v3232 = vpop.f32.mrf.mxu0
        %v3233 = vadd.f32 0.0, %v3232
        %3234 = vmatmul.bf16.gmra.mxu0 %v3114
        %v3235 = vpop.f32.mrf.mxu0
        %v3236 = vadd.f32 0.0, %v3235
        %v3237 = vpop.f32.mrf.mxu0
        %v3238 = vadd.f32 0.0, %v3237
        %3239 = vmatmul.bf16.gmra.mxu0 %v3115
        %v3240 = vpop.f32.mrf.mxu0
        %v3241 = vadd.f32 0.0, %v3240
        %v3242 = vpop.f32.mrf.mxu0
        %v3243 = vadd.f32 0.0, %v3242
        %3244 = vmatmul.bf16.gmra.mxu0 %v3116
        %v3245 = vpop.f32.mrf.mxu0
        %v3246 = vadd.f32 0.0, %v3245
        %v3247 = vpop.f32.mrf.mxu0
        %v3248 = vadd.f32 0.0, %v3247
        %3249 = vmatmul.bf16.gmra.mxu0 %v3117
        %v3250 = vpop.f32.mrf.mxu0
        %v3251 = vadd.f32 0.0, %v3250
        %v3252 = vpop.f32.mrf.mxu0
        %v3253 = vadd.f32 0.0, %v3252
        %3254 = vmatmul.bf16.gmra.mxu0 %v3118
        %v3255 = vpop.f32.mrf.mxu0
        %v3256 = vadd.f32 0.0, %v3255
        %v3257 = vpop.f32.mrf.mxu0
        %v3258 = vadd.f32 0.0, %v3257
        %3259 = vmatmul.bf16.gmra.mxu0 %v3119
        %v3260 = vpop.f32.mrf.mxu0
        %v3261 = vadd.f32 0.0, %v3260
        %v3262 = vpop.f32.mrf.mxu0
        %v3263 = vadd.f32 0.0, %v3262
        %3264 = vmatmul.bf16.gmra.mxu0 %v3120
        %v3265 = vpop.f32.mrf.mxu0
        %v3266 = vadd.f32 0.0, %v3265
        %v3267 = vpop.f32.mrf.mxu0
        %v3268 = vadd.f32 0.0, %v3267
        %3269 = vmatmul.bf16.gmra.mxu0 %v3121
        %v3270 = vpop.f32.mrf.mxu0
        %v3271 = vadd.f32 0.0, %v3270
        %v3272 = vpop.f32.mrf.mxu0
        %v3273 = vadd.f32 0.0, %v3272
        %3274 = vdwg.mxu0
        %v3275 = vadd.f32 %v2593, %v3196
        %v3276 = vadd.f32 %v2594, %v3198
        %v3277 = vadd.f32 %v2595, %v3201
        %v3278 = vadd.f32 %v2596, %v3203
        %v3279 = vadd.f32 %v2597, %v3206
        %v3280 = vadd.f32 %v2598, %v3208
        %v3281 = vadd.f32 %v2599, %v3211
        %v3282 = vadd.f32 %v2600, %v3213
        %v3283 = vadd.f32 %v2601, %v3216
        %v3284 = vadd.f32 %v2602, %v3218
        %v3285 = vadd.f32 %v2603, %v3221
        %v3286 = vadd.f32 %v2604, %v3223
        %v3287 = vadd.f32 %v2605, %v3226
        %v3288 = vadd.f32 %v2606, %v3228
        %v3289 = vadd.f32 %v2607, %v3231
        %v3290 = vadd.f32 %v2608, %v3233
        %v3291 = vadd.f32 %v2609, %v3236
        %v3292 = vadd.f32 %v2610, %v3238
        %v3293 = vadd.f32 %v2611, %v3241
        %v3294 = vadd.f32 %v2612, %v3243
        %v3295 = vadd.f32 %v2613, %v3246
        %v3296 = vadd.f32 %v2614, %v3248
        %v3297 = vadd.f32 %v2615, %v3251
        %v3298 = vadd.f32 %v2616, %v3253
        %v3299 = vadd.f32 %v2617, %v3256
        %v3300 = vadd.f32 %v2618, %v3258
        %v3301 = vadd.f32 %v2619, %v3261
        %v3302 = vadd.f32 %v2620, %v3263
        %v3303 = vadd.f32 %v2621, %v3266
        %v3304 = vadd.f32 %v2622, %v3268
        %v3305 = vadd.f32 %v2623, %v3271
        %v3306 = vadd.f32 %v2624, %v3273
        %v3307 = vld [vmem:[%s878] sm:$0xe]
        %v3308 = vld [vmem:[%s878 + $0xc] sm:$0xe]
        %v3309 = vld [vmem:[%s878 + $0x18] sm:$0xe]
        %v3310 = vld [vmem:[%s878 + $0x24] sm:$0xe]
        %v3311 = vld [vmem:[%s878 + $0x30] sm:$0xe]
        %v3312 = vld [vmem:[%s878 + $0x3c] sm:$0xe]
        %v3313 = vld [vmem:[%s878 + $0x48] sm:$0xe]
        %v3314 = vld [vmem:[%s878 + $0x54] sm:$0xe]
        %v3315 = vld [vmem:[%s878 + $0x60] sm:$0xe]
        %v3316 = vld [vmem:[%s878 + $0x6c] sm:$0xe]
        %v3317 = vld [vmem:[%s878 + $0x78] sm:$0xe]
        %v3318 = vld [vmem:[%s878 + $0x84] sm:$0xe]
        %v3319 = vld [vmem:[%s878 + $0x90] sm:$0xe]
        %v3320 = vld [vmem:[%s878 + $0x9c] sm:$0xe]
        %v3321 = vld [vmem:[%s878 + $0xa8] sm:$0xe]
        %v3322 = vld [vmem:[%s878 + $0xb4] sm:$0xe]
        %v3371 = vrot.slane %v3307, 5
        %v3372 = vrot.slane %v3371, 4
        %v3373 = vrot.slane %v2626, 5
        %v3374 = vsel %vm1948, %v3372, %v3373
        %v3375 = vrot.slane %v3373, 4
        %v3376 = vrot.slane %v2627, 5
        %v3377 = vsel %vm1948, %v3375, %v3376
        %v3378 = vrot.slane %v3308, 5
        %v3379 = vrot.slane %v3378, 4
        %v3380 = vrot.slane %v2629, 5
        %v3381 = vsel %vm1948, %v3379, %v3380
        %v3382 = vrot.slane %v3380, 4
        %v3383 = vrot.slane %v2630, 5
        %v3384 = vsel %vm1948, %v3382, %v3383
        %v3385 = vrot.slane %v3309, 5
        %v3386 = vrot.slane %v3385, 4
        %v3387 = vrot.slane %v2632, 5
        %v3388 = vsel %vm1948, %v3386, %v3387
        %v3389 = vrot.slane %v3387, 4
        %v3390 = vrot.slane %v2633, 5
        %v3391 = vsel %vm1948, %v3389, %v3390
        %v3392 = vrot.slane %v3310, 5
        %v3393 = vrot.slane %v3392, 4
        %v3394 = vrot.slane %v2635, 5
        %v3395 = vsel %vm1948, %v3393, %v3394
        %v3396 = vrot.slane %v3394, 4
        %v3397 = vrot.slane %v2636, 5
        %v3398 = vsel %vm1948, %v3396, %v3397
        %v3399 = vrot.slane %v3311, 5
        %v3400 = vrot.slane %v3399, 4
        %v3401 = vrot.slane %v2638, 5
        %v3402 = vsel %vm1948, %v3400, %v3401
        %v3403 = vrot.slane %v3401, 4
        %v3404 = vrot.slane %v2639, 5
        %v3405 = vsel %vm1948, %v3403, %v3404
        %v3406 = vrot.slane %v3312, 5
        %v3407 = vrot.slane %v3406, 4
        %v3408 = vrot.slane %v2641, 5
        %v3409 = vsel %vm1948, %v3407, %v3408
        %v3410 = vrot.slane %v3408, 4
        %v3411 = vrot.slane %v2642, 5
        %v3412 = vsel %vm1948, %v3410, %v3411
        %v3413 = vrot.slane %v3313, 5
        %v3414 = vrot.slane %v3413, 4
        %v3415 = vrot.slane %v2644, 5
        %v3416 = vsel %vm1948, %v3414, %v3415
        %v3417 = vrot.slane %v3415, 4
        %v3418 = vrot.slane %v2645, 5
        %v3419 = vsel %vm1948, %v3417, %v3418
        %v3420 = vrot.slane %v3314, 5
        %v3421 = vrot.slane %v3420, 4
        %v3422 = vrot.slane %v2647, 5
        %v3423 = vsel %vm1948, %v3421, %v3422
        %v3424 = vrot.slane %v3422, 4
        %v3425 = vrot.slane %v2648, 5
        %v3426 = vsel %vm1948, %v3424, %v3425
        %v3427 = vrot.slane %v3315, 5
        %v3428 = vrot.slane %v3427, 4
        %v3429 = vrot.slane %v2650, 5
        %v3430 = vsel %vm1948, %v3428, %v3429
        %v3431 = vrot.slane %v3429, 4
        %v3432 = vrot.slane %v2651, 5
        %v3433 = vsel %vm1948, %v3431, %v3432
        %v3434 = vrot.slane %v3316, 5
        %v3435 = vrot.slane %v3434, 4
        %v3436 = vrot.slane %v2653, 5
        %v3437 = vsel %vm1948, %v3435, %v3436
        %v3438 = vrot.slane %v3436, 4
        %v3439 = vrot.slane %v2654, 5
        %v3440 = vsel %vm1948, %v3438, %v3439
        %v3441 = vrot.slane %v3317, 5
        %v3442 = vrot.slane %v3441, 4
        %v3443 = vrot.slane %v2656, 5
        %v3444 = vsel %vm1948, %v3442, %v3443
        %v3445 = vrot.slane %v3443, 4
        %v3446 = vrot.slane %v2657, 5
        %v3447 = vsel %vm1948, %v3445, %v3446
        %v3448 = vrot.slane %v3318, 5
        %v3449 = vrot.slane %v3448, 4
        %v3450 = vrot.slane %v2659, 5
        %v3451 = vsel %vm1948, %v3449, %v3450
        %v3452 = vrot.slane %v3450, 4
        %v3453 = vrot.slane %v2660, 5
        %v3454 = vsel %vm1948, %v3452, %v3453
        %v3455 = vrot.slane %v3319, 5
        %v3456 = vrot.slane %v3455, 4
        %v3457 = vrot.slane %v2662, 5
        %v3458 = vsel %vm1948, %v3456, %v3457
        %v3459 = vrot.slane %v3457, 4
        %v3460 = vrot.slane %v2663, 5
        %v3461 = vsel %vm1948, %v3459, %v3460
        %v3462 = vrot.slane %v3320, 5
        %v3463 = vrot.slane %v3462, 4
        %v3464 = vrot.slane %v2665, 5
        %v3465 = vsel %vm1948, %v3463, %v3464
        %v3466 = vrot.slane %v3464, 4
        %v3467 = vrot.slane %v2666, 5
        %v3468 = vsel %vm1948, %v3466, %v3467
        %v3469 = vrot.slane %v3321, 5
        %v3470 = vrot.slane %v3469, 4
        %v3471 = vrot.slane %v2668, 5
        %v3472 = vsel %vm1948, %v3470, %v3471
        %v3473 = vrot.slane %v3471, 4
        %v3474 = vrot.slane %v2669, 5
        %v3475 = vsel %vm1948, %v3473, %v3474
        %v3476 = vrot.slane %v3322, 5
        %v3477 = vrot.slane %v3476, 4
        %v3478 = vrot.slane %v2671, 5
        %v3479 = vsel %vm1948, %v3477, %v3478
        %v3480 = vrot.slane %v3478, 4
        %v3481 = vrot.slane %v2672, 5
        %v3482 = vsel %vm1948, %v3480, %v3481
        %s3483 = scalar_lea.vmem [#allocation6], 320
        %v3484 = vld [vmem:[%s3483] sm:$0xf]
        %v3485 = vld [vmem:[%s3483 + $0x4] sm:$0xf]
        %v3486 = vld [vmem:[%s3483 + $0x8] sm:$0xf]
        %v3487 = vld [vmem:[%s3483 + $0xc] sm:$0xf]
        %v3488 = vld [vmem:[%s3483 + $0x10] sm:$0xf]
        %v3489 = vld [vmem:[%s3483 + $0x14] sm:$0xf]
        %v3490 = vld [vmem:[%s3483 + $0x18] sm:$0xf]
        %v3491 = vld [vmem:[%s3483 + $0x1c] sm:$0xf]
        %v3492 = vld [vmem:[%s3483 + $0x20] sm:$0xf]
        %v3493 = vld [vmem:[%s3483 + $0x24] sm:$0xf]
        %v3494 = vld [vmem:[%s3483 + $0x28] sm:$0xf]
        %v3495 = vld [vmem:[%s3483 + $0x2c] sm:$0xf]
        %v3496 = vld [vmem:[%s3483 + $0x30] sm:$0xf]
        %v3497 = vld [vmem:[%s3483 + $0x34] sm:$0xf]
        %v3498 = vld [vmem:[%s3483 + $0x38] sm:$0xf]
        %v3499 = vld [vmem:[%s3483 + $0x3c] sm:$0xf]
        %v3500 = vunpack.c.l.b16 %v3374
        %v3501 = vunpack.c.l.b16 %v3377
        %v3502 = vunpack.c.l.b16 %v3381
        %v3503 = vunpack.c.l.b16 %v3384
        %v3504 = vunpack.c.l.b16 %v3388
        %v3505 = vunpack.c.l.b16 %v3391
        %v3506 = vunpack.c.l.b16 %v3395
        %v3507 = vunpack.c.l.b16 %v3398
        %v3508 = vunpack.c.l.b16 %v3402
        %v3509 = vunpack.c.l.b16 %v3405
        %v3510 = vunpack.c.l.b16 %v3409
        %v3511 = vunpack.c.l.b16 %v3412
        %v3512 = vunpack.c.l.b16 %v3416
        %v3513 = vunpack.c.l.b16 %v3419
        %v3514 = vunpack.c.l.b16 %v3423
        %v3515 = vunpack.c.l.b16 %v3426
        %v3516 = vunpack.c.l.b16 %v3430
        %v3517 = vunpack.c.l.b16 %v3433
        %v3518 = vunpack.c.l.b16 %v3437
        %v3519 = vunpack.c.l.b16 %v3440
        %v3520 = vunpack.c.l.b16 %v3444
        %v3521 = vunpack.c.l.b16 %v3447
        %v3522 = vunpack.c.l.b16 %v3451
        %v3523 = vunpack.c.l.b16 %v3454
        %v3524 = vunpack.c.l.b16 %v3458
        %v3525 = vunpack.c.l.b16 %v3461
        %v3526 = vunpack.c.l.b16 %v3465
        %v3527 = vunpack.c.l.b16 %v3468
        %v3528 = vunpack.c.l.b16 %v3472
        %v3529 = vunpack.c.l.b16 %v3475
        %v3530 = vunpack.c.l.b16 %v3479
        %v3531 = vunpack.c.l.b16 %v3482
        %v3532 = vpack.c.b16 %v3501, %v3500
        %v3533 = vpack.c.b16 %v3503, %v3502
        %v3534 = vpack.c.b16 %v3505, %v3504
        %v3535 = vpack.c.b16 %v3507, %v3506
        %v3536 = vpack.c.b16 %v3509, %v3508
        %v3537 = vpack.c.b16 %v3511, %v3510
        %v3538 = vpack.c.b16 %v3513, %v3512
        %v3539 = vpack.c.b16 %v3515, %v3514
        %v3540 = vpack.c.b16 %v3517, %v3516
        %v3541 = vpack.c.b16 %v3519, %v3518
        %v3542 = vpack.c.b16 %v3521, %v3520
        %v3543 = vpack.c.b16 %v3523, %v3522
        %v3544 = vpack.c.b16 %v3525, %v3524
        %v3545 = vpack.c.b16 %v3527, %v3526
        %v3546 = vpack.c.b16 %v3529, %v3528
        %v3547 = vpack.c.b16 %v3531, %v3530
        %v3580 = vunpack.c.l.b16 %v3484
        %v3581 = vunpack.c.l.b16 %v3485
        %v3582 = vunpack.c.l.b16 %v3486
        %v3583 = vunpack.c.l.b16 %v3487
        %v3584 = vunpack.c.l.b16 %v3488
        %v3585 = vunpack.c.l.b16 %v3489
        %v3586 = vunpack.c.l.b16 %v3490
        %v3587 = vunpack.c.l.b16 %v3491
        %v3588 = vunpack.c.l.b16 %v3492
        %v3589 = vunpack.c.l.b16 %v3493
        %v3590 = vunpack.c.l.b16 %v3494
        %v3591 = vunpack.c.l.b16 %v3495
        %v3592 = vunpack.c.l.b16 %v3496
        %v3593 = vunpack.c.l.b16 %v3497
        %v3594 = vunpack.c.l.b16 %v3498
        %v3595 = vunpack.c.l.b16 %v3499
        %v3596 = vpack.c.b16 %v3581, %v3580
        %v3597 = vpack.c.b16 %v3583, %v3582
        %v3598 = vpack.c.b16 %v3585, %v3584
        %v3599 = vpack.c.b16 %v3587, %v3586
        %v3600 = vpack.c.b16 %v3589, %v3588
        %v3601 = vpack.c.b16 %v3591, %v3590
        %v3602 = vpack.c.b16 %v3593, %v3592
        %v3603 = vpack.c.b16 %v3595, %v3594
        %3612 = vmatpush.bf16.msra.mxu0 %v3603
        %3613 = vmatpush.bf16.msra.mxu0 %v3602
        %3614 = vmatpush.bf16.msra.mxu0 %v3601
        %3615 = vmatpush.bf16.msra.mxu0 %v3600
        %3616 = vmatpush.bf16.msra.mxu0 %v3599
        %3617 = vmatpush.bf16.msra.mxu0 %v3598
        %3618 = vmatpush.bf16.msra.mxu0 %v3597
        %3619 = vmatpush.bf16.msra.mxu0 %v3596
        %3620 = vmatmul.bf16.gmra.mxu0 %v3532
        %v3621 = vpop.f32.mrf.mxu0
        %v3622 = vadd.f32 0.0, %v3621
        %v3623 = vpop.f32.mrf.mxu0
        %v3624 = vadd.f32 0.0, %v3623
        %3625 = vmatmul.bf16.gmra.mxu0 %v3533
        %v3626 = vpop.f32.mrf.mxu0
        %v3627 = vadd.f32 0.0, %v3626
        %v3628 = vpop.f32.mrf.mxu0
        %v3629 = vadd.f32 0.0, %v3628
        %3630 = vmatmul.bf16.gmra.mxu0 %v3534
        %v3631 = vpop.f32.mrf.mxu0
        %v3632 = vadd.f32 0.0, %v3631
        %v3633 = vpop.f32.mrf.mxu0
        %v3634 = vadd.f32 0.0, %v3633
        %3635 = vmatmul.bf16.gmra.mxu0 %v3535
        %v3636 = vpop.f32.mrf.mxu0
        %v3637 = vadd.f32 0.0, %v3636
        %v3638 = vpop.f32.mrf.mxu0
        %v3639 = vadd.f32 0.0, %v3638
        %3640 = vmatmul.bf16.gmra.mxu0 %v3536
        %v3641 = vpop.f32.mrf.mxu0
        %v3642 = vadd.f32 0.0, %v3641
        %v3643 = vpop.f32.mrf.mxu0
        %v3644 = vadd.f32 0.0, %v3643
        %3645 = vmatmul.bf16.gmra.mxu0 %v3537
        %v3646 = vpop.f32.mrf.mxu0
        %v3647 = vadd.f32 0.0, %v3646
        %v3648 = vpop.f32.mrf.mxu0
        %v3649 = vadd.f32 0.0, %v3648
        %3650 = vmatmul.bf16.gmra.mxu0 %v3538
        %v3651 = vpop.f32.mrf.mxu0
        %v3652 = vadd.f32 0.0, %v3651
        %v3653 = vpop.f32.mrf.mxu0
        %v3654 = vadd.f32 0.0, %v3653
        %3655 = vmatmul.bf16.gmra.mxu0 %v3539
        %v3656 = vpop.f32.mrf.mxu0
        %v3657 = vadd.f32 0.0, %v3656
        %v3658 = vpop.f32.mrf.mxu0
        %v3659 = vadd.f32 0.0, %v3658
        %3660 = vmatmul.bf16.gmra.mxu0 %v3540
        %v3661 = vpop.f32.mrf.mxu0
        %v3662 = vadd.f32 0.0, %v3661
        %v3663 = vpop.f32.mrf.mxu0
        %v3664 = vadd.f32 0.0, %v3663
        %3665 = vmatmul.bf16.gmra.mxu0 %v3541
        %v3666 = vpop.f32.mrf.mxu0
        %v3667 = vadd.f32 0.0, %v3666
        %v3668 = vpop.f32.mrf.mxu0
        %v3669 = vadd.f32 0.0, %v3668
        %3670 = vmatmul.bf16.gmra.mxu0 %v3542
        %v3671 = vpop.f32.mrf.mxu0
        %v3672 = vadd.f32 0.0, %v3671
        %v3673 = vpop.f32.mrf.mxu0
        %v3674 = vadd.f32 0.0, %v3673
        %3675 = vmatmul.bf16.gmra.mxu0 %v3543
        %v3676 = vpop.f32.mrf.mxu0
        %v3677 = vadd.f32 0.0, %v3676
        %v3678 = vpop.f32.mrf.mxu0
        %v3679 = vadd.f32 0.0, %v3678
        %3680 = vmatmul.bf16.gmra.mxu0 %v3544
        %v3681 = vpop.f32.mrf.mxu0
        %v3682 = vadd.f32 0.0, %v3681
        %v3683 = vpop.f32.mrf.mxu0
        %v3684 = vadd.f32 0.0, %v3683
        %3685 = vmatmul.bf16.gmra.mxu0 %v3545
        %v3686 = vpop.f32.mrf.mxu0
        %v3687 = vadd.f32 0.0, %v3686
        %v3688 = vpop.f32.mrf.mxu0
        %v3689 = vadd.f32 0.0, %v3688
        %3690 = vmatmul.bf16.gmra.mxu0 %v3546
        %v3691 = vpop.f32.mrf.mxu0
        %v3692 = vadd.f32 0.0, %v3691
        %v3693 = vpop.f32.mrf.mxu0
        %v3694 = vadd.f32 0.0, %v3693
        %3695 = vmatmul.bf16.gmra.mxu0 %v3547
        %v3696 = vpop.f32.mrf.mxu0
        %v3697 = vadd.f32 0.0, %v3696
        %v3698 = vpop.f32.mrf.mxu0
        %v3699 = vadd.f32 0.0, %v3698
        %3700 = vdwg.mxu0
        %v3701 = vadd.f32 %v3275, %v3622
        %v3702 = vadd.f32 %v3276, %v3624
        %v3703 = vadd.f32 %v3277, %v3627
        %v3704 = vadd.f32 %v3278, %v3629
        %v3705 = vadd.f32 %v3279, %v3632
        %v3706 = vadd.f32 %v3280, %v3634
        %v3707 = vadd.f32 %v3281, %v3637
        %v3708 = vadd.f32 %v3282, %v3639
        %v3709 = vadd.f32 %v3283, %v3642
        %v3710 = vadd.f32 %v3284, %v3644
        %v3711 = vadd.f32 %v3285, %v3647
        %v3712 = vadd.f32 %v3286, %v3649
        %v3713 = vadd.f32 %v3287, %v3652
        %v3714 = vadd.f32 %v3288, %v3654
        %v3715 = vadd.f32 %v3289, %v3657
        %v3716 = vadd.f32 %v3290, %v3659
        %v3717 = vadd.f32 %v3291, %v3662
        %v3718 = vadd.f32 %v3292, %v3664
        %v3719 = vadd.f32 %v3293, %v3667
        %v3720 = vadd.f32 %v3294, %v3669
        %v3721 = vadd.f32 %v3295, %v3672
        %v3722 = vadd.f32 %v3296, %v3674
        %v3723 = vadd.f32 %v3297, %v3677
        %v3724 = vadd.f32 %v3298, %v3679
        %v3725 = vadd.f32 %v3299, %v3682
        %v3726 = vadd.f32 %v3300, %v3684
        %v3727 = vadd.f32 %v3301, %v3687
        %v3728 = vadd.f32 %v3302, %v3689
        %v3729 = vadd.f32 %v3303, %v3692
        %v3730 = vadd.f32 %v3304, %v3694
        %v3731 = vadd.f32 %v3305, %v3697
        %v3732 = vadd.f32 %v3306, %v3699
        %s3733 = scalar_lea.vmem [#allocation2], 24
        %v3734 = vld [vmem:[%s3733] sm:$0xf]
        %v3735 = vld [vmem:[%s3733 + $0x4] sm:$0xf]
        %v3736 = vld [vmem:[%s3733 + $0xc] sm:$0xf]
        %v3737 = vld [vmem:[%s3733 + $0x10] sm:$0xf]
        %v3738 = vld [vmem:[%s3733 + $0x18] sm:$0xf]
        %v3739 = vld [vmem:[%s3733 + $0x1c] sm:$0xf]
        %v3740 = vld [vmem:[%s3733 + $0x24] sm:$0xf]
        %v3741 = vld [vmem:[%s3733 + $0x28] sm:$0xf]
        %v3742 = vld [vmem:[%s3733 + $0x30] sm:$0xf]
        %v3743 = vld [vmem:[%s3733 + $0x34] sm:$0xf]
        %v3744 = vld [vmem:[%s3733 + $0x3c] sm:$0xf]
        %v3745 = vld [vmem:[%s3733 + $0x40] sm:$0xf]
        %v3746 = vld [vmem:[%s3733 + $0x48] sm:$0xf]
        %v3747 = vld [vmem:[%s3733 + $0x4c] sm:$0xf]
        %v3748 = vld [vmem:[%s3733 + $0x54] sm:$0xf]
        %v3749 = vld [vmem:[%s3733 + $0x58] sm:$0xf]
        %v3750 = vld [vmem:[%s3733 + $0x60] sm:$0xf]
        %v3751 = vld [vmem:[%s3733 + $0x64] sm:$0xf]
        %v3752 = vld [vmem:[%s3733 + $0x6c] sm:$0xf]
        %v3753 = vld [vmem:[%s3733 + $0x70] sm:$0xf]
        %v3754 = vld [vmem:[%s3733 + $0x78] sm:$0xf]
        %v3755 = vld [vmem:[%s3733 + $0x7c] sm:$0xf]
        %v3756 = vld [vmem:[%s3733 + $0x84] sm:$0xf]
        %v3757 = vld [vmem:[%s3733 + $0x88] sm:$0xf]
        %v3758 = vld [vmem:[%s3733 + $0x90] sm:$0xf]
        %v3759 = vld [vmem:[%s3733 + $0x94] sm:$0xf]
        %v3760 = vld [vmem:[%s3733 + $0x9c] sm:$0xf]
        %v3761 = vld [vmem:[%s3733 + $0xa0] sm:$0xf]
        %v3762 = vld [vmem:[%s3733 + $0xa8] sm:$0xf]
        %v3763 = vld [vmem:[%s3733 + $0xac] sm:$0xf]
        %v3764 = vld [vmem:[%s3733 + $0xb4] sm:$0xf]
        %v3765 = vld [vmem:[%s3733 + $0xb8] sm:$0xf]
        %s3766 = scalar_lea.vmem [#allocation6], 384
        %v3767 = vld [vmem:[%s3766] sm:$0xf]
        %v3768 = vld [vmem:[%s3766 + $0x4] sm:$0xf]
        %v3769 = vld [vmem:[%s3766 + $0x8] sm:$0xf]
        %v3770 = vld [vmem:[%s3766 + $0xc] sm:$0xf]
        %v3771 = vld [vmem:[%s3766 + $0x10] sm:$0xf]
        %v3772 = vld [vmem:[%s3766 + $0x14] sm:$0xf]
        %v3773 = vld [vmem:[%s3766 + $0x18] sm:$0xf]
        %v3774 = vld [vmem:[%s3766 + $0x1c] sm:$0xf]
        %v3775 = vld [vmem:[%s3766 + $0x20] sm:$0xf]
        %v3776 = vld [vmem:[%s3766 + $0x24] sm:$0xf]
        %v3777 = vld [vmem:[%s3766 + $0x28] sm:$0xf]
        %v3778 = vld [vmem:[%s3766 + $0x2c] sm:$0xf]
        %v3779 = vld [vmem:[%s3766 + $0x30] sm:$0xf]
        %v3780 = vld [vmem:[%s3766 + $0x34] sm:$0xf]
        %v3781 = vld [vmem:[%s3766 + $0x38] sm:$0xf]
        %v3782 = vld [vmem:[%s3766 + $0x3c] sm:$0xf]
        %v3815 = vunpack.c.l.b16 %v3734
        %v3816 = vunpack.c.l.b16 %v3735
        %v3817 = vunpack.c.l.b16 %v3736
        %v3818 = vunpack.c.l.b16 %v3737
        %v3819 = vunpack.c.l.b16 %v3738
        %v3820 = vunpack.c.l.b16 %v3739
        %v3821 = vunpack.c.l.b16 %v3740
        %v3822 = vunpack.c.l.b16 %v3741
        %v3823 = vunpack.c.l.b16 %v3742
        %v3824 = vunpack.c.l.b16 %v3743
        %v3825 = vunpack.c.l.b16 %v3744
        %v3826 = vunpack.c.l.b16 %v3745
        %v3827 = vunpack.c.l.b16 %v3746
        %v3828 = vunpack.c.l.b16 %v3747
        %v3829 = vunpack.c.l.b16 %v3748
        %v3830 = vunpack.c.l.b16 %v3749
        %v3831 = vunpack.c.l.b16 %v3750
        %v3832 = vunpack.c.l.b16 %v3751
        %v3833 = vunpack.c.l.b16 %v3752
        %v3834 = vunpack.c.l.b16 %v3753
        %v3835 = vunpack.c.l.b16 %v3754
        %v3836 = vunpack.c.l.b16 %v3755
        %v3837 = vunpack.c.l.b16 %v3756
        %v3838 = vunpack.c.l.b16 %v3757
        %v3839 = vunpack.c.l.b16 %v3758
        %v3840 = vunpack.c.l.b16 %v3759
        %v3841 = vunpack.c.l.b16 %v3760
        %v3842 = vunpack.c.l.b16 %v3761
        %v3843 = vunpack.c.l.b16 %v3762
        %v3844 = vunpack.c.l.b16 %v3763
        %v3845 = vunpack.c.l.b16 %v3764
        %v3846 = vunpack.c.l.b16 %v3765
        %v3847 = vpack.c.b16 %v3816, %v3815
        %v3848 = vpack.c.b16 %v3818, %v3817
        %v3849 = vpack.c.b16 %v3820, %v3819
        %v3850 = vpack.c.b16 %v3822, %v3821
        %v3851 = vpack.c.b16 %v3824, %v3823
        %v3852 = vpack.c.b16 %v3826, %v3825
        %v3853 = vpack.c.b16 %v3828, %v3827
        %v3854 = vpack.c.b16 %v3830, %v3829
        %v3855 = vpack.c.b16 %v3832, %v3831
        %v3856 = vpack.c.b16 %v3834, %v3833
        %v3857 = vpack.c.b16 %v3836, %v3835
        %v3858 = vpack.c.b16 %v3838, %v3837
        %v3859 = vpack.c.b16 %v3840, %v3839
        %v3860 = vpack.c.b16 %v3842, %v3841
        %v3861 = vpack.c.b16 %v3844, %v3843
        %v3862 = vpack.c.b16 %v3846, %v3845
        %v3895 = vunpack.c.l.b16 %v3767
        %v3896 = vunpack.c.l.b16 %v3768
        %v3897 = vunpack.c.l.b16 %v3769
        %v3898 = vunpack.c.l.b16 %v3770
        %v3899 = vunpack.c.l.b16 %v3771
        %v3900 = vunpack.c.l.b16 %v3772
        %v3901 = vunpack.c.l.b16 %v3773
        %v3902 = vunpack.c.l.b16 %v3774
        %v3903 = vunpack.c.l.b16 %v3775
        %v3904 = vunpack.c.l.b16 %v3776
        %v3905 = vunpack.c.l.b16 %v3777
        %v3906 = vunpack.c.l.b16 %v3778
        %v3907 = vunpack.c.l.b16 %v3779
        %v3908 = vunpack.c.l.b16 %v3780
        %v3909 = vunpack.c.l.b16 %v3781
        %v3910 = vunpack.c.l.b16 %v3782
        %v3911 = vpack.c.b16 %v3896, %v3895
        %v3912 = vpack.c.b16 %v3898, %v3897
        %v3913 = vpack.c.b16 %v3900, %v3899
        %v3914 = vpack.c.b16 %v3902, %v3901
        %v3915 = vpack.c.b16 %v3904, %v3903
        %v3916 = vpack.c.b16 %v3906, %v3905
        %v3917 = vpack.c.b16 %v3908, %v3907
        %v3918 = vpack.c.b16 %v3910, %v3909
        %3927 = vmatpush.bf16.msra.mxu0 %v3918
        %3928 = vmatpush.bf16.msra.mxu0 %v3917
        %3929 = vmatpush.bf16.msra.mxu0 %v3916
        %3930 = vmatpush.bf16.msra.mxu0 %v3915
        %3931 = vmatpush.bf16.msra.mxu0 %v3914
        %3932 = vmatpush.bf16.msra.mxu0 %v3913
        %3933 = vmatpush.bf16.msra.mxu0 %v3912
        %3934 = vmatpush.bf16.msra.mxu0 %v3911
        %3935 = vmatmul.bf16.gmra.mxu0 %v3847
        %v3936 = vpop.f32.mrf.mxu0
        %v3937 = vadd.f32 0.0, %v3936
        %v3938 = vpop.f32.mrf.mxu0
        %v3939 = vadd.f32 0.0, %v3938
        %3940 = vmatmul.bf16.gmra.mxu0 %v3848
        %v3941 = vpop.f32.mrf.mxu0
        %v3942 = vadd.f32 0.0, %v3941
        %v3943 = vpop.f32.mrf.mxu0
        %v3944 = vadd.f32 0.0, %v3943
        %3945 = vmatmul.bf16.gmra.mxu0 %v3849
        %v3946 = vpop.f32.mrf.mxu0
        %v3947 = vadd.f32 0.0, %v3946
        %v3948 = vpop.f32.mrf.mxu0
        %v3949 = vadd.f32 0.0, %v3948
        %3950 = vmatmul.bf16.gmra.mxu0 %v3850
        %v3951 = vpop.f32.mrf.mxu0
        %v3952 = vadd.f32 0.0, %v3951
        %v3953 = vpop.f32.mrf.mxu0
        %v3954 = vadd.f32 0.0, %v3953
        %3955 = vmatmul.bf16.gmra.mxu0 %v3851
        %v3956 = vpop.f32.mrf.mxu0
        %v3957 = vadd.f32 0.0, %v3956
        %v3958 = vpop.f32.mrf.mxu0
        %v3959 = vadd.f32 0.0, %v3958
        %3960 = vmatmul.bf16.gmra.mxu0 %v3852
        %v3961 = vpop.f32.mrf.mxu0
        %v3962 = vadd.f32 0.0, %v3961
        %v3963 = vpop.f32.mrf.mxu0
        %v3964 = vadd.f32 0.0, %v3963
        %3965 = vmatmul.bf16.gmra.mxu0 %v3853
        %v3966 = vpop.f32.mrf.mxu0
        %v3967 = vadd.f32 0.0, %v3966
        %v3968 = vpop.f32.mrf.mxu0
        %v3969 = vadd.f32 0.0, %v3968
        %3970 = vmatmul.bf16.gmra.mxu0 %v3854
        %v3971 = vpop.f32.mrf.mxu0
        %v3972 = vadd.f32 0.0, %v3971
        %v3973 = vpop.f32.mrf.mxu0
        %v3974 = vadd.f32 0.0, %v3973
        %3975 = vmatmul.bf16.gmra.mxu0 %v3855
        %v3976 = vpop.f32.mrf.mxu0
        %v3977 = vadd.f32 0.0, %v3976
        %v3978 = vpop.f32.mrf.mxu0
        %v3979 = vadd.f32 0.0, %v3978
        %3980 = vmatmul.bf16.gmra.mxu0 %v3856
        %v3981 = vpop.f32.mrf.mxu0
        %v3982 = vadd.f32 0.0, %v3981
        %v3983 = vpop.f32.mrf.mxu0
        %v3984 = vadd.f32 0.0, %v3983
        %3985 = vmatmul.bf16.gmra.mxu0 %v3857
        %v3986 = vpop.f32.mrf.mxu0
        %v3987 = vadd.f32 0.0, %v3986
        %v3988 = vpop.f32.mrf.mxu0
        %v3989 = vadd.f32 0.0, %v3988
        %3990 = vmatmul.bf16.gmra.mxu0 %v3858
        %v3991 = vpop.f32.mrf.mxu0
        %v3992 = vadd.f32 0.0, %v3991
        %v3993 = vpop.f32.mrf.mxu0
        %v3994 = vadd.f32 0.0, %v3993
        %3995 = vmatmul.bf16.gmra.mxu0 %v3859
        %v3996 = vpop.f32.mrf.mxu0
        %v3997 = vadd.f32 0.0, %v3996
        %v3998 = vpop.f32.mrf.mxu0
        %v3999 = vadd.f32 0.0, %v3998
        %4000 = vmatmul.bf16.gmra.mxu0 %v3860
        %v4001 = vpop.f32.mrf.mxu0
        %v4002 = vadd.f32 0.0, %v4001
        %v4003 = vpop.f32.mrf.mxu0
        %v4004 = vadd.f32 0.0, %v4003
        %4005 = vmatmul.bf16.gmra.mxu0 %v3861
        %v4006 = vpop.f32.mrf.mxu0
        %v4007 = vadd.f32 0.0, %v4006
        %v4008 = vpop.f32.mrf.mxu0
        %v4009 = vadd.f32 0.0, %v4008
        %4010 = vmatmul.bf16.gmra.mxu0 %v3862
        %v4011 = vpop.f32.mrf.mxu0
        %v4012 = vadd.f32 0.0, %v4011
        %v4013 = vpop.f32.mrf.mxu0
        %v4014 = vadd.f32 0.0, %v4013
        %4015 = vdwg.mxu0
        %v4016 = vadd.f32 %v3701, %v3937
        %v4017 = vadd.f32 %v3702, %v3939
        %v4018 = vadd.f32 %v3703, %v3942
        %v4019 = vadd.f32 %v3704, %v3944
        %v4020 = vadd.f32 %v3705, %v3947
        %v4021 = vadd.f32 %v3706, %v3949
        %v4022 = vadd.f32 %v3707, %v3952
        %v4023 = vadd.f32 %v3708, %v3954
        %v4024 = vadd.f32 %v3709, %v3957
        %v4025 = vadd.f32 %v3710, %v3959
        %v4026 = vadd.f32 %v3711, %v3962
        %v4027 = vadd.f32 %v3712, %v3964
        %v4028 = vadd.f32 %v3713, %v3967
        %v4029 = vadd.f32 %v3714, %v3969
        %v4030 = vadd.f32 %v3715, %v3972
        %v4031 = vadd.f32 %v3716, %v3974
        %v4032 = vadd.f32 %v3717, %v3977
        %v4033 = vadd.f32 %v3718, %v3979
        %v4034 = vadd.f32 %v3719, %v3982
        %v4035 = vadd.f32 %v3720, %v3984
        %v4036 = vadd.f32 %v3721, %v3987
        %v4037 = vadd.f32 %v3722, %v3989
        %v4038 = vadd.f32 %v3723, %v3992
        %v4039 = vadd.f32 %v3724, %v3994
        %v4040 = vadd.f32 %v3725, %v3997
        %v4041 = vadd.f32 %v3726, %v3999
        %v4042 = vadd.f32 %v3727, %v4002
        %v4043 = vadd.f32 %v3728, %v4004
        %v4044 = vadd.f32 %v3729, %v4007
        %v4045 = vadd.f32 %v3730, %v4009
        %v4046 = vadd.f32 %v3731, %v4012
        %v4047 = vadd.f32 %v3732, %v4014
        %v4048 = vld [vmem:[%s3733] sm:$0xf]
        %v4049 = vld [vmem:[%s3733 + $0x4] sm:$0xf]
        %v4050 = vld [vmem:[%s3733 + $0x8] sm:$0x1]
        %v4051 = vld [vmem:[%s3733 + $0xc] sm:$0xf]
        %v4052 = vld [vmem:[%s3733 + $0x10] sm:$0xf]
        %v4053 = vld [vmem:[%s3733 + $0x14] sm:$0x1]
        %v4054 = vld [vmem:[%s3733 + $0x18] sm:$0xf]
        %v4055 = vld [vmem:[%s3733 + $0x1c] sm:$0xf]
        %v4056 = vld [vmem:[%s3733 + $0x20] sm:$0x1]
        %v4057 = vld [vmem:[%s3733 + $0x24] sm:$0xf]
        %v4058 = vld [vmem:[%s3733 + $0x28] sm:$0xf]
        %v4059 = vld [vmem:[%s3733 + $0x2c] sm:$0x1]
        %v4060 = vld [vmem:[%s3733 + $0x30] sm:$0xf]
        %v4061 = vld [vmem:[%s3733 + $0x34] sm:$0xf]
        %v4062 = vld [vmem:[%s3733 + $0x38] sm:$0x1]
        %v4063 = vld [vmem:[%s3733 + $0x3c] sm:$0xf]
        %v4064 = vld [vmem:[%s3733 + $0x40] sm:$0xf]
        %v4065 = vld [vmem:[%s3733 + $0x44] sm:$0x1]
        %v4066 = vld [vmem:[%s3733 + $0x48] sm:$0xf]
        %v4067 = vld [vmem:[%s3733 + $0x4c] sm:$0xf]
        %v4068 = vld [vmem:[%s3733 + $0x50] sm:$0x1]
        %v4069 = vld [vmem:[%s3733 + $0x54] sm:$0xf]
        %v4070 = vld [vmem:[%s3733 + $0x58] sm:$0xf]
        %v4071 = vld [vmem:[%s3733 + $0x5c] sm:$0x1]
        %v4072 = vld [vmem:[%s3733 + $0x60] sm:$0xf]
        %v4073 = vld [vmem:[%s3733 + $0x64] sm:$0xf]
        %v4074 = vld [vmem:[%s3733 + $0x68] sm:$0x1]
        %v4075 = vld [vmem:[%s3733 + $0x6c] sm:$0xf]
        %v4076 = vld [vmem:[%s3733 + $0x70] sm:$0xf]
        %v4077 = vld [vmem:[%s3733 + $0x74] sm:$0x1]
        %v4078 = vld [vmem:[%s3733 + $0x78] sm:$0xf]
        %v4079 = vld [vmem:[%s3733 + $0x7c] sm:$0xf]
        %v4080 = vld [vmem:[%s3733 + $0x80] sm:$0x1]
        %v4081 = vld [vmem:[%s3733 + $0x84] sm:$0xf]
        %v4082 = vld [vmem:[%s3733 + $0x88] sm:$0xf]
        %v4083 = vld [vmem:[%s3733 + $0x8c] sm:$0x1]
        %v4084 = vld [vmem:[%s3733 + $0x90] sm:$0xf]
        %v4085 = vld [vmem:[%s3733 + $0x94] sm:$0xf]
        %v4086 = vld [vmem:[%s3733 + $0x98] sm:$0x1]
        %v4087 = vld [vmem:[%s3733 + $0x9c] sm:$0xf]
        %v4088 = vld [vmem:[%s3733 + $0xa0] sm:$0xf]
        %v4089 = vld [vmem:[%s3733 + $0xa4] sm:$0x1]
        %v4090 = vld [vmem:[%s3733 + $0xa8] sm:$0xf]
        %v4091 = vld [vmem:[%s3733 + $0xac] sm:$0xf]
        %v4092 = vld [vmem:[%s3733 + $0xb0] sm:$0x1]
        %v4093 = vld [vmem:[%s3733 + $0xb4] sm:$0xf]
        %v4094 = vld [vmem:[%s3733 + $0xb8] sm:$0xf]
        %v4095 = vld [vmem:[%s3733 + $0xbc] sm:$0x1]
        %v4097 = vshrl.u32 %v4048, 16
        %v4099 = vrot.slane %v4097, 4
        %v4100 = vshll.u32 %v4048, 16
        %v4102 = vrot.slane %v4100, 5
        %v4103 = vor.u32 %v4099, %v4102
        %v4104 = vrot.slane %v4103, 4
        %v4106 = vshll.u32 %v4049, 16
        %v4108 = vrot.slane %v4106, 5
        %v4109 = vsel %vm1062, %v4104, %v4108
        %v4110 = vshrl.u32 %v4049, 16
        %v4112 = vrot.slane %v4110, 4
        %v4113 = vor.u32 %v4112, %v4108
        %v4114 = vrot.slane %v4113, 4
        %v4116 = vshll.u32 %v4050, 16
        %v4118 = vrot.slane %v4116, 5
        %v4119 = vsel %vm1062, %v4114, %v4118
        %v4121 = vshrl.u32 %v4051, 16
        %v4123 = vrot.slane %v4121, 4
        %v4124 = vshll.u32 %v4051, 16
        %v4126 = vrot.slane %v4124, 5
        %v4127 = vor.u32 %v4123, %v4126
        %v4128 = vrot.slane %v4127, 4
        %v4130 = vshll.u32 %v4052, 16
        %v4132 = vrot.slane %v4130, 5
        %v4133 = vsel %vm1062, %v4128, %v4132
        %v4134 = vshrl.u32 %v4052, 16
        %v4136 = vrot.slane %v4134, 4
        %v4137 = vor.u32 %v4136, %v4132
        %v4138 = vrot.slane %v4137, 4
        %v4140 = vshll.u32 %v4053, 16
        %v4142 = vrot.slane %v4140, 5
        %v4143 = vsel %vm1062, %v4138, %v4142
        %v4145 = vshrl.u32 %v4054, 16
        %v4147 = vrot.slane %v4145, 4
        %v4148 = vshll.u32 %v4054, 16
        %v4150 = vrot.slane %v4148, 5
        %v4151 = vor.u32 %v4147, %v4150
        %v4152 = vrot.slane %v4151, 4
        %v4154 = vshll.u32 %v4055, 16
        %v4156 = vrot.slane %v4154, 5
        %v4157 = vsel %vm1062, %v4152, %v4156
        %v4158 = vshrl.u32 %v4055, 16
        %v4160 = vrot.slane %v4158, 4
        %v4161 = vor.u32 %v4160, %v4156
        %v4162 = vrot.slane %v4161, 4
        %v4164 = vshll.u32 %v4056, 16
        %v4166 = vrot.slane %v4164, 5
        %v4167 = vsel %vm1062, %v4162, %v4166
        %v4169 = vshrl.u32 %v4057, 16
        %v4171 = vrot.slane %v4169, 4
        %v4172 = vshll.u32 %v4057, 16
        %v4174 = vrot.slane %v4172, 5
        %v4175 = vor.u32 %v4171, %v4174
        %v4176 = vrot.slane %v4175, 4
        %v4178 = vshll.u32 %v4058, 16
        %v4180 = vrot.slane %v4178, 5
        %v4181 = vsel %vm1062, %v4176, %v4180
        %v4182 = vshrl.u32 %v4058, 16
        %v4184 = vrot.slane %v4182, 4
        %v4185 = vor.u32 %v4184, %v4180
        %v4186 = vrot.slane %v4185, 4
        %v4188 = vshll.u32 %v4059, 16
        %v4190 = vrot.slane %v4188, 5
        %v4191 = vsel %vm1062, %v4186, %v4190
        %v4193 = vshrl.u32 %v4060, 16
        %v4195 = vrot.slane %v4193, 4
        %v4196 = vshll.u32 %v4060, 16
        %v4198 = vrot.slane %v4196, 5
        %v4199 = vor.u32 %v4195, %v4198
        %v4200 = vrot.slane %v4199, 4
        %v4202 = vshll.u32 %v4061, 16
        %v4204 = vrot.slane %v4202, 5
        %v4205 = vsel %vm1062, %v4200, %v4204
        %v4206 = vshrl.u32 %v4061, 16
        %v4208 = vrot.slane %v4206, 4
        %v4209 = vor.u32 %v4208, %v4204
        %v4210 = vrot.slane %v4209, 4
        %v4212 = vshll.u32 %v4062, 16
        %v4214 = vrot.slane %v4212, 5
        %v4215 = vsel %vm1062, %v4210, %v4214
        %v4217 = vshrl.u32 %v4063, 16
        %v4219 = vrot.slane %v4217, 4
        %v4220 = vshll.u32 %v4063, 16
        %v4222 = vrot.slane %v4220, 5
        %v4223 = vor.u32 %v4219, %v4222
        %v4224 = vrot.slane %v4223, 4
        %v4226 = vshll.u32 %v4064, 16
        %v4228 = vrot.slane %v4226, 5
        %v4229 = vsel %vm1062, %v4224, %v4228
        %v4230 = vshrl.u32 %v4064, 16
        %v4232 = vrot.slane %v4230, 4
        %v4233 = vor.u32 %v4232, %v4228
        %v4234 = vrot.slane %v4233, 4
        %v4236 = vshll.u32 %v4065, 16
        %v4238 = vrot.slane %v4236, 5
        %v4239 = vsel %vm1062, %v4234, %v4238
        %v4241 = vshrl.u32 %v4066, 16
        %v4243 = vrot.slane %v4241, 4
        %v4244 = vshll.u32 %v4066, 16
        %v4246 = vrot.slane %v4244, 5
        %v4247 = vor.u32 %v4243, %v4246
        %v4248 = vrot.slane %v4247, 4
        %v4250 = vshll.u32 %v4067, 16
        %v4252 = vrot.slane %v4250, 5
        %v4253 = vsel %vm1062, %v4248, %v4252
        %v4254 = vshrl.u32 %v4067, 16
        %v4256 = vrot.slane %v4254, 4
        %v4257 = vor.u32 %v4256, %v4252
        %v4258 = vrot.slane %v4257, 4
        %v4260 = vshll.u32 %v4068, 16
        %v4262 = vrot.slane %v4260, 5
        %v4263 = vsel %vm1062, %v4258, %v4262
        %v4265 = vshrl.u32 %v4069, 16
        %v4267 = vrot.slane %v4265, 4
        %v4268 = vshll.u32 %v4069, 16
        %v4270 = vrot.slane %v4268, 5
        %v4271 = vor.u32 %v4267, %v4270
        %v4272 = vrot.slane %v4271, 4
        %v4274 = vshll.u32 %v4070, 16
        %v4276 = vrot.slane %v4274, 5
        %v4277 = vsel %vm1062, %v4272, %v4276
        %v4278 = vshrl.u32 %v4070, 16
        %v4280 = vrot.slane %v4278, 4
        %v4281 = vor.u32 %v4280, %v4276
        %v4282 = vrot.slane %v4281, 4
        %v4284 = vshll.u32 %v4071, 16
        %v4286 = vrot.slane %v4284, 5
        %v4287 = vsel %vm1062, %v4282, %v4286
        %v4289 = vshrl.u32 %v4072, 16
        %v4291 = vrot.slane %v4289, 4
        %v4292 = vshll.u32 %v4072, 16
        %v4294 = vrot.slane %v4292, 5
        %v4295 = vor.u32 %v4291, %v4294
        %v4296 = vrot.slane %v4295, 4
        %v4298 = vshll.u32 %v4073, 16
        %v4300 = vrot.slane %v4298, 5
        %v4301 = vsel %vm1062, %v4296, %v4300
        %v4302 = vshrl.u32 %v4073, 16
        %v4304 = vrot.slane %v4302, 4
        %v4305 = vor.u32 %v4304, %v4300
        %v4306 = vrot.slane %v4305, 4
        %v4308 = vshll.u32 %v4074, 16
        %v4310 = vrot.slane %v4308, 5
        %v4311 = vsel %vm1062, %v4306, %v4310
        %v4313 = vshrl.u32 %v4075, 16
        %v4315 = vrot.slane %v4313, 4
        %v4316 = vshll.u32 %v4075, 16
        %v4318 = vrot.slane %v4316, 5
        %v4319 = vor.u32 %v4315, %v4318
        %v4320 = vrot.slane %v4319, 4
        %v4322 = vshll.u32 %v4076, 16
        %v4324 = vrot.slane %v4322, 5
        %v4325 = vsel %vm1062, %v4320, %v4324
        %v4326 = vshrl.u32 %v4076, 16
        %v4328 = vrot.slane %v4326, 4
        %v4329 = vor.u32 %v4328, %v4324
        %v4330 = vrot.slane %v4329, 4
        %v4332 = vshll.u32 %v4077, 16
        %v4334 = vrot.slane %v4332, 5
        %v4335 = vsel %vm1062, %v4330, %v4334
        %v4337 = vshrl.u32 %v4078, 16
        %v4339 = vrot.slane %v4337, 4
        %v4340 = vshll.u32 %v4078, 16
        %v4342 = vrot.slane %v4340, 5
        %v4343 = vor.u32 %v4339, %v4342
        %v4344 = vrot.slane %v4343, 4
        %v4346 = vshll.u32 %v4079, 16
        %v4348 = vrot.slane %v4346, 5
        %v4349 = vsel %vm1062, %v4344, %v4348
        %v4350 = vshrl.u32 %v4079, 16
        %v4352 = vrot.slane %v4350, 4
        %v4353 = vor.u32 %v4352, %v4348
        %v4354 = vrot.slane %v4353, 4
        %v4356 = vshll.u32 %v4080, 16
        %v4358 = vrot.slane %v4356, 5
        %v4359 = vsel %vm1062, %v4354, %v4358
        %v4361 = vshrl.u32 %v4081, 16
        %v4363 = vrot.slane %v4361, 4
        %v4364 = vshll.u32 %v4081, 16
        %v4366 = vrot.slane %v4364, 5
        %v4367 = vor.u32 %v4363, %v4366
        %v4368 = vrot.slane %v4367, 4
        %v4370 = vshll.u32 %v4082, 16
        %v4372 = vrot.slane %v4370, 5
        %v4373 = vsel %vm1062, %v4368, %v4372
        %v4374 = vshrl.u32 %v4082, 16
        %v4376 = vrot.slane %v4374, 4
        %v4377 = vor.u32 %v4376, %v4372
        %v4378 = vrot.slane %v4377, 4
        %v4380 = vshll.u32 %v4083, 16
        %v4382 = vrot.slane %v4380, 5
        %v4383 = vsel %vm1062, %v4378, %v4382
        %v4385 = vshrl.u32 %v4084, 16
        %v4387 = vrot.slane %v4385, 4
        %v4388 = vshll.u32 %v4084, 16
        %v4390 = vrot.slane %v4388, 5
        %v4391 = vor.u32 %v4387, %v4390
        %v4392 = vrot.slane %v4391, 4
        %v4394 = vshll.u32 %v4085, 16
        %v4396 = vrot.slane %v4394, 5
        %v4397 = vsel %vm1062, %v4392, %v4396
        %v4398 = vshrl.u32 %v4085, 16
        %v4400 = vrot.slane %v4398, 4
        %v4401 = vor.u32 %v4400, %v4396
        %v4402 = vrot.slane %v4401, 4
        %v4404 = vshll.u32 %v4086, 16
        %v4406 = vrot.slane %v4404, 5
        %v4407 = vsel %vm1062, %v4402, %v4406
        %v4409 = vshrl.u32 %v4087, 16
        %v4411 = vrot.slane %v4409, 4
        %v4412 = vshll.u32 %v4087, 16
        %v4414 = vrot.slane %v4412, 5
        %v4415 = vor.u32 %v4411, %v4414
        %v4416 = vrot.slane %v4415, 4
        %v4418 = vshll.u32 %v4088, 16
        %v4420 = vrot.slane %v4418, 5
        %v4421 = vsel %vm1062, %v4416, %v4420
        %v4422 = vshrl.u32 %v4088, 16
        %v4424 = vrot.slane %v4422, 4
        %v4425 = vor.u32 %v4424, %v4420
        %v4426 = vrot.slane %v4425, 4
        %v4428 = vshll.u32 %v4089, 16
        %v4430 = vrot.slane %v4428, 5
        %v4431 = vsel %vm1062, %v4426, %v4430
        %v4433 = vshrl.u32 %v4090, 16
        %v4435 = vrot.slane %v4433, 4
        %v4436 = vshll.u32 %v4090, 16
        %v4438 = vrot.slane %v4436, 5
        %v4439 = vor.u32 %v4435, %v4438
        %v4440 = vrot.slane %v4439, 4
        %v4442 = vshll.u32 %v4091, 16
        %v4444 = vrot.slane %v4442, 5
        %v4445 = vsel %vm1062, %v4440, %v4444
        %v4446 = vshrl.u32 %v4091, 16
        %v4448 = vrot.slane %v4446, 4
        %v4449 = vor.u32 %v4448, %v4444
        %v4450 = vrot.slane %v4449, 4
        %v4452 = vshll.u32 %v4092, 16
        %v4454 = vrot.slane %v4452, 5
        %v4455 = vsel %vm1062, %v4450, %v4454
        %v4457 = vshrl.u32 %v4093, 16
        %v4459 = vrot.slane %v4457, 4
        %v4460 = vshll.u32 %v4093, 16
        %v4462 = vrot.slane %v4460, 5
        %v4463 = vor.u32 %v4459, %v4462
        %v4464 = vrot.slane %v4463, 4
        %v4466 = vshll.u32 %v4094, 16
        %v4468 = vrot.slane %v4466, 5
        %v4469 = vsel %vm1062, %v4464, %v4468
        %v4470 = vshrl.u32 %v4094, 16
        %v4472 = vrot.slane %v4470, 4
        %v4473 = vor.u32 %v4472, %v4468
        %v4474 = vrot.slane %v4473, 4
        %v4476 = vshll.u32 %v4095, 16
        %v4478 = vrot.slane %v4476, 5
        %v4479 = vsel %vm1062, %v4474, %v4478
        %s4480 = scalar_lea.vmem [#allocation6], 448
        %v4481 = vld [vmem:[%s4480] sm:$0xf]
        %v4482 = vld [vmem:[%s4480 + $0x4] sm:$0xf]
        %v4483 = vld [vmem:[%s4480 + $0x8] sm:$0xf]
        %v4484 = vld [vmem:[%s4480 + $0xc] sm:$0xf]
        %v4485 = vld [vmem:[%s4480 + $0x10] sm:$0xf]
        %v4486 = vld [vmem:[%s4480 + $0x14] sm:$0xf]
        %v4487 = vld [vmem:[%s4480 + $0x18] sm:$0xf]
        %v4488 = vld [vmem:[%s4480 + $0x1c] sm:$0xf]
        %v4489 = vld [vmem:[%s4480 + $0x20] sm:$0xf]
        %v4490 = vld [vmem:[%s4480 + $0x24] sm:$0xf]
        %v4491 = vld [vmem:[%s4480 + $0x28] sm:$0xf]
        %v4492 = vld [vmem:[%s4480 + $0x2c] sm:$0xf]
        %v4493 = vld [vmem:[%s4480 + $0x30] sm:$0xf]
        %v4494 = vld [vmem:[%s4480 + $0x34] sm:$0xf]
        %v4495 = vld [vmem:[%s4480 + $0x38] sm:$0xf]
        %v4496 = vld [vmem:[%s4480 + $0x3c] sm:$0xf]
        %v4497 = vunpack.c.l.b16 %v4109
        %v4498 = vunpack.c.l.b16 %v4119
        %v4499 = vunpack.c.l.b16 %v4133
        %v4500 = vunpack.c.l.b16 %v4143
        %v4501 = vunpack.c.l.b16 %v4157
        %v4502 = vunpack.c.l.b16 %v4167
        %v4503 = vunpack.c.l.b16 %v4181
        %v4504 = vunpack.c.l.b16 %v4191
        %v4505 = vunpack.c.l.b16 %v4205
        %v4506 = vunpack.c.l.b16 %v4215
        %v4507 = vunpack.c.l.b16 %v4229
        %v4508 = vunpack.c.l.b16 %v4239
        %v4509 = vunpack.c.l.b16 %v4253
        %v4510 = vunpack.c.l.b16 %v4263
        %v4511 = vunpack.c.l.b16 %v4277
        %v4512 = vunpack.c.l.b16 %v4287
        %v4513 = vunpack.c.l.b16 %v4301
        %v4514 = vunpack.c.l.b16 %v4311
        %v4515 = vunpack.c.l.b16 %v4325
        %v4516 = vunpack.c.l.b16 %v4335
        %v4517 = vunpack.c.l.b16 %v4349
        %v4518 = vunpack.c.l.b16 %v4359
        %v4519 = vunpack.c.l.b16 %v4373
        %v4520 = vunpack.c.l.b16 %v4383
        %v4521 = vunpack.c.l.b16 %v4397
        %v4522 = vunpack.c.l.b16 %v4407
        %v4523 = vunpack.c.l.b16 %v4421
        %v4524 = vunpack.c.l.b16 %v4431
        %v4525 = vunpack.c.l.b16 %v4445
        %v4526 = vunpack.c.l.b16 %v4455
        %v4527 = vunpack.c.l.b16 %v4469
        %v4528 = vunpack.c.l.b16 %v4479
        %v4529 = vpack.c.b16 %v4498, %v4497
        %v4530 = vpack.c.b16 %v4500, %v4499
        %v4531 = vpack.c.b16 %v4502, %v4501
        %v4532 = vpack.c.b16 %v4504, %v4503
        %v4533 = vpack.c.b16 %v4506, %v4505
        %v4534 = vpack.c.b16 %v4508, %v4507
        %v4535 = vpack.c.b16 %v4510, %v4509
        %v4536 = vpack.c.b16 %v4512, %v4511
        %v4537 = vpack.c.b16 %v4514, %v4513
        %v4538 = vpack.c.b16 %v4516, %v4515
        %v4539 = vpack.c.b16 %v4518, %v4517
        %v4540 = vpack.c.b16 %v4520, %v4519
        %v4541 = vpack.c.b16 %v4522, %v4521
        %v4542 = vpack.c.b16 %v4524, %v4523
        %v4543 = vpack.c.b16 %v4526, %v4525
        %v4544 = vpack.c.b16 %v4528, %v4527
        %v4577 = vunpack.c.l.b16 %v4481
        %v4578 = vunpack.c.l.b16 %v4482
        %v4579 = vunpack.c.l.b16 %v4483
        %v4580 = vunpack.c.l.b16 %v4484
        %v4581 = vunpack.c.l.b16 %v4485
        %v4582 = vunpack.c.l.b16 %v4486
        %v4583 = vunpack.c.l.b16 %v4487
        %v4584 = vunpack.c.l.b16 %v4488
        %v4585 = vunpack.c.l.b16 %v4489
        %v4586 = vunpack.c.l.b16 %v4490
        %v4587 = vunpack.c.l.b16 %v4491
        %v4588 = vunpack.c.l.b16 %v4492
        %v4589 = vunpack.c.l.b16 %v4493
        %v4590 = vunpack.c.l.b16 %v4494
        %v4591 = vunpack.c.l.b16 %v4495
        %v4592 = vunpack.c.l.b16 %v4496
        %v4593 = vpack.c.b16 %v4578, %v4577
        %v4594 = vpack.c.b16 %v4580, %v4579
        %v4595 = vpack.c.b16 %v4582, %v4581
        %v4596 = vpack.c.b16 %v4584, %v4583
        %v4597 = vpack.c.b16 %v4586, %v4585
        %v4598 = vpack.c.b16 %v4588, %v4587
        %v4599 = vpack.c.b16 %v4590, %v4589
        %v4600 = vpack.c.b16 %v4592, %v4591
        %4609 = vmatpush.bf16.msra.mxu0 %v4600
        %4610 = vmatpush.bf16.msra.mxu0 %v4599
        %4611 = vmatpush.bf16.msra.mxu0 %v4598
        %4612 = vmatpush.bf16.msra.mxu0 %v4597
        %4613 = vmatpush.bf16.msra.mxu0 %v4596
        %4614 = vmatpush.bf16.msra.mxu0 %v4595
        %4615 = vmatpush.bf16.msra.mxu0 %v4594
        %4616 = vmatpush.bf16.msra.mxu0 %v4593
        %4617 = vmatmul.bf16.gmra.mxu0 %v4529
        %v4618 = vpop.f32.mrf.mxu0
        %v4619 = vadd.f32 0.0, %v4618
        %v4620 = vpop.f32.mrf.mxu0
        %v4621 = vadd.f32 0.0, %v4620
        %4622 = vmatmul.bf16.gmra.mxu0 %v4530
        %v4623 = vpop.f32.mrf.mxu0
        %v4624 = vadd.f32 0.0, %v4623
        %v4625 = vpop.f32.mrf.mxu0
        %v4626 = vadd.f32 0.0, %v4625
        %4627 = vmatmul.bf16.gmra.mxu0 %v4531
        %v4628 = vpop.f32.mrf.mxu0
        %v4629 = vadd.f32 0.0, %v4628
        %v4630 = vpop.f32.mrf.mxu0
        %v4631 = vadd.f32 0.0, %v4630
        %4632 = vmatmul.bf16.gmra.mxu0 %v4532
        %v4633 = vpop.f32.mrf.mxu0
        %v4634 = vadd.f32 0.0, %v4633
        %v4635 = vpop.f32.mrf.mxu0
        %v4636 = vadd.f32 0.0, %v4635
        %4637 = vmatmul.bf16.gmra.mxu0 %v4533
        %v4638 = vpop.f32.mrf.mxu0
        %v4639 = vadd.f32 0.0, %v4638
        %v4640 = vpop.f32.mrf.mxu0
        %v4641 = vadd.f32 0.0, %v4640
        %4642 = vmatmul.bf16.gmra.mxu0 %v4534
        %v4643 = vpop.f32.mrf.mxu0
        %v4644 = vadd.f32 0.0, %v4643
        %v4645 = vpop.f32.mrf.mxu0
        %v4646 = vadd.f32 0.0, %v4645
        %4647 = vmatmul.bf16.gmra.mxu0 %v4535
        %v4648 = vpop.f32.mrf.mxu0
        %v4649 = vadd.f32 0.0, %v4648
        %v4650 = vpop.f32.mrf.mxu0
        %v4651 = vadd.f32 0.0, %v4650
        %4652 = vmatmul.bf16.gmra.mxu0 %v4536
        %v4653 = vpop.f32.mrf.mxu0
        %v4654 = vadd.f32 0.0, %v4653
        %v4655 = vpop.f32.mrf.mxu0
        %v4656 = vadd.f32 0.0, %v4655
        %4657 = vmatmul.bf16.gmra.mxu0 %v4537
        %v4658 = vpop.f32.mrf.mxu0
        %v4659 = vadd.f32 0.0, %v4658
        %v4660 = vpop.f32.mrf.mxu0
        %v4661 = vadd.f32 0.0, %v4660
        %4662 = vmatmul.bf16.gmra.mxu0 %v4538
        %v4663 = vpop.f32.mrf.mxu0
        %v4664 = vadd.f32 0.0, %v4663
        %v4665 = vpop.f32.mrf.mxu0
        %v4666 = vadd.f32 0.0, %v4665
        %4667 = vmatmul.bf16.gmra.mxu0 %v4539
        %v4668 = vpop.f32.mrf.mxu0
        %v4669 = vadd.f32 0.0, %v4668
        %v4670 = vpop.f32.mrf.mxu0
        %v4671 = vadd.f32 0.0, %v4670
        %4672 = vmatmul.bf16.gmra.mxu0 %v4540
        %v4673 = vpop.f32.mrf.mxu0
        %v4674 = vadd.f32 0.0, %v4673
        %v4675 = vpop.f32.mrf.mxu0
        %v4676 = vadd.f32 0.0, %v4675
        %4677 = vmatmul.bf16.gmra.mxu0 %v4541
        %v4678 = vpop.f32.mrf.mxu0
        %v4679 = vadd.f32 0.0, %v4678
        %v4680 = vpop.f32.mrf.mxu0
        %v4681 = vadd.f32 0.0, %v4680
        %4682 = vmatmul.bf16.gmra.mxu0 %v4542
        %v4683 = vpop.f32.mrf.mxu0
        %v4684 = vadd.f32 0.0, %v4683
        %v4685 = vpop.f32.mrf.mxu0
        %v4686 = vadd.f32 0.0, %v4685
        %4687 = vmatmul.bf16.gmra.mxu0 %v4543
        %v4688 = vpop.f32.mrf.mxu0
        %v4689 = vadd.f32 0.0, %v4688
        %v4690 = vpop.f32.mrf.mxu0
        %v4691 = vadd.f32 0.0, %v4690
        %4692 = vmatmul.bf16.gmra.mxu0 %v4544
        %v4693 = vpop.f32.mrf.mxu0
        %v4694 = vadd.f32 0.0, %v4693
        %v4695 = vpop.f32.mrf.mxu0
        %v4696 = vadd.f32 0.0, %v4695
        %4697 = vdwg.mxu0
        %v4698 = vadd.f32 %v4016, %v4619
        %v4699 = vadd.f32 %v4017, %v4621
        %v4700 = vadd.f32 %v4018, %v4624
        %v4701 = vadd.f32 %v4019, %v4626
        %v4702 = vadd.f32 %v4020, %v4629
        %v4703 = vadd.f32 %v4021, %v4631
        %v4704 = vadd.f32 %v4022, %v4634
        %v4705 = vadd.f32 %v4023, %v4636
        %v4706 = vadd.f32 %v4024, %v4639
        %v4707 = vadd.f32 %v4025, %v4641
        %v4708 = vadd.f32 %v4026, %v4644
        %v4709 = vadd.f32 %v4027, %v4646
        %v4710 = vadd.f32 %v4028, %v4649
        %v4711 = vadd.f32 %v4029, %v4651
        %v4712 = vadd.f32 %v4030, %v4654
        %v4713 = vadd.f32 %v4031, %v4656
        %v4714 = vadd.f32 %v4032, %v4659
        %v4715 = vadd.f32 %v4033, %v4661
        %v4716 = vadd.f32 %v4034, %v4664
        %v4717 = vadd.f32 %v4035, %v4666
        %v4718 = vadd.f32 %v4036, %v4669
        %v4719 = vadd.f32 %v4037, %v4671
        %v4720 = vadd.f32 %v4038, %v4674
        %v4721 = vadd.f32 %v4039, %v4676
        %v4722 = vadd.f32 %v4040, %v4679
        %v4723 = vadd.f32 %v4041, %v4681
        %v4724 = vadd.f32 %v4042, %v4684
        %v4725 = vadd.f32 %v4043, %v4686
        %v4726 = vadd.f32 %v4044, %v4689
        %v4727 = vadd.f32 %v4045, %v4691
        %v4728 = vadd.f32 %v4046, %v4694
        %v4729 = vadd.f32 %v4047, %v4696
        %v4730 = vld [vmem:[%s3733] sm:$0xe]
        %v4731 = vld [vmem:[%s3733 + $0xc] sm:$0xe]
        %v4732 = vld [vmem:[%s3733 + $0x18] sm:$0xe]
        %v4733 = vld [vmem:[%s3733 + $0x24] sm:$0xe]
        %v4734 = vld [vmem:[%s3733 + $0x30] sm:$0xe]
        %v4735 = vld [vmem:[%s3733 + $0x3c] sm:$0xe]
        %v4736 = vld [vmem:[%s3733 + $0x48] sm:$0xe]
        %v4737 = vld [vmem:[%s3733 + $0x54] sm:$0xe]
        %v4738 = vld [vmem:[%s3733 + $0x60] sm:$0xe]
        %v4739 = vld [vmem:[%s3733 + $0x6c] sm:$0xe]
        %v4740 = vld [vmem:[%s3733 + $0x78] sm:$0xe]
        %v4741 = vld [vmem:[%s3733 + $0x84] sm:$0xe]
        %v4742 = vld [vmem:[%s3733 + $0x90] sm:$0xe]
        %v4743 = vld [vmem:[%s3733 + $0x9c] sm:$0xe]
        %v4744 = vld [vmem:[%s3733 + $0xa8] sm:$0xe]
        %v4745 = vld [vmem:[%s3733 + $0xb4] sm:$0xe]
        %v4794 = vrot.slane %v4730, 5
        %v4795 = vrot.slane %v4794, 4
        %v4796 = vrot.slane %v4049, 5
        %v4797 = vsel %vm1948, %v4795, %v4796
        %v4798 = vrot.slane %v4796, 4
        %v4799 = vrot.slane %v4050, 5
        %v4800 = vsel %vm1948, %v4798, %v4799
        %v4801 = vrot.slane %v4731, 5
        %v4802 = vrot.slane %v4801, 4
        %v4803 = vrot.slane %v4052, 5
        %v4804 = vsel %vm1948, %v4802, %v4803
        %v4805 = vrot.slane %v4803, 4
        %v4806 = vrot.slane %v4053, 5
        %v4807 = vsel %vm1948, %v4805, %v4806
        %v4808 = vrot.slane %v4732, 5
        %v4809 = vrot.slane %v4808, 4
        %v4810 = vrot.slane %v4055, 5
        %v4811 = vsel %vm1948, %v4809, %v4810
        %v4812 = vrot.slane %v4810, 4
        %v4813 = vrot.slane %v4056, 5
        %v4814 = vsel %vm1948, %v4812, %v4813
        %v4815 = vrot.slane %v4733, 5
        %v4816 = vrot.slane %v4815, 4
        %v4817 = vrot.slane %v4058, 5
        %v4818 = vsel %vm1948, %v4816, %v4817
        %v4819 = vrot.slane %v4817, 4
        %v4820 = vrot.slane %v4059, 5
        %v4821 = vsel %vm1948, %v4819, %v4820
        %v4822 = vrot.slane %v4734, 5
        %v4823 = vrot.slane %v4822, 4
        %v4824 = vrot.slane %v4061, 5
        %v4825 = vsel %vm1948, %v4823, %v4824
        %v4826 = vrot.slane %v4824, 4
        %v4827 = vrot.slane %v4062, 5
        %v4828 = vsel %vm1948, %v4826, %v4827
        %v4829 = vrot.slane %v4735, 5
        %v4830 = vrot.slane %v4829, 4
        %v4831 = vrot.slane %v4064, 5
        %v4832 = vsel %vm1948, %v4830, %v4831
        %v4833 = vrot.slane %v4831, 4
        %v4834 = vrot.slane %v4065, 5
        %v4835 = vsel %vm1948, %v4833, %v4834
        %v4836 = vrot.slane %v4736, 5
        %v4837 = vrot.slane %v4836, 4
        %v4838 = vrot.slane %v4067, 5
        %v4839 = vsel %vm1948, %v4837, %v4838
        %v4840 = vrot.slane %v4838, 4
        %v4841 = vrot.slane %v4068, 5
        %v4842 = vsel %vm1948, %v4840, %v4841
        %v4843 = vrot.slane %v4737, 5
        %v4844 = vrot.slane %v4843, 4
        %v4845 = vrot.slane %v4070, 5
        %v4846 = vsel %vm1948, %v4844, %v4845
        %v4847 = vrot.slane %v4845, 4
        %v4848 = vrot.slane %v4071, 5
        %v4849 = vsel %vm1948, %v4847, %v4848
        %v4850 = vrot.slane %v4738, 5
        %v4851 = vrot.slane %v4850, 4
        %v4852 = vrot.slane %v4073, 5
        %v4853 = vsel %vm1948, %v4851, %v4852
        %v4854 = vrot.slane %v4852, 4
        %v4855 = vrot.slane %v4074, 5
        %v4856 = vsel %vm1948, %v4854, %v4855
        %v4857 = vrot.slane %v4739, 5
        %v4858 = vrot.slane %v4857, 4
        %v4859 = vrot.slane %v4076, 5
        %v4860 = vsel %vm1948, %v4858, %v4859
        %v4861 = vrot.slane %v4859, 4
        %v4862 = vrot.slane %v4077, 5
        %v4863 = vsel %vm1948, %v4861, %v4862
        %v4864 = vrot.slane %v4740, 5
        %v4865 = vrot.slane %v4864, 4
        %v4866 = vrot.slane %v4079, 5
        %v4867 = vsel %vm1948, %v4865, %v4866
        %v4868 = vrot.slane %v4866, 4
        %v4869 = vrot.slane %v4080, 5
        %v4870 = vsel %vm1948, %v4868, %v4869
        %v4871 = vrot.slane %v4741, 5
        %v4872 = vrot.slane %v4871, 4
        %v4873 = vrot.slane %v4082, 5
        %v4874 = vsel %vm1948, %v4872, %v4873
        %v4875 = vrot.slane %v4873, 4
        %v4876 = vrot.slane %v4083, 5
        %v4877 = vsel %vm1948, %v4875, %v4876
        %v4878 = vrot.slane %v4742, 5
        %v4879 = vrot.slane %v4878, 4
        %v4880 = vrot.slane %v4085, 5
        %v4881 = vsel %vm1948, %v4879, %v4880
        %v4882 = vrot.slane %v4880, 4
        %v4883 = vrot.slane %v4086, 5
        %v4884 = vsel %vm1948, %v4882, %v4883
        %v4885 = vrot.slane %v4743, 5
        %v4886 = vrot.slane %v4885, 4
        %v4887 = vrot.slane %v4088, 5
        %v4888 = vsel %vm1948, %v4886, %v4887
        %v4889 = vrot.slane %v4887, 4
        %v4890 = vrot.slane %v4089, 5
        %v4891 = vsel %vm1948, %v4889, %v4890
        %v4892 = vrot.slane %v4744, 5
        %v4893 = vrot.slane %v4892, 4
        %v4894 = vrot.slane %v4091, 5
        %v4895 = vsel %vm1948, %v4893, %v4894
        %v4896 = vrot.slane %v4894, 4
        %v4897 = vrot.slane %v4092, 5
        %v4898 = vsel %vm1948, %v4896, %v4897
        %v4899 = vrot.slane %v4745, 5
        %v4900 = vrot.slane %v4899, 4
        %v4901 = vrot.slane %v4094, 5
        %v4902 = vsel %vm1948, %v4900, %v4901
        %v4903 = vrot.slane %v4901, 4
        %v4904 = vrot.slane %v4095, 5
        %v4905 = vsel %vm1948, %v4903, %v4904
        %s4906 = scalar_lea.vmem [#allocation6], 512
        %v4907 = vld [vmem:[%s4906] sm:$0xf]
        %v4908 = vld [vmem:[%s4906 + $0x4] sm:$0xf]
        %v4909 = vld [vmem:[%s4906 + $0x8] sm:$0xf]
        %v4910 = vld [vmem:[%s4906 + $0xc] sm:$0xf]
        %v4911 = vld [vmem:[%s4906 + $0x10] sm:$0xf]
        %v4912 = vld [vmem:[%s4906 + $0x14] sm:$0xf]
        %v4913 = vld [vmem:[%s4906 + $0x18] sm:$0xf]
        %v4914 = vld [vmem:[%s4906 + $0x1c] sm:$0xf]
        %v4915 = vld [vmem:[%s4906 + $0x20] sm:$0xf]
        %v4916 = vld [vmem:[%s4906 + $0x24] sm:$0xf]
        %v4917 = vld [vmem:[%s4906 + $0x28] sm:$0xf]
        %v4918 = vld [vmem:[%s4906 + $0x2c] sm:$0xf]
        %v4919 = vld [vmem:[%s4906 + $0x30] sm:$0xf]
        %v4920 = vld [vmem:[%s4906 + $0x34] sm:$0xf]
        %v4921 = vld [vmem:[%s4906 + $0x38] sm:$0xf]
        %v4922 = vld [vmem:[%s4906 + $0x3c] sm:$0xf]
        %v4923 = vunpack.c.l.b16 %v4797
        %v4924 = vunpack.c.l.b16 %v4800
        %v4925 = vunpack.c.l.b16 %v4804
        %v4926 = vunpack.c.l.b16 %v4807
        %v4927 = vunpack.c.l.b16 %v4811
        %v4928 = vunpack.c.l.b16 %v4814
        %v4929 = vunpack.c.l.b16 %v4818
        %v4930 = vunpack.c.l.b16 %v4821
        %v4931 = vunpack.c.l.b16 %v4825
        %v4932 = vunpack.c.l.b16 %v4828
        %v4933 = vunpack.c.l.b16 %v4832
        %v4934 = vunpack.c.l.b16 %v4835
        %v4935 = vunpack.c.l.b16 %v4839
        %v4936 = vunpack.c.l.b16 %v4842
        %v4937 = vunpack.c.l.b16 %v4846
        %v4938 = vunpack.c.l.b16 %v4849
        %v4939 = vunpack.c.l.b16 %v4853
        %v4940 = vunpack.c.l.b16 %v4856
        %v4941 = vunpack.c.l.b16 %v4860
        %v4942 = vunpack.c.l.b16 %v4863
        %v4943 = vunpack.c.l.b16 %v4867
        %v4944 = vunpack.c.l.b16 %v4870
        %v4945 = vunpack.c.l.b16 %v4874
        %v4946 = vunpack.c.l.b16 %v4877
        %v4947 = vunpack.c.l.b16 %v4881
        %v4948 = vunpack.c.l.b16 %v4884
        %v4949 = vunpack.c.l.b16 %v4888
        %v4950 = vunpack.c.l.b16 %v4891
        %v4951 = vunpack.c.l.b16 %v4895
        %v4952 = vunpack.c.l.b16 %v4898
        %v4953 = vunpack.c.l.b16 %v4902
        %v4954 = vunpack.c.l.b16 %v4905
        %v4955 = vpack.c.b16 %v4924, %v4923
        %v4956 = vpack.c.b16 %v4926, %v4925
        %v4957 = vpack.c.b16 %v4928, %v4927
        %v4958 = vpack.c.b16 %v4930, %v4929
        %v4959 = vpack.c.b16 %v4932, %v4931
        %v4960 = vpack.c.b16 %v4934, %v4933
        %v4961 = vpack.c.b16 %v4936, %v4935
        %v4962 = vpack.c.b16 %v4938, %v4937
        %v4963 = vpack.c.b16 %v4940, %v4939
        %v4964 = vpack.c.b16 %v4942, %v4941
        %v4965 = vpack.c.b16 %v4944, %v4943
        %v4966 = vpack.c.b16 %v4946, %v4945
        %v4967 = vpack.c.b16 %v4948, %v4947
        %v4968 = vpack.c.b16 %v4950, %v4949
        %v4969 = vpack.c.b16 %v4952, %v4951
        %v4970 = vpack.c.b16 %v4954, %v4953
        %v5003 = vunpack.c.l.b16 %v4907
        %v5004 = vunpack.c.l.b16 %v4908
        %v5005 = vunpack.c.l.b16 %v4909
        %v5006 = vunpack.c.l.b16 %v4910
        %v5007 = vunpack.c.l.b16 %v4911
        %v5008 = vunpack.c.l.b16 %v4912
        %v5009 = vunpack.c.l.b16 %v4913
        %v5010 = vunpack.c.l.b16 %v4914
        %v5011 = vunpack.c.l.b16 %v4915
        %v5012 = vunpack.c.l.b16 %v4916
        %v5013 = vunpack.c.l.b16 %v4917
        %v5014 = vunpack.c.l.b16 %v4918
        %v5015 = vunpack.c.l.b16 %v4919
        %v5016 = vunpack.c.l.b16 %v4920
        %v5017 = vunpack.c.l.b16 %v4921
        %v5018 = vunpack.c.l.b16 %v4922
        %v5019 = vpack.c.b16 %v5004, %v5003
        %v5020 = vpack.c.b16 %v5006, %v5005
        %v5021 = vpack.c.b16 %v5008, %v5007
        %v5022 = vpack.c.b16 %v5010, %v5009
        %v5023 = vpack.c.b16 %v5012, %v5011
        %v5024 = vpack.c.b16 %v5014, %v5013
        %v5025 = vpack.c.b16 %v5016, %v5015
        %v5026 = vpack.c.b16 %v5018, %v5017
        %5035 = vmatpush.bf16.msra.mxu0 %v5026
        %5036 = vmatpush.bf16.msra.mxu0 %v5025
        %5037 = vmatpush.bf16.msra.mxu0 %v5024
        %5038 = vmatpush.bf16.msra.mxu0 %v5023
        %5039 = vmatpush.bf16.msra.mxu0 %v5022
        %5040 = vmatpush.bf16.msra.mxu0 %v5021
        %5041 = vmatpush.bf16.msra.mxu0 %v5020
        %5042 = vmatpush.bf16.msra.mxu0 %v5019
        %5043 = vmatmul.bf16.gmra.mxu0 %v4955
        %v5044 = vpop.f32.mrf.mxu0
        %v5045 = vadd.f32 0.0, %v5044
        %v5046 = vpop.f32.mrf.mxu0
        %v5047 = vadd.f32 0.0, %v5046
        %5048 = vmatmul.bf16.gmra.mxu0 %v4956
        %v5049 = vpop.f32.mrf.mxu0
        %v5050 = vadd.f32 0.0, %v5049
        %v5051 = vpop.f32.mrf.mxu0
        %v5052 = vadd.f32 0.0, %v5051
        %5053 = vmatmul.bf16.gmra.mxu0 %v4957
        %v5054 = vpop.f32.mrf.mxu0
        %v5055 = vadd.f32 0.0, %v5054
        %v5056 = vpop.f32.mrf.mxu0
        %v5057 = vadd.f32 0.0, %v5056
        %5058 = vmatmul.bf16.gmra.mxu0 %v4958
        %v5059 = vpop.f32.mrf.mxu0
        %v5060 = vadd.f32 0.0, %v5059
        %v5061 = vpop.f32.mrf.mxu0
        %v5062 = vadd.f32 0.0, %v5061
        %5063 = vmatmul.bf16.gmra.mxu0 %v4959
        %v5064 = vpop.f32.mrf.mxu0
        %v5065 = vadd.f32 0.0, %v5064
        %v5066 = vpop.f32.mrf.mxu0
        %v5067 = vadd.f32 0.0, %v5066
        %5068 = vmatmul.bf16.gmra.mxu0 %v4960
        %v5069 = vpop.f32.mrf.mxu0
        %v5070 = vadd.f32 0.0, %v5069
        %v5071 = vpop.f32.mrf.mxu0
        %v5072 = vadd.f32 0.0, %v5071
        %5073 = vmatmul.bf16.gmra.mxu0 %v4961
        %v5074 = vpop.f32.mrf.mxu0
        %v5075 = vadd.f32 0.0, %v5074
        %v5076 = vpop.f32.mrf.mxu0
        %v5077 = vadd.f32 0.0, %v5076
        %5078 = vmatmul.bf16.gmra.mxu0 %v4962
        %v5079 = vpop.f32.mrf.mxu0
        %v5080 = vadd.f32 0.0, %v5079
        %v5081 = vpop.f32.mrf.mxu0
        %v5082 = vadd.f32 0.0, %v5081
        %5083 = vmatmul.bf16.gmra.mxu0 %v4963
        %v5084 = vpop.f32.mrf.mxu0
        %v5085 = vadd.f32 0.0, %v5084
        %v5086 = vpop.f32.mrf.mxu0
        %v5087 = vadd.f32 0.0, %v5086
        %5088 = vmatmul.bf16.gmra.mxu0 %v4964
        %v5089 = vpop.f32.mrf.mxu0
        %v5090 = vadd.f32 0.0, %v5089
        %v5091 = vpop.f32.mrf.mxu0
        %v5092 = vadd.f32 0.0, %v5091
        %5093 = vmatmul.bf16.gmra.mxu0 %v4965
        %v5094 = vpop.f32.mrf.mxu0
        %v5095 = vadd.f32 0.0, %v5094
        %v5096 = vpop.f32.mrf.mxu0
        %v5097 = vadd.f32 0.0, %v5096
        %5098 = vmatmul.bf16.gmra.mxu0 %v4966
        %v5099 = vpop.f32.mrf.mxu0
        %v5100 = vadd.f32 0.0, %v5099
        %v5101 = vpop.f32.mrf.mxu0
        %v5102 = vadd.f32 0.0, %v5101
        %5103 = vmatmul.bf16.gmra.mxu0 %v4967
        %v5104 = vpop.f32.mrf.mxu0
        %v5105 = vadd.f32 0.0, %v5104
        %v5106 = vpop.f32.mrf.mxu0
        %v5107 = vadd.f32 0.0, %v5106
        %5108 = vmatmul.bf16.gmra.mxu0 %v4968
        %v5109 = vpop.f32.mrf.mxu0
        %v5110 = vadd.f32 0.0, %v5109
        %v5111 = vpop.f32.mrf.mxu0
        %v5112 = vadd.f32 0.0, %v5111
        %5113 = vmatmul.bf16.gmra.mxu0 %v4969
        %v5114 = vpop.f32.mrf.mxu0
        %v5115 = vadd.f32 0.0, %v5114
        %v5116 = vpop.f32.mrf.mxu0
        %v5117 = vadd.f32 0.0, %v5116
        %5118 = vmatmul.bf16.gmra.mxu0 %v4970
        %v5119 = vpop.f32.mrf.mxu0
        %v5120 = vadd.f32 0.0, %v5119
        %v5121 = vpop.f32.mrf.mxu0
        %v5122 = vadd.f32 0.0, %v5121
        %5123 = vdwg.mxu0
        %v5124 = vadd.f32 %v4698, %v5045
        %v5125 = vadd.f32 %v4699, %v5047
        %v5126 = vadd.f32 %v4700, %v5050
        %v5127 = vadd.f32 %v4701, %v5052
        %v5128 = vadd.f32 %v4702, %v5055
        %v5129 = vadd.f32 %v4703, %v5057
        %v5130 = vadd.f32 %v4704, %v5060
        %v5131 = vadd.f32 %v4705, %v5062
        %v5132 = vadd.f32 %v4706, %v5065
        %v5133 = vadd.f32 %v4707, %v5067
        %v5134 = vadd.f32 %v4708, %v5070
        %v5135 = vadd.f32 %v4709, %v5072
        %v5136 = vadd.f32 %v4710, %v5075
        %v5137 = vadd.f32 %v4711, %v5077
        %v5138 = vadd.f32 %v4712, %v5080
        %v5139 = vadd.f32 %v4713, %v5082
        %v5140 = vadd.f32 %v4714, %v5085
        %v5141 = vadd.f32 %v4715, %v5087
        %v5142 = vadd.f32 %v4716, %v5090
        %v5143 = vadd.f32 %v4717, %v5092
        %v5144 = vadd.f32 %v4718, %v5095
        %v5145 = vadd.f32 %v4719, %v5097
        %v5146 = vadd.f32 %v4720, %v5100
        %v5147 = vadd.f32 %v4721, %v5102
        %v5148 = vadd.f32 %v4722, %v5105
        %v5149 = vadd.f32 %v4723, %v5107
        %v5150 = vadd.f32 %v4724, %v5110
        %v5151 = vadd.f32 %v4725, %v5112
        %v5152 = vadd.f32 %v4726, %v5115
        %v5153 = vadd.f32 %v4727, %v5117
        %v5154 = vadd.f32 %v4728, %v5120
        %v5155 = vadd.f32 %v4729, %v5122
        %v5156 = vld [vmem:[%s5] sm:$0x1]
        %v5158 = vperm.slane %v5156, 0
        %v5160 = vmul.f32 %v5124, %v5158
        %v5161 = vmul.f32 %v5125, %v5158
        %v5162 = vmul.f32 %v5126, %v5158
        %v5163 = vmul.f32 %v5127, %v5158
        %v5164 = vmul.f32 %v5128, %v5158
        %v5165 = vmul.f32 %v5129, %v5158
        %v5166 = vmul.f32 %v5130, %v5158
        %v5167 = vmul.f32 %v5131, %v5158
        %v5168 = vmul.f32 %v5132, %v5158
        %v5169 = vmul.f32 %v5133, %v5158
        %v5170 = vmul.f32 %v5134, %v5158
        %v5171 = vmul.f32 %v5135, %v5158
        %v5172 = vmul.f32 %v5136, %v5158
        %v5173 = vmul.f32 %v5137, %v5158
        %v5174 = vmul.f32 %v5138, %v5158
        %v5175 = vmul.f32 %v5139, %v5158
        %v5176 = vmul.f32 %v5140, %v5158
        %v5177 = vmul.f32 %v5141, %v5158
        %v5178 = vmul.f32 %v5142, %v5158
        %v5179 = vmul.f32 %v5143, %v5158
        %v5180 = vmul.f32 %v5144, %v5158
        %v5181 = vmul.f32 %v5145, %v5158
        %v5182 = vmul.f32 %v5146, %v5158
        %v5183 = vmul.f32 %v5147, %v5158
        %v5184 = vmul.f32 %v5148, %v5158
        %v5185 = vmul.f32 %v5149, %v5158
        %v5186 = vmul.f32 %v5150, %v5158
        %v5187 = vmul.f32 %v5151, %v5158
        %v5188 = vmul.f32 %v5152, %v5158
        %v5189 = vmul.f32 %v5153, %v5158
        %v5190 = vmul.f32 %v5154, %v5158
        %v5191 = vmul.f32 %v5155, %v5158
        %v5192 = vld [vmem:[%s6] sm:$0x1]
        %v5194 = vperm.slane %v5192, 0
        %v5196 = vadd.f32 %v5160, %v5194
        %v5197 = vadd.f32 %v5161, %v5194
        %v5198 = vadd.f32 %v5162, %v5194
        %v5199 = vadd.f32 %v5163, %v5194
        %v5200 = vadd.f32 %v5164, %v5194
        %v5201 = vadd.f32 %v5165, %v5194
        %v5202 = vadd.f32 %v5166, %v5194
        %v5203 = vadd.f32 %v5167, %v5194
        %v5204 = vadd.f32 %v5168, %v5194
        %v5205 = vadd.f32 %v5169, %v5194
        %v5206 = vadd.f32 %v5170, %v5194
        %v5207 = vadd.f32 %v5171, %v5194
        %v5208 = vadd.f32 %v5172, %v5194
        %v5209 = vadd.f32 %v5173, %v5194
        %v5210 = vadd.f32 %v5174, %v5194
        %v5211 = vadd.f32 %v5175, %v5194
        %v5212 = vadd.f32 %v5176, %v5194
        %v5213 = vadd.f32 %v5177, %v5194
        %v5214 = vadd.f32 %v5178, %v5194
        %v5215 = vadd.f32 %v5179, %v5194
        %v5216 = vadd.f32 %v5180, %v5194
        %v5217 = vadd.f32 %v5181, %v5194
        %v5218 = vadd.f32 %v5182, %v5194
        %v5219 = vadd.f32 %v5183, %v5194
        %v5220 = vadd.f32 %v5184, %v5194
        %v5221 = vadd.f32 %v5185, %v5194
        %v5222 = vadd.f32 %v5186, %v5194
        %v5223 = vadd.f32 %v5187, %v5194
        %v5224 = vadd.f32 %v5188, %v5194
        %v5225 = vadd.f32 %v5189, %v5194
        %v5226 = vadd.f32 %v5190, %v5194
        %v5227 = vadd.f32 %v5191, %v5194
        %v5228 = vmax.f32 %v5196, 0.0
        %v5229 = vmax.f32 %v5197, 0.0
        %v5230 = vmax.f32 %v5198, 0.0
        %v5231 = vmax.f32 %v5199, 0.0
        %v5232 = vmax.f32 %v5200, 0.0
        %v5233 = vmax.f32 %v5201, 0.0
        %v5234 = vmax.f32 %v5202, 0.0
        %v5235 = vmax.f32 %v5203, 0.0
        %v5236 = vmax.f32 %v5204, 0.0
        %v5237 = vmax.f32 %v5205, 0.0
        %v5238 = vmax.f32 %v5206, 0.0
        %v5239 = vmax.f32 %v5207, 0.0
        %v5240 = vmax.f32 %v5208, 0.0
        %v5241 = vmax.f32 %v5209, 0.0
        %v5242 = vmax.f32 %v5210, 0.0
        %v5243 = vmax.f32 %v5211, 0.0
        %v5244 = vmax.f32 %v5212, 0.0
        %v5245 = vmax.f32 %v5213, 0.0
        %v5246 = vmax.f32 %v5214, 0.0
        %v5247 = vmax.f32 %v5215, 0.0
        %v5248 = vmax.f32 %v5216, 0.0
        %v5249 = vmax.f32 %v5217, 0.0
        %v5250 = vmax.f32 %v5218, 0.0
        %v5251 = vmax.f32 %v5219, 0.0
        %v5252 = vmax.f32 %v5220, 0.0
        %v5253 = vmax.f32 %v5221, 0.0
        %v5254 = vmax.f32 %v5222, 0.0
        %v5255 = vmax.f32 %v5223, 0.0
        %v5256 = vmax.f32 %v5224, 0.0
        %v5257 = vmax.f32 %v5225, 0.0
        %v5258 = vmax.f32 %v5226, 0.0
        %v5259 = vmax.f32 %v5227, 0.0
        %v5260 = vpack.c.bf16 %v5228, %v5228
        %v5261 = vpack.c.bf16 %v5229, %v5229
        %v5262 = vpack.c.bf16 %v5230, %v5230
        %v5263 = vpack.c.bf16 %v5231, %v5231
        %v5264 = vpack.c.bf16 %v5232, %v5232
        %v5265 = vpack.c.bf16 %v5233, %v5233
        %v5266 = vpack.c.bf16 %v5234, %v5234
        %v5267 = vpack.c.bf16 %v5235, %v5235
        %v5268 = vpack.c.bf16 %v5236, %v5236
        %v5269 = vpack.c.bf16 %v5237, %v5237
        %v5270 = vpack.c.bf16 %v5238, %v5238
        %v5271 = vpack.c.bf16 %v5239, %v5239
        %v5272 = vpack.c.bf16 %v5240, %v5240
        %v5273 = vpack.c.bf16 %v5241, %v5241
        %v5274 = vpack.c.bf16 %v5242, %v5242
        %v5275 = vpack.c.bf16 %v5243, %v5243
        %v5276 = vpack.c.bf16 %v5244, %v5244
        %v5277 = vpack.c.bf16 %v5245, %v5245
        %v5278 = vpack.c.bf16 %v5246, %v5246
        %v5279 = vpack.c.bf16 %v5247, %v5247
        %v5280 = vpack.c.bf16 %v5248, %v5248
        %v5281 = vpack.c.bf16 %v5249, %v5249
        %v5282 = vpack.c.bf16 %v5250, %v5250
        %v5283 = vpack.c.bf16 %v5251, %v5251
        %v5284 = vpack.c.bf16 %v5252, %v5252
        %v5285 = vpack.c.bf16 %v5253, %v5253
        %v5286 = vpack.c.bf16 %v5254, %v5254
        %v5287 = vpack.c.bf16 %v5255, %v5255
        %v5288 = vpack.c.bf16 %v5256, %v5256
        %v5289 = vpack.c.bf16 %v5257, %v5257
        %v5290 = vpack.c.bf16 %v5258, %v5258
        %v5291 = vpack.c.bf16 %v5259, %v5259
        %v5293 = vshrl.u32 %v5260, 16
        %v5295 = vrot.slane %v5293, 7
        %v5296 = vshll.u32 %v5260, 16
        %v5298 = vor.u32 %v5295, %v5296
        %v5299 = vrot.slane %v5295, 4
        %v5301 = vshrl.u32 %v5261, 16
        %v5303 = vrot.slane %v5301, 7
        %v5304 = vshll.u32 %v5261, 16
        %v5306 = vor.u32 %v5303, %v5304
        %v5307 = vsel %vm557, %v5299, %v5306
        %v5308 = vrot.slane %v5303, 4
        %v5310 = vshrl.u32 %v5262, 16
        %v5312 = vrot.slane %v5310, 7
        %v5313 = vshll.u32 %v5262, 16
        %v5315 = vor.u32 %v5312, %v5313
        %v5316 = vrot.slane %v5312, 4
        %v5318 = vshrl.u32 %v5263, 16
        %v5320 = vrot.slane %v5318, 7
        %v5321 = vshll.u32 %v5263, 16
        %v5323 = vor.u32 %v5320, %v5321
        %v5324 = vsel %vm557, %v5316, %v5323
        %v5325 = vrot.slane %v5320, 4
        %v5327 = vshrl.u32 %v5264, 16
        %v5329 = vrot.slane %v5327, 7
        %v5330 = vshll.u32 %v5264, 16
        %v5332 = vor.u32 %v5329, %v5330
        %v5333 = vrot.slane %v5329, 4
        %v5335 = vshrl.u32 %v5265, 16
        %v5337 = vrot.slane %v5335, 7
        %v5338 = vshll.u32 %v5265, 16
        %v5340 = vor.u32 %v5337, %v5338
        %v5341 = vsel %vm557, %v5333, %v5340
        %v5342 = vrot.slane %v5337, 4
        %v5344 = vshrl.u32 %v5266, 16
        %v5346 = vrot.slane %v5344, 7
        %v5347 = vshll.u32 %v5266, 16
        %v5349 = vor.u32 %v5346, %v5347
        %v5350 = vrot.slane %v5346, 4
        %v5352 = vshrl.u32 %v5267, 16
        %v5354 = vrot.slane %v5352, 7
        %v5355 = vshll.u32 %v5267, 16
        %v5357 = vor.u32 %v5354, %v5355
        %v5358 = vsel %vm557, %v5350, %v5357
        %v5359 = vrot.slane %v5354, 4
        %v5361 = vshrl.u32 %v5268, 16
        %v5363 = vrot.slane %v5361, 7
        %v5364 = vshll.u32 %v5268, 16
        %v5366 = vor.u32 %v5363, %v5364
        %v5367 = vrot.slane %v5363, 4
        %v5369 = vshrl.u32 %v5269, 16
        %v5371 = vrot.slane %v5369, 7
        %v5372 = vshll.u32 %v5269, 16
        %v5374 = vor.u32 %v5371, %v5372
        %v5375 = vsel %vm557, %v5367, %v5374
        %v5376 = vrot.slane %v5371, 4
        %v5378 = vshrl.u32 %v5270, 16
        %v5380 = vrot.slane %v5378, 7
        %v5381 = vshll.u32 %v5270, 16
        %v5383 = vor.u32 %v5380, %v5381
        %v5384 = vrot.slane %v5380, 4
        %v5386 = vshrl.u32 %v5271, 16
        %v5388 = vrot.slane %v5386, 7
        %v5389 = vshll.u32 %v5271, 16
        %v5391 = vor.u32 %v5388, %v5389
        %v5392 = vsel %vm557, %v5384, %v5391
        %v5393 = vrot.slane %v5388, 4
        %v5395 = vshrl.u32 %v5272, 16
        %v5397 = vrot.slane %v5395, 7
        %v5398 = vshll.u32 %v5272, 16
        %v5400 = vor.u32 %v5397, %v5398
        %v5401 = vrot.slane %v5397, 4
        %v5403 = vshrl.u32 %v5273, 16
        %v5405 = vrot.slane %v5403, 7
        %v5406 = vshll.u32 %v5273, 16
        %v5408 = vor.u32 %v5405, %v5406
        %v5409 = vsel %vm557, %v5401, %v5408
        %v5410 = vrot.slane %v5405, 4
        %v5412 = vshrl.u32 %v5274, 16
        %v5414 = vrot.slane %v5412, 7
        %v5415 = vshll.u32 %v5274, 16
        %v5417 = vor.u32 %v5414, %v5415
        %v5418 = vrot.slane %v5414, 4
        %v5420 = vshrl.u32 %v5275, 16
        %v5422 = vrot.slane %v5420, 7
        %v5423 = vshll.u32 %v5275, 16
        %v5425 = vor.u32 %v5422, %v5423
        %v5426 = vsel %vm557, %v5418, %v5425
        %v5427 = vrot.slane %v5422, 4
        %v5429 = vshrl.u32 %v5276, 16
        %v5431 = vrot.slane %v5429, 7
        %v5432 = vshll.u32 %v5276, 16
        %v5434 = vor.u32 %v5431, %v5432
        %v5435 = vrot.slane %v5431, 4
        %v5437 = vshrl.u32 %v5277, 16
        %v5439 = vrot.slane %v5437, 7
        %v5440 = vshll.u32 %v5277, 16
        %v5442 = vor.u32 %v5439, %v5440
        %v5443 = vsel %vm557, %v5435, %v5442
        %v5444 = vrot.slane %v5439, 4
        %v5446 = vshrl.u32 %v5278, 16
        %v5448 = vrot.slane %v5446, 7
        %v5449 = vshll.u32 %v5278, 16
        %v5451 = vor.u32 %v5448, %v5449
        %v5452 = vrot.slane %v5448, 4
        %v5454 = vshrl.u32 %v5279, 16
        %v5456 = vrot.slane %v5454, 7
        %v5457 = vshll.u32 %v5279, 16
        %v5459 = vor.u32 %v5456, %v5457
        %v5460 = vsel %vm557, %v5452, %v5459
        %v5461 = vrot.slane %v5456, 4
        %v5463 = vshrl.u32 %v5280, 16
        %v5465 = vrot.slane %v5463, 7
        %v5466 = vshll.u32 %v5280, 16
        %v5468 = vor.u32 %v5465, %v5466
        %v5469 = vrot.slane %v5465, 4
        %v5471 = vshrl.u32 %v5281, 16
        %v5473 = vrot.slane %v5471, 7
        %v5474 = vshll.u32 %v5281, 16
        %v5476 = vor.u32 %v5473, %v5474
        %v5477 = vsel %vm557, %v5469, %v5476
        %v5478 = vrot.slane %v5473, 4
        %v5480 = vshrl.u32 %v5282, 16
        %v5482 = vrot.slane %v5480, 7
        %v5483 = vshll.u32 %v5282, 16
        %v5485 = vor.u32 %v5482, %v5483
        %v5486 = vrot.slane %v5482, 4
        %v5488 = vshrl.u32 %v5283, 16
        %v5490 = vrot.slane %v5488, 7
        %v5491 = vshll.u32 %v5283, 16
        %v5493 = vor.u32 %v5490, %v5491
        %v5494 = vsel %vm557, %v5486, %v5493
        %v5495 = vrot.slane %v5490, 4
        %v5497 = vshrl.u32 %v5284, 16
        %v5499 = vrot.slane %v5497, 7
        %v5500 = vshll.u32 %v5284, 16
        %v5502 = vor.u32 %v5499, %v5500
        %v5503 = vrot.slane %v5499, 4
        %v5505 = vshrl.u32 %v5285, 16
        %v5507 = vrot.slane %v5505, 7
        %v5508 = vshll.u32 %v5285, 16
        %v5510 = vor.u32 %v5507, %v5508
        %v5511 = vsel %vm557, %v5503, %v5510
        %v5512 = vrot.slane %v5507, 4
        %v5514 = vshrl.u32 %v5286, 16
        %v5516 = vrot.slane %v5514, 7
        %v5517 = vshll.u32 %v5286, 16
        %v5519 = vor.u32 %v5516, %v5517
        %v5520 = vrot.slane %v5516, 4
        %v5522 = vshrl.u32 %v5287, 16
        %v5524 = vrot.slane %v5522, 7
        %v5525 = vshll.u32 %v5287, 16
        %v5527 = vor.u32 %v5524, %v5525
        %v5528 = vsel %vm557, %v5520, %v5527
        %v5529 = vrot.slane %v5524, 4
        %v5531 = vshrl.u32 %v5288, 16
        %v5533 = vrot.slane %v5531, 7
        %v5534 = vshll.u32 %v5288, 16
        %v5536 = vor.u32 %v5533, %v5534
        %v5537 = vrot.slane %v5533, 4
        %v5539 = vshrl.u32 %v5289, 16
        %v5541 = vrot.slane %v5539, 7
        %v5542 = vshll.u32 %v5289, 16
        %v5544 = vor.u32 %v5541, %v5542
        %v5545 = vsel %vm557, %v5537, %v5544
        %v5546 = vrot.slane %v5541, 4
        %v5548 = vshrl.u32 %v5290, 16
        %v5550 = vrot.slane %v5548, 7
        %v5551 = vshll.u32 %v5290, 16
        %v5553 = vor.u32 %v5550, %v5551
        %v5554 = vrot.slane %v5550, 4
        %v5556 = vshrl.u32 %v5291, 16
        %v5558 = vrot.slane %v5556, 7
        %v5559 = vshll.u32 %v5291, 16
        %v5561 = vor.u32 %v5558, %v5559
        %v5562 = vsel %vm557, %v5554, %v5561
        %v5563 = vrot.slane %v5558, 4
        %v5612 = vsel %vm881, %v5298, %v2625
        %5613 = vst [vmem:[%s878] sm:$0xf] %v5612
        %5614 = vst [vmem:[%s878 + $0x4] sm:$0xf] %v5307
        %v5615 = vld [vmem:[%s878 + $0x8] sm:$0x1]
        %v5616 = vsel %vm887, %v5308, %v5615
        %5617 = vst [vmem:[%s878 + $0x8] sm:$0x1] %v5616
        %v5618 = vld [vmem:[%s878 + $0xc] sm:$0xf]
        %v5619 = vsel %vm881, %v5315, %v5618
        %5620 = vst [vmem:[%s878 + $0xc] sm:$0xf] %v5619
        %5621 = vst [vmem:[%s878 + $0x10] sm:$0xf] %v5324
        %v5622 = vld [vmem:[%s878 + $0x14] sm:$0x1]
        %v5623 = vsel %vm887, %v5325, %v5622
        %5624 = vst [vmem:[%s878 + $0x14] sm:$0x1] %v5623
        %v5625 = vld [vmem:[%s878 + $0x18] sm:$0xf]
        %v5626 = vsel %vm881, %v5332, %v5625
        %5627 = vst [vmem:[%s878 + $0x18] sm:$0xf] %v5626
        %5628 = vst [vmem:[%s878 + $0x1c] sm:$0xf] %v5341
        %v5629 = vld [vmem:[%s878 + $0x20] sm:$0x1]
        %v5630 = vsel %vm887, %v5342, %v5629
        %5631 = vst [vmem:[%s878 + $0x20] sm:$0x1] %v5630
        %v5632 = vld [vmem:[%s878 + $0x24] sm:$0xf]
        %v5633 = vsel %vm881, %v5349, %v5632
        %5634 = vst [vmem:[%s878 + $0x24] sm:$0xf] %v5633
        %5635 = vst [vmem:[%s878 + $0x28] sm:$0xf] %v5358
        %v5636 = vld [vmem:[%s878 + $0x2c] sm:$0x1]
        %v5637 = vsel %vm887, %v5359, %v5636
        %5638 = vst [vmem:[%s878 + $0x2c] sm:$0x1] %v5637
        %v5639 = vld [vmem:[%s878 + $0x30] sm:$0xf]
        %v5640 = vsel %vm881, %v5366, %v5639
        %5641 = vst [vmem:[%s878 + $0x30] sm:$0xf] %v5640
        %5642 = vst [vmem:[%s878 + $0x34] sm:$0xf] %v5375
        %v5643 = vld [vmem:[%s878 + $0x38] sm:$0x1]
        %v5644 = vsel %vm887, %v5376, %v5643
        %5645 = vst [vmem:[%s878 + $0x38] sm:$0x1] %v5644
        %v5646 = vld [vmem:[%s878 + $0x3c] sm:$0xf]
        %v5647 = vsel %vm881, %v5383, %v5646
        %5648 = vst [vmem:[%s878 + $0x3c] sm:$0xf] %v5647
        %5649 = vst [vmem:[%s878 + $0x40] sm:$0xf] %v5392
        %v5650 = vld [vmem:[%s878 + $0x44] sm:$0x1]
        %v5651 = vsel %vm887, %v5393, %v5650
        %5652 = vst [vmem:[%s878 + $0x44] sm:$0x1] %v5651
        %v5653 = vld [vmem:[%s878 + $0x48] sm:$0xf]
        %v5654 = vsel %vm881, %v5400, %v5653
        %5655 = vst [vmem:[%s878 + $0x48] sm:$0xf] %v5654
        %5656 = vst [vmem:[%s878 + $0x4c] sm:$0xf] %v5409
        %v5657 = vld [vmem:[%s878 + $0x50] sm:$0x1]
        %v5658 = vsel %vm887, %v5410, %v5657
        %5659 = vst [vmem:[%s878 + $0x50] sm:$0x1] %v5658
        %v5660 = vld [vmem:[%s878 + $0x54] sm:$0xf]
        %v5661 = vsel %vm881, %v5417, %v5660
        %5662 = vst [vmem:[%s878 + $0x54] sm:$0xf] %v5661
        %5663 = vst [vmem:[%s878 + $0x58] sm:$0xf] %v5426
        %v5664 = vld [vmem:[%s878 + $0x5c] sm:$0x1]
        %v5665 = vsel %vm887, %v5427, %v5664
        %5666 = vst [vmem:[%s878 + $0x5c] sm:$0x1] %v5665
        %v5667 = vld [vmem:[%s878 + $0x60] sm:$0xf]
        %v5668 = vsel %vm881, %v5434, %v5667
        %5669 = vst [vmem:[%s878 + $0x60] sm:$0xf] %v5668
        %5670 = vst [vmem:[%s878 + $0x64] sm:$0xf] %v5443
        %v5671 = vld [vmem:[%s878 + $0x68] sm:$0x1]
        %v5672 = vsel %vm887, %v5444, %v5671
        %5673 = vst [vmem:[%s878 + $0x68] sm:$0x1] %v5672
        %v5674 = vld [vmem:[%s878 + $0x6c] sm:$0xf]
        %v5675 = vsel %vm881, %v5451, %v5674
        %5676 = vst [vmem:[%s878 + $0x6c] sm:$0xf] %v5675
        %5677 = vst [vmem:[%s878 + $0x70] sm:$0xf] %v5460
        %v5678 = vld [vmem:[%s878 + $0x74] sm:$0x1]
        %v5679 = vsel %vm887, %v5461, %v5678
        %5680 = vst [vmem:[%s878 + $0x74] sm:$0x1] %v5679
        %v5681 = vld [vmem:[%s878 + $0x78] sm:$0xf]
        %v5682 = vsel %vm881, %v5468, %v5681
        %5683 = vst [vmem:[%s878 + $0x78] sm:$0xf] %v5682
        %5684 = vst [vmem:[%s878 + $0x7c] sm:$0xf] %v5477
        %v5685 = vld [vmem:[%s878 + $0x80] sm:$0x1]
        %v5686 = vsel %vm887, %v5478, %v5685
        %5687 = vst [vmem:[%s878 + $0x80] sm:$0x1] %v5686
        %v5688 = vld [vmem:[%s878 + $0x84] sm:$0xf]
        %v5689 = vsel %vm881, %v5485, %v5688
        %5690 = vst [vmem:[%s878 + $0x84] sm:$0xf] %v5689
        %5691 = vst [vmem:[%s878 + $0x88] sm:$0xf] %v5494
        %v5692 = vld [vmem:[%s878 + $0x8c] sm:$0x1]
        %v5693 = vsel %vm887, %v5495, %v5692
        %5694 = vst [vmem:[%s878 + $0x8c] sm:$0x1] %v5693
        %v5695 = vld [vmem:[%s878 + $0x90] sm:$0xf]
        %v5696 = vsel %vm881, %v5502, %v5695
        %5697 = vst [vmem:[%s878 + $0x90] sm:$0xf] %v5696
        %5698 = vst [vmem:[%s878 + $0x94] sm:$0xf] %v5511
        %v5699 = vld [vmem:[%s878 + $0x98] sm:$0x1]
        %v5700 = vsel %vm887, %v5512, %v5699
        %5701 = vst [vmem:[%s878 + $0x98] sm:$0x1] %v5700
        %v5702 = vld [vmem:[%s878 + $0x9c] sm:$0xf]
        %v5703 = vsel %vm881, %v5519, %v5702
        %5704 = vst [vmem:[%s878 + $0x9c] sm:$0xf] %v5703
        %5705 = vst [vmem:[%s878 + $0xa0] sm:$0xf] %v5528
        %v5706 = vld [vmem:[%s878 + $0xa4] sm:$0x1]
        %v5707 = vsel %vm887, %v5529, %v5706
        %5708 = vst [vmem:[%s878 + $0xa4] sm:$0x1] %v5707
        %v5709 = vld [vmem:[%s878 + $0xa8] sm:$0xf]
        %v5710 = vsel %vm881, %v5536, %v5709
        %5711 = vst [vmem:[%s878 + $0xa8] sm:$0xf] %v5710
        %5712 = vst [vmem:[%s878 + $0xac] sm:$0xf] %v5545
        %v5713 = vld [vmem:[%s878 + $0xb0] sm:$0x1]
        %v5714 = vsel %vm887, %v5546, %v5713
        %5715 = vst [vmem:[%s878 + $0xb0] sm:$0x1] %v5714
        %v5716 = vld [vmem:[%s878 + $0xb4] sm:$0xf]
        %v5717 = vsel %vm881, %v5553, %v5716
        %5718 = vst [vmem:[%s878 + $0xb4] sm:$0xf] %v5717
        %5719 = vst [vmem:[%s878 + $0xb8] sm:$0xf] %v5562
        %v5720 = vld [vmem:[%s878 + $0xbc] sm:$0x1]
        %v5721 = vsel %vm887, %v5563, %v5720
        %5722 = vst [vmem:[%s878 + $0xbc] sm:$0x1] %v5721
        %v5723 = vld [vmem:[#allocation2] sm:$0xf]
        %v5724 = vld [vmem:[#allocation2 + $0x4] sm:$0xf]
        %v5725 = vld [vmem:[#allocation2 + $0xc] sm:$0xf]
        %v5726 = vld [vmem:[#allocation2 + $0x10] sm:$0xf]
        %v5727 = vld [vmem:[#allocation2 + $0x18] sm:$0xf]
        %v5728 = vld [vmem:[#allocation2 + $0x1c] sm:$0xf]
        %v5729 = vld [vmem:[#allocation2 + $0x24] sm:$0xf]
        %v5730 = vld [vmem:[#allocation2 + $0x28] sm:$0xf]
        %v5731 = vld [vmem:[#allocation2 + $0x30] sm:$0xf]
        %v5732 = vld [vmem:[#allocation2 + $0x34] sm:$0xf]
        %v5733 = vld [vmem:[#allocation2 + $0x3c] sm:$0xf]
        %v5734 = vld [vmem:[#allocation2 + $0x40] sm:$0xf]
        %v5735 = vld [vmem:[#allocation2 + $0x48] sm:$0xf]
        %v5736 = vld [vmem:[#allocation2 + $0x4c] sm:$0xf]
        %v5737 = vld [vmem:[#allocation2 + $0x54] sm:$0xf]
        %v5738 = vld [vmem:[#allocation2 + $0x58] sm:$0xf]
        %v5739 = vld [vmem:[#allocation2 + $0x60] sm:$0xf]
        %v5740 = vld [vmem:[#allocation2 + $0x64] sm:$0xf]
        %v5741 = vld [vmem:[#allocation2 + $0x6c] sm:$0xf]
        %v5742 = vld [vmem:[#allocation2 + $0x70] sm:$0xf]
        %v5743 = vld [vmem:[#allocation2 + $0x78] sm:$0xf]
        %v5744 = vld [vmem:[#allocation2 + $0x7c] sm:$0xf]
        %v5745 = vld [vmem:[#allocation2 + $0x84] sm:$0xf]
        %v5746 = vld [vmem:[#allocation2 + $0x88] sm:$0xf]
        %v5747 = vld [vmem:[#allocation2 + $0x90] sm:$0xf]
        %v5748 = vld [vmem:[#allocation2 + $0x94] sm:$0xf]
        %v5749 = vld [vmem:[#allocation2 + $0x9c] sm:$0xf]
        %v5750 = vld [vmem:[#allocation2 + $0xa0] sm:$0xf]
        %v5751 = vld [vmem:[#allocation2 + $0xa8] sm:$0xf]
        %v5752 = vld [vmem:[#allocation2 + $0xac] sm:$0xf]
        %v5753 = vld [vmem:[#allocation2 + $0xb4] sm:$0xf]
        %v5754 = vld [vmem:[#allocation2 + $0xb8] sm:$0xf]
        %v5755 = vld [vmem:[#allocation8] sm:$0xf]
        %v5756 = vld [vmem:[#allocation8 + $0x4] sm:$0xf]
        %v5757 = vld [vmem:[#allocation8 + $0x8] sm:$0xf]
        %v5758 = vld [vmem:[#allocation8 + $0xc] sm:$0xf]
        %v5759 = vld [vmem:[#allocation8 + $0x10] sm:$0xf]
        %v5760 = vld [vmem:[#allocation8 + $0x14] sm:$0xf]
        %v5761 = vld [vmem:[#allocation8 + $0x18] sm:$0xf]
        %v5762 = vld [vmem:[#allocation8 + $0x1c] sm:$0xf]
        %v5763 = vld [vmem:[#allocation8 + $0x20] sm:$0xf]
        %v5764 = vld [vmem:[#allocation8 + $0x24] sm:$0xf]
        %v5765 = vld [vmem:[#allocation8 + $0x28] sm:$0xf]
        %v5766 = vld [vmem:[#allocation8 + $0x2c] sm:$0xf]
        %v5767 = vld [vmem:[#allocation8 + $0x30] sm:$0xf]
        %v5768 = vld [vmem:[#allocation8 + $0x34] sm:$0xf]
        %v5769 = vld [vmem:[#allocation8 + $0x38] sm:$0xf]
        %v5770 = vld [vmem:[#allocation8 + $0x3c] sm:$0xf]
        %v5771 = vld [vmem:[#allocation2 + $0x8] sm:$0x1]
        %v5772 = vld [vmem:[#allocation2 + $0x14] sm:$0x1]
        %v5773 = vld [vmem:[#allocation2 + $0x20] sm:$0x1]
        %v5774 = vld [vmem:[#allocation2 + $0x2c] sm:$0x1]
        %v5775 = vld [vmem:[#allocation2 + $0x38] sm:$0x1]
        %v5776 = vld [vmem:[#allocation2 + $0x44] sm:$0x1]
        %v5777 = vld [vmem:[#allocation2 + $0x50] sm:$0x1]
        %v5778 = vld [vmem:[#allocation2 + $0x5c] sm:$0x1]
        %v5779 = vld [vmem:[#allocation2 + $0x68] sm:$0x1]
        %v5780 = vld [vmem:[#allocation2 + $0x74] sm:$0x1]
        %v5781 = vld [vmem:[#allocation2 + $0x80] sm:$0x1]
        %v5782 = vld [vmem:[#allocation2 + $0x8c] sm:$0x1]
        %v5783 = vld [vmem:[#allocation2 + $0x98] sm:$0x1]
        %v5784 = vld [vmem:[#allocation2 + $0xa4] sm:$0x1]
        %v5785 = vld [vmem:[#allocation2 + $0xb0] sm:$0x1]
        %v5786 = vld [vmem:[#allocation2 + $0xbc] sm:$0x1]
        %v5788 = vshrl.u32 %v5723, 16
        %v5790 = vrot.slane %v5788, 4
        %v5791 = vshll.u32 %v5723, 16
        %v5793 = vrot.slane %v5791, 5
        %v5794 = vor.u32 %v5790, %v5793
        %v5795 = vrot.slane %v5794, 4
        %v5797 = vshll.u32 %v5724, 16
        %v5799 = vrot.slane %v5797, 5
        %v5800 = vsel %vm1062, %v5795, %v5799
        %v5801 = vshrl.u32 %v5724, 16
        %v5803 = vrot.slane %v5801, 4
        %v5804 = vor.u32 %v5803, %v5799
        %v5805 = vrot.slane %v5804, 4
        %v5807 = vshll.u32 %v5771, 16
        %v5809 = vrot.slane %v5807, 5
        %v5810 = vsel %vm1062, %v5805, %v5809
        %v5812 = vshrl.u32 %v5725, 16
        %v5814 = vrot.slane %v5812, 4
        %v5815 = vshll.u32 %v5725, 16
        %v5817 = vrot.slane %v5815, 5
        %v5818 = vor.u32 %v5814, %v5817
        %v5819 = vrot.slane %v5818, 4
        %v5821 = vshll.u32 %v5726, 16
        %v5823 = vrot.slane %v5821, 5
        %v5824 = vsel %vm1062, %v5819, %v5823
        %v5825 = vshrl.u32 %v5726, 16
        %v5827 = vrot.slane %v5825, 4
        %v5828 = vor.u32 %v5827, %v5823
        %v5829 = vrot.slane %v5828, 4
        %v5831 = vshll.u32 %v5772, 16
        %v5833 = vrot.slane %v5831, 5
        %v5834 = vsel %vm1062, %v5829, %v5833
        %v5836 = vshrl.u32 %v5727, 16
        %v5838 = vrot.slane %v5836, 4
        %v5839 = vshll.u32 %v5727, 16
        %v5841 = vrot.slane %v5839, 5
        %v5842 = vor.u32 %v5838, %v5841
        %v5843 = vrot.slane %v5842, 4
        %v5845 = vshll.u32 %v5728, 16
        %v5847 = vrot.slane %v5845, 5
        %v5848 = vsel %vm1062, %v5843, %v5847
        %v5849 = vshrl.u32 %v5728, 16
        %v5851 = vrot.slane %v5849, 4
        %v5852 = vor.u32 %v5851, %v5847
        %v5853 = vrot.slane %v5852, 4
        %v5855 = vshll.u32 %v5773, 16
        %v5857 = vrot.slane %v5855, 5
        %v5858 = vsel %vm1062, %v5853, %v5857
        %v5860 = vshrl.u32 %v5729, 16
        %v5862 = vrot.slane %v5860, 4
        %v5863 = vshll.u32 %v5729, 16
        %v5865 = vrot.slane %v5863, 5
        %v5866 = vor.u32 %v5862, %v5865
        %v5867 = vrot.slane %v5866, 4
        %v5869 = vshll.u32 %v5730, 16
        %v5871 = vrot.slane %v5869, 5
        %v5872 = vsel %vm1062, %v5867, %v5871
        %v5873 = vshrl.u32 %v5730, 16
        %v5875 = vrot.slane %v5873, 4
        %v5876 = vor.u32 %v5875, %v5871
        %v5877 = vrot.slane %v5876, 4
        %v5879 = vshll.u32 %v5774, 16
        %v5881 = vrot.slane %v5879, 5
        %v5882 = vsel %vm1062, %v5877, %v5881
        %v5884 = vshrl.u32 %v5731, 16
        %v5886 = vrot.slane %v5884, 4
        %v5887 = vshll.u32 %v5731, 16
        %v5889 = vrot.slane %v5887, 5
        %v5890 = vor.u32 %v5886, %v5889
        %v5891 = vrot.slane %v5890, 4
        %v5893 = vshll.u32 %v5732, 16
        %v5895 = vrot.slane %v5893, 5
        %v5896 = vsel %vm1062, %v5891, %v5895
        %v5897 = vshrl.u32 %v5732, 16
        %v5899 = vrot.slane %v5897, 4
        %v5900 = vor.u32 %v5899, %v5895
        %v5901 = vrot.slane %v5900, 4
        %v5903 = vshll.u32 %v5775, 16
        %v5905 = vrot.slane %v5903, 5
        %v5906 = vsel %vm1062, %v5901, %v5905
        %v5908 = vshrl.u32 %v5733, 16
        %v5910 = vrot.slane %v5908, 4
        %v5911 = vshll.u32 %v5733, 16
        %v5913 = vrot.slane %v5911, 5
        %v5914 = vor.u32 %v5910, %v5913
        %v5915 = vrot.slane %v5914, 4
        %v5917 = vshll.u32 %v5734, 16
        %v5919 = vrot.slane %v5917, 5
        %v5920 = vsel %vm1062, %v5915, %v5919
        %v5921 = vshrl.u32 %v5734, 16
        %v5923 = vrot.slane %v5921, 4
        %v5924 = vor.u32 %v5923, %v5919
        %v5925 = vrot.slane %v5924, 4
        %v5927 = vshll.u32 %v5776, 16
        %v5929 = vrot.slane %v5927, 5
        %v5930 = vsel %vm1062, %v5925, %v5929
        %v5932 = vshrl.u32 %v5735, 16
        %v5934 = vrot.slane %v5932, 4
        %v5935 = vshll.u32 %v5735, 16
        %v5937 = vrot.slane %v5935, 5
        %v5938 = vor.u32 %v5934, %v5937
        %v5939 = vrot.slane %v5938, 4
        %v5941 = vshll.u32 %v5736, 16
        %v5943 = vrot.slane %v5941, 5
        %v5944 = vsel %vm1062, %v5939, %v5943
        %v5945 = vshrl.u32 %v5736, 16
        %v5947 = vrot.slane %v5945, 4
        %v5948 = vor.u32 %v5947, %v5943
        %v5949 = vrot.slane %v5948, 4
        %v5951 = vshll.u32 %v5777, 16
        %v5953 = vrot.slane %v5951, 5
        %v5954 = vsel %vm1062, %v5949, %v5953
        %v5956 = vshrl.u32 %v5737, 16
        %v5958 = vrot.slane %v5956, 4
        %v5959 = vshll.u32 %v5737, 16
        %v5961 = vrot.slane %v5959, 5
        %v5962 = vor.u32 %v5958, %v5961
        %v5963 = vrot.slane %v5962, 4
        %v5965 = vshll.u32 %v5738, 16
        %v5967 = vrot.slane %v5965, 5
        %v5968 = vsel %vm1062, %v5963, %v5967
        %v5969 = vshrl.u32 %v5738, 16
        %v5971 = vrot.slane %v5969, 4
        %v5972 = vor.u32 %v5971, %v5967
        %v5973 = vrot.slane %v5972, 4
        %v5975 = vshll.u32 %v5778, 16
        %v5977 = vrot.slane %v5975, 5
        %v5978 = vsel %vm1062, %v5973, %v5977
        %v5980 = vshrl.u32 %v5739, 16
        %v5982 = vrot.slane %v5980, 4
        %v5983 = vshll.u32 %v5739, 16
        %v5985 = vrot.slane %v5983, 5
        %v5986 = vor.u32 %v5982, %v5985
        %v5987 = vrot.slane %v5986, 4
        %v5989 = vshll.u32 %v5740, 16
        %v5991 = vrot.slane %v5989, 5
        %v5992 = vsel %vm1062, %v5987, %v5991
        %v5993 = vshrl.u32 %v5740, 16
        %v5995 = vrot.slane %v5993, 4
        %v5996 = vor.u32 %v5995, %v5991
        %v5997 = vrot.slane %v5996, 4
        %v5999 = vshll.u32 %v5779, 16
        %v6001 = vrot.slane %v5999, 5
        %v6002 = vsel %vm1062, %v5997, %v6001
        %v6004 = vshrl.u32 %v5741, 16
        %v6006 = vrot.slane %v6004, 4
        %v6007 = vshll.u32 %v5741, 16
        %v6009 = vrot.slane %v6007, 5
        %v6010 = vor.u32 %v6006, %v6009
        %v6011 = vrot.slane %v6010, 4
        %v6013 = vshll.u32 %v5742, 16
        %v6015 = vrot.slane %v6013, 5
        %v6016 = vsel %vm1062, %v6011, %v6015
        %v6017 = vshrl.u32 %v5742, 16
        %v6019 = vrot.slane %v6017, 4
        %v6020 = vor.u32 %v6019, %v6015
        %v6021 = vrot.slane %v6020, 4
        %v6023 = vshll.u32 %v5780, 16
        %v6025 = vrot.slane %v6023, 5
        %v6026 = vsel %vm1062, %v6021, %v6025
        %v6028 = vshrl.u32 %v5743, 16
        %v6030 = vrot.slane %v6028, 4
        %v6031 = vshll.u32 %v5743, 16
        %v6033 = vrot.slane %v6031, 5
        %v6034 = vor.u32 %v6030, %v6033
        %v6035 = vrot.slane %v6034, 4
        %v6037 = vshll.u32 %v5744, 16
        %v6039 = vrot.slane %v6037, 5
        %v6040 = vsel %vm1062, %v6035, %v6039
        %v6041 = vshrl.u32 %v5744, 16
        %v6043 = vrot.slane %v6041, 4
        %v6044 = vor.u32 %v6043, %v6039
        %v6045 = vrot.slane %v6044, 4
        %v6047 = vshll.u32 %v5781, 16
        %v6049 = vrot.slane %v6047, 5
        %v6050 = vsel %vm1062, %v6045, %v6049
        %v6052 = vshrl.u32 %v5745, 16
        %v6054 = vrot.slane %v6052, 4
        %v6055 = vshll.u32 %v5745, 16
        %v6057 = vrot.slane %v6055, 5
        %v6058 = vor.u32 %v6054, %v6057
        %v6059 = vrot.slane %v6058, 4
        %v6061 = vshll.u32 %v5746, 16
        %v6063 = vrot.slane %v6061, 5
        %v6064 = vsel %vm1062, %v6059, %v6063
        %v6065 = vshrl.u32 %v5746, 16
        %v6067 = vrot.slane %v6065, 4
        %v6068 = vor.u32 %v6067, %v6063
        %v6069 = vrot.slane %v6068, 4
        %v6071 = vshll.u32 %v5782, 16
        %v6073 = vrot.slane %v6071, 5
        %v6074 = vsel %vm1062, %v6069, %v6073
        %v6076 = vshrl.u32 %v5747, 16
        %v6078 = vrot.slane %v6076, 4
        %v6079 = vshll.u32 %v5747, 16
        %v6081 = vrot.slane %v6079, 5
        %v6082 = vor.u32 %v6078, %v6081
        %v6083 = vrot.slane %v6082, 4
        %v6085 = vshll.u32 %v5748, 16
        %v6087 = vrot.slane %v6085, 5
        %v6088 = vsel %vm1062, %v6083, %v6087
        %v6089 = vshrl.u32 %v5748, 16
        %v6091 = vrot.slane %v6089, 4
        %v6092 = vor.u32 %v6091, %v6087
        %v6093 = vrot.slane %v6092, 4
        %v6095 = vshll.u32 %v5783, 16
        %v6097 = vrot.slane %v6095, 5
        %v6098 = vsel %vm1062, %v6093, %v6097
        %v6100 = vshrl.u32 %v5749, 16
        %v6102 = vrot.slane %v6100, 4
        %v6103 = vshll.u32 %v5749, 16
        %v6105 = vrot.slane %v6103, 5
        %v6106 = vor.u32 %v6102, %v6105
        %v6107 = vrot.slane %v6106, 4
        %v6109 = vshll.u32 %v5750, 16
        %v6111 = vrot.slane %v6109, 5
        %v6112 = vsel %vm1062, %v6107, %v6111
        %v6113 = vshrl.u32 %v5750, 16
        %v6115 = vrot.slane %v6113, 4
        %v6116 = vor.u32 %v6115, %v6111
        %v6117 = vrot.slane %v6116, 4
        %v6119 = vshll.u32 %v5784, 16
        %v6121 = vrot.slane %v6119, 5
        %v6122 = vsel %vm1062, %v6117, %v6121
        %v6124 = vshrl.u32 %v5751, 16
        %v6126 = vrot.slane %v6124, 4
        %v6127 = vshll.u32 %v5751, 16
        %v6129 = vrot.slane %v6127, 5
        %v6130 = vor.u32 %v6126, %v6129
        %v6131 = vrot.slane %v6130, 4
        %v6133 = vshll.u32 %v5752, 16
        %v6135 = vrot.slane %v6133, 5
        %v6136 = vsel %vm1062, %v6131, %v6135
        %v6137 = vshrl.u32 %v5752, 16
        %v6139 = vrot.slane %v6137, 4
        %v6140 = vor.u32 %v6139, %v6135
        %v6141 = vrot.slane %v6140, 4
        %v6143 = vshll.u32 %v5785, 16
        %v6145 = vrot.slane %v6143, 5
        %v6146 = vsel %vm1062, %v6141, %v6145
        %v6148 = vshrl.u32 %v5753, 16
        %v6150 = vrot.slane %v6148, 4
        %v6151 = vshll.u32 %v5753, 16
        %v6153 = vrot.slane %v6151, 5
        %v6154 = vor.u32 %v6150, %v6153
        %v6155 = vrot.slane %v6154, 4
        %v6157 = vshll.u32 %v5754, 16
        %v6159 = vrot.slane %v6157, 5
        %v6160 = vsel %vm1062, %v6155, %v6159
        %v6161 = vshrl.u32 %v5754, 16
        %v6163 = vrot.slane %v6161, 4
        %v6164 = vor.u32 %v6163, %v6159
        %v6165 = vrot.slane %v6164, 4
        %v6167 = vshll.u32 %v5786, 16
        %v6169 = vrot.slane %v6167, 5
        %v6170 = vsel %vm1062, %v6165, %v6169
        %s6171 = scalar_lea.vmem [#allocation8], 64
        %v6172 = vld [vmem:[%s6171] sm:$0xf]
        %v6173 = vld [vmem:[%s6171 + $0x4] sm:$0xf]
        %v6174 = vld [vmem:[%s6171 + $0x8] sm:$0xf]
        %v6175 = vld [vmem:[%s6171 + $0xc] sm:$0xf]
        %v6176 = vld [vmem:[%s6171 + $0x10] sm:$0xf]
        %v6177 = vld [vmem:[%s6171 + $0x14] sm:$0xf]
        %v6178 = vld [vmem:[%s6171 + $0x18] sm:$0xf]
        %v6179 = vld [vmem:[%s6171 + $0x1c] sm:$0xf]
        %v6180 = vld [vmem:[%s6171 + $0x20] sm:$0xf]
        %v6181 = vld [vmem:[%s6171 + $0x24] sm:$0xf]
        %v6182 = vld [vmem:[%s6171 + $0x28] sm:$0xf]
        %v6183 = vld [vmem:[%s6171 + $0x2c] sm:$0xf]
        %v6184 = vld [vmem:[%s6171 + $0x30] sm:$0xf]
        %v6185 = vld [vmem:[%s6171 + $0x34] sm:$0xf]
        %v6186 = vld [vmem:[%s6171 + $0x38] sm:$0xf]
        %v6187 = vld [vmem:[%s6171 + $0x3c] sm:$0xf]
        %v6188 = vunpack.c.l.b16 %v5800
        %v6189 = vunpack.c.l.b16 %v5810
        %v6190 = vunpack.c.l.b16 %v5824
        %v6191 = vunpack.c.l.b16 %v5834
        %v6192 = vunpack.c.l.b16 %v5848
        %v6193 = vunpack.c.l.b16 %v5858
        %v6194 = vunpack.c.l.b16 %v5872
        %v6195 = vunpack.c.l.b16 %v5882
        %v6196 = vunpack.c.l.b16 %v5896
        %v6197 = vunpack.c.l.b16 %v5906
        %v6198 = vunpack.c.l.b16 %v5920
        %v6199 = vunpack.c.l.b16 %v5930
        %v6200 = vunpack.c.l.b16 %v5944
        %v6201 = vunpack.c.l.b16 %v5954
        %v6202 = vunpack.c.l.b16 %v5968
        %v6203 = vunpack.c.l.b16 %v5978
        %v6204 = vunpack.c.l.b16 %v5992
        %v6205 = vunpack.c.l.b16 %v6002
        %v6206 = vunpack.c.l.b16 %v6016
        %v6207 = vunpack.c.l.b16 %v6026
        %v6208 = vunpack.c.l.b16 %v6040
        %v6209 = vunpack.c.l.b16 %v6050
        %v6210 = vunpack.c.l.b16 %v6064
        %v6211 = vunpack.c.l.b16 %v6074
        %v6212 = vunpack.c.l.b16 %v6088
        %v6213 = vunpack.c.l.b16 %v6098
        %v6214 = vunpack.c.l.b16 %v6112
        %v6215 = vunpack.c.l.b16 %v6122
        %v6216 = vunpack.c.l.b16 %v6136
        %v6217 = vunpack.c.l.b16 %v6146
        %v6218 = vunpack.c.l.b16 %v6160
        %v6219 = vunpack.c.l.b16 %v6170
        %v6220 = vpack.c.b16 %v6189, %v6188
        %v6221 = vpack.c.b16 %v6191, %v6190
        %v6222 = vpack.c.b16 %v6193, %v6192
        %v6223 = vpack.c.b16 %v6195, %v6194
        %v6224 = vpack.c.b16 %v6197, %v6196
        %v6225 = vpack.c.b16 %v6199, %v6198
        %v6226 = vpack.c.b16 %v6201, %v6200
        %v6227 = vpack.c.b16 %v6203, %v6202
        %v6228 = vpack.c.b16 %v6205, %v6204
        %v6229 = vpack.c.b16 %v6207, %v6206
        %v6230 = vpack.c.b16 %v6209, %v6208
        %v6231 = vpack.c.b16 %v6211, %v6210
        %v6232 = vpack.c.b16 %v6213, %v6212
        %v6233 = vpack.c.b16 %v6215, %v6214
        %v6234 = vpack.c.b16 %v6217, %v6216
        %v6235 = vpack.c.b16 %v6219, %v6218
        %v6268 = vunpack.c.l.b16 %v6172
        %v6269 = vunpack.c.l.b16 %v6173
        %v6270 = vunpack.c.l.b16 %v6174
        %v6271 = vunpack.c.l.b16 %v6175
        %v6272 = vunpack.c.l.b16 %v6176
        %v6273 = vunpack.c.l.b16 %v6177
        %v6274 = vunpack.c.l.b16 %v6178
        %v6275 = vunpack.c.l.b16 %v6179
        %v6276 = vunpack.c.l.b16 %v6180
        %v6277 = vunpack.c.l.b16 %v6181
        %v6278 = vunpack.c.l.b16 %v6182
        %v6279 = vunpack.c.l.b16 %v6183
        %v6280 = vunpack.c.l.b16 %v6184
        %v6281 = vunpack.c.l.b16 %v6185
        %v6282 = vunpack.c.l.b16 %v6186
        %v6283 = vunpack.c.l.b16 %v6187
        %v6284 = vpack.c.b16 %v6269, %v6268
        %v6285 = vpack.c.b16 %v6271, %v6270
        %v6286 = vpack.c.b16 %v6273, %v6272
        %v6287 = vpack.c.b16 %v6275, %v6274
        %v6288 = vpack.c.b16 %v6277, %v6276
        %v6289 = vpack.c.b16 %v6279, %v6278
        %v6290 = vpack.c.b16 %v6281, %v6280
        %v6291 = vpack.c.b16 %v6283, %v6282
        %6300 = vmatpush.bf16.msra.mxu0 %v6291
        %6301 = vmatpush.bf16.msra.mxu0 %v6290
        %6302 = vmatpush.bf16.msra.mxu0 %v6289
        %6303 = vmatpush.bf16.msra.mxu0 %v6288
        %6304 = vmatpush.bf16.msra.mxu0 %v6287
        %6305 = vmatpush.bf16.msra.mxu0 %v6286
        %6306 = vmatpush.bf16.msra.mxu0 %v6285
        %6307 = vmatpush.bf16.msra.mxu0 %v6284
        %6308 = vmatmul.bf16.gmra.mxu0 %v6220
        %v6309 = vpop.f32.mrf.mxu0
        %v6310 = vadd.f32 0.0, %v6309
        %v6311 = vpop.f32.mrf.mxu0
        %v6312 = vadd.f32 0.0, %v6311
        %6313 = vmatmul.bf16.gmra.mxu0 %v6221
        %v6314 = vpop.f32.mrf.mxu0
        %v6315 = vadd.f32 0.0, %v6314
        %v6316 = vpop.f32.mrf.mxu0
        %v6317 = vadd.f32 0.0, %v6316
        %6318 = vmatmul.bf16.gmra.mxu0 %v6222
        %v6319 = vpop.f32.mrf.mxu0
        %v6320 = vadd.f32 0.0, %v6319
        %v6321 = vpop.f32.mrf.mxu0
        %v6322 = vadd.f32 0.0, %v6321
        %6323 = vmatmul.bf16.gmra.mxu0 %v6223
        %v6324 = vpop.f32.mrf.mxu0
        %v6325 = vadd.f32 0.0, %v6324
        %v6326 = vpop.f32.mrf.mxu0
        %v6327 = vadd.f32 0.0, %v6326
        %6328 = vmatmul.bf16.gmra.mxu0 %v6224
        %v6329 = vpop.f32.mrf.mxu0
        %v6330 = vadd.f32 0.0, %v6329
        %v6331 = vpop.f32.mrf.mxu0
        %v6332 = vadd.f32 0.0, %v6331
        %6333 = vmatmul.bf16.gmra.mxu0 %v6225
        %v6334 = vpop.f32.mrf.mxu0
        %v6335 = vadd.f32 0.0, %v6334
        %v6336 = vpop.f32.mrf.mxu0
        %v6337 = vadd.f32 0.0, %v6336
        %6338 = vmatmul.bf16.gmra.mxu0 %v6226
        %v6339 = vpop.f32.mrf.mxu0
        %v6340 = vadd.f32 0.0, %v6339
        %v6341 = vpop.f32.mrf.mxu0
        %v6342 = vadd.f32 0.0, %v6341
        %6343 = vmatmul.bf16.gmra.mxu0 %v6227
        %v6344 = vpop.f32.mrf.mxu0
        %v6345 = vadd.f32 0.0, %v6344
        %v6346 = vpop.f32.mrf.mxu0
        %v6347 = vadd.f32 0.0, %v6346
        %6348 = vmatmul.bf16.gmra.mxu0 %v6228
        %v6349 = vpop.f32.mrf.mxu0
        %v6350 = vadd.f32 0.0, %v6349
        %v6351 = vpop.f32.mrf.mxu0
        %v6352 = vadd.f32 0.0, %v6351
        %6353 = vmatmul.bf16.gmra.mxu0 %v6229
        %v6354 = vpop.f32.mrf.mxu0
        %v6355 = vadd.f32 0.0, %v6354
        %v6356 = vpop.f32.mrf.mxu0
        %v6357 = vadd.f32 0.0, %v6356
        %6358 = vmatmul.bf16.gmra.mxu0 %v6230
        %v6359 = vpop.f32.mrf.mxu0
        %v6360 = vadd.f32 0.0, %v6359
        %v6361 = vpop.f32.mrf.mxu0
        %v6362 = vadd.f32 0.0, %v6361
        %6363 = vmatmul.bf16.gmra.mxu0 %v6231
        %v6364 = vpop.f32.mrf.mxu0
        %v6365 = vadd.f32 0.0, %v6364
        %v6366 = vpop.f32.mrf.mxu0
        %v6367 = vadd.f32 0.0, %v6366
        %6368 = vmatmul.bf16.gmra.mxu0 %v6232
        %v6369 = vpop.f32.mrf.mxu0
        %v6370 = vadd.f32 0.0, %v6369
        %v6371 = vpop.f32.mrf.mxu0
        %v6372 = vadd.f32 0.0, %v6371
        %6373 = vmatmul.bf16.gmra.mxu0 %v6233
        %v6374 = vpop.f32.mrf.mxu0
        %v6375 = vadd.f32 0.0, %v6374
        %v6376 = vpop.f32.mrf.mxu0
        %v6377 = vadd.f32 0.0, %v6376
        %6378 = vmatmul.bf16.gmra.mxu0 %v6234
        %v6379 = vpop.f32.mrf.mxu0
        %v6380 = vadd.f32 0.0, %v6379
        %v6381 = vpop.f32.mrf.mxu0
        %v6382 = vadd.f32 0.0, %v6381
        %6383 = vmatmul.bf16.gmra.mxu0 %v6235
        %v6384 = vpop.f32.mrf.mxu0
        %v6385 = vadd.f32 0.0, %v6384
        %v6386 = vpop.f32.mrf.mxu0
        %v6387 = vadd.f32 0.0, %v6386
        %6388 = vdwg.mxu0
        %v6421 = vunpack.c.l.b16 %v5723
        %v6422 = vunpack.c.l.b16 %v5724
        %v6423 = vunpack.c.l.b16 %v5725
        %v6424 = vunpack.c.l.b16 %v5726
        %v6425 = vunpack.c.l.b16 %v5727
        %v6426 = vunpack.c.l.b16 %v5728
        %v6427 = vunpack.c.l.b16 %v5729
        %v6428 = vunpack.c.l.b16 %v5730
        %v6429 = vunpack.c.l.b16 %v5731
        %v6430 = vunpack.c.l.b16 %v5732
        %v6431 = vunpack.c.l.b16 %v5733
        %v6432 = vunpack.c.l.b16 %v5734
        %v6433 = vunpack.c.l.b16 %v5735
        %v6434 = vunpack.c.l.b16 %v5736
        %v6435 = vunpack.c.l.b16 %v5737
        %v6436 = vunpack.c.l.b16 %v5738
        %v6437 = vunpack.c.l.b16 %v5739
        %v6438 = vunpack.c.l.b16 %v5740
        %v6439 = vunpack.c.l.b16 %v5741
        %v6440 = vunpack.c.l.b16 %v5742
        %v6441 = vunpack.c.l.b16 %v5743
        %v6442 = vunpack.c.l.b16 %v5744
        %v6443 = vunpack.c.l.b16 %v5745
        %v6444 = vunpack.c.l.b16 %v5746
        %v6445 = vunpack.c.l.b16 %v5747
        %v6446 = vunpack.c.l.b16 %v5748
        %v6447 = vunpack.c.l.b16 %v5749
        %v6448 = vunpack.c.l.b16 %v5750
        %v6449 = vunpack.c.l.b16 %v5751
        %v6450 = vunpack.c.l.b16 %v5752
        %v6451 = vunpack.c.l.b16 %v5753
        %v6452 = vunpack.c.l.b16 %v5754
        %v6453 = vpack.c.b16 %v6422, %v6421
        %v6454 = vpack.c.b16 %v6424, %v6423
        %v6455 = vpack.c.b16 %v6426, %v6425
        %v6456 = vpack.c.b16 %v6428, %v6427
        %v6457 = vpack.c.b16 %v6430, %v6429
        %v6458 = vpack.c.b16 %v6432, %v6431
        %v6459 = vpack.c.b16 %v6434, %v6433
        %v6460 = vpack.c.b16 %v6436, %v6435
        %v6461 = vpack.c.b16 %v6438, %v6437
        %v6462 = vpack.c.b16 %v6440, %v6439
        %v6463 = vpack.c.b16 %v6442, %v6441
        %v6464 = vpack.c.b16 %v6444, %v6443
        %v6465 = vpack.c.b16 %v6446, %v6445
        %v6466 = vpack.c.b16 %v6448, %v6447
        %v6467 = vpack.c.b16 %v6450, %v6449
        %v6468 = vpack.c.b16 %v6452, %v6451
        %v6501 = vunpack.c.l.b16 %v5755
        %v6502 = vunpack.c.l.b16 %v5756
        %v6503 = vunpack.c.l.b16 %v5757
        %v6504 = vunpack.c.l.b16 %v5758
        %v6505 = vunpack.c.l.b16 %v5759
        %v6506 = vunpack.c.l.b16 %v5760
        %v6507 = vunpack.c.l.b16 %v5761
        %v6508 = vunpack.c.l.b16 %v5762
        %v6509 = vunpack.c.l.b16 %v5763
        %v6510 = vunpack.c.l.b16 %v5764
        %v6511 = vunpack.c.l.b16 %v5765
        %v6512 = vunpack.c.l.b16 %v5766
        %v6513 = vunpack.c.l.b16 %v5767
        %v6514 = vunpack.c.l.b16 %v5768
        %v6515 = vunpack.c.l.b16 %v5769
        %v6516 = vunpack.c.l.b16 %v5770
        %v6517 = vpack.c.b16 %v6502, %v6501
        %v6518 = vpack.c.b16 %v6504, %v6503
        %v6519 = vpack.c.b16 %v6506, %v6505
        %v6520 = vpack.c.b16 %v6508, %v6507
        %v6521 = vpack.c.b16 %v6510, %v6509
        %v6522 = vpack.c.b16 %v6512, %v6511
        %v6523 = vpack.c.b16 %v6514, %v6513
        %v6524 = vpack.c.b16 %v6516, %v6515
        %6533 = vmatpush.bf16.msra.mxu0 %v6524
        %6534 = vmatpush.bf16.msra.mxu0 %v6523
        %6535 = vmatpush.bf16.msra.mxu0 %v6522
        %6536 = vmatpush.bf16.msra.mxu0 %v6521
        %6537 = vmatpush.bf16.msra.mxu0 %v6520
        %6538 = vmatpush.bf16.msra.mxu0 %v6519
        %6539 = vmatpush.bf16.msra.mxu0 %v6518
        %6540 = vmatpush.bf16.msra.mxu0 %v6517
        %6541 = vmatmul.bf16.gmra.mxu0 %v6453
        %v6542 = vpop.f32.mrf.mxu0
        %v6543 = vadd.f32 %v6310, %v6542
        %v6544 = vpop.f32.mrf.mxu0
        %v6545 = vadd.f32 %v6312, %v6544
        %6546 = vmatmul.bf16.gmra.mxu0 %v6454
        %v6547 = vpop.f32.mrf.mxu0
        %v6548 = vadd.f32 %v6315, %v6547
        %v6549 = vpop.f32.mrf.mxu0
        %v6550 = vadd.f32 %v6317, %v6549
        %6551 = vmatmul.bf16.gmra.mxu0 %v6455
        %v6552 = vpop.f32.mrf.mxu0
        %v6553 = vadd.f32 %v6320, %v6552
        %v6554 = vpop.f32.mrf.mxu0
        %v6555 = vadd.f32 %v6322, %v6554
        %6556 = vmatmul.bf16.gmra.mxu0 %v6456
        %v6557 = vpop.f32.mrf.mxu0
        %v6558 = vadd.f32 %v6325, %v6557
        %v6559 = vpop.f32.mrf.mxu0
        %v6560 = vadd.f32 %v6327, %v6559
        %6561 = vmatmul.bf16.gmra.mxu0 %v6457
        %v6562 = vpop.f32.mrf.mxu0
        %v6563 = vadd.f32 %v6330, %v6562
        %v6564 = vpop.f32.mrf.mxu0
        %v6565 = vadd.f32 %v6332, %v6564
        %6566 = vmatmul.bf16.gmra.mxu0 %v6458
        %v6567 = vpop.f32.mrf.mxu0
        %v6568 = vadd.f32 %v6335, %v6567
        %v6569 = vpop.f32.mrf.mxu0
        %v6570 = vadd.f32 %v6337, %v6569
        %6571 = vmatmul.bf16.gmra.mxu0 %v6459
        %v6572 = vpop.f32.mrf.mxu0
        %v6573 = vadd.f32 %v6340, %v6572
        %v6574 = vpop.f32.mrf.mxu0
        %v6575 = vadd.f32 %v6342, %v6574
        %6576 = vmatmul.bf16.gmra.mxu0 %v6460
        %v6577 = vpop.f32.mrf.mxu0
        %v6578 = vadd.f32 %v6345, %v6577
        %v6579 = vpop.f32.mrf.mxu0
        %v6580 = vadd.f32 %v6347, %v6579
        %6581 = vmatmul.bf16.gmra.mxu0 %v6461
        %v6582 = vpop.f32.mrf.mxu0
        %v6583 = vadd.f32 %v6350, %v6582
        %v6584 = vpop.f32.mrf.mxu0
        %v6585 = vadd.f32 %v6352, %v6584
        %6586 = vmatmul.bf16.gmra.mxu0 %v6462
        %v6587 = vpop.f32.mrf.mxu0
        %v6588 = vadd.f32 %v6355, %v6587
        %v6589 = vpop.f32.mrf.mxu0
        %v6590 = vadd.f32 %v6357, %v6589
        %6591 = vmatmul.bf16.gmra.mxu0 %v6463
        %v6592 = vpop.f32.mrf.mxu0
        %v6593 = vadd.f32 %v6360, %v6592
        %v6594 = vpop.f32.mrf.mxu0
        %v6595 = vadd.f32 %v6362, %v6594
        %6596 = vmatmul.bf16.gmra.mxu0 %v6464
        %v6597 = vpop.f32.mrf.mxu0
        %v6598 = vadd.f32 %v6365, %v6597
        %v6599 = vpop.f32.mrf.mxu0
        %v6600 = vadd.f32 %v6367, %v6599
        %6601 = vmatmul.bf16.gmra.mxu0 %v6465
        %v6602 = vpop.f32.mrf.mxu0
        %v6603 = vadd.f32 %v6370, %v6602
        %v6604 = vpop.f32.mrf.mxu0
        %v6605 = vadd.f32 %v6372, %v6604
        %6606 = vmatmul.bf16.gmra.mxu0 %v6466
        %v6607 = vpop.f32.mrf.mxu0
        %v6608 = vadd.f32 %v6375, %v6607
        %v6609 = vpop.f32.mrf.mxu0
        %v6610 = vadd.f32 %v6377, %v6609
        %6611 = vmatmul.bf16.gmra.mxu0 %v6467
        %v6612 = vpop.f32.mrf.mxu0
        %v6613 = vadd.f32 %v6380, %v6612
        %v6614 = vpop.f32.mrf.mxu0
        %v6615 = vadd.f32 %v6382, %v6614
        %6616 = vmatmul.bf16.gmra.mxu0 %v6468
        %v6617 = vpop.f32.mrf.mxu0
        %v6618 = vadd.f32 %v6385, %v6617
        %v6619 = vpop.f32.mrf.mxu0
        %v6620 = vadd.f32 %v6387, %v6619
        %6621 = vdwg.mxu0
        %v6622 = vld [vmem:[#allocation2] sm:$0xe]
        %v6623 = vld [vmem:[#allocation2 + $0xc] sm:$0xe]
        %v6624 = vld [vmem:[#allocation2 + $0x18] sm:$0xe]
        %v6625 = vld [vmem:[#allocation2 + $0x24] sm:$0xe]
        %v6626 = vld [vmem:[#allocation2 + $0x30] sm:$0xe]
        %v6627 = vld [vmem:[#allocation2 + $0x3c] sm:$0xe]
        %v6628 = vld [vmem:[#allocation2 + $0x48] sm:$0xe]
        %v6629 = vld [vmem:[#allocation2 + $0x54] sm:$0xe]
        %v6630 = vld [vmem:[#allocation2 + $0x60] sm:$0xe]
        %v6631 = vld [vmem:[#allocation2 + $0x6c] sm:$0xe]
        %v6632 = vld [vmem:[#allocation2 + $0x78] sm:$0xe]
        %v6633 = vld [vmem:[#allocation2 + $0x84] sm:$0xe]
        %v6634 = vld [vmem:[#allocation2 + $0x90] sm:$0xe]
        %v6635 = vld [vmem:[#allocation2 + $0x9c] sm:$0xe]
        %v6636 = vld [vmem:[#allocation2 + $0xa8] sm:$0xe]
        %v6637 = vld [vmem:[#allocation2 + $0xb4] sm:$0xe]
        %v6670 = vrot.slane %v6622, 5
        %v6671 = vrot.slane %v6670, 4
        %v6672 = vrot.slane %v5724, 5
        %v6673 = vsel %vm1948, %v6671, %v6672
        %v6674 = vrot.slane %v6672, 4
        %v6675 = vrot.slane %v5771, 5
        %v6676 = vsel %vm1948, %v6674, %v6675
        %v6677 = vrot.slane %v6623, 5
        %v6678 = vrot.slane %v6677, 4
        %v6679 = vrot.slane %v5726, 5
        %v6680 = vsel %vm1948, %v6678, %v6679
        %v6681 = vrot.slane %v6679, 4
        %v6682 = vrot.slane %v5772, 5
        %v6683 = vsel %vm1948, %v6681, %v6682
        %v6684 = vrot.slane %v6624, 5
        %v6685 = vrot.slane %v6684, 4
        %v6686 = vrot.slane %v5728, 5
        %v6687 = vsel %vm1948, %v6685, %v6686
        %v6688 = vrot.slane %v6686, 4
        %v6689 = vrot.slane %v5773, 5
        %v6690 = vsel %vm1948, %v6688, %v6689
        %v6691 = vrot.slane %v6625, 5
        %v6692 = vrot.slane %v6691, 4
        %v6693 = vrot.slane %v5730, 5
        %v6694 = vsel %vm1948, %v6692, %v6693
        %v6695 = vrot.slane %v6693, 4
        %v6696 = vrot.slane %v5774, 5
        %v6697 = vsel %vm1948, %v6695, %v6696
        %v6698 = vrot.slane %v6626, 5
        %v6699 = vrot.slane %v6698, 4
        %v6700 = vrot.slane %v5732, 5
        %v6701 = vsel %vm1948, %v6699, %v6700
        %v6702 = vrot.slane %v6700, 4
        %v6703 = vrot.slane %v5775, 5
        %v6704 = vsel %vm1948, %v6702, %v6703
        %v6705 = vrot.slane %v6627, 5
        %v6706 = vrot.slane %v6705, 4
        %v6707 = vrot.slane %v5734, 5
        %v6708 = vsel %vm1948, %v6706, %v6707
        %v6709 = vrot.slane %v6707, 4
        %v6710 = vrot.slane %v5776, 5
        %v6711 = vsel %vm1948, %v6709, %v6710
        %v6712 = vrot.slane %v6628, 5
        %v6713 = vrot.slane %v6712, 4
        %v6714 = vrot.slane %v5736, 5
        %v6715 = vsel %vm1948, %v6713, %v6714
        %v6716 = vrot.slane %v6714, 4
        %v6717 = vrot.slane %v5777, 5
        %v6718 = vsel %vm1948, %v6716, %v6717
        %v6719 = vrot.slane %v6629, 5
        %v6720 = vrot.slane %v6719, 4
        %v6721 = vrot.slane %v5738, 5
        %v6722 = vsel %vm1948, %v6720, %v6721
        %v6723 = vrot.slane %v6721, 4
        %v6724 = vrot.slane %v5778, 5
        %v6725 = vsel %vm1948, %v6723, %v6724
        %v6726 = vrot.slane %v6630, 5
        %v6727 = vrot.slane %v6726, 4
        %v6728 = vrot.slane %v5740, 5
        %v6729 = vsel %vm1948, %v6727, %v6728
        %v6730 = vrot.slane %v6728, 4
        %v6731 = vrot.slane %v5779, 5
        %v6732 = vsel %vm1948, %v6730, %v6731
        %v6733 = vrot.slane %v6631, 5
        %v6734 = vrot.slane %v6733, 4
        %v6735 = vrot.slane %v5742, 5
        %v6736 = vsel %vm1948, %v6734, %v6735
        %v6737 = vrot.slane %v6735, 4
        %v6738 = vrot.slane %v5780, 5
        %v6739 = vsel %vm1948, %v6737, %v6738
        %v6740 = vrot.slane %v6632, 5
        %v6741 = vrot.slane %v6740, 4
        %v6742 = vrot.slane %v5744, 5
        %v6743 = vsel %vm1948, %v6741, %v6742
        %v6744 = vrot.slane %v6742, 4
        %v6745 = vrot.slane %v5781, 5
        %v6746 = vsel %vm1948, %v6744, %v6745
        %v6747 = vrot.slane %v6633, 5
        %v6748 = vrot.slane %v6747, 4
        %v6749 = vrot.slane %v5746, 5
        %v6750 = vsel %vm1948, %v6748, %v6749
        %v6751 = vrot.slane %v6749, 4
        %v6752 = vrot.slane %v5782, 5
        %v6753 = vsel %vm1948, %v6751, %v6752
        %v6754 = vrot.slane %v6634, 5
        %v6755 = vrot.slane %v6754, 4
        %v6756 = vrot.slane %v5748, 5
        %v6757 = vsel %vm1948, %v6755, %v6756
        %v6758 = vrot.slane %v6756, 4
        %v6759 = vrot.slane %v5783, 5
        %v6760 = vsel %vm1948, %v6758, %v6759
        %v6761 = vrot.slane %v6635, 5
        %v6762 = vrot.slane %v6761, 4
        %v6763 = vrot.slane %v5750, 5
        %v6764 = vsel %vm1948, %v6762, %v6763
        %v6765 = vrot.slane %v6763, 4
        %v6766 = vrot.slane %v5784, 5
        %v6767 = vsel %vm1948, %v6765, %v6766
        %v6768 = vrot.slane %v6636, 5
        %v6769 = vrot.slane %v6768, 4
        %v6770 = vrot.slane %v5752, 5
        %v6771 = vsel %vm1948, %v6769, %v6770
        %v6772 = vrot.slane %v6770, 4
        %v6773 = vrot.slane %v5785, 5
        %v6774 = vsel %vm1948, %v6772, %v6773
        %v6775 = vrot.slane %v6637, 5
        %v6776 = vrot.slane %v6775, 4
        %v6777 = vrot.slane %v5754, 5
        %v6778 = vsel %vm1948, %v6776, %v6777
        %v6779 = vrot.slane %v6777, 4
        %v6780 = vrot.slane %v5786, 5
        %v6781 = vsel %vm1948, %v6779, %v6780
        %s6782 = scalar_lea.vmem [#allocation8], 128
        %v6783 = vld [vmem:[%s6782] sm:$0xf]
        %v6784 = vld [vmem:[%s6782 + $0x4] sm:$0xf]
        %v6785 = vld [vmem:[%s6782 + $0x8] sm:$0xf]
        %v6786 = vld [vmem:[%s6782 + $0xc] sm:$0xf]
        %v6787 = vld [vmem:[%s6782 + $0x10] sm:$0xf]
        %v6788 = vld [vmem:[%s6782 + $0x14] sm:$0xf]
        %v6789 = vld [vmem:[%s6782 + $0x18] sm:$0xf]
        %v6790 = vld [vmem:[%s6782 + $0x1c] sm:$0xf]
        %v6791 = vld [vmem:[%s6782 + $0x20] sm:$0xf]
        %v6792 = vld [vmem:[%s6782 + $0x24] sm:$0xf]
        %v6793 = vld [vmem:[%s6782 + $0x28] sm:$0xf]
        %v6794 = vld [vmem:[%s6782 + $0x2c] sm:$0xf]
        %v6795 = vld [vmem:[%s6782 + $0x30] sm:$0xf]
        %v6796 = vld [vmem:[%s6782 + $0x34] sm:$0xf]
        %v6797 = vld [vmem:[%s6782 + $0x38] sm:$0xf]
        %v6798 = vld [vmem:[%s6782 + $0x3c] sm:$0xf]
        %v6799 = vunpack.c.l.b16 %v6673
        %v6800 = vunpack.c.l.b16 %v6676
        %v6801 = vunpack.c.l.b16 %v6680
        %v6802 = vunpack.c.l.b16 %v6683
        %v6803 = vunpack.c.l.b16 %v6687
        %v6804 = vunpack.c.l.b16 %v6690
        %v6805 = vunpack.c.l.b16 %v6694
        %v6806 = vunpack.c.l.b16 %v6697
        %v6807 = vunpack.c.l.b16 %v6701
        %v6808 = vunpack.c.l.b16 %v6704
        %v6809 = vunpack.c.l.b16 %v6708
        %v6810 = vunpack.c.l.b16 %v6711
        %v6811 = vunpack.c.l.b16 %v6715
        %v6812 = vunpack.c.l.b16 %v6718
        %v6813 = vunpack.c.l.b16 %v6722
        %v6814 = vunpack.c.l.b16 %v6725
        %v6815 = vunpack.c.l.b16 %v6729
        %v6816 = vunpack.c.l.b16 %v6732
        %v6817 = vunpack.c.l.b16 %v6736
        %v6818 = vunpack.c.l.b16 %v6739
        %v6819 = vunpack.c.l.b16 %v6743
        %v6820 = vunpack.c.l.b16 %v6746
        %v6821 = vunpack.c.l.b16 %v6750
        %v6822 = vunpack.c.l.b16 %v6753
        %v6823 = vunpack.c.l.b16 %v6757
        %v6824 = vunpack.c.l.b16 %v6760
        %v6825 = vunpack.c.l.b16 %v6764
        %v6826 = vunpack.c.l.b16 %v6767
        %v6827 = vunpack.c.l.b16 %v6771
        %v6828 = vunpack.c.l.b16 %v6774
        %v6829 = vunpack.c.l.b16 %v6778
        %v6830 = vunpack.c.l.b16 %v6781
        %v6831 = vpack.c.b16 %v6800, %v6799
        %v6832 = vpack.c.b16 %v6802, %v6801
        %v6833 = vpack.c.b16 %v6804, %v6803
        %v6834 = vpack.c.b16 %v6806, %v6805
        %v6835 = vpack.c.b16 %v6808, %v6807
        %v6836 = vpack.c.b16 %v6810, %v6809
        %v6837 = vpack.c.b16 %v6812, %v6811
        %v6838 = vpack.c.b16 %v6814, %v6813
        %v6839 = vpack.c.b16 %v6816, %v6815
        %v6840 = vpack.c.b16 %v6818, %v6817
        %v6841 = vpack.c.b16 %v6820, %v6819
        %v6842 = vpack.c.b16 %v6822, %v6821
        %v6843 = vpack.c.b16 %v6824, %v6823
        %v6844 = vpack.c.b16 %v6826, %v6825
        %v6845 = vpack.c.b16 %v6828, %v6827
        %v6846 = vpack.c.b16 %v6830, %v6829
        %v6879 = vunpack.c.l.b16 %v6783
        %v6880 = vunpack.c.l.b16 %v6784
        %v6881 = vunpack.c.l.b16 %v6785
        %v6882 = vunpack.c.l.b16 %v6786
        %v6883 = vunpack.c.l.b16 %v6787
        %v6884 = vunpack.c.l.b16 %v6788
        %v6885 = vunpack.c.l.b16 %v6789
        %v6886 = vunpack.c.l.b16 %v6790
        %v6887 = vunpack.c.l.b16 %v6791
        %v6888 = vunpack.c.l.b16 %v6792
        %v6889 = vunpack.c.l.b16 %v6793
        %v6890 = vunpack.c.l.b16 %v6794
        %v6891 = vunpack.c.l.b16 %v6795
        %v6892 = vunpack.c.l.b16 %v6796
        %v6893 = vunpack.c.l.b16 %v6797
        %v6894 = vunpack.c.l.b16 %v6798
        %v6895 = vpack.c.b16 %v6880, %v6879
        %v6896 = vpack.c.b16 %v6882, %v6881
        %v6897 = vpack.c.b16 %v6884, %v6883
        %v6898 = vpack.c.b16 %v6886, %v6885
        %v6899 = vpack.c.b16 %v6888, %v6887
        %v6900 = vpack.c.b16 %v6890, %v6889
        %v6901 = vpack.c.b16 %v6892, %v6891
        %v6902 = vpack.c.b16 %v6894, %v6893
        %6911 = vmatpush.bf16.msra.mxu0 %v6902
        %6912 = vmatpush.bf16.msra.mxu0 %v6901
        %6913 = vmatpush.bf16.msra.mxu0 %v6900
        %6914 = vmatpush.bf16.msra.mxu0 %v6899
        %6915 = vmatpush.bf16.msra.mxu0 %v6898
        %6916 = vmatpush.bf16.msra.mxu0 %v6897
        %6917 = vmatpush.bf16.msra.mxu0 %v6896
        %6918 = vmatpush.bf16.msra.mxu0 %v6895
        %6919 = vmatmul.bf16.gmra.mxu0 %v6831
        %v6920 = vpop.f32.mrf.mxu0
        %v6921 = vadd.f32 0.0, %v6920
        %v6922 = vpop.f32.mrf.mxu0
        %v6923 = vadd.f32 0.0, %v6922
        %6924 = vmatmul.bf16.gmra.mxu0 %v6832
        %v6925 = vpop.f32.mrf.mxu0
        %v6926 = vadd.f32 0.0, %v6925
        %v6927 = vpop.f32.mrf.mxu0
        %v6928 = vadd.f32 0.0, %v6927
        %6929 = vmatmul.bf16.gmra.mxu0 %v6833
        %v6930 = vpop.f32.mrf.mxu0
        %v6931 = vadd.f32 0.0, %v6930
        %v6932 = vpop.f32.mrf.mxu0
        %v6933 = vadd.f32 0.0, %v6932
        %6934 = vmatmul.bf16.gmra.mxu0 %v6834
        %v6935 = vpop.f32.mrf.mxu0
        %v6936 = vadd.f32 0.0, %v6935
        %v6937 = vpop.f32.mrf.mxu0
        %v6938 = vadd.f32 0.0, %v6937
        %6939 = vmatmul.bf16.gmra.mxu0 %v6835
        %v6940 = vpop.f32.mrf.mxu0
        %v6941 = vadd.f32 0.0, %v6940
        %v6942 = vpop.f32.mrf.mxu0
        %v6943 = vadd.f32 0.0, %v6942
        %6944 = vmatmul.bf16.gmra.mxu0 %v6836
        %v6945 = vpop.f32.mrf.mxu0
        %v6946 = vadd.f32 0.0, %v6945
        %v6947 = vpop.f32.mrf.mxu0
        %v6948 = vadd.f32 0.0, %v6947
        %6949 = vmatmul.bf16.gmra.mxu0 %v6837
        %v6950 = vpop.f32.mrf.mxu0
        %v6951 = vadd.f32 0.0, %v6950
        %v6952 = vpop.f32.mrf.mxu0
        %v6953 = vadd.f32 0.0, %v6952
        %6954 = vmatmul.bf16.gmra.mxu0 %v6838
        %v6955 = vpop.f32.mrf.mxu0
        %v6956 = vadd.f32 0.0, %v6955
        %v6957 = vpop.f32.mrf.mxu0
        %v6958 = vadd.f32 0.0, %v6957
        %6959 = vmatmul.bf16.gmra.mxu0 %v6839
        %v6960 = vpop.f32.mrf.mxu0
        %v6961 = vadd.f32 0.0, %v6960
        %v6962 = vpop.f32.mrf.mxu0
        %v6963 = vadd.f32 0.0, %v6962
        %6964 = vmatmul.bf16.gmra.mxu0 %v6840
        %v6965 = vpop.f32.mrf.mxu0
        %v6966 = vadd.f32 0.0, %v6965
        %v6967 = vpop.f32.mrf.mxu0
        %v6968 = vadd.f32 0.0, %v6967
        %6969 = vmatmul.bf16.gmra.mxu0 %v6841
        %v6970 = vpop.f32.mrf.mxu0
        %v6971 = vadd.f32 0.0, %v6970
        %v6972 = vpop.f32.mrf.mxu0
        %v6973 = vadd.f32 0.0, %v6972
        %6974 = vmatmul.bf16.gmra.mxu0 %v6842
        %v6975 = vpop.f32.mrf.mxu0
        %v6976 = vadd.f32 0.0, %v6975
        %v6977 = vpop.f32.mrf.mxu0
        %v6978 = vadd.f32 0.0, %v6977
        %6979 = vmatmul.bf16.gmra.mxu0 %v6843
        %v6980 = vpop.f32.mrf.mxu0
        %v6981 = vadd.f32 0.0, %v6980
        %v6982 = vpop.f32.mrf.mxu0
        %v6983 = vadd.f32 0.0, %v6982
        %6984 = vmatmul.bf16.gmra.mxu0 %v6844
        %v6985 = vpop.f32.mrf.mxu0
        %v6986 = vadd.f32 0.0, %v6985
        %v6987 = vpop.f32.mrf.mxu0
        %v6988 = vadd.f32 0.0, %v6987
        %6989 = vmatmul.bf16.gmra.mxu0 %v6845
        %v6990 = vpop.f32.mrf.mxu0
        %v6991 = vadd.f32 0.0, %v6990
        %v6992 = vpop.f32.mrf.mxu0
        %v6993 = vadd.f32 0.0, %v6992
        %6994 = vmatmul.bf16.gmra.mxu0 %v6846
        %v6995 = vpop.f32.mrf.mxu0
        %v6996 = vadd.f32 0.0, %v6995
        %v6997 = vpop.f32.mrf.mxu0
        %v6998 = vadd.f32 0.0, %v6997
        %6999 = vdwg.mxu0
        %v7000 = vadd.f32 %v6543, %v6921
        %v7001 = vadd.f32 %v6545, %v6923
        %v7002 = vadd.f32 %v6548, %v6926
        %v7003 = vadd.f32 %v6550, %v6928
        %v7004 = vadd.f32 %v6553, %v6931
        %v7005 = vadd.f32 %v6555, %v6933
        %v7006 = vadd.f32 %v6558, %v6936
        %v7007 = vadd.f32 %v6560, %v6938
        %v7008 = vadd.f32 %v6563, %v6941
        %v7009 = vadd.f32 %v6565, %v6943
        %v7010 = vadd.f32 %v6568, %v6946
        %v7011 = vadd.f32 %v6570, %v6948
        %v7012 = vadd.f32 %v6573, %v6951
        %v7013 = vadd.f32 %v6575, %v6953
        %v7014 = vadd.f32 %v6578, %v6956
        %v7015 = vadd.f32 %v6580, %v6958
        %v7016 = vadd.f32 %v6583, %v6961
        %v7017 = vadd.f32 %v6585, %v6963
        %v7018 = vadd.f32 %v6588, %v6966
        %v7019 = vadd.f32 %v6590, %v6968
        %v7020 = vadd.f32 %v6593, %v6971
        %v7021 = vadd.f32 %v6595, %v6973
        %v7022 = vadd.f32 %v6598, %v6976
        %v7023 = vadd.f32 %v6600, %v6978
        %v7024 = vadd.f32 %v6603, %v6981
        %v7025 = vadd.f32 %v6605, %v6983
        %v7026 = vadd.f32 %v6608, %v6986
        %v7027 = vadd.f32 %v6610, %v6988
        %v7028 = vadd.f32 %v6613, %v6991
        %v7029 = vadd.f32 %v6615, %v6993
        %v7030 = vadd.f32 %v6618, %v6996
        %v7031 = vadd.f32 %v6620, %v6998
        %v7032 = vld [vmem:[%s878] sm:$0xf]
        %v7033 = vld [vmem:[%s878 + $0x4] sm:$0xf]
        %v7034 = vld [vmem:[%s878 + $0xc] sm:$0xf]
        %v7035 = vld [vmem:[%s878 + $0x10] sm:$0xf]
        %v7036 = vld [vmem:[%s878 + $0x18] sm:$0xf]
        %v7037 = vld [vmem:[%s878 + $0x1c] sm:$0xf]
        %v7038 = vld [vmem:[%s878 + $0x24] sm:$0xf]
        %v7039 = vld [vmem:[%s878 + $0x28] sm:$0xf]
        %v7040 = vld [vmem:[%s878 + $0x30] sm:$0xf]
        %v7041 = vld [vmem:[%s878 + $0x34] sm:$0xf]
        %v7042 = vld [vmem:[%s878 + $0x3c] sm:$0xf]
        %v7043 = vld [vmem:[%s878 + $0x40] sm:$0xf]
        %v7044 = vld [vmem:[%s878 + $0x48] sm:$0xf]
        %v7045 = vld [vmem:[%s878 + $0x4c] sm:$0xf]
        %v7046 = vld [vmem:[%s878 + $0x54] sm:$0xf]
        %v7047 = vld [vmem:[%s878 + $0x58] sm:$0xf]
        %v7048 = vld [vmem:[%s878 + $0x60] sm:$0xf]
        %v7049 = vld [vmem:[%s878 + $0x64] sm:$0xf]
        %v7050 = vld [vmem:[%s878 + $0x6c] sm:$0xf]
        %v7051 = vld [vmem:[%s878 + $0x70] sm:$0xf]
        %v7052 = vld [vmem:[%s878 + $0x78] sm:$0xf]
        %v7053 = vld [vmem:[%s878 + $0x7c] sm:$0xf]
        %v7054 = vld [vmem:[%s878 + $0x84] sm:$0xf]
        %v7055 = vld [vmem:[%s878 + $0x88] sm:$0xf]
        %v7056 = vld [vmem:[%s878 + $0x90] sm:$0xf]
        %v7057 = vld [vmem:[%s878 + $0x94] sm:$0xf]
        %v7058 = vld [vmem:[%s878 + $0x9c] sm:$0xf]
        %v7059 = vld [vmem:[%s878 + $0xa0] sm:$0xf]
        %v7060 = vld [vmem:[%s878 + $0xa8] sm:$0xf]
        %v7061 = vld [vmem:[%s878 + $0xac] sm:$0xf]
        %v7062 = vld [vmem:[%s878 + $0xb4] sm:$0xf]
        %v7063 = vld [vmem:[%s878 + $0xb8] sm:$0xf]
        %s7064 = scalar_lea.vmem [#allocation8], 192
        %v7065 = vld [vmem:[%s7064] sm:$0xf]
        %v7066 = vld [vmem:[%s7064 + $0x4] sm:$0xf]
        %v7067 = vld [vmem:[%s7064 + $0x8] sm:$0xf]
        %v7068 = vld [vmem:[%s7064 + $0xc] sm:$0xf]
        %v7069 = vld [vmem:[%s7064 + $0x10] sm:$0xf]
        %v7070 = vld [vmem:[%s7064 + $0x14] sm:$0xf]
        %v7071 = vld [vmem:[%s7064 + $0x18] sm:$0xf]
        %v7072 = vld [vmem:[%s7064 + $0x1c] sm:$0xf]
        %v7073 = vld [vmem:[%s7064 + $0x20] sm:$0xf]
        %v7074 = vld [vmem:[%s7064 + $0x24] sm:$0xf]
        %v7075 = vld [vmem:[%s7064 + $0x28] sm:$0xf]
        %v7076 = vld [vmem:[%s7064 + $0x2c] sm:$0xf]
        %v7077 = vld [vmem:[%s7064 + $0x30] sm:$0xf]
        %v7078 = vld [vmem:[%s7064 + $0x34] sm:$0xf]
        %v7079 = vld [vmem:[%s7064 + $0x38] sm:$0xf]
        %v7080 = vld [vmem:[%s7064 + $0x3c] sm:$0xf]
        %v7113 = vunpack.c.l.b16 %v7032
        %v7114 = vunpack.c.l.b16 %v7033
        %v7115 = vunpack.c.l.b16 %v7034
        %v7116 = vunpack.c.l.b16 %v7035
        %v7117 = vunpack.c.l.b16 %v7036
        %v7118 = vunpack.c.l.b16 %v7037
        %v7119 = vunpack.c.l.b16 %v7038
        %v7120 = vunpack.c.l.b16 %v7039
        %v7121 = vunpack.c.l.b16 %v7040
        %v7122 = vunpack.c.l.b16 %v7041
        %v7123 = vunpack.c.l.b16 %v7042
        %v7124 = vunpack.c.l.b16 %v7043
        %v7125 = vunpack.c.l.b16 %v7044
        %v7126 = vunpack.c.l.b16 %v7045
        %v7127 = vunpack.c.l.b16 %v7046
        %v7128 = vunpack.c.l.b16 %v7047
        %v7129 = vunpack.c.l.b16 %v7048
        %v7130 = vunpack.c.l.b16 %v7049
        %v7131 = vunpack.c.l.b16 %v7050
        %v7132 = vunpack.c.l.b16 %v7051
        %v7133 = vunpack.c.l.b16 %v7052
        %v7134 = vunpack.c.l.b16 %v7053
        %v7135 = vunpack.c.l.b16 %v7054
        %v7136 = vunpack.c.l.b16 %v7055
        %v7137 = vunpack.c.l.b16 %v7056
        %v7138 = vunpack.c.l.b16 %v7057
        %v7139 = vunpack.c.l.b16 %v7058
        %v7140 = vunpack.c.l.b16 %v7059
        %v7141 = vunpack.c.l.b16 %v7060
        %v7142 = vunpack.c.l.b16 %v7061
        %v7143 = vunpack.c.l.b16 %v7062
        %v7144 = vunpack.c.l.b16 %v7063
        %v7145 = vpack.c.b16 %v7114, %v7113
        %v7146 = vpack.c.b16 %v7116, %v7115
        %v7147 = vpack.c.b16 %v7118, %v7117
        %v7148 = vpack.c.b16 %v7120, %v7119
        %v7149 = vpack.c.b16 %v7122, %v7121
        %v7150 = vpack.c.b16 %v7124, %v7123
        %v7151 = vpack.c.b16 %v7126, %v7125
        %v7152 = vpack.c.b16 %v7128, %v7127
        %v7153 = vpack.c.b16 %v7130, %v7129
        %v7154 = vpack.c.b16 %v7132, %v7131
        %v7155 = vpack.c.b16 %v7134, %v7133
        %v7156 = vpack.c.b16 %v7136, %v7135
        %v7157 = vpack.c.b16 %v7138, %v7137
        %v7158 = vpack.c.b16 %v7140, %v7139
        %v7159 = vpack.c.b16 %v7142, %v7141
        %v7160 = vpack.c.b16 %v7144, %v7143
        %v7193 = vunpack.c.l.b16 %v7065
        %v7194 = vunpack.c.l.b16 %v7066
        %v7195 = vunpack.c.l.b16 %v7067
        %v7196 = vunpack.c.l.b16 %v7068
        %v7197 = vunpack.c.l.b16 %v7069
        %v7198 = vunpack.c.l.b16 %v7070
        %v7199 = vunpack.c.l.b16 %v7071
        %v7200 = vunpack.c.l.b16 %v7072
        %v7201 = vunpack.c.l.b16 %v7073
        %v7202 = vunpack.c.l.b16 %v7074
        %v7203 = vunpack.c.l.b16 %v7075
        %v7204 = vunpack.c.l.b16 %v7076
        %v7205 = vunpack.c.l.b16 %v7077
        %v7206 = vunpack.c.l.b16 %v7078
        %v7207 = vunpack.c.l.b16 %v7079
        %v7208 = vunpack.c.l.b16 %v7080
        %v7209 = vpack.c.b16 %v7194, %v7193
        %v7210 = vpack.c.b16 %v7196, %v7195
        %v7211 = vpack.c.b16 %v7198, %v7197
        %v7212 = vpack.c.b16 %v7200, %v7199
        %v7213 = vpack.c.b16 %v7202, %v7201
        %v7214 = vpack.c.b16 %v7204, %v7203
        %v7215 = vpack.c.b16 %v7206, %v7205
        %v7216 = vpack.c.b16 %v7208, %v7207
        %7225 = vmatpush.bf16.msra.mxu0 %v7216
        %7226 = vmatpush.bf16.msra.mxu0 %v7215
        %7227 = vmatpush.bf16.msra.mxu0 %v7214
        %7228 = vmatpush.bf16.msra.mxu0 %v7213
        %7229 = vmatpush.bf16.msra.mxu0 %v7212
        %7230 = vmatpush.bf16.msra.mxu0 %v7211
        %7231 = vmatpush.bf16.msra.mxu0 %v7210
        %7232 = vmatpush.bf16.msra.mxu0 %v7209
        %7233 = vmatmul.bf16.gmra.mxu0 %v7145
        %v7234 = vpop.f32.mrf.mxu0
        %v7235 = vadd.f32 0.0, %v7234
        %v7236 = vpop.f32.mrf.mxu0
        %v7237 = vadd.f32 0.0, %v7236
        %7238 = vmatmul.bf16.gmra.mxu0 %v7146
        %v7239 = vpop.f32.mrf.mxu0
        %v7240 = vadd.f32 0.0, %v7239
        %v7241 = vpop.f32.mrf.mxu0
        %v7242 = vadd.f32 0.0, %v7241
        %7243 = vmatmul.bf16.gmra.mxu0 %v7147
        %v7244 = vpop.f32.mrf.mxu0
        %v7245 = vadd.f32 0.0, %v7244
        %v7246 = vpop.f32.mrf.mxu0
        %v7247 = vadd.f32 0.0, %v7246
        %7248 = vmatmul.bf16.gmra.mxu0 %v7148
        %v7249 = vpop.f32.mrf.mxu0
        %v7250 = vadd.f32 0.0, %v7249
        %v7251 = vpop.f32.mrf.mxu0
        %v7252 = vadd.f32 0.0, %v7251
        %7253 = vmatmul.bf16.gmra.mxu0 %v7149
        %v7254 = vpop.f32.mrf.mxu0
        %v7255 = vadd.f32 0.0, %v7254
        %v7256 = vpop.f32.mrf.mxu0
        %v7257 = vadd.f32 0.0, %v7256
        %7258 = vmatmul.bf16.gmra.mxu0 %v7150
        %v7259 = vpop.f32.mrf.mxu0
        %v7260 = vadd.f32 0.0, %v7259
        %v7261 = vpop.f32.mrf.mxu0
        %v7262 = vadd.f32 0.0, %v7261
        %7263 = vmatmul.bf16.gmra.mxu0 %v7151
        %v7264 = vpop.f32.mrf.mxu0
        %v7265 = vadd.f32 0.0, %v7264
        %v7266 = vpop.f32.mrf.mxu0
        %v7267 = vadd.f32 0.0, %v7266
        %7268 = vmatmul.bf16.gmra.mxu0 %v7152
        %v7269 = vpop.f32.mrf.mxu0
        %v7270 = vadd.f32 0.0, %v7269
        %v7271 = vpop.f32.mrf.mxu0
        %v7272 = vadd.f32 0.0, %v7271
        %7273 = vmatmul.bf16.gmra.mxu0 %v7153
        %v7274 = vpop.f32.mrf.mxu0
        %v7275 = vadd.f32 0.0, %v7274
        %v7276 = vpop.f32.mrf.mxu0
        %v7277 = vadd.f32 0.0, %v7276
        %7278 = vmatmul.bf16.gmra.mxu0 %v7154
        %v7279 = vpop.f32.mrf.mxu0
        %v7280 = vadd.f32 0.0, %v7279
        %v7281 = vpop.f32.mrf.mxu0
        %v7282 = vadd.f32 0.0, %v7281
        %7283 = vmatmul.bf16.gmra.mxu0 %v7155
        %v7284 = vpop.f32.mrf.mxu0
        %v7285 = vadd.f32 0.0, %v7284
        %v7286 = vpop.f32.mrf.mxu0
        %v7287 = vadd.f32 0.0, %v7286
        %7288 = vmatmul.bf16.gmra.mxu0 %v7156
        %v7289 = vpop.f32.mrf.mxu0
        %v7290 = vadd.f32 0.0, %v7289
        %v7291 = vpop.f32.mrf.mxu0
        %v7292 = vadd.f32 0.0, %v7291
        %7293 = vmatmul.bf16.gmra.mxu0 %v7157
        %v7294 = vpop.f32.mrf.mxu0
        %v7295 = vadd.f32 0.0, %v7294
        %v7296 = vpop.f32.mrf.mxu0
        %v7297 = vadd.f32 0.0, %v7296
        %7298 = vmatmul.bf16.gmra.mxu0 %v7158
        %v7299 = vpop.f32.mrf.mxu0
        %v7300 = vadd.f32 0.0, %v7299
        %v7301 = vpop.f32.mrf.mxu0
        %v7302 = vadd.f32 0.0, %v7301
        %7303 = vmatmul.bf16.gmra.mxu0 %v7159
        %v7304 = vpop.f32.mrf.mxu0
        %v7305 = vadd.f32 0.0, %v7304
        %v7306 = vpop.f32.mrf.mxu0
        %v7307 = vadd.f32 0.0, %v7306
        %7308 = vmatmul.bf16.gmra.mxu0 %v7160
        %v7309 = vpop.f32.mrf.mxu0
        %v7310 = vadd.f32 0.0, %v7309
        %v7311 = vpop.f32.mrf.mxu0
        %v7312 = vadd.f32 0.0, %v7311
        %7313 = vdwg.mxu0
        %v7314 = vadd.f32 %v7000, %v7235
        %v7315 = vadd.f32 %v7001, %v7237
        %v7316 = vadd.f32 %v7002, %v7240
        %v7317 = vadd.f32 %v7003, %v7242
        %v7318 = vadd.f32 %v7004, %v7245
        %v7319 = vadd.f32 %v7005, %v7247
        %v7320 = vadd.f32 %v7006, %v7250
        %v7321 = vadd.f32 %v7007, %v7252
        %v7322 = vadd.f32 %v7008, %v7255
        %v7323 = vadd.f32 %v7009, %v7257
        %v7324 = vadd.f32 %v7010, %v7260
        %v7325 = vadd.f32 %v7011, %v7262
        %v7326 = vadd.f32 %v7012, %v7265
        %v7327 = vadd.f32 %v7013, %v7267
        %v7328 = vadd.f32 %v7014, %v7270
        %v7329 = vadd.f32 %v7015, %v7272
        %v7330 = vadd.f32 %v7016, %v7275
        %v7331 = vadd.f32 %v7017, %v7277
        %v7332 = vadd.f32 %v7018, %v7280
        %v7333 = vadd.f32 %v7019, %v7282
        %v7334 = vadd.f32 %v7020, %v7285
        %v7335 = vadd.f32 %v7021, %v7287
        %v7336 = vadd.f32 %v7022, %v7290
        %v7337 = vadd.f32 %v7023, %v7292
        %v7338 = vadd.f32 %v7024, %v7295
        %v7339 = vadd.f32 %v7025, %v7297
        %v7340 = vadd.f32 %v7026, %v7300
        %v7341 = vadd.f32 %v7027, %v7302
        %v7342 = vadd.f32 %v7028, %v7305
        %v7343 = vadd.f32 %v7029, %v7307
        %v7344 = vadd.f32 %v7030, %v7310
        %v7345 = vadd.f32 %v7031, %v7312
        %v7346 = vld [vmem:[%s878] sm:$0xf]
        %v7347 = vld [vmem:[%s878 + $0x4] sm:$0xf]
        %v7348 = vld [vmem:[%s878 + $0x8] sm:$0x1]
        %v7349 = vld [vmem:[%s878 + $0xc] sm:$0xf]
        %v7350 = vld [vmem:[%s878 + $0x10] sm:$0xf]
        %v7351 = vld [vmem:[%s878 + $0x14] sm:$0x1]
        %v7352 = vld [vmem:[%s878 + $0x18] sm:$0xf]
        %v7353 = vld [vmem:[%s878 + $0x1c] sm:$0xf]
        %v7354 = vld [vmem:[%s878 + $0x20] sm:$0x1]
        %v7355 = vld [vmem:[%s878 + $0x24] sm:$0xf]
        %v7356 = vld [vmem:[%s878 + $0x28] sm:$0xf]
        %v7357 = vld [vmem:[%s878 + $0x2c] sm:$0x1]
        %v7358 = vld [vmem:[%s878 + $0x30] sm:$0xf]
        %v7359 = vld [vmem:[%s878 + $0x34] sm:$0xf]
        %v7360 = vld [vmem:[%s878 + $0x38] sm:$0x1]
        %v7361 = vld [vmem:[%s878 + $0x3c] sm:$0xf]
        %v7362 = vld [vmem:[%s878 + $0x40] sm:$0xf]
        %v7363 = vld [vmem:[%s878 + $0x44] sm:$0x1]
        %v7364 = vld [vmem:[%s878 + $0x48] sm:$0xf]
        %v7365 = vld [vmem:[%s878 + $0x4c] sm:$0xf]
        %v7366 = vld [vmem:[%s878 + $0x50] sm:$0x1]
        %v7367 = vld [vmem:[%s878 + $0x54] sm:$0xf]
        %v7368 = vld [vmem:[%s878 + $0x58] sm:$0xf]
        %v7369 = vld [vmem:[%s878 + $0x5c] sm:$0x1]
        %v7370 = vld [vmem:[%s878 + $0x60] sm:$0xf]
        %v7371 = vld [vmem:[%s878 + $0x64] sm:$0xf]
        %v7372 = vld [vmem:[%s878 + $0x68] sm:$0x1]
        %v7373 = vld [vmem:[%s878 + $0x6c] sm:$0xf]
        %v7374 = vld [vmem:[%s878 + $0x70] sm:$0xf]
        %v7375 = vld [vmem:[%s878 + $0x74] sm:$0x1]
        %v7376 = vld [vmem:[%s878 + $0x78] sm:$0xf]
        %v7377 = vld [vmem:[%s878 + $0x7c] sm:$0xf]
        %v7378 = vld [vmem:[%s878 + $0x80] sm:$0x1]
        %v7379 = vld [vmem:[%s878 + $0x84] sm:$0xf]
        %v7380 = vld [vmem:[%s878 + $0x88] sm:$0xf]
        %v7381 = vld [vmem:[%s878 + $0x8c] sm:$0x1]
        %v7382 = vld [vmem:[%s878 + $0x90] sm:$0xf]
        %v7383 = vld [vmem:[%s878 + $0x94] sm:$0xf]
        %v7384 = vld [vmem:[%s878 + $0x98] sm:$0x1]
        %v7385 = vld [vmem:[%s878 + $0x9c] sm:$0xf]
        %v7386 = vld [vmem:[%s878 + $0xa0] sm:$0xf]
        %v7387 = vld [vmem:[%s878 + $0xa4] sm:$0x1]
        %v7388 = vld [vmem:[%s878 + $0xa8] sm:$0xf]
        %v7389 = vld [vmem:[%s878 + $0xac] sm:$0xf]
        %v7390 = vld [vmem:[%s878 + $0xb0] sm:$0x1]
        %v7391 = vld [vmem:[%s878 + $0xb4] sm:$0xf]
        %v7392 = vld [vmem:[%s878 + $0xb8] sm:$0xf]
        %v7393 = vld [vmem:[%s878 + $0xbc] sm:$0x1]
        %v7395 = vshrl.u32 %v7346, 16
        %v7397 = vrot.slane %v7395, 4
        %v7398 = vshll.u32 %v7346, 16
        %v7400 = vrot.slane %v7398, 5
        %v7401 = vor.u32 %v7397, %v7400
        %v7402 = vrot.slane %v7401, 4
        %v7404 = vshll.u32 %v7347, 16
        %v7406 = vrot.slane %v7404, 5
        %v7407 = vsel %vm1062, %v7402, %v7406
        %v7408 = vshrl.u32 %v7347, 16
        %v7410 = vrot.slane %v7408, 4
        %v7411 = vor.u32 %v7410, %v7406
        %v7412 = vrot.slane %v7411, 4
        %v7414 = vshll.u32 %v7348, 16
        %v7416 = vrot.slane %v7414, 5
        %v7417 = vsel %vm1062, %v7412, %v7416
        %v7419 = vshrl.u32 %v7349, 16
        %v7421 = vrot.slane %v7419, 4
        %v7422 = vshll.u32 %v7349, 16
        %v7424 = vrot.slane %v7422, 5
        %v7425 = vor.u32 %v7421, %v7424
        %v7426 = vrot.slane %v7425, 4
        %v7428 = vshll.u32 %v7350, 16
        %v7430 = vrot.slane %v7428, 5
        %v7431 = vsel %vm1062, %v7426, %v7430
        %v7432 = vshrl.u32 %v7350, 16
        %v7434 = vrot.slane %v7432, 4
        %v7435 = vor.u32 %v7434, %v7430
        %v7436 = vrot.slane %v7435, 4
        %v7438 = vshll.u32 %v7351, 16
        %v7440 = vrot.slane %v7438, 5
        %v7441 = vsel %vm1062, %v7436, %v7440
        %v7443 = vshrl.u32 %v7352, 16
        %v7445 = vrot.slane %v7443, 4
        %v7446 = vshll.u32 %v7352, 16
        %v7448 = vrot.slane %v7446, 5
        %v7449 = vor.u32 %v7445, %v7448
        %v7450 = vrot.slane %v7449, 4
        %v7452 = vshll.u32 %v7353, 16
        %v7454 = vrot.slane %v7452, 5
        %v7455 = vsel %vm1062, %v7450, %v7454
        %v7456 = vshrl.u32 %v7353, 16
        %v7458 = vrot.slane %v7456, 4
        %v7459 = vor.u32 %v7458, %v7454
        %v7460 = vrot.slane %v7459, 4
        %v7462 = vshll.u32 %v7354, 16
        %v7464 = vrot.slane %v7462, 5
        %v7465 = vsel %vm1062, %v7460, %v7464
        %v7467 = vshrl.u32 %v7355, 16
        %v7469 = vrot.slane %v7467, 4
        %v7470 = vshll.u32 %v7355, 16
        %v7472 = vrot.slane %v7470, 5
        %v7473 = vor.u32 %v7469, %v7472
        %v7474 = vrot.slane %v7473, 4
        %v7476 = vshll.u32 %v7356, 16
        %v7478 = vrot.slane %v7476, 5
        %v7479 = vsel %vm1062, %v7474, %v7478
        %v7480 = vshrl.u32 %v7356, 16
        %v7482 = vrot.slane %v7480, 4
        %v7483 = vor.u32 %v7482, %v7478
        %v7484 = vrot.slane %v7483, 4
        %v7486 = vshll.u32 %v7357, 16
        %v7488 = vrot.slane %v7486, 5
        %v7489 = vsel %vm1062, %v7484, %v7488
        %v7491 = vshrl.u32 %v7358, 16
        %v7493 = vrot.slane %v7491, 4
        %v7494 = vshll.u32 %v7358, 16
        %v7496 = vrot.slane %v7494, 5
        %v7497 = vor.u32 %v7493, %v7496
        %v7498 = vrot.slane %v7497, 4
        %v7500 = vshll.u32 %v7359, 16
        %v7502 = vrot.slane %v7500, 5
        %v7503 = vsel %vm1062, %v7498, %v7502
        %v7504 = vshrl.u32 %v7359, 16
        %v7506 = vrot.slane %v7504, 4
        %v7507 = vor.u32 %v7506, %v7502
        %v7508 = vrot.slane %v7507, 4
        %v7510 = vshll.u32 %v7360, 16
        %v7512 = vrot.slane %v7510, 5
        %v7513 = vsel %vm1062, %v7508, %v7512
        %v7515 = vshrl.u32 %v7361, 16
        %v7517 = vrot.slane %v7515, 4
        %v7518 = vshll.u32 %v7361, 16
        %v7520 = vrot.slane %v7518, 5
        %v7521 = vor.u32 %v7517, %v7520
        %v7522 = vrot.slane %v7521, 4
        %v7524 = vshll.u32 %v7362, 16
        %v7526 = vrot.slane %v7524, 5
        %v7527 = vsel %vm1062, %v7522, %v7526
        %v7528 = vshrl.u32 %v7362, 16
        %v7530 = vrot.slane %v7528, 4
        %v7531 = vor.u32 %v7530, %v7526
        %v7532 = vrot.slane %v7531, 4
        %v7534 = vshll.u32 %v7363, 16
        %v7536 = vrot.slane %v7534, 5
        %v7537 = vsel %vm1062, %v7532, %v7536
        %v7539 = vshrl.u32 %v7364, 16
        %v7541 = vrot.slane %v7539, 4
        %v7542 = vshll.u32 %v7364, 16
        %v7544 = vrot.slane %v7542, 5
        %v7545 = vor.u32 %v7541, %v7544
        %v7546 = vrot.slane %v7545, 4
        %v7548 = vshll.u32 %v7365, 16
        %v7550 = vrot.slane %v7548, 5
        %v7551 = vsel %vm1062, %v7546, %v7550
        %v7552 = vshrl.u32 %v7365, 16
        %v7554 = vrot.slane %v7552, 4
        %v7555 = vor.u32 %v7554, %v7550
        %v7556 = vrot.slane %v7555, 4
        %v7558 = vshll.u32 %v7366, 16
        %v7560 = vrot.slane %v7558, 5
        %v7561 = vsel %vm1062, %v7556, %v7560
        %v7563 = vshrl.u32 %v7367, 16
        %v7565 = vrot.slane %v7563, 4
        %v7566 = vshll.u32 %v7367, 16
        %v7568 = vrot.slane %v7566, 5
        %v7569 = vor.u32 %v7565, %v7568
        %v7570 = vrot.slane %v7569, 4
        %v7572 = vshll.u32 %v7368, 16
        %v7574 = vrot.slane %v7572, 5
        %v7575 = vsel %vm1062, %v7570, %v7574
        %v7576 = vshrl.u32 %v7368, 16
        %v7578 = vrot.slane %v7576, 4
        %v7579 = vor.u32 %v7578, %v7574
        %v7580 = vrot.slane %v7579, 4
        %v7582 = vshll.u32 %v7369, 16
        %v7584 = vrot.slane %v7582, 5
        %v7585 = vsel %vm1062, %v7580, %v7584
        %v7587 = vshrl.u32 %v7370, 16
        %v7589 = vrot.slane %v7587, 4
        %v7590 = vshll.u32 %v7370, 16
        %v7592 = vrot.slane %v7590, 5
        %v7593 = vor.u32 %v7589, %v7592
        %v7594 = vrot.slane %v7593, 4
        %v7596 = vshll.u32 %v7371, 16
        %v7598 = vrot.slane %v7596, 5
        %v7599 = vsel %vm1062, %v7594, %v7598
        %v7600 = vshrl.u32 %v7371, 16
        %v7602 = vrot.slane %v7600, 4
        %v7603 = vor.u32 %v7602, %v7598
        %v7604 = vrot.slane %v7603, 4
        %v7606 = vshll.u32 %v7372, 16
        %v7608 = vrot.slane %v7606, 5
        %v7609 = vsel %vm1062, %v7604, %v7608
        %v7611 = vshrl.u32 %v7373, 16
        %v7613 = vrot.slane %v7611, 4
        %v7614 = vshll.u32 %v7373, 16
        %v7616 = vrot.slane %v7614, 5
        %v7617 = vor.u32 %v7613, %v7616
        %v7618 = vrot.slane %v7617, 4
        %v7620 = vshll.u32 %v7374, 16
        %v7622 = vrot.slane %v7620, 5
        %v7623 = vsel %vm1062, %v7618, %v7622
        %v7624 = vshrl.u32 %v7374, 16
        %v7626 = vrot.slane %v7624, 4
        %v7627 = vor.u32 %v7626, %v7622
        %v7628 = vrot.slane %v7627, 4
        %v7630 = vshll.u32 %v7375, 16
        %v7632 = vrot.slane %v7630, 5
        %v7633 = vsel %vm1062, %v7628, %v7632
        %v7635 = vshrl.u32 %v7376, 16
        %v7637 = vrot.slane %v7635, 4
        %v7638 = vshll.u32 %v7376, 16
        %v7640 = vrot.slane %v7638, 5
        %v7641 = vor.u32 %v7637, %v7640
        %v7642 = vrot.slane %v7641, 4
        %v7644 = vshll.u32 %v7377, 16
        %v7646 = vrot.slane %v7644, 5
        %v7647 = vsel %vm1062, %v7642, %v7646
        %v7648 = vshrl.u32 %v7377, 16
        %v7650 = vrot.slane %v7648, 4
        %v7651 = vor.u32 %v7650, %v7646
        %v7652 = vrot.slane %v7651, 4
        %v7654 = vshll.u32 %v7378, 16
        %v7656 = vrot.slane %v7654, 5
        %v7657 = vsel %vm1062, %v7652, %v7656
        %v7659 = vshrl.u32 %v7379, 16
        %v7661 = vrot.slane %v7659, 4
        %v7662 = vshll.u32 %v7379, 16
        %v7664 = vrot.slane %v7662, 5
        %v7665 = vor.u32 %v7661, %v7664
        %v7666 = vrot.slane %v7665, 4
        %v7668 = vshll.u32 %v7380, 16
        %v7670 = vrot.slane %v7668, 5
        %v7671 = vsel %vm1062, %v7666, %v7670
        %v7672 = vshrl.u32 %v7380, 16
        %v7674 = vrot.slane %v7672, 4
        %v7675 = vor.u32 %v7674, %v7670
        %v7676 = vrot.slane %v7675, 4
        %v7678 = vshll.u32 %v7381, 16
        %v7680 = vrot.slane %v7678, 5
        %v7681 = vsel %vm1062, %v7676, %v7680
        %v7683 = vshrl.u32 %v7382, 16
        %v7685 = vrot.slane %v7683, 4
        %v7686 = vshll.u32 %v7382, 16
        %v7688 = vrot.slane %v7686, 5
        %v7689 = vor.u32 %v7685, %v7688
        %v7690 = vrot.slane %v7689, 4
        %v7692 = vshll.u32 %v7383, 16
        %v7694 = vrot.slane %v7692, 5
        %v7695 = vsel %vm1062, %v7690, %v7694
        %v7696 = vshrl.u32 %v7383, 16
        %v7698 = vrot.slane %v7696, 4
        %v7699 = vor.u32 %v7698, %v7694
        %v7700 = vrot.slane %v7699, 4
        %v7702 = vshll.u32 %v7384, 16
        %v7704 = vrot.slane %v7702, 5
        %v7705 = vsel %vm1062, %v7700, %v7704
        %v7707 = vshrl.u32 %v7385, 16
        %v7709 = vrot.slane %v7707, 4
        %v7710 = vshll.u32 %v7385, 16
        %v7712 = vrot.slane %v7710, 5
        %v7713 = vor.u32 %v7709, %v7712
        %v7714 = vrot.slane %v7713, 4
        %v7716 = vshll.u32 %v7386, 16
        %v7718 = vrot.slane %v7716, 5
        %v7719 = vsel %vm1062, %v7714, %v7718
        %v7720 = vshrl.u32 %v7386, 16
        %v7722 = vrot.slane %v7720, 4
        %v7723 = vor.u32 %v7722, %v7718
        %v7724 = vrot.slane %v7723, 4
        %v7726 = vshll.u32 %v7387, 16
        %v7728 = vrot.slane %v7726, 5
        %v7729 = vsel %vm1062, %v7724, %v7728
        %v7731 = vshrl.u32 %v7388, 16
        %v7733 = vrot.slane %v7731, 4
        %v7734 = vshll.u32 %v7388, 16
        %v7736 = vrot.slane %v7734, 5
        %v7737 = vor.u32 %v7733, %v7736
        %v7738 = vrot.slane %v7737, 4
        %v7740 = vshll.u32 %v7389, 16
        %v7742 = vrot.slane %v7740, 5
        %v7743 = vsel %vm1062, %v7738, %v7742
        %v7744 = vshrl.u32 %v7389, 16
        %v7746 = vrot.slane %v7744, 4
        %v7747 = vor.u32 %v7746, %v7742
        %v7748 = vrot.slane %v7747, 4
        %v7750 = vshll.u32 %v7390, 16
        %v7752 = vrot.slane %v7750, 5
        %v7753 = vsel %vm1062, %v7748, %v7752
        %v7755 = vshrl.u32 %v7391, 16
        %v7757 = vrot.slane %v7755, 4
        %v7758 = vshll.u32 %v7391, 16
        %v7760 = vrot.slane %v7758, 5
        %v7761 = vor.u32 %v7757, %v7760
        %v7762 = vrot.slane %v7761, 4
        %v7764 = vshll.u32 %v7392, 16
        %v7766 = vrot.slane %v7764, 5
        %v7767 = vsel %vm1062, %v7762, %v7766
        %v7768 = vshrl.u32 %v7392, 16
        %v7770 = vrot.slane %v7768, 4
        %v7771 = vor.u32 %v7770, %v7766
        %v7772 = vrot.slane %v7771, 4
        %v7774 = vshll.u32 %v7393, 16
        %v7776 = vrot.slane %v7774, 5
        %v7777 = vsel %vm1062, %v7772, %v7776
        %s7778 = scalar_lea.vmem [#allocation8], 256
        %v7779 = vld [vmem:[%s7778] sm:$0xf]
        %v7780 = vld [vmem:[%s7778 + $0x4] sm:$0xf]
        %v7781 = vld [vmem:[%s7778 + $0x8] sm:$0xf]
        %v7782 = vld [vmem:[%s7778 + $0xc] sm:$0xf]
        %v7783 = vld [vmem:[%s7778 + $0x10] sm:$0xf]
        %v7784 = vld [vmem:[%s7778 + $0x14] sm:$0xf]
        %v7785 = vld [vmem:[%s7778 + $0x18] sm:$0xf]
        %v7786 = vld [vmem:[%s7778 + $0x1c] sm:$0xf]
        %v7787 = vld [vmem:[%s7778 + $0x20] sm:$0xf]
        %v7788 = vld [vmem:[%s7778 + $0x24] sm:$0xf]
        %v7789 = vld [vmem:[%s7778 + $0x28] sm:$0xf]
        %v7790 = vld [vmem:[%s7778 + $0x2c] sm:$0xf]
        %v7791 = vld [vmem:[%s7778 + $0x30] sm:$0xf]
        %v7792 = vld [vmem:[%s7778 + $0x34] sm:$0xf]
        %v7793 = vld [vmem:[%s7778 + $0x38] sm:$0xf]
        %v7794 = vld [vmem:[%s7778 + $0x3c] sm:$0xf]
        %v7795 = vunpack.c.l.b16 %v7407
        %v7796 = vunpack.c.l.b16 %v7417
        %v7797 = vunpack.c.l.b16 %v7431
        %v7798 = vunpack.c.l.b16 %v7441
        %v7799 = vunpack.c.l.b16 %v7455
        %v7800 = vunpack.c.l.b16 %v7465
        %v7801 = vunpack.c.l.b16 %v7479
        %v7802 = vunpack.c.l.b16 %v7489
        %v7803 = vunpack.c.l.b16 %v7503
        %v7804 = vunpack.c.l.b16 %v7513
        %v7805 = vunpack.c.l.b16 %v7527
        %v7806 = vunpack.c.l.b16 %v7537
        %v7807 = vunpack.c.l.b16 %v7551
        %v7808 = vunpack.c.l.b16 %v7561
        %v7809 = vunpack.c.l.b16 %v7575
        %v7810 = vunpack.c.l.b16 %v7585
        %v7811 = vunpack.c.l.b16 %v7599
        %v7812 = vunpack.c.l.b16 %v7609
        %v7813 = vunpack.c.l.b16 %v7623
        %v7814 = vunpack.c.l.b16 %v7633
        %v7815 = vunpack.c.l.b16 %v7647
        %v7816 = vunpack.c.l.b16 %v7657
        %v7817 = vunpack.c.l.b16 %v7671
        %v7818 = vunpack.c.l.b16 %v7681
        %v7819 = vunpack.c.l.b16 %v7695
        %v7820 = vunpack.c.l.b16 %v7705
        %v7821 = vunpack.c.l.b16 %v7719
        %v7822 = vunpack.c.l.b16 %v7729
        %v7823 = vunpack.c.l.b16 %v7743
        %v7824 = vunpack.c.l.b16 %v7753
        %v7825 = vunpack.c.l.b16 %v7767
        %v7826 = vunpack.c.l.b16 %v7777
        %v7827 = vpack.c.b16 %v7796, %v7795
        %v7828 = vpack.c.b16 %v7798, %v7797
        %v7829 = vpack.c.b16 %v7800, %v7799
        %v7830 = vpack.c.b16 %v7802, %v7801
        %v7831 = vpack.c.b16 %v7804, %v7803
        %v7832 = vpack.c.b16 %v7806, %v7805
        %v7833 = vpack.c.b16 %v7808, %v7807
        %v7834 = vpack.c.b16 %v7810, %v7809
        %v7835 = vpack.c.b16 %v7812, %v7811
        %v7836 = vpack.c.b16 %v7814, %v7813
        %v7837 = vpack.c.b16 %v7816, %v7815
        %v7838 = vpack.c.b16 %v7818, %v7817
        %v7839 = vpack.c.b16 %v7820, %v7819
        %v7840 = vpack.c.b16 %v7822, %v7821
        %v7841 = vpack.c.b16 %v7824, %v7823
        %v7842 = vpack.c.b16 %v7826, %v7825
        %v7875 = vunpack.c.l.b16 %v7779
        %v7876 = vunpack.c.l.b16 %v7780
        %v7877 = vunpack.c.l.b16 %v7781
        %v7878 = vunpack.c.l.b16 %v7782
        %v7879 = vunpack.c.l.b16 %v7783
        %v7880 = vunpack.c.l.b16 %v7784
        %v7881 = vunpack.c.l.b16 %v7785
        %v7882 = vunpack.c.l.b16 %v7786
        %v7883 = vunpack.c.l.b16 %v7787
        %v7884 = vunpack.c.l.b16 %v7788
        %v7885 = vunpack.c.l.b16 %v7789
        %v7886 = vunpack.c.l.b16 %v7790
        %v7887 = vunpack.c.l.b16 %v7791
        %v7888 = vunpack.c.l.b16 %v7792
        %v7889 = vunpack.c.l.b16 %v7793
        %v7890 = vunpack.c.l.b16 %v7794
        %v7891 = vpack.c.b16 %v7876, %v7875
        %v7892 = vpack.c.b16 %v7878, %v7877
        %v7893 = vpack.c.b16 %v7880, %v7879
        %v7894 = vpack.c.b16 %v7882, %v7881
        %v7895 = vpack.c.b16 %v7884, %v7883
        %v7896 = vpack.c.b16 %v7886, %v7885
        %v7897 = vpack.c.b16 %v7888, %v7887
        %v7898 = vpack.c.b16 %v7890, %v7889
        %7907 = vmatpush.bf16.msra.mxu0 %v7898
        %7908 = vmatpush.bf16.msra.mxu0 %v7897
        %7909 = vmatpush.bf16.msra.mxu0 %v7896
        %7910 = vmatpush.bf16.msra.mxu0 %v7895
        %7911 = vmatpush.bf16.msra.mxu0 %v7894
        %7912 = vmatpush.bf16.msra.mxu0 %v7893
        %7913 = vmatpush.bf16.msra.mxu0 %v7892
        %7914 = vmatpush.bf16.msra.mxu0 %v7891
        %7915 = vmatmul.bf16.gmra.mxu0 %v7827
        %v7916 = vpop.f32.mrf.mxu0
        %v7917 = vadd.f32 0.0, %v7916
        %v7918 = vpop.f32.mrf.mxu0
        %v7919 = vadd.f32 0.0, %v7918
        %7920 = vmatmul.bf16.gmra.mxu0 %v7828
        %v7921 = vpop.f32.mrf.mxu0
        %v7922 = vadd.f32 0.0, %v7921
        %v7923 = vpop.f32.mrf.mxu0
        %v7924 = vadd.f32 0.0, %v7923
        %7925 = vmatmul.bf16.gmra.mxu0 %v7829
        %v7926 = vpop.f32.mrf.mxu0
        %v7927 = vadd.f32 0.0, %v7926
        %v7928 = vpop.f32.mrf.mxu0
        %v7929 = vadd.f32 0.0, %v7928
        %7930 = vmatmul.bf16.gmra.mxu0 %v7830
        %v7931 = vpop.f32.mrf.mxu0
        %v7932 = vadd.f32 0.0, %v7931
        %v7933 = vpop.f32.mrf.mxu0
        %v7934 = vadd.f32 0.0, %v7933
        %7935 = vmatmul.bf16.gmra.mxu0 %v7831
        %v7936 = vpop.f32.mrf.mxu0
        %v7937 = vadd.f32 0.0, %v7936
        %v7938 = vpop.f32.mrf.mxu0
        %v7939 = vadd.f32 0.0, %v7938
        %7940 = vmatmul.bf16.gmra.mxu0 %v7832
        %v7941 = vpop.f32.mrf.mxu0
        %v7942 = vadd.f32 0.0, %v7941
        %v7943 = vpop.f32.mrf.mxu0
        %v7944 = vadd.f32 0.0, %v7943
        %7945 = vmatmul.bf16.gmra.mxu0 %v7833
        %v7946 = vpop.f32.mrf.mxu0
        %v7947 = vadd.f32 0.0, %v7946
        %v7948 = vpop.f32.mrf.mxu0
        %v7949 = vadd.f32 0.0, %v7948
        %7950 = vmatmul.bf16.gmra.mxu0 %v7834
        %v7951 = vpop.f32.mrf.mxu0
        %v7952 = vadd.f32 0.0, %v7951
        %v7953 = vpop.f32.mrf.mxu0
        %v7954 = vadd.f32 0.0, %v7953
        %7955 = vmatmul.bf16.gmra.mxu0 %v7835
        %v7956 = vpop.f32.mrf.mxu0
        %v7957 = vadd.f32 0.0, %v7956
        %v7958 = vpop.f32.mrf.mxu0
        %v7959 = vadd.f32 0.0, %v7958
        %7960 = vmatmul.bf16.gmra.mxu0 %v7836
        %v7961 = vpop.f32.mrf.mxu0
        %v7962 = vadd.f32 0.0, %v7961
        %v7963 = vpop.f32.mrf.mxu0
        %v7964 = vadd.f32 0.0, %v7963
        %7965 = vmatmul.bf16.gmra.mxu0 %v7837
        %v7966 = vpop.f32.mrf.mxu0
        %v7967 = vadd.f32 0.0, %v7966
        %v7968 = vpop.f32.mrf.mxu0
        %v7969 = vadd.f32 0.0, %v7968
        %7970 = vmatmul.bf16.gmra.mxu0 %v7838
        %v7971 = vpop.f32.mrf.mxu0
        %v7972 = vadd.f32 0.0, %v7971
        %v7973 = vpop.f32.mrf.mxu0
        %v7974 = vadd.f32 0.0, %v7973
        %7975 = vmatmul.bf16.gmra.mxu0 %v7839
        %v7976 = vpop.f32.mrf.mxu0
        %v7977 = vadd.f32 0.0, %v7976
        %v7978 = vpop.f32.mrf.mxu0
        %v7979 = vadd.f32 0.0, %v7978
        %7980 = vmatmul.bf16.gmra.mxu0 %v7840
        %v7981 = vpop.f32.mrf.mxu0
        %v7982 = vadd.f32 0.0, %v7981
        %v7983 = vpop.f32.mrf.mxu0
        %v7984 = vadd.f32 0.0, %v7983
        %7985 = vmatmul.bf16.gmra.mxu0 %v7841
        %v7986 = vpop.f32.mrf.mxu0
        %v7987 = vadd.f32 0.0, %v7986
        %v7988 = vpop.f32.mrf.mxu0
        %v7989 = vadd.f32 0.0, %v7988
        %7990 = vmatmul.bf16.gmra.mxu0 %v7842
        %v7991 = vpop.f32.mrf.mxu0
        %v7992 = vadd.f32 0.0, %v7991
        %v7993 = vpop.f32.mrf.mxu0
        %v7994 = vadd.f32 0.0, %v7993
        %7995 = vdwg.mxu0
        %v7996 = vadd.f32 %v7314, %v7917
        %v7997 = vadd.f32 %v7315, %v7919
        %v7998 = vadd.f32 %v7316, %v7922
        %v7999 = vadd.f32 %v7317, %v7924
        %v8000 = vadd.f32 %v7318, %v7927
        %v8001 = vadd.f32 %v7319, %v7929
        %v8002 = vadd.f32 %v7320, %v7932
        %v8003 = vadd.f32 %v7321, %v7934
        %v8004 = vadd.f32 %v7322, %v7937
        %v8005 = vadd.f32 %v7323, %v7939
        %v8006 = vadd.f32 %v7324, %v7942
        %v8007 = vadd.f32 %v7325, %v7944
        %v8008 = vadd.f32 %v7326, %v7947
        %v8009 = vadd.f32 %v7327, %v7949
        %v8010 = vadd.f32 %v7328, %v7952
        %v8011 = vadd.f32 %v7329, %v7954
        %v8012 = vadd.f32 %v7330, %v7957
        %v8013 = vadd.f32 %v7331, %v7959
        %v8014 = vadd.f32 %v7332, %v7962
        %v8015 = vadd.f32 %v7333, %v7964
        %v8016 = vadd.f32 %v7334, %v7967
        %v8017 = vadd.f32 %v7335, %v7969
        %v8018 = vadd.f32 %v7336, %v7972
        %v8019 = vadd.f32 %v7337, %v7974
        %v8020 = vadd.f32 %v7338, %v7977
        %v8021 = vadd.f32 %v7339, %v7979
        %v8022 = vadd.f32 %v7340, %v7982
        %v8023 = vadd.f32 %v7341, %v7984
        %v8024 = vadd.f32 %v7342, %v7987
        %v8025 = vadd.f32 %v7343, %v7989
        %v8026 = vadd.f32 %v7344, %v7992
        %v8027 = vadd.f32 %v7345, %v7994
        %v8028 = vld [vmem:[%s878] sm:$0xe]
        %v8029 = vld [vmem:[%s878 + $0xc] sm:$0xe]
        %v8030 = vld [vmem:[%s878 + $0x18] sm:$0xe]
        %v8031 = vld [vmem:[%s878 + $0x24] sm:$0xe]
        %v8032 = vld [vmem:[%s878 + $0x30] sm:$0xe]
        %v8033 = vld [vmem:[%s878 + $0x3c] sm:$0xe]
        %v8034 = vld [vmem:[%s878 + $0x48] sm:$0xe]
        %v8035 = vld [vmem:[%s878 + $0x54] sm:$0xe]
        %v8036 = vld [vmem:[%s878 + $0x60] sm:$0xe]
        %v8037 = vld [vmem:[%s878 + $0x6c] sm:$0xe]
        %v8038 = vld [vmem:[%s878 + $0x78] sm:$0xe]
        %v8039 = vld [vmem:[%s878 + $0x84] sm:$0xe]
        %v8040 = vld [vmem:[%s878 + $0x90] sm:$0xe]
        %v8041 = vld [vmem:[%s878 + $0x9c] sm:$0xe]
        %v8042 = vld [vmem:[%s878 + $0xa8] sm:$0xe]
        %v8043 = vld [vmem:[%s878 + $0xb4] sm:$0xe]
        %v8092 = vrot.slane %v8028, 5
        %v8093 = vrot.slane %v8092, 4
        %v8094 = vrot.slane %v7347, 5
        %v8095 = vsel %vm1948, %v8093, %v8094
        %v8096 = vrot.slane %v8094, 4
        %v8097 = vrot.slane %v7348, 5
        %v8098 = vsel %vm1948, %v8096, %v8097
        %v8099 = vrot.slane %v8029, 5
        %v8100 = vrot.slane %v8099, 4
        %v8101 = vrot.slane %v7350, 5
        %v8102 = vsel %vm1948, %v8100, %v8101
        %v8103 = vrot.slane %v8101, 4
        %v8104 = vrot.slane %v7351, 5
        %v8105 = vsel %vm1948, %v8103, %v8104
        %v8106 = vrot.slane %v8030, 5
        %v8107 = vrot.slane %v8106, 4
        %v8108 = vrot.slane %v7353, 5
        %v8109 = vsel %vm1948, %v8107, %v8108
        %v8110 = vrot.slane %v8108, 4
        %v8111 = vrot.slane %v7354, 5
        %v8112 = vsel %vm1948, %v8110, %v8111
        %v8113 = vrot.slane %v8031, 5
        %v8114 = vrot.slane %v8113, 4
        %v8115 = vrot.slane %v7356, 5
        %v8116 = vsel %vm1948, %v8114, %v8115
        %v8117 = vrot.slane %v8115, 4
        %v8118 = vrot.slane %v7357, 5
        %v8119 = vsel %vm1948, %v8117, %v8118
        %v8120 = vrot.slane %v8032, 5
        %v8121 = vrot.slane %v8120, 4
        %v8122 = vrot.slane %v7359, 5
        %v8123 = vsel %vm1948, %v8121, %v8122
        %v8124 = vrot.slane %v8122, 4
        %v8125 = vrot.slane %v7360, 5
        %v8126 = vsel %vm1948, %v8124, %v8125
        %v8127 = vrot.slane %v8033, 5
        %v8128 = vrot.slane %v8127, 4
        %v8129 = vrot.slane %v7362, 5
        %v8130 = vsel %vm1948, %v8128, %v8129
        %v8131 = vrot.slane %v8129, 4
        %v8132 = vrot.slane %v7363, 5
        %v8133 = vsel %vm1948, %v8131, %v8132
        %v8134 = vrot.slane %v8034, 5
        %v8135 = vrot.slane %v8134, 4
        %v8136 = vrot.slane %v7365, 5
        %v8137 = vsel %vm1948, %v8135, %v8136
        %v8138 = vrot.slane %v8136, 4
        %v8139 = vrot.slane %v7366, 5
        %v8140 = vsel %vm1948, %v8138, %v8139
        %v8141 = vrot.slane %v8035, 5
        %v8142 = vrot.slane %v8141, 4
        %v8143 = vrot.slane %v7368, 5
        %v8144 = vsel %vm1948, %v8142, %v8143
        %v8145 = vrot.slane %v8143, 4
        %v8146 = vrot.slane %v7369, 5
        %v8147 = vsel %vm1948, %v8145, %v8146
        %v8148 = vrot.slane %v8036, 5
        %v8149 = vrot.slane %v8148, 4
        %v8150 = vrot.slane %v7371, 5
        %v8151 = vsel %vm1948, %v8149, %v8150
        %v8152 = vrot.slane %v8150, 4
        %v8153 = vrot.slane %v7372, 5
        %v8154 = vsel %vm1948, %v8152, %v8153
        %v8155 = vrot.slane %v8037, 5
        %v8156 = vrot.slane %v8155, 4
        %v8157 = vrot.slane %v7374, 5
        %v8158 = vsel %vm1948, %v8156, %v8157
        %v8159 = vrot.slane %v8157, 4
        %v8160 = vrot.slane %v7375, 5
        %v8161 = vsel %vm1948, %v8159, %v8160
        %v8162 = vrot.slane %v8038, 5
        %v8163 = vrot.slane %v8162, 4
        %v8164 = vrot.slane %v7377, 5
        %v8165 = vsel %vm1948, %v8163, %v8164
        %v8166 = vrot.slane %v8164, 4
        %v8167 = vrot.slane %v7378, 5
        %v8168 = vsel %vm1948, %v8166, %v8167
        %v8169 = vrot.slane %v8039, 5
        %v8170 = vrot.slane %v8169, 4
        %v8171 = vrot.slane %v7380, 5
        %v8172 = vsel %vm1948, %v8170, %v8171
        %v8173 = vrot.slane %v8171, 4
        %v8174 = vrot.slane %v7381, 5
        %v8175 = vsel %vm1948, %v8173, %v8174
        %v8176 = vrot.slane %v8040, 5
        %v8177 = vrot.slane %v8176, 4
        %v8178 = vrot.slane %v7383, 5
        %v8179 = vsel %vm1948, %v8177, %v8178
        %v8180 = vrot.slane %v8178, 4
        %v8181 = vrot.slane %v7384, 5
        %v8182 = vsel %vm1948, %v8180, %v8181
        %v8183 = vrot.slane %v8041, 5
        %v8184 = vrot.slane %v8183, 4
        %v8185 = vrot.slane %v7386, 5
        %v8186 = vsel %vm1948, %v8184, %v8185
        %v8187 = vrot.slane %v8185, 4
        %v8188 = vrot.slane %v7387, 5
        %v8189 = vsel %vm1948, %v8187, %v8188
        %v8190 = vrot.slane %v8042, 5
        %v8191 = vrot.slane %v8190, 4
        %v8192 = vrot.slane %v7389, 5
        %v8193 = vsel %vm1948, %v8191, %v8192
        %v8194 = vrot.slane %v8192, 4
        %v8195 = vrot.slane %v7390, 5
        %v8196 = vsel %vm1948, %v8194, %v8195
        %v8197 = vrot.slane %v8043, 5
        %v8198 = vrot.slane %v8197, 4
        %v8199 = vrot.slane %v7392, 5
        %v8200 = vsel %vm1948, %v8198, %v8199
        %v8201 = vrot.slane %v8199, 4
        %v8202 = vrot.slane %v7393, 5
        %v8203 = vsel %vm1948, %v8201, %v8202
        %s8204 = scalar_lea.vmem [#allocation8], 320
        %v8205 = vld [vmem:[%s8204] sm:$0xf]
        %v8206 = vld [vmem:[%s8204 + $0x4] sm:$0xf]
        %v8207 = vld [vmem:[%s8204 + $0x8] sm:$0xf]
        %v8208 = vld [vmem:[%s8204 + $0xc] sm:$0xf]
        %v8209 = vld [vmem:[%s8204 + $0x10] sm:$0xf]
        %v8210 = vld [vmem:[%s8204 + $0x14] sm:$0xf]
        %v8211 = vld [vmem:[%s8204 + $0x18] sm:$0xf]
        %v8212 = vld [vmem:[%s8204 + $0x1c] sm:$0xf]
        %v8213 = vld [vmem:[%s8204 + $0x20] sm:$0xf]
        %v8214 = vld [vmem:[%s8204 + $0x24] sm:$0xf]
        %v8215 = vld [vmem:[%s8204 + $0x28] sm:$0xf]
        %v8216 = vld [vmem:[%s8204 + $0x2c] sm:$0xf]
        %v8217 = vld [vmem:[%s8204 + $0x30] sm:$0xf]
        %v8218 = vld [vmem:[%s8204 + $0x34] sm:$0xf]
        %v8219 = vld [vmem:[%s8204 + $0x38] sm:$0xf]
        %v8220 = vld [vmem:[%s8204 + $0x3c] sm:$0xf]
        %v8221 = vunpack.c.l.b16 %v8095
        %v8222 = vunpack.c.l.b16 %v8098
        %v8223 = vunpack.c.l.b16 %v8102
        %v8224 = vunpack.c.l.b16 %v8105
        %v8225 = vunpack.c.l.b16 %v8109
        %v8226 = vunpack.c.l.b16 %v8112
        %v8227 = vunpack.c.l.b16 %v8116
        %v8228 = vunpack.c.l.b16 %v8119
        %v8229 = vunpack.c.l.b16 %v8123
        %v8230 = vunpack.c.l.b16 %v8126
        %v8231 = vunpack.c.l.b16 %v8130
        %v8232 = vunpack.c.l.b16 %v8133
        %v8233 = vunpack.c.l.b16 %v8137
        %v8234 = vunpack.c.l.b16 %v8140
        %v8235 = vunpack.c.l.b16 %v8144
        %v8236 = vunpack.c.l.b16 %v8147
        %v8237 = vunpack.c.l.b16 %v8151
        %v8238 = vunpack.c.l.b16 %v8154
        %v8239 = vunpack.c.l.b16 %v8158
        %v8240 = vunpack.c.l.b16 %v8161
        %v8241 = vunpack.c.l.b16 %v8165
        %v8242 = vunpack.c.l.b16 %v8168
        %v8243 = vunpack.c.l.b16 %v8172
        %v8244 = vunpack.c.l.b16 %v8175
        %v8245 = vunpack.c.l.b16 %v8179
        %v8246 = vunpack.c.l.b16 %v8182
        %v8247 = vunpack.c.l.b16 %v8186
        %v8248 = vunpack.c.l.b16 %v8189
        %v8249 = vunpack.c.l.b16 %v8193
        %v8250 = vunpack.c.l.b16 %v8196
        %v8251 = vunpack.c.l.b16 %v8200
        %v8252 = vunpack.c.l.b16 %v8203
        %v8253 = vpack.c.b16 %v8222, %v8221
        %v8254 = vpack.c.b16 %v8224, %v8223
        %v8255 = vpack.c.b16 %v8226, %v8225
        %v8256 = vpack.c.b16 %v8228, %v8227
        %v8257 = vpack.c.b16 %v8230, %v8229
        %v8258 = vpack.c.b16 %v8232, %v8231
        %v8259 = vpack.c.b16 %v8234, %v8233
        %v8260 = vpack.c.b16 %v8236, %v8235
        %v8261 = vpack.c.b16 %v8238, %v8237
        %v8262 = vpack.c.b16 %v8240, %v8239
        %v8263 = vpack.c.b16 %v8242, %v8241
        %v8264 = vpack.c.b16 %v8244, %v8243
        %v8265 = vpack.c.b16 %v8246, %v8245
        %v8266 = vpack.c.b16 %v8248, %v8247
        %v8267 = vpack.c.b16 %v8250, %v8249
        %v8268 = vpack.c.b16 %v8252, %v8251
        %v8301 = vunpack.c.l.b16 %v8205
        %v8302 = vunpack.c.l.b16 %v8206
        %v8303 = vunpack.c.l.b16 %v8207
        %v8304 = vunpack.c.l.b16 %v8208
        %v8305 = vunpack.c.l.b16 %v8209
        %v8306 = vunpack.c.l.b16 %v8210
        %v8307 = vunpack.c.l.b16 %v8211
        %v8308 = vunpack.c.l.b16 %v8212
        %v8309 = vunpack.c.l.b16 %v8213
        %v8310 = vunpack.c.l.b16 %v8214
        %v8311 = vunpack.c.l.b16 %v8215
        %v8312 = vunpack.c.l.b16 %v8216
        %v8313 = vunpack.c.l.b16 %v8217
        %v8314 = vunpack.c.l.b16 %v8218
        %v8315 = vunpack.c.l.b16 %v8219
        %v8316 = vunpack.c.l.b16 %v8220
        %v8317 = vpack.c.b16 %v8302, %v8301
        %v8318 = vpack.c.b16 %v8304, %v8303
        %v8319 = vpack.c.b16 %v8306, %v8305
        %v8320 = vpack.c.b16 %v8308, %v8307
        %v8321 = vpack.c.b16 %v8310, %v8309
        %v8322 = vpack.c.b16 %v8312, %v8311
        %v8323 = vpack.c.b16 %v8314, %v8313
        %v8324 = vpack.c.b16 %v8316, %v8315
        %8333 = vmatpush.bf16.msra.mxu0 %v8324
        %8334 = vmatpush.bf16.msra.mxu0 %v8323
        %8335 = vmatpush.bf16.msra.mxu0 %v8322
        %8336 = vmatpush.bf16.msra.mxu0 %v8321
        %8337 = vmatpush.bf16.msra.mxu0 %v8320
        %8338 = vmatpush.bf16.msra.mxu0 %v8319
        %8339 = vmatpush.bf16.msra.mxu0 %v8318
        %8340 = vmatpush.bf16.msra.mxu0 %v8317
        %8341 = vmatmul.bf16.gmra.mxu0 %v8253
        %v8342 = vpop.f32.mrf.mxu0
        %v8343 = vadd.f32 0.0, %v8342
        %v8344 = vpop.f32.mrf.mxu0
        %v8345 = vadd.f32 0.0, %v8344
        %8346 = vmatmul.bf16.gmra.mxu0 %v8254
        %v8347 = vpop.f32.mrf.mxu0
        %v8348 = vadd.f32 0.0, %v8347
        %v8349 = vpop.f32.mrf.mxu0
        %v8350 = vadd.f32 0.0, %v8349
        %8351 = vmatmul.bf16.gmra.mxu0 %v8255
        %v8352 = vpop.f32.mrf.mxu0
        %v8353 = vadd.f32 0.0, %v8352
        %v8354 = vpop.f32.mrf.mxu0
        %v8355 = vadd.f32 0.0, %v8354
        %8356 = vmatmul.bf16.gmra.mxu0 %v8256
        %v8357 = vpop.f32.mrf.mxu0
        %v8358 = vadd.f32 0.0, %v8357
        %v8359 = vpop.f32.mrf.mxu0
        %v8360 = vadd.f32 0.0, %v8359
        %8361 = vmatmul.bf16.gmra.mxu0 %v8257
        %v8362 = vpop.f32.mrf.mxu0
        %v8363 = vadd.f32 0.0, %v8362
        %v8364 = vpop.f32.mrf.mxu0
        %v8365 = vadd.f32 0.0, %v8364
        %8366 = vmatmul.bf16.gmra.mxu0 %v8258
        %v8367 = vpop.f32.mrf.mxu0
        %v8368 = vadd.f32 0.0, %v8367
        %v8369 = vpop.f32.mrf.mxu0
        %v8370 = vadd.f32 0.0, %v8369
        %8371 = vmatmul.bf16.gmra.mxu0 %v8259
        %v8372 = vpop.f32.mrf.mxu0
        %v8373 = vadd.f32 0.0, %v8372
        %v8374 = vpop.f32.mrf.mxu0
        %v8375 = vadd.f32 0.0, %v8374
        %8376 = vmatmul.bf16.gmra.mxu0 %v8260
        %v8377 = vpop.f32.mrf.mxu0
        %v8378 = vadd.f32 0.0, %v8377
        %v8379 = vpop.f32.mrf.mxu0
        %v8380 = vadd.f32 0.0, %v8379
        %8381 = vmatmul.bf16.gmra.mxu0 %v8261
        %v8382 = vpop.f32.mrf.mxu0
        %v8383 = vadd.f32 0.0, %v8382
        %v8384 = vpop.f32.mrf.mxu0
        %v8385 = vadd.f32 0.0, %v8384
        %8386 = vmatmul.bf16.gmra.mxu0 %v8262
        %v8387 = vpop.f32.mrf.mxu0
        %v8388 = vadd.f32 0.0, %v8387
        %v8389 = vpop.f32.mrf.mxu0
        %v8390 = vadd.f32 0.0, %v8389
        %8391 = vmatmul.bf16.gmra.mxu0 %v8263
        %v8392 = vpop.f32.mrf.mxu0
        %v8393 = vadd.f32 0.0, %v8392
        %v8394 = vpop.f32.mrf.mxu0
        %v8395 = vadd.f32 0.0, %v8394
        %8396 = vmatmul.bf16.gmra.mxu0 %v8264
        %v8397 = vpop.f32.mrf.mxu0
        %v8398 = vadd.f32 0.0, %v8397
        %v8399 = vpop.f32.mrf.mxu0
        %v8400 = vadd.f32 0.0, %v8399
        %8401 = vmatmul.bf16.gmra.mxu0 %v8265
        %v8402 = vpop.f32.mrf.mxu0
        %v8403 = vadd.f32 0.0, %v8402
        %v8404 = vpop.f32.mrf.mxu0
        %v8405 = vadd.f32 0.0, %v8404
        %8406 = vmatmul.bf16.gmra.mxu0 %v8266
        %v8407 = vpop.f32.mrf.mxu0
        %v8408 = vadd.f32 0.0, %v8407
        %v8409 = vpop.f32.mrf.mxu0
        %v8410 = vadd.f32 0.0, %v8409
        %8411 = vmatmul.bf16.gmra.mxu0 %v8267
        %v8412 = vpop.f32.mrf.mxu0
        %v8413 = vadd.f32 0.0, %v8412
        %v8414 = vpop.f32.mrf.mxu0
        %v8415 = vadd.f32 0.0, %v8414
        %8416 = vmatmul.bf16.gmra.mxu0 %v8268
        %v8417 = vpop.f32.mrf.mxu0
        %v8418 = vadd.f32 0.0, %v8417
        %v8419 = vpop.f32.mrf.mxu0
        %v8420 = vadd.f32 0.0, %v8419
        %8421 = vdwg.mxu0
        %v8422 = vadd.f32 %v7996, %v8343
        %v8423 = vadd.f32 %v7997, %v8345
        %v8424 = vadd.f32 %v7998, %v8348
        %v8425 = vadd.f32 %v7999, %v8350
        %v8426 = vadd.f32 %v8000, %v8353
        %v8427 = vadd.f32 %v8001, %v8355
        %v8428 = vadd.f32 %v8002, %v8358
        %v8429 = vadd.f32 %v8003, %v8360
        %v8430 = vadd.f32 %v8004, %v8363
        %v8431 = vadd.f32 %v8005, %v8365
        %v8432 = vadd.f32 %v8006, %v8368
        %v8433 = vadd.f32 %v8007, %v8370
        %v8434 = vadd.f32 %v8008, %v8373
        %v8435 = vadd.f32 %v8009, %v8375
        %v8436 = vadd.f32 %v8010, %v8378
        %v8437 = vadd.f32 %v8011, %v8380
        %v8438 = vadd.f32 %v8012, %v8383
        %v8439 = vadd.f32 %v8013, %v8385
        %v8440 = vadd.f32 %v8014, %v8388
        %v8441 = vadd.f32 %v8015, %v8390
        %v8442 = vadd.f32 %v8016, %v8393
        %v8443 = vadd.f32 %v8017, %v8395
        %v8444 = vadd.f32 %v8018, %v8398
        %v8445 = vadd.f32 %v8019, %v8400
        %v8446 = vadd.f32 %v8020, %v8403
        %v8447 = vadd.f32 %v8021, %v8405
        %v8448 = vadd.f32 %v8022, %v8408
        %v8449 = vadd.f32 %v8023, %v8410
        %v8450 = vadd.f32 %v8024, %v8413
        %v8451 = vadd.f32 %v8025, %v8415
        %v8452 = vadd.f32 %v8026, %v8418
        %v8453 = vadd.f32 %v8027, %v8420
        %v8454 = vld [vmem:[%s3733] sm:$0xf]
        %v8455 = vld [vmem:[%s3733 + $0x4] sm:$0xf]
        %v8456 = vld [vmem:[%s3733 + $0xc] sm:$0xf]
        %v8457 = vld [vmem:[%s3733 + $0x10] sm:$0xf]
        %v8458 = vld [vmem:[%s3733 + $0x18] sm:$0xf]
        %v8459 = vld [vmem:[%s3733 + $0x1c] sm:$0xf]
        %v8460 = vld [vmem:[%s3733 + $0x24] sm:$0xf]
        %v8461 = vld [vmem:[%s3733 + $0x28] sm:$0xf]
        %v8462 = vld [vmem:[%s3733 + $0x30] sm:$0xf]
        %v8463 = vld [vmem:[%s3733 + $0x34] sm:$0xf]
        %v8464 = vld [vmem:[%s3733 + $0x3c] sm:$0xf]
        %v8465 = vld [vmem:[%s3733 + $0x40] sm:$0xf]
        %v8466 = vld [vmem:[%s3733 + $0x48] sm:$0xf]
        %v8467 = vld [vmem:[%s3733 + $0x4c] sm:$0xf]
        %v8468 = vld [vmem:[%s3733 + $0x54] sm:$0xf]
        %v8469 = vld [vmem:[%s3733 + $0x58] sm:$0xf]
        %v8470 = vld [vmem:[%s3733 + $0x60] sm:$0xf]
        %v8471 = vld [vmem:[%s3733 + $0x64] sm:$0xf]
        %v8472 = vld [vmem:[%s3733 + $0x6c] sm:$0xf]
        %v8473 = vld [vmem:[%s3733 + $0x70] sm:$0xf]
        %v8474 = vld [vmem:[%s3733 + $0x78] sm:$0xf]
        %v8475 = vld [vmem:[%s3733 + $0x7c] sm:$0xf]
        %v8476 = vld [vmem:[%s3733 + $0x84] sm:$0xf]
        %v8477 = vld [vmem:[%s3733 + $0x88] sm:$0xf]
        %v8478 = vld [vmem:[%s3733 + $0x90] sm:$0xf]
        %v8479 = vld [vmem:[%s3733 + $0x94] sm:$0xf]
        %v8480 = vld [vmem:[%s3733 + $0x9c] sm:$0xf]
        %v8481 = vld [vmem:[%s3733 + $0xa0] sm:$0xf]
        %v8482 = vld [vmem:[%s3733 + $0xa8] sm:$0xf]
        %v8483 = vld [vmem:[%s3733 + $0xac] sm:$0xf]
        %v8484 = vld [vmem:[%s3733 + $0xb4] sm:$0xf]
        %v8485 = vld [vmem:[%s3733 + $0xb8] sm:$0xf]
        %s8486 = scalar_lea.vmem [#allocation8], 384
        %v8487 = vld [vmem:[%s8486] sm:$0xf]
        %v8488 = vld [vmem:[%s8486 + $0x4] sm:$0xf]
        %v8489 = vld [vmem:[%s8486 + $0x8] sm:$0xf]
        %v8490 = vld [vmem:[%s8486 + $0xc] sm:$0xf]
        %v8491 = vld [vmem:[%s8486 + $0x10] sm:$0xf]
        %v8492 = vld [vmem:[%s8486 + $0x14] sm:$0xf]
        %v8493 = vld [vmem:[%s8486 + $0x18] sm:$0xf]
        %v8494 = vld [vmem:[%s8486 + $0x1c] sm:$0xf]
        %v8495 = vld [vmem:[%s8486 + $0x20] sm:$0xf]
        %v8496 = vld [vmem:[%s8486 + $0x24] sm:$0xf]
        %v8497 = vld [vmem:[%s8486 + $0x28] sm:$0xf]
        %v8498 = vld [vmem:[%s8486 + $0x2c] sm:$0xf]
        %v8499 = vld [vmem:[%s8486 + $0x30] sm:$0xf]
        %v8500 = vld [vmem:[%s8486 + $0x34] sm:$0xf]
        %v8501 = vld [vmem:[%s8486 + $0x38] sm:$0xf]
        %v8502 = vld [vmem:[%s8486 + $0x3c] sm:$0xf]
        %v8535 = vunpack.c.l.b16 %v8454
        %v8536 = vunpack.c.l.b16 %v8455
        %v8537 = vunpack.c.l.b16 %v8456
        %v8538 = vunpack.c.l.b16 %v8457
        %v8539 = vunpack.c.l.b16 %v8458
        %v8540 = vunpack.c.l.b16 %v8459
        %v8541 = vunpack.c.l.b16 %v8460
        %v8542 = vunpack.c.l.b16 %v8461
        %v8543 = vunpack.c.l.b16 %v8462
        %v8544 = vunpack.c.l.b16 %v8463
        %v8545 = vunpack.c.l.b16 %v8464
        %v8546 = vunpack.c.l.b16 %v8465
        %v8547 = vunpack.c.l.b16 %v8466
        %v8548 = vunpack.c.l.b16 %v8467
        %v8549 = vunpack.c.l.b16 %v8468
        %v8550 = vunpack.c.l.b16 %v8469
        %v8551 = vunpack.c.l.b16 %v8470
        %v8552 = vunpack.c.l.b16 %v8471
        %v8553 = vunpack.c.l.b16 %v8472
        %v8554 = vunpack.c.l.b16 %v8473
        %v8555 = vunpack.c.l.b16 %v8474
        %v8556 = vunpack.c.l.b16 %v8475
        %v8557 = vunpack.c.l.b16 %v8476
        %v8558 = vunpack.c.l.b16 %v8477
        %v8559 = vunpack.c.l.b16 %v8478
        %v8560 = vunpack.c.l.b16 %v8479
        %v8561 = vunpack.c.l.b16 %v8480
        %v8562 = vunpack.c.l.b16 %v8481
        %v8563 = vunpack.c.l.b16 %v8482
        %v8564 = vunpack.c.l.b16 %v8483
        %v8565 = vunpack.c.l.b16 %v8484
        %v8566 = vunpack.c.l.b16 %v8485
        %v8567 = vpack.c.b16 %v8536, %v8535
        %v8568 = vpack.c.b16 %v8538, %v8537
        %v8569 = vpack.c.b16 %v8540, %v8539
        %v8570 = vpack.c.b16 %v8542, %v8541
        %v8571 = vpack.c.b16 %v8544, %v8543
        %v8572 = vpack.c.b16 %v8546, %v8545
        %v8573 = vpack.c.b16 %v8548, %v8547
        %v8574 = vpack.c.b16 %v8550, %v8549
        %v8575 = vpack.c.b16 %v8552, %v8551
        %v8576 = vpack.c.b16 %v8554, %v8553
        %v8577 = vpack.c.b16 %v8556, %v8555
        %v8578 = vpack.c.b16 %v8558, %v8557
        %v8579 = vpack.c.b16 %v8560, %v8559
        %v8580 = vpack.c.b16 %v8562, %v8561
        %v8581 = vpack.c.b16 %v8564, %v8563
        %v8582 = vpack.c.b16 %v8566, %v8565
        %v8615 = vunpack.c.l.b16 %v8487
        %v8616 = vunpack.c.l.b16 %v8488
        %v8617 = vunpack.c.l.b16 %v8489
        %v8618 = vunpack.c.l.b16 %v8490
        %v8619 = vunpack.c.l.b16 %v8491
        %v8620 = vunpack.c.l.b16 %v8492
        %v8621 = vunpack.c.l.b16 %v8493
        %v8622 = vunpack.c.l.b16 %v8494
        %v8623 = vunpack.c.l.b16 %v8495
        %v8624 = vunpack.c.l.b16 %v8496
        %v8625 = vunpack.c.l.b16 %v8497
        %v8626 = vunpack.c.l.b16 %v8498
        %v8627 = vunpack.c.l.b16 %v8499
        %v8628 = vunpack.c.l.b16 %v8500
        %v8629 = vunpack.c.l.b16 %v8501
        %v8630 = vunpack.c.l.b16 %v8502
        %v8631 = vpack.c.b16 %v8616, %v8615
        %v8632 = vpack.c.b16 %v8618, %v8617
        %v8633 = vpack.c.b16 %v8620, %v8619
        %v8634 = vpack.c.b16 %v8622, %v8621
        %v8635 = vpack.c.b16 %v8624, %v8623
        %v8636 = vpack.c.b16 %v8626, %v8625
        %v8637 = vpack.c.b16 %v8628, %v8627
        %v8638 = vpack.c.b16 %v8630, %v8629
        %8647 = vmatpush.bf16.msra.mxu0 %v8638
        %8648 = vmatpush.bf16.msra.mxu0 %v8637
        %8649 = vmatpush.bf16.msra.mxu0 %v8636
        %8650 = vmatpush.bf16.msra.mxu0 %v8635
        %8651 = vmatpush.bf16.msra.mxu0 %v8634
        %8652 = vmatpush.bf16.msra.mxu0 %v8633
        %8653 = vmatpush.bf16.msra.mxu0 %v8632
        %8654 = vmatpush.bf16.msra.mxu0 %v8631
        %8655 = vmatmul.bf16.gmra.mxu0 %v8567
        %v8656 = vpop.f32.mrf.mxu0
        %v8657 = vadd.f32 0.0, %v8656
        %v8658 = vpop.f32.mrf.mxu0
        %v8659 = vadd.f32 0.0, %v8658
        %8660 = vmatmul.bf16.gmra.mxu0 %v8568
        %v8661 = vpop.f32.mrf.mxu0
        %v8662 = vadd.f32 0.0, %v8661
        %v8663 = vpop.f32.mrf.mxu0
        %v8664 = vadd.f32 0.0, %v8663
        %8665 = vmatmul.bf16.gmra.mxu0 %v8569
        %v8666 = vpop.f32.mrf.mxu0
        %v8667 = vadd.f32 0.0, %v8666
        %v8668 = vpop.f32.mrf.mxu0
        %v8669 = vadd.f32 0.0, %v8668
        %8670 = vmatmul.bf16.gmra.mxu0 %v8570
        %v8671 = vpop.f32.mrf.mxu0
        %v8672 = vadd.f32 0.0, %v8671
        %v8673 = vpop.f32.mrf.mxu0
        %v8674 = vadd.f32 0.0, %v8673
        %8675 = vmatmul.bf16.gmra.mxu0 %v8571
        %v8676 = vpop.f32.mrf.mxu0
        %v8677 = vadd.f32 0.0, %v8676
        %v8678 = vpop.f32.mrf.mxu0
        %v8679 = vadd.f32 0.0, %v8678
        %8680 = vmatmul.bf16.gmra.mxu0 %v8572
        %v8681 = vpop.f32.mrf.mxu0
        %v8682 = vadd.f32 0.0, %v8681
        %v8683 = vpop.f32.mrf.mxu0
        %v8684 = vadd.f32 0.0, %v8683
        %8685 = vmatmul.bf16.gmra.mxu0 %v8573
        %v8686 = vpop.f32.mrf.mxu0
        %v8687 = vadd.f32 0.0, %v8686
        %v8688 = vpop.f32.mrf.mxu0
        %v8689 = vadd.f32 0.0, %v8688
        %8690 = vmatmul.bf16.gmra.mxu0 %v8574
        %v8691 = vpop.f32.mrf.mxu0
        %v8692 = vadd.f32 0.0, %v8691
        %v8693 = vpop.f32.mrf.mxu0
        %v8694 = vadd.f32 0.0, %v8693
        %8695 = vmatmul.bf16.gmra.mxu0 %v8575
        %v8696 = vpop.f32.mrf.mxu0
        %v8697 = vadd.f32 0.0, %v8696
        %v8698 = vpop.f32.mrf.mxu0
        %v8699 = vadd.f32 0.0, %v8698
        %8700 = vmatmul.bf16.gmra.mxu0 %v8576
        %v8701 = vpop.f32.mrf.mxu0
        %v8702 = vadd.f32 0.0, %v8701
        %v8703 = vpop.f32.mrf.mxu0
        %v8704 = vadd.f32 0.0, %v8703
        %8705 = vmatmul.bf16.gmra.mxu0 %v8577
        %v8706 = vpop.f32.mrf.mxu0
        %v8707 = vadd.f32 0.0, %v8706
        %v8708 = vpop.f32.mrf.mxu0
        %v8709 = vadd.f32 0.0, %v8708
        %8710 = vmatmul.bf16.gmra.mxu0 %v8578
        %v8711 = vpop.f32.mrf.mxu0
        %v8712 = vadd.f32 0.0, %v8711
        %v8713 = vpop.f32.mrf.mxu0
        %v8714 = vadd.f32 0.0, %v8713
        %8715 = vmatmul.bf16.gmra.mxu0 %v8579
        %v8716 = vpop.f32.mrf.mxu0
        %v8717 = vadd.f32 0.0, %v8716
        %v8718 = vpop.f32.mrf.mxu0
        %v8719 = vadd.f32 0.0, %v8718
        %8720 = vmatmul.bf16.gmra.mxu0 %v8580
        %v8721 = vpop.f32.mrf.mxu0
        %v8722 = vadd.f32 0.0, %v8721
        %v8723 = vpop.f32.mrf.mxu0
        %v8724 = vadd.f32 0.0, %v8723
        %8725 = vmatmul.bf16.gmra.mxu0 %v8581
        %v8726 = vpop.f32.mrf.mxu0
        %v8727 = vadd.f32 0.0, %v8726
        %v8728 = vpop.f32.mrf.mxu0
        %v8729 = vadd.f32 0.0, %v8728
        %8730 = vmatmul.bf16.gmra.mxu0 %v8582
        %v8731 = vpop.f32.mrf.mxu0
        %v8732 = vadd.f32 0.0, %v8731
        %v8733 = vpop.f32.mrf.mxu0
        %v8734 = vadd.f32 0.0, %v8733
        %8735 = vdwg.mxu0
        %v8736 = vadd.f32 %v8422, %v8657
        %v8737 = vadd.f32 %v8423, %v8659
        %v8738 = vadd.f32 %v8424, %v8662
        %v8739 = vadd.f32 %v8425, %v8664
        %v8740 = vadd.f32 %v8426, %v8667
        %v8741 = vadd.f32 %v8427, %v8669
        %v8742 = vadd.f32 %v8428, %v8672
        %v8743 = vadd.f32 %v8429, %v8674
        %v8744 = vadd.f32 %v8430, %v8677
        %v8745 = vadd.f32 %v8431, %v8679
        %v8746 = vadd.f32 %v8432, %v8682
        %v8747 = vadd.f32 %v8433, %v8684
        %v8748 = vadd.f32 %v8434, %v8687
        %v8749 = vadd.f32 %v8435, %v8689
        %v8750 = vadd.f32 %v8436, %v8692
        %v8751 = vadd.f32 %v8437, %v8694
        %v8752 = vadd.f32 %v8438, %v8697
        %v8753 = vadd.f32 %v8439, %v8699
        %v8754 = vadd.f32 %v8440, %v8702
        %v8755 = vadd.f32 %v8441, %v8704
        %v8756 = vadd.f32 %v8442, %v8707
        %v8757 = vadd.f32 %v8443, %v8709
        %v8758 = vadd.f32 %v8444, %v8712
        %v8759 = vadd.f32 %v8445, %v8714
        %v8760 = vadd.f32 %v8446, %v8717
        %v8761 = vadd.f32 %v8447, %v8719
        %v8762 = vadd.f32 %v8448, %v8722
        %v8763 = vadd.f32 %v8449, %v8724
        %v8764 = vadd.f32 %v8450, %v8727
        %v8765 = vadd.f32 %v8451, %v8729
        %v8766 = vadd.f32 %v8452, %v8732
        %v8767 = vadd.f32 %v8453, %v8734
        %v8768 = vld [vmem:[%s3733] sm:$0xf]
        %v8769 = vld [vmem:[%s3733 + $0x4] sm:$0xf]
        %v8770 = vld [vmem:[%s3733 + $0x8] sm:$0x1]
        %v8771 = vld [vmem:[%s3733 + $0xc] sm:$0xf]
        %v8772 = vld [vmem:[%s3733 + $0x10] sm:$0xf]
        %v8773 = vld [vmem:[%s3733 + $0x14] sm:$0x1]
        %v8774 = vld [vmem:[%s3733 + $0x18] sm:$0xf]
        %v8775 = vld [vmem:[%s3733 + $0x1c] sm:$0xf]
        %v8776 = vld [vmem:[%s3733 + $0x20] sm:$0x1]
        %v8777 = vld [vmem:[%s3733 + $0x24] sm:$0xf]
        %v8778 = vld [vmem:[%s3733 + $0x28] sm:$0xf]
        %v8779 = vld [vmem:[%s3733 + $0x2c] sm:$0x1]
        %v8780 = vld [vmem:[%s3733 + $0x30] sm:$0xf]
        %v8781 = vld [vmem:[%s3733 + $0x34] sm:$0xf]
        %v8782 = vld [vmem:[%s3733 + $0x38] sm:$0x1]
        %v8783 = vld [vmem:[%s3733 + $0x3c] sm:$0xf]
        %v8784 = vld [vmem:[%s3733 + $0x40] sm:$0xf]
        %v8785 = vld [vmem:[%s3733 + $0x44] sm:$0x1]
        %v8786 = vld [vmem:[%s3733 + $0x48] sm:$0xf]
        %v8787 = vld [vmem:[%s3733 + $0x4c] sm:$0xf]
        %v8788 = vld [vmem:[%s3733 + $0x50] sm:$0x1]
        %v8789 = vld [vmem:[%s3733 + $0x54] sm:$0xf]
        %v8790 = vld [vmem:[%s3733 + $0x58] sm:$0xf]
        %v8791 = vld [vmem:[%s3733 + $0x5c] sm:$0x1]
        %v8792 = vld [vmem:[%s3733 + $0x60] sm:$0xf]
        %v8793 = vld [vmem:[%s3733 + $0x64] sm:$0xf]
        %v8794 = vld [vmem:[%s3733 + $0x68] sm:$0x1]
        %v8795 = vld [vmem:[%s3733 + $0x6c] sm:$0xf]
        %v8796 = vld [vmem:[%s3733 + $0x70] sm:$0xf]
        %v8797 = vld [vmem:[%s3733 + $0x74] sm:$0x1]
        %v8798 = vld [vmem:[%s3733 + $0x78] sm:$0xf]
        %v8799 = vld [vmem:[%s3733 + $0x7c] sm:$0xf]
        %v8800 = vld [vmem:[%s3733 + $0x80] sm:$0x1]
        %v8801 = vld [vmem:[%s3733 + $0x84] sm:$0xf]
        %v8802 = vld [vmem:[%s3733 + $0x88] sm:$0xf]
        %v8803 = vld [vmem:[%s3733 + $0x8c] sm:$0x1]
        %v8804 = vld [vmem:[%s3733 + $0x90] sm:$0xf]
        %v8805 = vld [vmem:[%s3733 + $0x94] sm:$0xf]
        %v8806 = vld [vmem:[%s3733 + $0x98] sm:$0x1]
        %v8807 = vld [vmem:[%s3733 + $0x9c] sm:$0xf]
        %v8808 = vld [vmem:[%s3733 + $0xa0] sm:$0xf]
        %v8809 = vld [vmem:[%s3733 + $0xa4] sm:$0x1]
        %v8810 = vld [vmem:[%s3733 + $0xa8] sm:$0xf]
        %v8811 = vld [vmem:[%s3733 + $0xac] sm:$0xf]
        %v8812 = vld [vmem:[%s3733 + $0xb0] sm:$0x1]
        %v8813 = vld [vmem:[%s3733 + $0xb4] sm:$0xf]
        %v8814 = vld [vmem:[%s3733 + $0xb8] sm:$0xf]
        %v8815 = vld [vmem:[%s3733 + $0xbc] sm:$0x1]
        %v8817 = vshrl.u32 %v8768, 16
        %v8819 = vrot.slane %v8817, 4
        %v8820 = vshll.u32 %v8768, 16
        %v8822 = vrot.slane %v8820, 5
        %v8823 = vor.u32 %v8819, %v8822
        %v8824 = vrot.slane %v8823, 4
        %v8826 = vshll.u32 %v8769, 16
        %v8828 = vrot.slane %v8826, 5
        %v8829 = vsel %vm1062, %v8824, %v8828
        %v8830 = vshrl.u32 %v8769, 16
        %v8832 = vrot.slane %v8830, 4
        %v8833 = vor.u32 %v8832, %v8828
        %v8834 = vrot.slane %v8833, 4
        %v8836 = vshll.u32 %v8770, 16
        %v8838 = vrot.slane %v8836, 5
        %v8839 = vsel %vm1062, %v8834, %v8838
        %v8841 = vshrl.u32 %v8771, 16
        %v8843 = vrot.slane %v8841, 4
        %v8844 = vshll.u32 %v8771, 16
        %v8846 = vrot.slane %v8844, 5
        %v8847 = vor.u32 %v8843, %v8846
        %v8848 = vrot.slane %v8847, 4
        %v8850 = vshll.u32 %v8772, 16
        %v8852 = vrot.slane %v8850, 5
        %v8853 = vsel %vm1062, %v8848, %v8852
        %v8854 = vshrl.u32 %v8772, 16
        %v8856 = vrot.slane %v8854, 4
        %v8857 = vor.u32 %v8856, %v8852
        %v8858 = vrot.slane %v8857, 4
        %v8860 = vshll.u32 %v8773, 16
        %v8862 = vrot.slane %v8860, 5
        %v8863 = vsel %vm1062, %v8858, %v8862
        %v8865 = vshrl.u32 %v8774, 16
        %v8867 = vrot.slane %v8865, 4
        %v8868 = vshll.u32 %v8774, 16
        %v8870 = vrot.slane %v8868, 5
        %v8871 = vor.u32 %v8867, %v8870
        %v8872 = vrot.slane %v8871, 4
        %v8874 = vshll.u32 %v8775, 16
        %v8876 = vrot.slane %v8874, 5
        %v8877 = vsel %vm1062, %v8872, %v8876
        %v8878 = vshrl.u32 %v8775, 16
        %v8880 = vrot.slane %v8878, 4
        %v8881 = vor.u32 %v8880, %v8876
        %v8882 = vrot.slane %v8881, 4
        %v8884 = vshll.u32 %v8776, 16
        %v8886 = vrot.slane %v8884, 5
        %v8887 = vsel %vm1062, %v8882, %v8886
        %v8889 = vshrl.u32 %v8777, 16
        %v8891 = vrot.slane %v8889, 4
        %v8892 = vshll.u32 %v8777, 16
        %v8894 = vrot.slane %v8892, 5
        %v8895 = vor.u32 %v8891, %v8894
        %v8896 = vrot.slane %v8895, 4
        %v8898 = vshll.u32 %v8778, 16
        %v8900 = vrot.slane %v8898, 5
        %v8901 = vsel %vm1062, %v8896, %v8900
        %v8902 = vshrl.u32 %v8778, 16
        %v8904 = vrot.slane %v8902, 4
        %v8905 = vor.u32 %v8904, %v8900
        %v8906 = vrot.slane %v8905, 4
        %v8908 = vshll.u32 %v8779, 16
        %v8910 = vrot.slane %v8908, 5
        %v8911 = vsel %vm1062, %v8906, %v8910
        %v8913 = vshrl.u32 %v8780, 16
        %v8915 = vrot.slane %v8913, 4
        %v8916 = vshll.u32 %v8780, 16
        %v8918 = vrot.slane %v8916, 5
        %v8919 = vor.u32 %v8915, %v8918
        %v8920 = vrot.slane %v8919, 4
        %v8922 = vshll.u32 %v8781, 16
        %v8924 = vrot.slane %v8922, 5
        %v8925 = vsel %vm1062, %v8920, %v8924
        %v8926 = vshrl.u32 %v8781, 16
        %v8928 = vrot.slane %v8926, 4
        %v8929 = vor.u32 %v8928, %v8924
        %v8930 = vrot.slane %v8929, 4
        %v8932 = vshll.u32 %v8782, 16
        %v8934 = vrot.slane %v8932, 5
        %v8935 = vsel %vm1062, %v8930, %v8934
        %v8937 = vshrl.u32 %v8783, 16
        %v8939 = vrot.slane %v8937, 4
        %v8940 = vshll.u32 %v8783, 16
        %v8942 = vrot.slane %v8940, 5
        %v8943 = vor.u32 %v8939, %v8942
        %v8944 = vrot.slane %v8943, 4
        %v8946 = vshll.u32 %v8784, 16
        %v8948 = vrot.slane %v8946, 5
        %v8949 = vsel %vm1062, %v8944, %v8948
        %v8950 = vshrl.u32 %v8784, 16
        %v8952 = vrot.slane %v8950, 4
        %v8953 = vor.u32 %v8952, %v8948
        %v8954 = vrot.slane %v8953, 4
        %v8956 = vshll.u32 %v8785, 16
        %v8958 = vrot.slane %v8956, 5
        %v8959 = vsel %vm1062, %v8954, %v8958
        %v8961 = vshrl.u32 %v8786, 16
        %v8963 = vrot.slane %v8961, 4
        %v8964 = vshll.u32 %v8786, 16
        %v8966 = vrot.slane %v8964, 5
        %v8967 = vor.u32 %v8963, %v8966
        %v8968 = vrot.slane %v8967, 4
        %v8970 = vshll.u32 %v8787, 16
        %v8972 = vrot.slane %v8970, 5
        %v8973 = vsel %vm1062, %v8968, %v8972
        %v8974 = vshrl.u32 %v8787, 16
        %v8976 = vrot.slane %v8974, 4
        %v8977 = vor.u32 %v8976, %v8972
        %v8978 = vrot.slane %v8977, 4
        %v8980 = vshll.u32 %v8788, 16
        %v8982 = vrot.slane %v8980, 5
        %v8983 = vsel %vm1062, %v8978, %v8982
        %v8985 = vshrl.u32 %v8789, 16
        %v8987 = vrot.slane %v8985, 4
        %v8988 = vshll.u32 %v8789, 16
        %v8990 = vrot.slane %v8988, 5
        %v8991 = vor.u32 %v8987, %v8990
        %v8992 = vrot.slane %v8991, 4
        %v8994 = vshll.u32 %v8790, 16
        %v8996 = vrot.slane %v8994, 5
        %v8997 = vsel %vm1062, %v8992, %v8996
        %v8998 = vshrl.u32 %v8790, 16
        %v9000 = vrot.slane %v8998, 4
        %v9001 = vor.u32 %v9000, %v8996
        %v9002 = vrot.slane %v9001, 4
        %v9004 = vshll.u32 %v8791, 16
        %v9006 = vrot.slane %v9004, 5
        %v9007 = vsel %vm1062, %v9002, %v9006
        %v9009 = vshrl.u32 %v8792, 16
        %v9011 = vrot.slane %v9009, 4
        %v9012 = vshll.u32 %v8792, 16
        %v9014 = vrot.slane %v9012, 5
        %v9015 = vor.u32 %v9011, %v9014
        %v9016 = vrot.slane %v9015, 4
        %v9018 = vshll.u32 %v8793, 16
        %v9020 = vrot.slane %v9018, 5
        %v9021 = vsel %vm1062, %v9016, %v9020
        %v9022 = vshrl.u32 %v8793, 16
        %v9024 = vrot.slane %v9022, 4
        %v9025 = vor.u32 %v9024, %v9020
        %v9026 = vrot.slane %v9025, 4
        %v9028 = vshll.u32 %v8794, 16
        %v9030 = vrot.slane %v9028, 5
        %v9031 = vsel %vm1062, %v9026, %v9030
        %v9033 = vshrl.u32 %v8795, 16
        %v9035 = vrot.slane %v9033, 4
        %v9036 = vshll.u32 %v8795, 16
        %v9038 = vrot.slane %v9036, 5
        %v9039 = vor.u32 %v9035, %v9038
        %v9040 = vrot.slane %v9039, 4
        %v9042 = vshll.u32 %v8796, 16
        %v9044 = vrot.slane %v9042, 5
        %v9045 = vsel %vm1062, %v9040, %v9044
        %v9046 = vshrl.u32 %v8796, 16
        %v9048 = vrot.slane %v9046, 4
        %v9049 = vor.u32 %v9048, %v9044
        %v9050 = vrot.slane %v9049, 4
        %v9052 = vshll.u32 %v8797, 16
        %v9054 = vrot.slane %v9052, 5
        %v9055 = vsel %vm1062, %v9050, %v9054
        %v9057 = vshrl.u32 %v8798, 16
        %v9059 = vrot.slane %v9057, 4
        %v9060 = vshll.u32 %v8798, 16
        %v9062 = vrot.slane %v9060, 5
        %v9063 = vor.u32 %v9059, %v9062
        %v9064 = vrot.slane %v9063, 4
        %v9066 = vshll.u32 %v8799, 16
        %v9068 = vrot.slane %v9066, 5
        %v9069 = vsel %vm1062, %v9064, %v9068
        %v9070 = vshrl.u32 %v8799, 16
        %v9072 = vrot.slane %v9070, 4
        %v9073 = vor.u32 %v9072, %v9068
        %v9074 = vrot.slane %v9073, 4
        %v9076 = vshll.u32 %v8800, 16
        %v9078 = vrot.slane %v9076, 5
        %v9079 = vsel %vm1062, %v9074, %v9078
        %v9081 = vshrl.u32 %v8801, 16
        %v9083 = vrot.slane %v9081, 4
        %v9084 = vshll.u32 %v8801, 16
        %v9086 = vrot.slane %v9084, 5
        %v9087 = vor.u32 %v9083, %v9086
        %v9088 = vrot.slane %v9087, 4
        %v9090 = vshll.u32 %v8802, 16
        %v9092 = vrot.slane %v9090, 5
        %v9093 = vsel %vm1062, %v9088, %v9092
        %v9094 = vshrl.u32 %v8802, 16
        %v9096 = vrot.slane %v9094, 4
        %v9097 = vor.u32 %v9096, %v9092
        %v9098 = vrot.slane %v9097, 4
        %v9100 = vshll.u32 %v8803, 16
        %v9102 = vrot.slane %v9100, 5
        %v9103 = vsel %vm1062, %v9098, %v9102
        %v9105 = vshrl.u32 %v8804, 16
        %v9107 = vrot.slane %v9105, 4
        %v9108 = vshll.u32 %v8804, 16
        %v9110 = vrot.slane %v9108, 5
        %v9111 = vor.u32 %v9107, %v9110
        %v9112 = vrot.slane %v9111, 4
        %v9114 = vshll.u32 %v8805, 16
        %v9116 = vrot.slane %v9114, 5
        %v9117 = vsel %vm1062, %v9112, %v9116
        %v9118 = vshrl.u32 %v8805, 16
        %v9120 = vrot.slane %v9118, 4
        %v9121 = vor.u32 %v9120, %v9116
        %v9122 = vrot.slane %v9121, 4
        %v9124 = vshll.u32 %v8806, 16
        %v9126 = vrot.slane %v9124, 5
        %v9127 = vsel %vm1062, %v9122, %v9126
        %v9129 = vshrl.u32 %v8807, 16
        %v9131 = vrot.slane %v9129, 4
        %v9132 = vshll.u32 %v8807, 16
        %v9134 = vrot.slane %v9132, 5
        %v9135 = vor.u32 %v9131, %v9134
        %v9136 = vrot.slane %v9135, 4
        %v9138 = vshll.u32 %v8808, 16
        %v9140 = vrot.slane %v9138, 5
        %v9141 = vsel %vm1062, %v9136, %v9140
        %v9142 = vshrl.u32 %v8808, 16
        %v9144 = vrot.slane %v9142, 4
        %v9145 = vor.u32 %v9144, %v9140
        %v9146 = vrot.slane %v9145, 4
        %v9148 = vshll.u32 %v8809, 16
        %v9150 = vrot.slane %v9148, 5
        %v9151 = vsel %vm1062, %v9146, %v9150
        %v9153 = vshrl.u32 %v8810, 16
        %v9155 = vrot.slane %v9153, 4
        %v9156 = vshll.u32 %v8810, 16
        %v9158 = vrot.slane %v9156, 5
        %v9159 = vor.u32 %v9155, %v9158
        %v9160 = vrot.slane %v9159, 4
        %v9162 = vshll.u32 %v8811, 16
        %v9164 = vrot.slane %v9162, 5
        %v9165 = vsel %vm1062, %v9160, %v9164
        %v9166 = vshrl.u32 %v8811, 16
        %v9168 = vrot.slane %v9166, 4
        %v9169 = vor.u32 %v9168, %v9164
        %v9170 = vrot.slane %v9169, 4
        %v9172 = vshll.u32 %v8812, 16
        %v9174 = vrot.slane %v9172, 5
        %v9175 = vsel %vm1062, %v9170, %v9174
        %v9177 = vshrl.u32 %v8813, 16
        %v9179 = vrot.slane %v9177, 4
        %v9180 = vshll.u32 %v8813, 16
        %v9182 = vrot.slane %v9180, 5
        %v9183 = vor.u32 %v9179, %v9182
        %v9184 = vrot.slane %v9183, 4
        %v9186 = vshll.u32 %v8814, 16
        %v9188 = vrot.slane %v9186, 5
        %v9189 = vsel %vm1062, %v9184, %v9188
        %v9190 = vshrl.u32 %v8814, 16
        %v9192 = vrot.slane %v9190, 4
        %v9193 = vor.u32 %v9192, %v9188
        %v9194 = vrot.slane %v9193, 4
        %v9196 = vshll.u32 %v8815, 16
        %v9198 = vrot.slane %v9196, 5
        %v9199 = vsel %vm1062, %v9194, %v9198
        %s9200 = scalar_lea.vmem [#allocation8], 448
        %v9201 = vld [vmem:[%s9200] sm:$0xf]
        %v9202 = vld [vmem:[%s9200 + $0x4] sm:$0xf]
        %v9203 = vld [vmem:[%s9200 + $0x8] sm:$0xf]
        %v9204 = vld [vmem:[%s9200 + $0xc] sm:$0xf]
        %v9205 = vld [vmem:[%s9200 + $0x10] sm:$0xf]
        %v9206 = vld [vmem:[%s9200 + $0x14] sm:$0xf]
        %v9207 = vld [vmem:[%s9200 + $0x18] sm:$0xf]
        %v9208 = vld [vmem:[%s9200 + $0x1c] sm:$0xf]
        %v9209 = vld [vmem:[%s9200 + $0x20] sm:$0xf]
        %v9210 = vld [vmem:[%s9200 + $0x24] sm:$0xf]
        %v9211 = vld [vmem:[%s9200 + $0x28] sm:$0xf]
        %v9212 = vld [vmem:[%s9200 + $0x2c] sm:$0xf]
        %v9213 = vld [vmem:[%s9200 + $0x30] sm:$0xf]
        %v9214 = vld [vmem:[%s9200 + $0x34] sm:$0xf]
        %v9215 = vld [vmem:[%s9200 + $0x38] sm:$0xf]
        %v9216 = vld [vmem:[%s9200 + $0x3c] sm:$0xf]
        %v9217 = vunpack.c.l.b16 %v8829
        %v9218 = vunpack.c.l.b16 %v8839
        %v9219 = vunpack.c.l.b16 %v8853
        %v9220 = vunpack.c.l.b16 %v8863
        %v9221 = vunpack.c.l.b16 %v8877
        %v9222 = vunpack.c.l.b16 %v8887
        %v9223 = vunpack.c.l.b16 %v8901
        %v9224 = vunpack.c.l.b16 %v8911
        %v9225 = vunpack.c.l.b16 %v8925
        %v9226 = vunpack.c.l.b16 %v8935
        %v9227 = vunpack.c.l.b16 %v8949
        %v9228 = vunpack.c.l.b16 %v8959
        %v9229 = vunpack.c.l.b16 %v8973
        %v9230 = vunpack.c.l.b16 %v8983
        %v9231 = vunpack.c.l.b16 %v8997
        %v9232 = vunpack.c.l.b16 %v9007
        %v9233 = vunpack.c.l.b16 %v9021
        %v9234 = vunpack.c.l.b16 %v9031
        %v9235 = vunpack.c.l.b16 %v9045
        %v9236 = vunpack.c.l.b16 %v9055
        %v9237 = vunpack.c.l.b16 %v9069
        %v9238 = vunpack.c.l.b16 %v9079
        %v9239 = vunpack.c.l.b16 %v9093
        %v9240 = vunpack.c.l.b16 %v9103
        %v9241 = vunpack.c.l.b16 %v9117
        %v9242 = vunpack.c.l.b16 %v9127
        %v9243 = vunpack.c.l.b16 %v9141
        %v9244 = vunpack.c.l.b16 %v9151
        %v9245 = vunpack.c.l.b16 %v9165
        %v9246 = vunpack.c.l.b16 %v9175
        %v9247 = vunpack.c.l.b16 %v9189
        %v9248 = vunpack.c.l.b16 %v9199
        %v9249 = vpack.c.b16 %v9218, %v9217
        %v9250 = vpack.c.b16 %v9220, %v9219
        %v9251 = vpack.c.b16 %v9222, %v9221
        %v9252 = vpack.c.b16 %v9224, %v9223
        %v9253 = vpack.c.b16 %v9226, %v9225
        %v9254 = vpack.c.b16 %v9228, %v9227
        %v9255 = vpack.c.b16 %v9230, %v9229
        %v9256 = vpack.c.b16 %v9232, %v9231
        %v9257 = vpack.c.b16 %v9234, %v9233
        %v9258 = vpack.c.b16 %v9236, %v9235
        %v9259 = vpack.c.b16 %v9238, %v9237
        %v9260 = vpack.c.b16 %v9240, %v9239
        %v9261 = vpack.c.b16 %v9242, %v9241
        %v9262 = vpack.c.b16 %v9244, %v9243
        %v9263 = vpack.c.b16 %v9246, %v9245
        %v9264 = vpack.c.b16 %v9248, %v9247
        %v9297 = vunpack.c.l.b16 %v9201
        %v9298 = vunpack.c.l.b16 %v9202
        %v9299 = vunpack.c.l.b16 %v9203
        %v9300 = vunpack.c.l.b16 %v9204
        %v9301 = vunpack.c.l.b16 %v9205
        %v9302 = vunpack.c.l.b16 %v9206
        %v9303 = vunpack.c.l.b16 %v9207
        %v9304 = vunpack.c.l.b16 %v9208
        %v9305 = vunpack.c.l.b16 %v9209
        %v9306 = vunpack.c.l.b16 %v9210
        %v9307 = vunpack.c.l.b16 %v9211
        %v9308 = vunpack.c.l.b16 %v9212
        %v9309 = vunpack.c.l.b16 %v9213
        %v9310 = vunpack.c.l.b16 %v9214
        %v9311 = vunpack.c.l.b16 %v9215
        %v9312 = vunpack.c.l.b16 %v9216
        %v9313 = vpack.c.b16 %v9298, %v9297
        %v9314 = vpack.c.b16 %v9300, %v9299
        %v9315 = vpack.c.b16 %v9302, %v9301
        %v9316 = vpack.c.b16 %v9304, %v9303
        %v9317 = vpack.c.b16 %v9306, %v9305
        %v9318 = vpack.c.b16 %v9308, %v9307
        %v9319 = vpack.c.b16 %v9310, %v9309
        %v9320 = vpack.c.b16 %v9312, %v9311
        %9329 = vmatpush.bf16.msra.mxu0 %v9320
        %9330 = vmatpush.bf16.msra.mxu0 %v9319
        %9331 = vmatpush.bf16.msra.mxu0 %v9318
        %9332 = vmatpush.bf16.msra.mxu0 %v9317
        %9333 = vmatpush.bf16.msra.mxu0 %v9316
        %9334 = vmatpush.bf16.msra.mxu0 %v9315
        %9335 = vmatpush.bf16.msra.mxu0 %v9314
        %9336 = vmatpush.bf16.msra.mxu0 %v9313
        %9337 = vmatmul.bf16.gmra.mxu0 %v9249
        %v9338 = vpop.f32.mrf.mxu0
        %v9339 = vadd.f32 0.0, %v9338
        %v9340 = vpop.f32.mrf.mxu0
        %v9341 = vadd.f32 0.0, %v9340
        %9342 = vmatmul.bf16.gmra.mxu0 %v9250
        %v9343 = vpop.f32.mrf.mxu0
        %v9344 = vadd.f32 0.0, %v9343
        %v9345 = vpop.f32.mrf.mxu0
        %v9346 = vadd.f32 0.0, %v9345
        %9347 = vmatmul.bf16.gmra.mxu0 %v9251
        %v9348 = vpop.f32.mrf.mxu0
        %v9349 = vadd.f32 0.0, %v9348
        %v9350 = vpop.f32.mrf.mxu0
        %v9351 = vadd.f32 0.0, %v9350
        %9352 = vmatmul.bf16.gmra.mxu0 %v9252
        %v9353 = vpop.f32.mrf.mxu0
        %v9354 = vadd.f32 0.0, %v9353
        %v9355 = vpop.f32.mrf.mxu0
        %v9356 = vadd.f32 0.0, %v9355
        %9357 = vmatmul.bf16.gmra.mxu0 %v9253
        %v9358 = vpop.f32.mrf.mxu0
        %v9359 = vadd.f32 0.0, %v9358
        %v9360 = vpop.f32.mrf.mxu0
        %v9361 = vadd.f32 0.0, %v9360
        %9362 = vmatmul.bf16.gmra.mxu0 %v9254
        %v9363 = vpop.f32.mrf.mxu0
        %v9364 = vadd.f32 0.0, %v9363
        %v9365 = vpop.f32.mrf.mxu0
        %v9366 = vadd.f32 0.0, %v9365
        %9367 = vmatmul.bf16.gmra.mxu0 %v9255
        %v9368 = vpop.f32.mrf.mxu0
        %v9369 = vadd.f32 0.0, %v9368
        %v9370 = vpop.f32.mrf.mxu0
        %v9371 = vadd.f32 0.0, %v9370
        %9372 = vmatmul.bf16.gmra.mxu0 %v9256
        %v9373 = vpop.f32.mrf.mxu0
        %v9374 = vadd.f32 0.0, %v9373
        %v9375 = vpop.f32.mrf.mxu0
        %v9376 = vadd.f32 0.0, %v9375
        %9377 = vmatmul.bf16.gmra.mxu0 %v9257
        %v9378 = vpop.f32.mrf.mxu0
        %v9379 = vadd.f32 0.0, %v9378
        %v9380 = vpop.f32.mrf.mxu0
        %v9381 = vadd.f32 0.0, %v9380
        %9382 = vmatmul.bf16.gmra.mxu0 %v9258
        %v9383 = vpop.f32.mrf.mxu0
        %v9384 = vadd.f32 0.0, %v9383
        %v9385 = vpop.f32.mrf.mxu0
        %v9386 = vadd.f32 0.0, %v9385
        %9387 = vmatmul.bf16.gmra.mxu0 %v9259
        %v9388 = vpop.f32.mrf.mxu0
        %v9389 = vadd.f32 0.0, %v9388
        %v9390 = vpop.f32.mrf.mxu0
        %v9391 = vadd.f32 0.0, %v9390
        %9392 = vmatmul.bf16.gmra.mxu0 %v9260
        %v9393 = vpop.f32.mrf.mxu0
        %v9394 = vadd.f32 0.0, %v9393
        %v9395 = vpop.f32.mrf.mxu0
        %v9396 = vadd.f32 0.0, %v9395
        %9397 = vmatmul.bf16.gmra.mxu0 %v9261
        %v9398 = vpop.f32.mrf.mxu0
        %v9399 = vadd.f32 0.0, %v9398
        %v9400 = vpop.f32.mrf.mxu0
        %v9401 = vadd.f32 0.0, %v9400
        %9402 = vmatmul.bf16.gmra.mxu0 %v9262
        %v9403 = vpop.f32.mrf.mxu0
        %v9404 = vadd.f32 0.0, %v9403
        %v9405 = vpop.f32.mrf.mxu0
        %v9406 = vadd.f32 0.0, %v9405
        %9407 = vmatmul.bf16.gmra.mxu0 %v9263
        %v9408 = vpop.f32.mrf.mxu0
        %v9409 = vadd.f32 0.0, %v9408
        %v9410 = vpop.f32.mrf.mxu0
        %v9411 = vadd.f32 0.0, %v9410
        %9412 = vmatmul.bf16.gmra.mxu0 %v9264
        %v9413 = vpop.f32.mrf.mxu0
        %v9414 = vadd.f32 0.0, %v9413
        %v9415 = vpop.f32.mrf.mxu0
        %v9416 = vadd.f32 0.0, %v9415
        %9417 = vdwg.mxu0
        %v9418 = vadd.f32 %v8736, %v9339
        %v9419 = vadd.f32 %v8737, %v9341
        %v9420 = vadd.f32 %v8738, %v9344
        %v9421 = vadd.f32 %v8739, %v9346
        %v9422 = vadd.f32 %v8740, %v9349
        %v9423 = vadd.f32 %v8741, %v9351
        %v9424 = vadd.f32 %v8742, %v9354
        %v9425 = vadd.f32 %v8743, %v9356
        %v9426 = vadd.f32 %v8744, %v9359
        %v9427 = vadd.f32 %v8745, %v9361
        %v9428 = vadd.f32 %v8746, %v9364
        %v9429 = vadd.f32 %v8747, %v9366
        %v9430 = vadd.f32 %v8748, %v9369
        %v9431 = vadd.f32 %v8749, %v9371
        %v9432 = vadd.f32 %v8750, %v9374
        %v9433 = vadd.f32 %v8751, %v9376
        %v9434 = vadd.f32 %v8752, %v9379
        %v9435 = vadd.f32 %v8753, %v9381
        %v9436 = vadd.f32 %v8754, %v9384
        %v9437 = vadd.f32 %v8755, %v9386
        %v9438 = vadd.f32 %v8756, %v9389
        %v9439 = vadd.f32 %v8757, %v9391
        %v9440 = vadd.f32 %v8758, %v9394
        %v9441 = vadd.f32 %v8759, %v9396
        %v9442 = vadd.f32 %v8760, %v9399
        %v9443 = vadd.f32 %v8761, %v9401
        %v9444 = vadd.f32 %v8762, %v9404
        %v9445 = vadd.f32 %v8763, %v9406
        %v9446 = vadd.f32 %v8764, %v9409
        %v9447 = vadd.f32 %v8765, %v9411
        %v9448 = vadd.f32 %v8766, %v9414
        %v9449 = vadd.f32 %v8767, %v9416
        %v9450 = vld [vmem:[%s3733] sm:$0xe]
        %v9451 = vld [vmem:[%s3733 + $0xc] sm:$0xe]
        %v9452 = vld [vmem:[%s3733 + $0x18] sm:$0xe]
        %v9453 = vld [vmem:[%s3733 + $0x24] sm:$0xe]
        %v9454 = vld [vmem:[%s3733 + $0x30] sm:$0xe]
        %v9455 = vld [vmem:[%s3733 + $0x3c] sm:$0xe]
        %v9456 = vld [vmem:[%s3733 + $0x48] sm:$0xe]
        %v9457 = vld [vmem:[%s3733 + $0x54] sm:$0xe]
        %v9458 = vld [vmem:[%s3733 + $0x60] sm:$0xe]
        %v9459 = vld [vmem:[%s3733 + $0x6c] sm:$0xe]
        %v9460 = vld [vmem:[%s3733 + $0x78] sm:$0xe]
        %v9461 = vld [vmem:[%s3733 + $0x84] sm:$0xe]
        %v9462 = vld [vmem:[%s3733 + $0x90] sm:$0xe]
        %v9463 = vld [vmem:[%s3733 + $0x9c] sm:$0xe]
        %v9464 = vld [vmem:[%s3733 + $0xa8] sm:$0xe]
        %v9465 = vld [vmem:[%s3733 + $0xb4] sm:$0xe]
        %v9514 = vrot.slane %v9450, 5
        %v9515 = vrot.slane %v9514, 4
        %v9516 = vrot.slane %v8769, 5
        %v9517 = vsel %vm1948, %v9515, %v9516
        %v9518 = vrot.slane %v9516, 4
        %v9519 = vrot.slane %v8770, 5
        %v9520 = vsel %vm1948, %v9518, %v9519
        %v9521 = vrot.slane %v9451, 5
        %v9522 = vrot.slane %v9521, 4
        %v9523 = vrot.slane %v8772, 5
        %v9524 = vsel %vm1948, %v9522, %v9523
        %v9525 = vrot.slane %v9523, 4
        %v9526 = vrot.slane %v8773, 5
        %v9527 = vsel %vm1948, %v9525, %v9526
        %v9528 = vrot.slane %v9452, 5
        %v9529 = vrot.slane %v9528, 4
        %v9530 = vrot.slane %v8775, 5
        %v9531 = vsel %vm1948, %v9529, %v9530
        %v9532 = vrot.slane %v9530, 4
        %v9533 = vrot.slane %v8776, 5
        %v9534 = vsel %vm1948, %v9532, %v9533
        %v9535 = vrot.slane %v9453, 5
        %v9536 = vrot.slane %v9535, 4
        %v9537 = vrot.slane %v8778, 5
        %v9538 = vsel %vm1948, %v9536, %v9537
        %v9539 = vrot.slane %v9537, 4
        %v9540 = vrot.slane %v8779, 5
        %v9541 = vsel %vm1948, %v9539, %v9540
        %v9542 = vrot.slane %v9454, 5
        %v9543 = vrot.slane %v9542, 4
        %v9544 = vrot.slane %v8781, 5
        %v9545 = vsel %vm1948, %v9543, %v9544
        %v9546 = vrot.slane %v9544, 4
        %v9547 = vrot.slane %v8782, 5
        %v9548 = vsel %vm1948, %v9546, %v9547
        %v9549 = vrot.slane %v9455, 5
        %v9550 = vrot.slane %v9549, 4
        %v9551 = vrot.slane %v8784, 5
        %v9552 = vsel %vm1948, %v9550, %v9551
        %v9553 = vrot.slane %v9551, 4
        %v9554 = vrot.slane %v8785, 5
        %v9555 = vsel %vm1948, %v9553, %v9554
        %v9556 = vrot.slane %v9456, 5
        %v9557 = vrot.slane %v9556, 4
        %v9558 = vrot.slane %v8787, 5
        %v9559 = vsel %vm1948, %v9557, %v9558
        %v9560 = vrot.slane %v9558, 4
        %v9561 = vrot.slane %v8788, 5
        %v9562 = vsel %vm1948, %v9560, %v9561
        %v9563 = vrot.slane %v9457, 5
        %v9564 = vrot.slane %v9563, 4
        %v9565 = vrot.slane %v8790, 5
        %v9566 = vsel %vm1948, %v9564, %v9565
        %v9567 = vrot.slane %v9565, 4
        %v9568 = vrot.slane %v8791, 5
        %v9569 = vsel %vm1948, %v9567, %v9568
        %v9570 = vrot.slane %v9458, 5
        %v9571 = vrot.slane %v9570, 4
        %v9572 = vrot.slane %v8793, 5
        %v9573 = vsel %vm1948, %v9571, %v9572
        %v9574 = vrot.slane %v9572, 4
        %v9575 = vrot.slane %v8794, 5
        %v9576 = vsel %vm1948, %v9574, %v9575
        %v9577 = vrot.slane %v9459, 5
        %v9578 = vrot.slane %v9577, 4
        %v9579 = vrot.slane %v8796, 5
        %v9580 = vsel %vm1948, %v9578, %v9579
        %v9581 = vrot.slane %v9579, 4
        %v9582 = vrot.slane %v8797, 5
        %v9583 = vsel %vm1948, %v9581, %v9582
        %v9584 = vrot.slane %v9460, 5
        %v9585 = vrot.slane %v9584, 4
        %v9586 = vrot.slane %v8799, 5
        %v9587 = vsel %vm1948, %v9585, %v9586
        %v9588 = vrot.slane %v9586, 4
        %v9589 = vrot.slane %v8800, 5
        %v9590 = vsel %vm1948, %v9588, %v9589
        %v9591 = vrot.slane %v9461, 5
        %v9592 = vrot.slane %v9591, 4
        %v9593 = vrot.slane %v8802, 5
        %v9594 = vsel %vm1948, %v9592, %v9593
        %v9595 = vrot.slane %v9593, 4
        %v9596 = vrot.slane %v8803, 5
        %v9597 = vsel %vm1948, %v9595, %v9596
        %v9598 = vrot.slane %v9462, 5
        %v9599 = vrot.slane %v9598, 4
        %v9600 = vrot.slane %v8805, 5
        %v9601 = vsel %vm1948, %v9599, %v9600
        %v9602 = vrot.slane %v9600, 4
        %v9603 = vrot.slane %v8806, 5
        %v9604 = vsel %vm1948, %v9602, %v9603
        %v9605 = vrot.slane %v9463, 5
        %v9606 = vrot.slane %v9605, 4
        %v9607 = vrot.slane %v8808, 5
        %v9608 = vsel %vm1948, %v9606, %v9607
        %v9609 = vrot.slane %v9607, 4
        %v9610 = vrot.slane %v8809, 5
        %v9611 = vsel %vm1948, %v9609, %v9610
        %v9612 = vrot.slane %v9464, 5
        %v9613 = vrot.slane %v9612, 4
        %v9614 = vrot.slane %v8811, 5
        %v9615 = vsel %vm1948, %v9613, %v9614
        %v9616 = vrot.slane %v9614, 4
        %v9617 = vrot.slane %v8812, 5
        %v9618 = vsel %vm1948, %v9616, %v9617
        %v9619 = vrot.slane %v9465, 5
        %v9620 = vrot.slane %v9619, 4
        %v9621 = vrot.slane %v8814, 5
        %v9622 = vsel %vm1948, %v9620, %v9621
        %v9623 = vrot.slane %v9621, 4
        %v9624 = vrot.slane %v8815, 5
        %v9625 = vsel %vm1948, %v9623, %v9624
        %s9626 = scalar_lea.vmem [#allocation8], 512
        %v9627 = vld [vmem:[%s9626] sm:$0xf]
        %v9628 = vld [vmem:[%s9626 + $0x4] sm:$0xf]
        %v9629 = vld [vmem:[%s9626 + $0x8] sm:$0xf]
        %v9630 = vld [vmem:[%s9626 + $0xc] sm:$0xf]
        %v9631 = vld [vmem:[%s9626 + $0x10] sm:$0xf]
        %v9632 = vld [vmem:[%s9626 + $0x14] sm:$0xf]
        %v9633 = vld [vmem:[%s9626 + $0x18] sm:$0xf]
        %v9634 = vld [vmem:[%s9626 + $0x1c] sm:$0xf]
        %v9635 = vld [vmem:[%s9626 + $0x20] sm:$0xf]
        %v9636 = vld [vmem:[%s9626 + $0x24] sm:$0xf]
        %v9637 = vld [vmem:[%s9626 + $0x28] sm:$0xf]
        %v9638 = vld [vmem:[%s9626 + $0x2c] sm:$0xf]
        %v9639 = vld [vmem:[%s9626 + $0x30] sm:$0xf]
        %v9640 = vld [vmem:[%s9626 + $0x34] sm:$0xf]
        %v9641 = vld [vmem:[%s9626 + $0x38] sm:$0xf]
        %v9642 = vld [vmem:[%s9626 + $0x3c] sm:$0xf]
        %v9643 = vunpack.c.l.b16 %v9517
        %v9644 = vunpack.c.l.b16 %v9520
        %v9645 = vunpack.c.l.b16 %v9524
        %v9646 = vunpack.c.l.b16 %v9527
        %v9647 = vunpack.c.l.b16 %v9531
        %v9648 = vunpack.c.l.b16 %v9534
        %v9649 = vunpack.c.l.b16 %v9538
        %v9650 = vunpack.c.l.b16 %v9541
        %v9651 = vunpack.c.l.b16 %v9545
        %v9652 = vunpack.c.l.b16 %v9548
        %v9653 = vunpack.c.l.b16 %v9552
        %v9654 = vunpack.c.l.b16 %v9555
        %v9655 = vunpack.c.l.b16 %v9559
        %v9656 = vunpack.c.l.b16 %v9562
        %v9657 = vunpack.c.l.b16 %v9566
        %v9658 = vunpack.c.l.b16 %v9569
        %v9659 = vunpack.c.l.b16 %v9573
        %v9660 = vunpack.c.l.b16 %v9576
        %v9661 = vunpack.c.l.b16 %v9580
        %v9662 = vunpack.c.l.b16 %v9583
        %v9663 = vunpack.c.l.b16 %v9587
        %v9664 = vunpack.c.l.b16 %v9590
        %v9665 = vunpack.c.l.b16 %v9594
        %v9666 = vunpack.c.l.b16 %v9597
        %v9667 = vunpack.c.l.b16 %v9601
        %v9668 = vunpack.c.l.b16 %v9604
        %v9669 = vunpack.c.l.b16 %v9608
        %v9670 = vunpack.c.l.b16 %v9611
        %v9671 = vunpack.c.l.b16 %v9615
        %v9672 = vunpack.c.l.b16 %v9618
        %v9673 = vunpack.c.l.b16 %v9622
        %v9674 = vunpack.c.l.b16 %v9625
        %v9675 = vpack.c.b16 %v9644, %v9643
        %v9676 = vpack.c.b16 %v9646, %v9645
        %v9677 = vpack.c.b16 %v9648, %v9647
        %v9678 = vpack.c.b16 %v9650, %v9649
        %v9679 = vpack.c.b16 %v9652, %v9651
        %v9680 = vpack.c.b16 %v9654, %v9653
        %v9681 = vpack.c.b16 %v9656, %v9655
        %v9682 = vpack.c.b16 %v9658, %v9657
        %v9683 = vpack.c.b16 %v9660, %v9659
        %v9684 = vpack.c.b16 %v9662, %v9661
        %v9685 = vpack.c.b16 %v9664, %v9663
        %v9686 = vpack.c.b16 %v9666, %v9665
        %v9687 = vpack.c.b16 %v9668, %v9667
        %v9688 = vpack.c.b16 %v9670, %v9669
        %v9689 = vpack.c.b16 %v9672, %v9671
        %v9690 = vpack.c.b16 %v9674, %v9673
        %v9723 = vunpack.c.l.b16 %v9627
        %v9724 = vunpack.c.l.b16 %v9628
        %v9725 = vunpack.c.l.b16 %v9629
        %v9726 = vunpack.c.l.b16 %v9630
        %v9727 = vunpack.c.l.b16 %v9631
        %v9728 = vunpack.c.l.b16 %v9632
        %v9729 = vunpack.c.l.b16 %v9633
        %v9730 = vunpack.c.l.b16 %v9634
        %v9731 = vunpack.c.l.b16 %v9635
        %v9732 = vunpack.c.l.b16 %v9636
        %v9733 = vunpack.c.l.b16 %v9637
        %v9734 = vunpack.c.l.b16 %v9638
        %v9735 = vunpack.c.l.b16 %v9639
        %v9736 = vunpack.c.l.b16 %v9640
        %v9737 = vunpack.c.l.b16 %v9641
        %v9738 = vunpack.c.l.b16 %v9642
        %v9739 = vpack.c.b16 %v9724, %v9723
        %v9740 = vpack.c.b16 %v9726, %v9725
        %v9741 = vpack.c.b16 %v9728, %v9727
        %v9742 = vpack.c.b16 %v9730, %v9729
        %v9743 = vpack.c.b16 %v9732, %v9731
        %v9744 = vpack.c.b16 %v9734, %v9733
        %v9745 = vpack.c.b16 %v9736, %v9735
        %v9746 = vpack.c.b16 %v9738, %v9737
        %9755 = vmatpush.bf16.msra.mxu0 %v9746
        %9756 = vmatpush.bf16.msra.mxu0 %v9745
        %9757 = vmatpush.bf16.msra.mxu0 %v9744
        %9758 = vmatpush.bf16.msra.mxu0 %v9743
        %9759 = vmatpush.bf16.msra.mxu0 %v9742
        %9760 = vmatpush.bf16.msra.mxu0 %v9741
        %9761 = vmatpush.bf16.msra.mxu0 %v9740
        %9762 = vmatpush.bf16.msra.mxu0 %v9739
        %9763 = vmatmul.bf16.gmra.mxu0 %v9675
        %v9764 = vpop.f32.mrf.mxu0
        %v9765 = vadd.f32 0.0, %v9764
        %v9766 = vpop.f32.mrf.mxu0
        %v9767 = vadd.f32 0.0, %v9766
        %9768 = vmatmul.bf16.gmra.mxu0 %v9676
        %v9769 = vpop.f32.mrf.mxu0
        %v9770 = vadd.f32 0.0, %v9769
        %v9771 = vpop.f32.mrf.mxu0
        %v9772 = vadd.f32 0.0, %v9771
        %9773 = vmatmul.bf16.gmra.mxu0 %v9677
        %v9774 = vpop.f32.mrf.mxu0
        %v9775 = vadd.f32 0.0, %v9774
        %v9776 = vpop.f32.mrf.mxu0
        %v9777 = vadd.f32 0.0, %v9776
        %9778 = vmatmul.bf16.gmra.mxu0 %v9678
        %v9779 = vpop.f32.mrf.mxu0
        %v9780 = vadd.f32 0.0, %v9779
        %v9781 = vpop.f32.mrf.mxu0
        %v9782 = vadd.f32 0.0, %v9781
        %9783 = vmatmul.bf16.gmra.mxu0 %v9679
        %v9784 = vpop.f32.mrf.mxu0
        %v9785 = vadd.f32 0.0, %v9784
        %v9786 = vpop.f32.mrf.mxu0
        %v9787 = vadd.f32 0.0, %v9786
        %9788 = vmatmul.bf16.gmra.mxu0 %v9680
        %v9789 = vpop.f32.mrf.mxu0
        %v9790 = vadd.f32 0.0, %v9789
        %v9791 = vpop.f32.mrf.mxu0
        %v9792 = vadd.f32 0.0, %v9791
        %9793 = vmatmul.bf16.gmra.mxu0 %v9681
        %v9794 = vpop.f32.mrf.mxu0
        %v9795 = vadd.f32 0.0, %v9794
        %v9796 = vpop.f32.mrf.mxu0
        %v9797 = vadd.f32 0.0, %v9796
        %9798 = vmatmul.bf16.gmra.mxu0 %v9682
        %v9799 = vpop.f32.mrf.mxu0
        %v9800 = vadd.f32 0.0, %v9799
        %v9801 = vpop.f32.mrf.mxu0
        %v9802 = vadd.f32 0.0, %v9801
        %9803 = vmatmul.bf16.gmra.mxu0 %v9683
        %v9804 = vpop.f32.mrf.mxu0
        %v9805 = vadd.f32 0.0, %v9804
        %v9806 = vpop.f32.mrf.mxu0
        %v9807 = vadd.f32 0.0, %v9806
        %9808 = vmatmul.bf16.gmra.mxu0 %v9684
        %v9809 = vpop.f32.mrf.mxu0
        %v9810 = vadd.f32 0.0, %v9809
        %v9811 = vpop.f32.mrf.mxu0
        %v9812 = vadd.f32 0.0, %v9811
        %9813 = vmatmul.bf16.gmra.mxu0 %v9685
        %v9814 = vpop.f32.mrf.mxu0
        %v9815 = vadd.f32 0.0, %v9814
        %v9816 = vpop.f32.mrf.mxu0
        %v9817 = vadd.f32 0.0, %v9816
        %9818 = vmatmul.bf16.gmra.mxu0 %v9686
        %v9819 = vpop.f32.mrf.mxu0
        %v9820 = vadd.f32 0.0, %v9819
        %v9821 = vpop.f32.mrf.mxu0
        %v9822 = vadd.f32 0.0, %v9821
        %9823 = vmatmul.bf16.gmra.mxu0 %v9687
        %v9824 = vpop.f32.mrf.mxu0
        %v9825 = vadd.f32 0.0, %v9824
        %v9826 = vpop.f32.mrf.mxu0
        %v9827 = vadd.f32 0.0, %v9826
        %9828 = vmatmul.bf16.gmra.mxu0 %v9688
        %v9829 = vpop.f32.mrf.mxu0
        %v9830 = vadd.f32 0.0, %v9829
        %v9831 = vpop.f32.mrf.mxu0
        %v9832 = vadd.f32 0.0, %v9831
        %9833 = vmatmul.bf16.gmra.mxu0 %v9689
        %v9834 = vpop.f32.mrf.mxu0
        %v9835 = vadd.f32 0.0, %v9834
        %v9836 = vpop.f32.mrf.mxu0
        %v9837 = vadd.f32 0.0, %v9836
        %9838 = vmatmul.bf16.gmra.mxu0 %v9690
        %v9839 = vpop.f32.mrf.mxu0
        %v9840 = vadd.f32 0.0, %v9839
        %v9841 = vpop.f32.mrf.mxu0
        %v9842 = vadd.f32 0.0, %v9841
        %9843 = vdwg.mxu0
        %v9844 = vadd.f32 %v9418, %v9765
        %v9845 = vadd.f32 %v9419, %v9767
        %v9846 = vadd.f32 %v9420, %v9770
        %v9847 = vadd.f32 %v9421, %v9772
        %v9848 = vadd.f32 %v9422, %v9775
        %v9849 = vadd.f32 %v9423, %v9777
        %v9850 = vadd.f32 %v9424, %v9780
        %v9851 = vadd.f32 %v9425, %v9782
        %v9852 = vadd.f32 %v9426, %v9785
        %v9853 = vadd.f32 %v9427, %v9787
        %v9854 = vadd.f32 %v9428, %v9790
        %v9855 = vadd.f32 %v9429, %v9792
        %v9856 = vadd.f32 %v9430, %v9795
        %v9857 = vadd.f32 %v9431, %v9797
        %v9858 = vadd.f32 %v9432, %v9800
        %v9859 = vadd.f32 %v9433, %v9802
        %v9860 = vadd.f32 %v9434, %v9805
        %v9861 = vadd.f32 %v9435, %v9807
        %v9862 = vadd.f32 %v9436, %v9810
        %v9863 = vadd.f32 %v9437, %v9812
        %v9864 = vadd.f32 %v9438, %v9815
        %v9865 = vadd.f32 %v9439, %v9817
        %v9866 = vadd.f32 %v9440, %v9820
        %v9867 = vadd.f32 %v9441, %v9822
        %v9868 = vadd.f32 %v9442, %v9825
        %v9869 = vadd.f32 %v9443, %v9827
        %v9870 = vadd.f32 %v9444, %v9830
        %v9871 = vadd.f32 %v9445, %v9832
        %v9872 = vadd.f32 %v9446, %v9835
        %v9873 = vadd.f32 %v9447, %v9837
        %v9874 = vadd.f32 %v9448, %v9840
        %v9875 = vadd.f32 %v9449, %v9842
        %v9876 = vld [vmem:[%s290] sm:$0xff]
        %v9877 = vld [vmem:[%s290 + $0x8] sm:$0xff]
        %v9878 = vld [vmem:[%s290 + $0x10] sm:$0xff]
        %v9879 = vld [vmem:[%s290 + $0x18] sm:$0xff]
        %v9880 = vld [vmem:[%s290 + $0x20] sm:$0xff]
        %v9881 = vld [vmem:[%s290 + $0x28] sm:$0xff]
        %v9882 = vld [vmem:[%s290 + $0x30] sm:$0xff]
        %v9883 = vld [vmem:[%s290 + $0x38] sm:$0xff]
        %v9884 = vld [vmem:[%s290 + $0x40] sm:$0xff]
        %v9885 = vld [vmem:[%s290 + $0x48] sm:$0xff]
        %v9886 = vld [vmem:[%s290 + $0x50] sm:$0xff]
        %v9887 = vld [vmem:[%s290 + $0x58] sm:$0xff]
        %v9888 = vld [vmem:[%s290 + $0x60] sm:$0xff]
        %v9889 = vld [vmem:[%s290 + $0x68] sm:$0xff]
        %v9890 = vld [vmem:[%s290 + $0x70] sm:$0xff]
        %v9891 = vld [vmem:[%s290 + $0x78] sm:$0xff]
        %v9892 = vld [vmem:[%s290 + $0x80] sm:$0xff]
        %v9893 = vld [vmem:[%s290 + $0x88] sm:$0xff]
        %v9894 = vld [vmem:[%s290 + $0x90] sm:$0xff]
        %v9895 = vld [vmem:[%s290 + $0x98] sm:$0xff]
        %v9896 = vld [vmem:[%s290 + $0xa0] sm:$0xff]
        %v9897 = vld [vmem:[%s290 + $0xa8] sm:$0xff]
        %v9898 = vld [vmem:[%s290 + $0xb0] sm:$0xff]
        %v9899 = vld [vmem:[%s290 + $0xb8] sm:$0xff]
        %v9900 = vld [vmem:[%s290 + $0xc0] sm:$0xff]
        %v9901 = vld [vmem:[%s290 + $0xc8] sm:$0xff]
        %v9902 = vld [vmem:[%s290 + $0xd0] sm:$0xff]
        %v9903 = vld [vmem:[%s290 + $0xd8] sm:$0xff]
        %v9904 = vld [vmem:[%s290 + $0xe0] sm:$0xff]
        %v9905 = vld [vmem:[%s290 + $0xe8] sm:$0xff]
        %v9906 = vld [vmem:[%s290 + $0xf0] sm:$0xff]
        %v9907 = vld [vmem:[%s290 + $0xf8] sm:$0xff]
        %v9908 = vadd.f32 %v9876, %v9844
        %v9909 = vadd.f32 %v9877, %v9845
        %v9910 = vadd.f32 %v9878, %v9846
        %v9911 = vadd.f32 %v9879, %v9847
        %v9912 = vadd.f32 %v9880, %v9848
        %v9913 = vadd.f32 %v9881, %v9849
        %v9914 = vadd.f32 %v9882, %v9850
        %v9915 = vadd.f32 %v9883, %v9851
        %v9916 = vadd.f32 %v9884, %v9852
        %v9917 = vadd.f32 %v9885, %v9853
        %v9918 = vadd.f32 %v9886, %v9854
        %v9919 = vadd.f32 %v9887, %v9855
        %v9920 = vadd.f32 %v9888, %v9856
        %v9921 = vadd.f32 %v9889, %v9857
        %v9922 = vadd.f32 %v9890, %v9858
        %v9923 = vadd.f32 %v9891, %v9859
        %v9924 = vadd.f32 %v9892, %v9860
        %v9925 = vadd.f32 %v9893, %v9861
        %v9926 = vadd.f32 %v9894, %v9862
        %v9927 = vadd.f32 %v9895, %v9863
        %v9928 = vadd.f32 %v9896, %v9864
        %v9929 = vadd.f32 %v9897, %v9865
        %v9930 = vadd.f32 %v9898, %v9866
        %v9931 = vadd.f32 %v9899, %v9867
        %v9932 = vadd.f32 %v9900, %v9868
        %v9933 = vadd.f32 %v9901, %v9869
        %v9934 = vadd.f32 %v9902, %v9870
        %v9935 = vadd.f32 %v9903, %v9871
        %v9936 = vadd.f32 %v9904, %v9872
        %v9937 = vadd.f32 %v9905, %v9873
        %v9938 = vadd.f32 %v9906, %v9874
        %v9939 = vadd.f32 %v9907, %v9875
        %9940 = vst [vmem:[%s331] sm:$0xff] %v9908
        %9941 = vst [vmem:[%s331 + $0x8] sm:$0xff] %v9909
        %9942 = vst [vmem:[%s331 + $0x10] sm:$0xff] %v9910
        %9943 = vst [vmem:[%s331 + $0x18] sm:$0xff] %v9911
        %9944 = vst [vmem:[%s331 + $0x20] sm:$0xff] %v9912
        %9945 = vst [vmem:[%s331 + $0x28] sm:$0xff] %v9913
        %9946 = vst [vmem:[%s331 + $0x30] sm:$0xff] %v9914
        %9947 = vst [vmem:[%s331 + $0x38] sm:$0xff] %v9915
        %9948 = vst [vmem:[%s331 + $0x40] sm:$0xff] %v9916
        %9949 = vst [vmem:[%s331 + $0x48] sm:$0xff] %v9917
        %9950 = vst [vmem:[%s331 + $0x50] sm:$0xff] %v9918
        %9951 = vst [vmem:[%s331 + $0x58] sm:$0xff] %v9919
        %9952 = vst [vmem:[%s331 + $0x60] sm:$0xff] %v9920
        %9953 = vst [vmem:[%s331 + $0x68] sm:$0xff] %v9921
        %9954 = vst [vmem:[%s331 + $0x70] sm:$0xff] %v9922
        %9955 = vst [vmem:[%s331 + $0x78] sm:$0xff] %v9923
        %9956 = vst [vmem:[%s331 + $0x80] sm:$0xff] %v9924
        %9957 = vst [vmem:[%s331 + $0x88] sm:$0xff] %v9925
        %9958 = vst [vmem:[%s331 + $0x90] sm:$0xff] %v9926
        %9959 = vst [vmem:[%s331 + $0x98] sm:$0xff] %v9927
        %9960 = vst [vmem:[%s331 + $0xa0] sm:$0xff] %v9928
        %9961 = vst [vmem:[%s331 + $0xa8] sm:$0xff] %v9929
        %9962 = vst [vmem:[%s331 + $0xb0] sm:$0xff] %v9930
        %9963 = vst [vmem:[%s331 + $0xb8] sm:$0xff] %v9931
        %9964 = vst [vmem:[%s331 + $0xc0] sm:$0xff] %v9932
        %9965 = vst [vmem:[%s331 + $0xc8] sm:$0xff] %v9933
        %9966 = vst [vmem:[%s331 + $0xd0] sm:$0xff] %v9934
        %9967 = vst [vmem:[%s331 + $0xd8] sm:$0xff] %v9935
        %9968 = vst [vmem:[%s331 + $0xe0] sm:$0xff] %v9936
        %9969 = vst [vmem:[%s331 + $0xe8] sm:$0xff] %v9937
        %9970 = vst [vmem:[%s331 + $0xf0] sm:$0xff] %v9938
        %9971 = vst [vmem:[%s331 + $0xf8] sm:$0xff] %v9939
        %s9972 = sand.u32 %s185, 1
        %s9973 = scalar_lea.sflag [#allocation5], %s9972
        %s9974 = sand.u32 %s185, 1
        %s9975 = smul.addr %s9974, 256
        %s9976 = scalar_lea.vmem [#allocation9], %s9975
        // Predicated region
        $region61: #{tpu_custom_call.1} parent=47 // pred_check
          %p9977 = pneg %p195
        $region62: #{tpu_custom_call.1} parent=47 // pred_check_branch
          %9979 = sbr.rel (%p9977) target = $region64
        $region63: #{tpu_custom_call.1} parent=47 // pred_region
          %9981 = vsyncadd %s9973, 0
          %s9982 = smul.addr %s25, 32
          %s9983 = smul.addr %s9982, 8
          %s9984 = scalar_lea.hbm %s7, %s9983
          %s9985 = sshll.u32 %s9976, 4
          %s9986 = int_to_ptr.vmem [resolvable:$true] %s9985
          %s9987 = sshll.u32 %s9984, 4
          %s9988 = int_to_ptr.hbm [resolvable:$true] %s9987
          %9993 = dma.vmem_to_hbm [thread:$0]  %s9986, 4096, %s9988, %s9973, 128, 128, 8
        $region64: #{tpu_custom_call.1} parent=47 // pred_fallthru
          _
      $region48: #{tpu_custom_call.1} parent=5 // pred_fallthru
        _
      %p9994 = scmp.le.s32.totalorder 2, %s20
      // Predicated region
      $region65: #{tpu_custom_call.1} parent=5 // pred_check
        %p9995 = pneg %p9994
      $region66: #{tpu_custom_call.1} parent=5 // pred_check_branch
        %9997 = sbr.rel (%p9995) target = $region68
      $region67: #{tpu_custom_call.1} parent=5 // pred_region
        %s9998 = ssub.s32 %s20, 2
        // Predicated region
        $region69: #{tpu_custom_call.1} parent=67 // pred_check
          %p9999 = pneg %p201
        $region70: #{tpu_custom_call.1} parent=67 // pred_check_branch
          %10001 = sbr.rel (%p9999) target = $region72
        $region71: #{tpu_custom_call.1} parent=67 // pred_region
          %s10002 = sand.u32 %s186, 1
          %s10003 = scalar_lea.sflag [#allocation5], %s10002
          %s10004 = sand.u32 %s186, 1
          %s10005 = smul.addr %s10004, 256
          %s10006 = scalar_lea.vmem [#allocation9], %s10005
          %10008 = dma.done %s10003, 4096
        $region72: #{tpu_custom_call.1} parent=67 // pred_fallthru
          _
      $region68: #{tpu_custom_call.1} parent=5 // pred_fallthru
        _
    $region6: #{tpu_custom_call.1} parent=1 // loop_footer
      %s24 = sadd.s32 1, %s20
    $region7: #{tpu_custom_call.1} parent=1 // loop_footer_branch
      %19 = sbr.rel target = $region3
    $region8: #{tpu_custom_call.1} parent=1 // loop_exit
      _
    %10009 = vsyncpa [#allocation4], 1
    %s10010 = scalar_lea.sflag [#allocation4], 1
    %10011 = vsyncpa %s10010, 1
    %10012 = vsyncpa [#allocation7], 1
    %10013 = vsyncpa [#allocation5], 1
    %s10014 = scalar_lea.sflag [#allocation5], 1
    %10015 = vsyncpa %s10014, 1

</llo_original>
